<compile_context>
chip_gen: v5e
topology: v5e:2x2
jax: 0.10.0
libtpu: 0.0.40
codegen_flags: <defaults>
</compile_context>

<pallas_src>
import jax
import jax.numpy as jnp
from jax.experimental import pallas as pl
from jax.experimental.pallas import tpu as pltpu

NEG_INF = -1e30
EPS = 1e-5        # GraphNorm eps (PyG default)
OUT_PAD = 128     # lane-dense padded width of the final linear output


def _full_spec(shape):
    nd = len(shape)
    return pl.BlockSpec(shape, lambda i, _nd=nd: (0,) * _nd)


def make_fused_forward(N, G, H, C1, C2, C3, out_dim):
    """One pallas_call for:
         GATv2(->C1,H,concat) -> GraphNorm -> ReLU
         GATv2(->C2,H,concat) -> GraphNorm -> ReLU
         GATv2(->C3,H,mean)   -> GraphNorm -> ReLU
         global_mean_pool -> Linear(C3 -> out_dim)."""
    assert C1 == C2, "concat scratch buffer is shared by layers 1 and 2"
    HC_CAT = H * C1
    layer_cfg = ((C1, True), (C2, True), (C3, False))
    NUM_L_ARGS = 3   # packed: w (lin_l|lin_r), rowvecs (8, H*C), attm (H*C, H)
    N_IN = 4 + 3 * NUM_L_ARGS + 2

    def kernel(*refs):
        x_ref, neg_ref, avg_ref, mm_ref = refs[:4]
        layer_refs = [refs[4 + l * NUM_L_ARGS: 4 + (l + 1) * NUM_L_ARGS]
                      for l in range(3)]
        lw_ref, lb_ref = refs[N_IN - 2], refs[N_IN - 1]
        o_ref = refs[N_IN]
        acc_ref = refs[N_IN + 1]                   # (N, H*C1) VMEM scratch

        neg = neg_ref[...]                         # (N, N) additive edge mask (0 / -1e30)
        avg = avg_ref[...]                         # (N, N) per-graph averaging matrix
        mm = mm_ref[...]                           # (G, N), rows = mask / count

        def gat_graphnorm_relu(xv, lrefs, C, concat):
            w_ref, rv_ref, attm_ref = lrefs
            HC = H * C
            D = HC if concat else C
            rv = rv_ref[...]                       # (8, HC): bl, br, gb, gamma, beta, mscale
            # Fused lin_l | lin_r: single MXU pass, then lane slices.
            xlr = jnp.dot(xv, w_ref[...], preferred_element_type=jnp.float32)  # (N, 2HC)
            xl = xlr[:, :HC] + rv[0:1, :HC]        # source side (lin_l)
            xr = xlr[:, HC:2 * HC] + rv[1:2, :HC]  # target side (lin_r)
            # GATv2 scores for all heads in one MXU pass:
            #   e[i, j, h] = att_h . leaky_relu(xr_h[i] + xl_h[j], 0.2)
            s = xr[:, None, :] + xl[None, :, :]                 # (N_tgt, N_src, H*C)
            s = jnp.where(s > 0.0, s, 0.2 * s)                  # LeakyReLU(0.2)
            e_all = jnp.dot(s.reshape(N * N, HC), attm_ref[...],
                            preferred_element_type=jnp.float32)  # (N*N, H)
            e_all = e_all.reshape(N, N, H)

            out = None
            for h in range(H):                                  # H small & static -> unrolled
                e = e_all[:, :, h] + neg                        # masked logits
                m = jnp.max(e, axis=1, keepdims=True)
                p = jnp.exp(e - m)                              # masked entries underflow to 0
                denom = jnp.maximum(jnp.sum(p, axis=1, keepdims=True), 1e-20)
                alpha = p * pl.reciprocal(denom, approx=True)   # EUP reciprocal, no divide
                head_out = jnp.dot(alpha, xl[:, h * C:(h + 1) * C],
                                   preferred_element_type=jnp.float32)  # (N, C)
                if concat:
                    acc_ref[:, h * C:(h + 1) * C] = head_out    # no lane-axis concat
                else:
                    out = head_out if out is None else out + head_out
            if concat:
                out = acc_ref[...]                              # (N, H*C)
            else:
                out = out * (1.0 / H)                           # mean over heads
            out = out + rv[2:3, :D]                             # GATv2 output bias

            # GraphNorm via the precomputed per-graph averaging matrix (divide-free) + ReLU
            mean_n = jnp.dot(avg, out, preferred_element_type=jnp.float32)
            cen = out - rv[5:6, :D] * mean_n                    # mean_scale
            var_n = jnp.dot(avg, cen * cen, preferred_element_type=jnp.float32)
            y = rv[3:4, :D] * cen * jax.lax.rsqrt(var_n + EPS) + rv[4:5, :D]
            return jnp.maximum(y, 0.0)

        hv = x_ref[...]
        for l, (C, concat) in enumerate(layer_cfg):
            hv = gat_graphnorm_relu(hv, layer_refs[l], C, concat)

        # global_mean_pool + Linear; weights zero-padded to 128 lanes so the single
        # HBM store is an unmasked full-lane vst (wrapper slices back to out_dim).
        pooled = jnp.dot(mm, hv, preferred_element_type=jnp.float32)       # (G, C3)
        o_ref[...] = jnp.dot(pooled, lw_ref[...],
                             preferred_element_type=jnp.float32) + lb_ref[...]

    def apply(x, neg, avg_mat, mask_mean, packed_layers, lin_w_pad, lin_b_pad):
        args = [x, neg, avg_mat, mask_mean]
        for (w, rv, attm) in packed_layers:
            args += [w, rv, attm]
        args += [lin_w_pad, lin_b_pad]
        assert len(args) == N_IN
        out_pad = pl.pallas_call(
            kernel,
            out_shape=jax.ShapeDtypeStruct((G, OUT_PAD), jnp.float32),
            grid=(1,),
            in_specs=[_full_spec(a.shape) for a in args],
            out_specs=_full_spec((G, OUT_PAD)),
            scratch_shapes=[pltpu.VMEM((N, HC_CAT), jnp.float32)],
            compiler_params=pltpu.CompilerParams(
                dimension_semantics=("arbitrary",),
                vmem_limit_bytes=32 * 1024 * 1024),
        )(*args)
        return out_pad[:, :out_dim]

    return apply


# ------------------------------ parameters -----------------------------------

def _glorot(key, shape):
    fan_in, fan_out = shape[0], shape[-1]
    return jnp.sqrt(2.0 / (fan_in + fan_out)) * jax.random.normal(key, shape, jnp.float32)


def att_block_matrix(att, H, C):
    """(H, C) per-head attention vectors -> block-diagonal (H*C, H) matrix so that
    scores for every head come out of a single MXU matmul."""
    m = jnp.zeros((H * C, H), jnp.float32)
    for h in range(H):
        m = m.at[h * C:(h + 1) * C, h].set(att[h])
    return m


def init_gat_layer_params(key, F_in, H, C, concat):
    D = H * C if concat else C
    k1, k2, k3 = jax.random.split(key, 3)
    att = _glorot(k3, (H, C))
    return dict(
        wl=_glorot(k1, (F_in, H * C)), bl=jnp.zeros((1, H * C), jnp.float32),
        wr=_glorot(k2, (F_in, H * C)), br=jnp.zeros((1, H * C), jnp.float32),
        att=att, attm=att_block_matrix(att, H, C),
        gb=jnp.zeros((1, D), jnp.float32),           # GATv2 bias
        gamma=jnp.ones((1, D), jnp.float32),         # GraphNorm weight (init 1)
        beta=jnp.zeros((1, D), jnp.float32),         # GraphNorm bias (init 0)
        mscale=jnp.ones((1, D), jnp.float32),        # GraphNorm mean_scale (init 1)
    )


def pack_layer_params(p, H, C, concat):
    """Host-side packing: one weight matrix, one (8, H*C) row-vector stack, one
    block-diag attention matrix per layer (DMA-count reduction)."""
    HC = H * C
    D = HC if concat else C
    w = jnp.concatenate([p['wl'], p['wr']], axis=1)          # (F_in, 2*H*C)
    rv = jnp.zeros((8, HC), jnp.float32)
    rv = rv.at[0, :HC].set(p['bl'][0])
    rv = rv.at[1, :HC].set(p['br'][0])
    rv = rv.at[2, :D].set(p['gb'][0])
    rv = rv.at[3, :D].set(p['gamma'][0])
    rv = rv.at[4, :D].set(p['beta'][0])
    rv = rv.at[5, :D].set(p['mscale'][0])
    return (w, rv, p['attm'])


# --------------------------- pure-JAX reference -------------------------------

def ref_gat_layer(x, p, adj, mask, maskT, cnt, H, C, concat):
    xl = x @ p['wl'] + p['bl']
    xr = x @ p['wr'] + p['br']
    outs = []
    for h in range(H):
        xl_h = xl[:, h * C:(h + 1) * C]
        xr_h = xr[:, h * C:(h + 1) * C]
        s = xr_h[:, None, :] + xl_h[None, :, :]
        s = jnp.where(s > 0, s, 0.2 * s)
        e = jnp.sum(s * p['att'][h][None, None, :], axis=-1)
        e = jnp.where(adj > 0, e, NEG_INF)
        m = jnp.max(e, axis=1, keepdims=True)
        pr = jnp.exp(e - m) * adj
        alpha = pr / jnp.sum(pr, axis=1, keepdims=True)
        outs.append(alpha @ xl_h)
    out = jnp.concatenate(outs, axis=1) if concat else sum(outs) / H
    out = out + p['gb']
    mean_g = mask @ out / cnt
    cen = out - p['mscale'] * (maskT @ mean_g)
    var_n = maskT @ (mask @ (cen * cen) / cnt)
    y = p['gamma'] * cen / jnp.sqrt(var_n + EPS) + p['beta']
    return jnp.maximum(y, 0.0)


def ref_pool_linear(x, mask, cnt, w, b):
    return (mask @ x) / cnt @ w + b


# --------------------------------- main ---------------------------------------

if __name__ == "__main__":
    # Shapes consistent with SimpleGAT: in_channels=8, h1=h2=h3=8, heads=2.
    in_channels, h1, h2, h3, H = 8, 8, 8, 8, 2
    nodes_per_graph, G = 8, 2            # N = 16 keeps sublane dims 8-aligned
    N = nodes_per_graph * G
    out_dim = 2

    key = jax.random.PRNGKey(0)
    key, kx, k1, k2, k3, k4 = jax.random.split(key, 6)

    x = jax.random.normal(kx, (N, in_channels), jnp.float32)

    # Graph structure: bidirectional ring within each graph + self-loops.
    src, dst = [], []
    for g in range(G):
        base = g * nodes_per_graph
        for u in range(nodes_per_graph):
            v = (u + 1) % nodes_per_graph
            src += [base + u, base + v]
            dst += [base + v, base + u]
    for n in range(N):                    # add_self_loops=True semantics
        src.append(n)
        dst.append(n)
    adj = jnp.zeros((N, N), jnp.float32).at[jnp.array(dst), jnp.array(src)].set(1.0)

    batch = jnp.repeat(jnp.arange(G), nodes_per_graph)
    mask = (batch[None, :] == jnp.arange(G)[:, None]).astype(jnp.float32)  # (G, N)
    maskT = mask.T                                                          # (N, G)
    cnt = jnp.sum(mask, axis=1, keepdims=True)                              # (G, 1)
    mask_mean = mask / cnt                     # host-side 1/count fold -> no in-kernel divide

    # Host-precomputed kernel operands: additive edge mask + per-graph averaging matrix.
    neg = jnp.where(adj > 0, 0.0, NEG_INF).astype(jnp.float32)              # (N, N)
    avg_mat = maskT @ mask_mean                                             # (N, N)

    # Parameters (deterministic init).
    p1 = init_gat_layer_params(k1, in_channels, H, h1, concat=True)
    p2 = init_gat_layer_params(k2, h1 * H, H, h2, concat=True)
    p3 = init_gat_layer_params(k3, h2 * H, H, h3, concat=False)
    packed_layers = (pack_layer_params(p1, H, h1, True),
                     pack_layer_params(p2, H, h2, True),
                     pack_layer_params(p3, H, h3, False))
    lin_w = _glorot(k4, (h3, out_dim))
    lin_b = jnp.zeros((1, out_dim), jnp.float32)
    lin_w_pad = jnp.zeros((h3, OUT_PAD), jnp.float32).at[:, :out_dim].set(lin_w)
    lin_b_pad = jnp.zeros((1, OUT_PAD), jnp.float32).at[:, :out_dim].set(lin_b)

    forward = make_fused_forward(N, G, H, h1, h2, h3, out_dim)
    out = forward(x, neg, avg_mat, mask_mean, packed_layers, lin_w_pad, lin_b_pad)
    out = jax.block_until_ready(out)

    # Pure-JAX reference (exact divides/sqrt; kernel uses approx EUP reciprocal).
    r = ref_gat_layer(x, p1, adj, mask, maskT, cnt, H, h1, True)
    r = ref_gat_layer(r, p2, adj, mask, maskT, cnt, H, h2, True)
    r = ref_gat_layer(r, p3, adj, mask, maskT, cnt, H, h3, False)
    r = ref_pool_linear(r, mask, cnt, lin_w, lin_b)

    assert out.shape == (G, out_dim), out.shape
    assert bool(jnp.all(jnp.isfinite(out)))
    assert bool(jnp.allclose(out, r, rtol=2e-2, atol=2e-2)), (out, r)

    print("KERNEL_OK")
</pallas_src>

<mosaic_0001>
module attributes {stable_mosaic.version = 11 : i64} {
  func.func @kernel(%arg0: i32, %arg1: memref<16x8xf32, #tpu.memory_space<vmem>>, %arg2: memref<16x16xf32, #tpu.memory_space<vmem>>, %arg3: memref<16x16xf32, #tpu.memory_space<vmem>>, %arg4: memref<2x16xf32, #tpu.memory_space<vmem>>, %arg5: memref<8x32xf32, #tpu.memory_space<vmem>>, %arg6: memref<8x16xf32, #tpu.memory_space<vmem>>, %arg7: memref<16x2xf32, #tpu.memory_space<vmem>>, %arg8: memref<16x32xf32, #tpu.memory_space<vmem>>, %arg9: memref<8x16xf32, #tpu.memory_space<vmem>>, %arg10: memref<16x2xf32, #tpu.memory_space<vmem>>, %arg11: memref<16x32xf32, #tpu.memory_space<vmem>>, %arg12: memref<8x16xf32, #tpu.memory_space<vmem>>, %arg13: memref<16x2xf32, #tpu.memory_space<vmem>>, %arg14: memref<8x128xf32, #tpu.memory_space<vmem>>, %arg15: memref<1x128xf32, #tpu.memory_space<vmem>>, %arg16: memref<2x128xf32, #tpu.memory_space<vmem>>, %arg17: memref<16x16xf32, #tpu.memory_space<vmem>>) attributes {dimension_semantics = [#tpu.dimension_semantics<arbitrary>], iteration_bounds = array<i64: 1>, scalar_prefetch = 0 : i64, scratch_operands = 1 : i64, tpu.core_type = #tpu.core_type<tc>, window_params = [{pipeline_mode = #tpu.pipeline_mode<synchronous>, transform_indices = @transform_0, window_bounds = array<i64: 16, 8>}, {pipeline_mode = #tpu.pipeline_mode<synchronous>, transform_indices = @transform_1, window_bounds = array<i64: 16, 16>}, {pipeline_mode = #tpu.pipeline_mode<synchronous>, transform_indices = @transform_2, window_bounds = array<i64: 16, 16>}, {pipeline_mode = #tpu.pipeline_mode<synchronous>, transform_indices = @transform_3, window_bounds = array<i64: 2, 16>}, {pipeline_mode = #tpu.pipeline_mode<synchronous>, transform_indices = @transform_4, window_bounds = array<i64: 8, 32>}, {pipeline_mode = #tpu.pipeline_mode<synchronous>, transform_indices = @transform_5, window_bounds = array<i64: 8, 16>}, {pipeline_mode = #tpu.pipeline_mode<synchronous>, transform_indices = @transform_6, window_bounds = array<i64: 16, 2>}, {pipeline_mode = #tpu.pipeline_mode<synchronous>, transform_indices = @transform_7, window_bounds = array<i64: 16, 32>}, {pipeline_mode = #tpu.pipeline_mode<synchronous>, transform_indices = @transform_8, window_bounds = array<i64: 8, 16>}, {pipeline_mode = #tpu.pipeline_mode<synchronous>, transform_indices = @transform_9, window_bounds = array<i64: 16, 2>}, {pipeline_mode = #tpu.pipeline_mode<synchronous>, transform_indices = @transform_10, window_bounds = array<i64: 16, 32>}, {pipeline_mode = #tpu.pipeline_mode<synchronous>, transform_indices = @transform_11, window_bounds = array<i64: 8, 16>}, {pipeline_mode = #tpu.pipeline_mode<synchronous>, transform_indices = @transform_12, window_bounds = array<i64: 16, 2>}, {pipeline_mode = #tpu.pipeline_mode<synchronous>, transform_indices = @transform_13, window_bounds = array<i64: 8, 128>}, {pipeline_mode = #tpu.pipeline_mode<synchronous>, transform_indices = @transform_14, window_bounds = array<i64: 1, 128>}, {pipeline_mode = #tpu.pipeline_mode<synchronous>, transform_indices = @transform_15, window_bounds = array<i64: 2, 128>}]} {
    %c0 = arith.constant 0 : index
    %c0_0 = arith.constant 0 : index
    %0 = vector.load %arg2[%c0, %c0_0] : memref<16x16xf32, #tpu.memory_space<vmem>>, vector<16x16xf32>
    %c0_1 = arith.constant 0 : index
    %c0_2 = arith.constant 0 : index
    %1 = vector.load %arg3[%c0_1, %c0_2] : memref<16x16xf32, #tpu.memory_space<vmem>>, vector<16x16xf32>
    %c0_3 = arith.constant 0 : index
    %c0_4 = arith.constant 0 : index
    %2 = vector.load %arg4[%c0_3, %c0_4] : memref<2x16xf32, #tpu.memory_space<vmem>>, vector<2x16xf32>
    %c0_5 = arith.constant 0 : index
    %c0_6 = arith.constant 0 : index
    %3 = vector.load %arg1[%c0_5, %c0_6] : memref<16x8xf32, #tpu.memory_space<vmem>>, vector<16x8xf32>
    %c0_7 = arith.constant 0 : index
    %c0_8 = arith.constant 0 : index
    %4 = vector.load %arg6[%c0_7, %c0_8] : memref<8x16xf32, #tpu.memory_space<vmem>>, vector<8x16xf32>
    %c0_9 = arith.constant 0 : index
    %c0_10 = arith.constant 0 : index
    %5 = vector.load %arg5[%c0_9, %c0_10] : memref<8x32xf32, #tpu.memory_space<vmem>>, vector<8x32xf32>
    %cst = arith.constant dense<0.000000e+00> : vector<16x32xf32>
    %6 = tpu.matmul %3, %5, %cst {dimension_numbers = #tpu.dot_dimension_numbers<[1], [0], [0], [1], [0, 0, 1, 1], [], []>} : vector<16x8xf32>, vector<8x32xf32>, vector<16x32xf32> -> vector<16x32xf32>
    %7 = vector.extract_strided_slice %6 {offsets = [0, 0], sizes = [16, 16], strides = [1, 1]} : vector<16x32xf32> to vector<16x16xf32>
    %8 = vector.extract_strided_slice %4 {offsets = [0, 0], sizes = [1, 16], strides = [1, 1]} : vector<8x16xf32> to vector<1x16xf32>
    %9 = vector.broadcast %8 : vector<1x16xf32> to vector<16x16xf32>
    %10 = arith.addf %7, %9 : vector<16x16xf32>
    %11 = vector.extract_strided_slice %6 {offsets = [0, 16], sizes = [16, 16], strides = [1, 1]} : vector<16x32xf32> to vector<16x16xf32>
    %12 = vector.extract_strided_slice %4 {offsets = [1, 0], sizes = [1, 16], strides = [1, 1]} : vector<8x16xf32> to vector<1x16xf32>
    %13 = vector.broadcast %12 : vector<1x16xf32> to vector<16x16xf32>
    %14 = arith.addf %11, %13 : vector<16x16xf32>
    %15 = vector.shape_cast %14 : vector<16x16xf32> to vector<16x1x16xf32>
    %16 = vector.shape_cast %10 : vector<16x16xf32> to vector<1x16x16xf32>
    %17 = vector.broadcast %15 : vector<16x1x16xf32> to vector<16x16x16xf32>
    %18 = vector.broadcast %16 : vector<1x16x16xf32> to vector<16x16x16xf32>
    %19 = arith.addf %17, %18 : vector<16x16x16xf32>
    %cst_11 = arith.constant 0.000000e+00 : f32
    %20 = vector.broadcast %cst_11 : f32 to vector<16x16x16xf32>
    %21 = arith.cmpf ogt, %19, %20 : vector<16x16x16xf32>
    %cst_12 = arith.constant 2.000000e-01 : f32
    %22 = vector.broadcast %cst_12 : f32 to vector<16x16x16xf32>
    %23 = arith.mulf %22, %19 : vector<16x16x16xf32>
    %24 = arith.select %21, %19, %23 : vector<16x16x16xi1>, vector<16x16x16xf32>
    %25 = vector.shape_cast %24 : vector<16x16x16xf32> to vector<256x16xf32>
    %c0_13 = arith.constant 0 : index
    %c0_14 = arith.constant 0 : index
    %26 = vector.load %arg7[%c0_13, %c0_14] : memref<16x2xf32, #tpu.memory_space<vmem>>, vector<16x2xf32>
    %cst_15 = arith.constant dense<0.000000e+00> : vector<256x2xf32>
    %27 = tpu.matmul %25, %26, %cst_15 {dimension_numbers = #tpu.dot_dimension_numbers<[1], [0], [0], [1], [0, 0, 1, 1], [], []>} : vector<256x16xf32>, vector<16x2xf32>, vector<256x2xf32> -> vector<256x2xf32>
    %28 = vector.shape_cast %27 : vector<256x2xf32> to vector<16x16x2xf32>
    %29 = vector.extract_strided_slice %28 {offsets = [0, 0, 0], sizes = [16, 16, 1], strides = [1, 1, 1]} : vector<16x16x2xf32> to vector<16x16x1xf32>
    %30 = vector.shape_cast %29 : vector<16x16x1xf32> to vector<16x16xf32>
    %31 = arith.addf %30, %0 : vector<16x16xf32>
    %cst_16 = arith.constant dense<0xFF800000> : vector<16xf32>
    %32 = vector.multi_reduction <maximumf>, %31, %cst_16 [1] : vector<16x16xf32> to vector<16xf32>
    %33 = vector.shape_cast %32 : vector<16xf32> to vector<16x1xf32>
    %34 = vector.broadcast %33 : vector<16x1xf32> to vector<16x16xf32>
    %35 = arith.subf %31, %34 : vector<16x16xf32>
    %36 = math.exp %35 : vector<16x16xf32>
    %cst_17 = arith.constant dense<0.000000e+00> : vector<16xf32>
    %37 = vector.multi_reduction <add>, %36, %cst_17 [1] : vector<16x16xf32> to vector<16xf32>
    %38 = vector.shape_cast %37 : vector<16xf32> to vector<16x1xf32>
    %cst_18 = arith.constant 9.99999968E-21 : f32
    %39 = vector.broadcast %cst_18 : f32 to vector<16x1xf32>
    %40 = arith.maximumf %38, %39 : vector<16x1xf32>
    %41 = tpu.reciprocal %40 {approx = true} : vector<16x1xf32> -> vector<16x1xf32>
    %42 = vector.broadcast %41 : vector<16x1xf32> to vector<16x16xf32>
    %43 = arith.mulf %36, %42 : vector<16x16xf32>
    %44 = vector.extract_strided_slice %10 {offsets = [0, 0], sizes = [16, 8], strides = [1, 1]} : vector<16x16xf32> to vector<16x8xf32>
    %cst_19 = arith.constant dense<0.000000e+00> : vector<16x8xf32>
    %45 = tpu.matmul %43, %44, %cst_19 {dimension_numbers = #tpu.dot_dimension_numbers<[1], [0], [0], [1], [0, 0, 1, 1], [], []>} : vector<16x16xf32>, vector<16x8xf32>, vector<16x8xf32> -> vector<16x8xf32>
    %c0_20 = arith.constant 0 : index
    %c0_21 = arith.constant 0 : index
    %46 = vector.load %arg17[%c0_20, %c0_21] : memref<16x16xf32, #tpu.memory_space<vmem>>, vector<16x8xf32>
    tpu.vector_store %arg17[%c0_20, %c0_21], %45 {strides = array<i32>} : memref<16x16xf32, #tpu.memory_space<vmem>>, vector<16x8xf32>,
    %47 = vector.extract_strided_slice %28 {offsets = [0, 0, 1], sizes = [16, 16, 1], strides = [1, 1, 1]} : vector<16x16x2xf32> to vector<16x16x1xf32>
    %48 = vector.shape_cast %47 : vector<16x16x1xf32> to vector<16x16xf32>
    %49 = arith.addf %48, %0 : vector<16x16xf32>
    %cst_22 = arith.constant dense<0xFF800000> : vector<16xf32>
    %50 = vector.multi_reduction <maximumf>, %49, %cst_22 [1] : vector<16x16xf32> to vector<16xf32>
    %51 = vector.shape_cast %50 : vector<16xf32> to vector<16x1xf32>
    %52 = vector.broadcast %51 : vector<16x1xf32> to vector<16x16xf32>
    %53 = arith.subf %49, %52 : vector<16x16xf32>
    %54 = math.exp %53 : vector<16x16xf32>
    %cst_23 = arith.constant dense<0.000000e+00> : vector<16xf32>
    %55 = vector.multi_reduction <add>, %54, %cst_23 [1] : vector<16x16xf32> to vector<16xf32>
    %56 = vector.shape_cast %55 : vector<16xf32> to vector<16x1xf32>
    %cst_24 = arith.constant 9.99999968E-21 : f32
    %57 = vector.broadcast %cst_24 : f32 to vector<16x1xf32>
    %58 = arith.maximumf %56, %57 : vector<16x1xf32>
    %59 = tpu.reciprocal %58 {approx = true} : vector<16x1xf32> -> vector<16x1xf32>
    %60 = vector.broadcast %59 : vector<16x1xf32> to vector<16x16xf32>
    %61 = arith.mulf %54, %60 : vector<16x16xf32>
    %62 = vector.extract_strided_slice %10 {offsets = [0, 8], sizes = [16, 8], strides = [1, 1]} : vector<16x16xf32> to vector<16x8xf32>
    %cst_25 = arith.constant dense<0.000000e+00> : vector<16x8xf32>
    %63 = tpu.matmul %61, %62, %cst_25 {dimension_numbers = #tpu.dot_dimension_numbers<[1], [0], [0], [1], [0, 0, 1, 1], [], []>} : vector<16x16xf32>, vector<16x8xf32>, vector<16x8xf32> -> vector<16x8xf32>
    %c0_26 = arith.constant 0 : index
    %c8 = arith.constant 8 : index
    %64 = vector.load %arg17[%c0_26, %c8] : memref<16x16xf32, #tpu.memory_space<vmem>>, vector<16x8xf32>
    tpu.vector_store %arg17[%c0_26, %c8], %63 {strides = array<i32>} : memref<16x16xf32, #tpu.memory_space<vmem>>, vector<16x8xf32>,
    %c0_27 = arith.constant 0 : index
    %c0_28 = arith.constant 0 : index
    %65 = vector.load %arg17[%c0_27, %c0_28] : memref<16x16xf32, #tpu.memory_space<vmem>>, vector<16x16xf32>
    %66 = vector.extract_strided_slice %4 {offsets = [2, 0], sizes = [1, 16], strides = [1, 1]} : vector<8x16xf32> to vector<1x16xf32>
    %67 = vector.broadcast %66 : vector<1x16xf32> to vector<16x16xf32>
    %68 = arith.addf %65, %67 : vector<16x16xf32>
    %cst_29 = arith.constant dense<0.000000e+00> : vector<16x16xf32>
    %69 = tpu.matmul %1, %68, %cst_29 {dimension_numbers = #tpu.dot_dimension_numbers<[1], [0], [0], [1], [0, 0, 1, 1], [], []>} : vector<16x16xf32>, vector<16x16xf32>, vector<16x16xf32> -> vector<16x16xf32>
    %70 = vector.extract_strided_slice %4 {offsets = [5, 0], sizes = [1, 16], strides = [1, 1]} : vector<8x16xf32> to vector<1x16xf32>
    %71 = vector.broadcast %70 : vector<1x16xf32> to vector<16x16xf32>
    %72 = arith.mulf %71, %69 : vector<16x16xf32>
    %73 = arith.subf %68, %72 : vector<16x16xf32>
    %74 = arith.mulf %73, %73 : vector<16x16xf32>
    %cst_30 = arith.constant dense<0.000000e+00> : vector<16x16xf32>
    %75 = tpu.matmul %1, %74, %cst_30 {dimension_numbers = #tpu.dot_dimension_numbers<[1], [0], [0], [1], [0, 0, 1, 1], [], []>} : vector<16x16xf32>, vector<16x16xf32>, vector<16x16xf32> -> vector<16x16xf32>
    %76 = vector.extract_strided_slice %4 {offsets = [3, 0], sizes = [1, 16], strides = [1, 1]} : vector<8x16xf32> to vector<1x16xf32>
    %77 = vector.broadcast %76 : vector<1x16xf32> to vector<16x16xf32>
    %78 = arith.mulf %77, %73 : vector<16x16xf32>
    %cst_31 = arith.constant 9.99999974E-6 : f32
    %79 = vector.broadcast %cst_31 : f32 to vector<16x16xf32>
    %80 = arith.addf %75, %79 : vector<16x16xf32>
    %81 = math.rsqrt %80 : vector<16x16xf32>
    %82 = arith.mulf %78, %81 : vector<16x16xf32>
    %83 = vector.extract_strided_slice %4 {offsets = [4, 0], sizes = [1, 16], strides = [1, 1]} : vector<8x16xf32> to vector<1x16xf32>
    %84 = vector.broadcast %83 : vector<1x16xf32> to vector<16x16xf32>
    %85 = arith.addf %82, %84 : vector<16x16xf32>
    %cst_32 = arith.constant 0.000000e+00 : f32
    %86 = vector.broadcast %cst_32 : f32 to vector<16x16xf32>
    %87 = arith.maximumf %85, %86 : vector<16x16xf32>
    %c0_33 = arith.constant 0 : index
    %c0_34 = arith.constant 0 : index
    %88 = vector.load %arg9[%c0_33, %c0_34] : memref<8x16xf32, #tpu.memory_space<vmem>>, vector<8x16xf32>
    %c0_35 = arith.constant 0 : index
    %c0_36 = arith.constant 0 : index
    %89 = vector.load %arg8[%c0_35, %c0_36] : memref<16x32xf32, #tpu.memory_space<vmem>>, vector<16x32xf32>
    %cst_37 = arith.constant dense<0.000000e+00> : vector<16x32xf32>
    %90 = tpu.matmul %87, %89, %cst_37 {dimension_numbers = #tpu.dot_dimension_numbers<[1], [0], [0], [1], [0, 0, 1, 1], [], []>} : vector<16x16xf32>, vector<16x32xf32>, vector<16x32xf32> -> vector<16x32xf32>
    %91 = vector.extract_strided_slice %90 {offsets = [0, 0], sizes = [16, 16], strides = [1, 1]} : vector<16x32xf32> to vector<16x16xf32>
    %92 = vector.extract_strided_slice %88 {offsets = [0, 0], sizes = [1, 16], strides = [1, 1]} : vector<8x16xf32> to vector<1x16xf32>
    %93 = vector.broadcast %92 : vector<1x16xf32> to vector<16x16xf32>
    %94 = arith.addf %91, %93 : vector<16x16xf32>
    %95 = vector.extract_strided_slice %90 {offsets = [0, 16], sizes = [16, 16], strides = [1, 1]} : vector<16x32xf32> to vector<16x16xf32>
    %96 = vector.extract_strided_slice %88 {offsets = [1, 0], sizes = [1, 16], strides = [1, 1]} : vector<8x16xf32> to vector<1x16xf32>
    %97 = vector.broadcast %96 : vector<1x16xf32> to vector<16x16xf32>
    %98 = arith.addf %95, %97 : vector<16x16xf32>
    %99 = vector.shape_cast %98 : vector<16x16xf32> to vector<16x1x16xf32>
    %100 = vector.shape_cast %94 : vector<16x16xf32> to vector<1x16x16xf32>
    %101 = vector.broadcast %99 : vector<16x1x16xf32> to vector<16x16x16xf32>
    %102 = vector.broadcast %100 : vector<1x16x16xf32> to vector<16x16x16xf32>
    %103 = arith.addf %101, %102 : vector<16x16x16xf32>
    %cst_38 = arith.constant 0.000000e+00 : f32
    %104 = vector.broadcast %cst_38 : f32 to vector<16x16x16xf32>
    %105 = arith.cmpf ogt, %103, %104 : vector<16x16x16xf32>
    %cst_39 = arith.constant 2.000000e-01 : f32
    %106 = vector.broadcast %cst_39 : f32 to vector<16x16x16xf32>
    %107 = arith.mulf %106, %103 : vector<16x16x16xf32>
    %108 = arith.select %105, %103, %107 : vector<16x16x16xi1>, vector<16x16x16xf32>
    %109 = vector.shape_cast %108 : vector<16x16x16xf32> to vector<256x16xf32>
    %c0_40 = arith.constant 0 : index
    %c0_41 = arith.constant 0 : index
    %110 = vector.load %arg10[%c0_40, %c0_41] : memref<16x2xf32, #tpu.memory_space<vmem>>, vector<16x2xf32>
    %cst_42 = arith.constant dense<0.000000e+00> : vector<256x2xf32>
    %111 = tpu.matmul %109, %110, %cst_42 {dimension_numbers = #tpu.dot_dimension_numbers<[1], [0], [0], [1], [0, 0, 1, 1], [], []>} : vector<256x16xf32>, vector<16x2xf32>, vector<256x2xf32> -> vector<256x2xf32>
    %112 = vector.shape_cast %111 : vector<256x2xf32> to vector<16x16x2xf32>
    %113 = vector.extract_strided_slice %112 {offsets = [0, 0, 0], sizes = [16, 16, 1], strides = [1, 1, 1]} : vector<16x16x2xf32> to vector<16x16x1xf32>
    %114 = vector.shape_cast %113 : vector<16x16x1xf32> to vector<16x16xf32>
    %115 = arith.addf %114, %0 : vector<16x16xf32>
    %cst_43 = arith.constant dense<0xFF800000> : vector<16xf32>
    %116 = vector.multi_reduction <maximumf>, %115, %cst_43 [1] : vector<16x16xf32> to vector<16xf32>
    %117 = vector.shape_cast %116 : vector<16xf32> to vector<16x1xf32>
    %118 = vector.broadcast %117 : vector<16x1xf32> to vector<16x16xf32>
    %119 = arith.subf %115, %118 : vector<16x16xf32>
    %120 = math.exp %119 : vector<16x16xf32>
    %cst_44 = arith.constant dense<0.000000e+00> : vector<16xf32>
    %121 = vector.multi_reduction <add>, %120, %cst_44 [1] : vector<16x16xf32> to vector<16xf32>
    %122 = vector.shape_cast %121 : vector<16xf32> to vector<16x1xf32>
    %cst_45 = arith.constant 9.99999968E-21 : f32
    %123 = vector.broadcast %cst_45 : f32 to vector<16x1xf32>
    %124 = arith.maximumf %122, %123 : vector<16x1xf32>
    %125 = tpu.reciprocal %124 {approx = true} : vector<16x1xf32> -> vector<16x1xf32>
    %126 = vector.broadcast %125 : vector<16x1xf32> to vector<16x16xf32>
    %127 = arith.mulf %120, %126 : vector<16x16xf32>
    %128 = vector.extract_strided_slice %94 {offsets = [0, 0], sizes = [16, 8], strides = [1, 1]} : vector<16x16xf32> to vector<16x8xf32>
    %cst_46 = arith.constant dense<0.000000e+00> : vector<16x8xf32>
    %129 = tpu.matmul %127, %128, %cst_46 {dimension_numbers = #tpu.dot_dimension_numbers<[1], [0], [0], [1], [0, 0, 1, 1], [], []>} : vector<16x16xf32>, vector<16x8xf32>, vector<16x8xf32> -> vector<16x8xf32>
    %c0_47 = arith.constant 0 : index
    %c0_48 = arith.constant 0 : index
    %130 = vector.load %arg17[%c0_47, %c0_48] : memref<16x16xf32, #tpu.memory_space<vmem>>, vector<16x8xf32>
    tpu.vector_store %arg17[%c0_47, %c0_48], %129 {strides = array<i32>} : memref<16x16xf32, #tpu.memory_space<vmem>>, vector<16x8xf32>,
    %131 = vector.extract_strided_slice %112 {offsets = [0, 0, 1], sizes = [16, 16, 1], strides = [1, 1, 1]} : vector<16x16x2xf32> to vector<16x16x1xf32>
    %132 = vector.shape_cast %131 : vector<16x16x1xf32> to vector<16x16xf32>
    %133 = arith.addf %132, %0 : vector<16x16xf32>
    %cst_49 = arith.constant dense<0xFF800000> : vector<16xf32>
    %134 = vector.multi_reduction <maximumf>, %133, %cst_49 [1] : vector<16x16xf32> to vector<16xf32>
    %135 = vector.shape_cast %134 : vector<16xf32> to vector<16x1xf32>
    %136 = vector.broadcast %135 : vector<16x1xf32> to vector<16x16xf32>
    %137 = arith.subf %133, %136 : vector<16x16xf32>
    %138 = math.exp %137 : vector<16x16xf32>
    %cst_50 = arith.constant dense<0.000000e+00> : vector<16xf32>
    %139 = vector.multi_reduction <add>, %138, %cst_50 [1] : vector<16x16xf32> to vector<16xf32>
    %140 = vector.shape_cast %139 : vector<16xf32> to vector<16x1xf32>
    %cst_51 = arith.constant 9.99999968E-21 : f32
    %141 = vector.broadcast %cst_51 : f32 to vector<16x1xf32>
    %142 = arith.maximumf %140, %141 : vector<16x1xf32>
    %143 = tpu.reciprocal %142 {approx = true} : vector<16x1xf32> -> vector<16x1xf32>
    %144 = vector.broadcast %143 : vector<16x1xf32> to vector<16x16xf32>
    %145 = arith.mulf %138, %144 : vector<16x16xf32>
    %146 = vector.extract_strided_slice %94 {offsets = [0, 8], sizes = [16, 8], strides = [1, 1]} : vector<16x16xf32> to vector<16x8xf32>
    %cst_52 = arith.constant dense<0.000000e+00> : vector<16x8xf32>
    %147 = tpu.matmul %145, %146, %cst_52 {dimension_numbers = #tpu.dot_dimension_numbers<[1], [0], [0], [1], [0, 0, 1, 1], [], []>} : vector<16x16xf32>, vector<16x8xf32>, vector<16x8xf32> -> vector<16x8xf32>
    %c0_53 = arith.constant 0 : index
    %c8_54 = arith.constant 8 : index
    %148 = vector.load %arg17[%c0_53, %c8_54] : memref<16x16xf32, #tpu.memory_space<vmem>>, vector<16x8xf32>
    tpu.vector_store %arg17[%c0_53, %c8_54], %147 {strides = array<i32>} : memref<16x16xf32, #tpu.memory_space<vmem>>, vector<16x8xf32>,
    %c0_55 = arith.constant 0 : index
    %c0_56 = arith.constant 0 : index
    %149 = vector.load %arg17[%c0_55, %c0_56] : memref<16x16xf32, #tpu.memory_space<vmem>>, vector<16x16xf32>
    %150 = vector.extract_strided_slice %88 {offsets = [2, 0], sizes = [1, 16], strides = [1, 1]} : vector<8x16xf32> to vector<1x16xf32>
    %151 = vector.broadcast %150 : vector<1x16xf32> to vector<16x16xf32>
    %152 = arith.addf %149, %151 : vector<16x16xf32>
    %cst_57 = arith.constant dense<0.000000e+00> : vector<16x16xf32>
    %153 = tpu.matmul %1, %152, %cst_57 {dimension_numbers = #tpu.dot_dimension_numbers<[1], [0], [0], [1], [0, 0, 1, 1], [], []>} : vector<16x16xf32>, vector<16x16xf32>, vector<16x16xf32> -> vector<16x16xf32>
    %154 = vector.extract_strided_slice %88 {offsets = [5, 0], sizes = [1, 16], strides = [1, 1]} : vector<8x16xf32> to vector<1x16xf32>
    %155 = vector.broadcast %154 : vector<1x16xf32> to vector<16x16xf32>
    %156 = arith.mulf %155, %153 : vector<16x16xf32>
    %157 = arith.subf %152, %156 : vector<16x16xf32>
    %158 = arith.mulf %157, %157 : vector<16x16xf32>
    %cst_58 = arith.constant dense<0.000000e+00> : vector<16x16xf32>
    %159 = tpu.matmul %1, %158, %cst_58 {dimension_numbers = #tpu.dot_dimension_numbers<[1], [0], [0], [1], [0, 0, 1, 1], [], []>} : vector<16x16xf32>, vector<16x16xf32>, vector<16x16xf32> -> vector<16x16xf32>
    %160 = vector.extract_strided_slice %88 {offsets = [3, 0], sizes = [1, 16], strides = [1, 1]} : vector<8x16xf32> to vector<1x16xf32>
    %161 = vector.broadcast %160 : vector<1x16xf32> to vector<16x16xf32>
    %162 = arith.mulf %161, %157 : vector<16x16xf32>
    %cst_59 = arith.constant 9.99999974E-6 : f32
    %163 = vector.broadcast %cst_59 : f32 to vector<16x16xf32>
    %164 = arith.addf %159, %163 : vector<16x16xf32>
    %165 = math.rsqrt %164 : vector<16x16xf32>
    %166 = arith.mulf %162, %165 : vector<16x16xf32>
    %167 = vector.extract_strided_slice %88 {offsets = [4, 0], sizes = [1, 16], strides = [1, 1]} : vector<8x16xf32> to vector<1x16xf32>
    %168 = vector.broadcast %167 : vector<1x16xf32> to vector<16x16xf32>
    %169 = arith.addf %166, %168 : vector<16x16xf32>
    %cst_60 = arith.constant 0.000000e+00 : f32
    %170 = vector.broadcast %cst_60 : f32 to vector<16x16xf32>
    %171 = arith.maximumf %169, %170 : vector<16x16xf32>
    %c0_61 = arith.constant 0 : index
    %c0_62 = arith.constant 0 : index
    %172 = vector.load %arg12[%c0_61, %c0_62] : memref<8x16xf32, #tpu.memory_space<vmem>>, vector<8x16xf32>
    %c0_63 = arith.constant 0 : index
    %c0_64 = arith.constant 0 : index
    %173 = vector.load %arg11[%c0_63, %c0_64] : memref<16x32xf32, #tpu.memory_space<vmem>>, vector<16x32xf32>
    %cst_65 = arith.constant dense<0.000000e+00> : vector<16x32xf32>
    %174 = tpu.matmul %171, %173, %cst_65 {dimension_numbers = #tpu.dot_dimension_numbers<[1], [0], [0], [1], [0, 0, 1, 1], [], []>} : vector<16x16xf32>, vector<16x32xf32>, vector<16x32xf32> -> vector<16x32xf32>
    %175 = vector.extract_strided_slice %174 {offsets = [0, 0], sizes = [16, 16], strides = [1, 1]} : vector<16x32xf32> to vector<16x16xf32>
    %176 = vector.extract_strided_slice %172 {offsets = [0, 0], sizes = [1, 16], strides = [1, 1]} : vector<8x16xf32> to vector<1x16xf32>
    %177 = vector.broadcast %176 : vector<1x16xf32> to vector<16x16xf32>
    %178 = arith.addf %175, %177 : vector<16x16xf32>
    %179 = vector.extract_strided_slice %174 {offsets = [0, 16], sizes = [16, 16], strides = [1, 1]} : vector<16x32xf32> to vector<16x16xf32>
    %180 = vector.extract_strided_slice %172 {offsets = [1, 0], sizes = [1, 16], strides = [1, 1]} : vector<8x16xf32> to vector<1x16xf32>
    %181 = vector.broadcast %180 : vector<1x16xf32> to vector<16x16xf32>
    %182 = arith.addf %179, %181 : vector<16x16xf32>
    %183 = vector.shape_cast %182 : vector<16x16xf32> to vector<16x1x16xf32>
    %184 = vector.shape_cast %178 : vector<16x16xf32> to vector<1x16x16xf32>
    %185 = vector.broadcast %183 : vector<16x1x16xf32> to vector<16x16x16xf32>
    %186 = vector.broadcast %184 : vector<1x16x16xf32> to vector<16x16x16xf32>
    %187 = arith.addf %185, %186 : vector<16x16x16xf32>
    %cst_66 = arith.constant 0.000000e+00 : f32
    %188 = vector.broadcast %cst_66 : f32 to vector<16x16x16xf32>
    %189 = arith.cmpf ogt, %187, %188 : vector<16x16x16xf32>
    %cst_67 = arith.constant 2.000000e-01 : f32
    %190 = vector.broadcast %cst_67 : f32 to vector<16x16x16xf32>
    %191 = arith.mulf %190, %187 : vector<16x16x16xf32>
    %192 = arith.select %189, %187, %191 : vector<16x16x16xi1>, vector<16x16x16xf32>
    %193 = vector.shape_cast %192 : vector<16x16x16xf32> to vector<256x16xf32>
    %c0_68 = arith.constant 0 : index
    %c0_69 = arith.constant 0 : index
    %194 = vector.load %arg13[%c0_68, %c0_69] : memref<16x2xf32, #tpu.memory_space<vmem>>, vector<16x2xf32>
    %cst_70 = arith.constant dense<0.000000e+00> : vector<256x2xf32>
    %195 = tpu.matmul %193, %194, %cst_70 {dimension_numbers = #tpu.dot_dimension_numbers<[1], [0], [0], [1], [0, 0, 1, 1], [], []>} : vector<256x16xf32>, vector<16x2xf32>, vector<256x2xf32> -> vector<256x2xf32>
    %196 = vector.shape_cast %195 : vector<256x2xf32> to vector<16x16x2xf32>
    %197 = vector.extract_strided_slice %196 {offsets = [0, 0, 0], sizes = [16, 16, 1], strides = [1, 1, 1]} : vector<16x16x2xf32> to vector<16x16x1xf32>
    %198 = vector.shape_cast %197 : vector<16x16x1xf32> to vector<16x16xf32>
    %199 = arith.addf %198, %0 : vector<16x16xf32>
    %cst_71 = arith.constant dense<0xFF800000> : vector<16xf32>
    %200 = vector.multi_reduction <maximumf>, %199, %cst_71 [1] : vector<16x16xf32> to vector<16xf32>
    %201 = vector.shape_cast %200 : vector<16xf32> to vector<16x1xf32>
    %202 = vector.broadcast %201 : vector<16x1xf32> to vector<16x16xf32>
    %203 = arith.subf %199, %202 : vector<16x16xf32>
    %204 = math.exp %203 : vector<16x16xf32>
    %cst_72 = arith.constant dense<0.000000e+00> : vector<16xf32>
    %205 = vector.multi_reduction <add>, %204, %cst_72 [1] : vector<16x16xf32> to vector<16xf32>
    %206 = vector.shape_cast %205 : vector<16xf32> to vector<16x1xf32>
    %cst_73 = arith.constant 9.99999968E-21 : f32
    %207 = vector.broadcast %cst_73 : f32 to vector<16x1xf32>
    %208 = arith.maximumf %206, %207 : vector<16x1xf32>
    %209 = tpu.reciprocal %208 {approx = true} : vector<16x1xf32> -> vector<16x1xf32>
    %210 = vector.broadcast %209 : vector<16x1xf32> to vector<16x16xf32>
    %211 = arith.mulf %204, %210 : vector<16x16xf32>
    %212 = vector.extract_strided_slice %178 {offsets = [0, 0], sizes = [16, 8], strides = [1, 1]} : vector<16x16xf32> to vector<16x8xf32>
    %cst_74 = arith.constant dense<0.000000e+00> : vector<16x8xf32>
    %213 = tpu.matmul %211, %212, %cst_74 {dimension_numbers = #tpu.dot_dimension_numbers<[1], [0], [0], [1], [0, 0, 1, 1], [], []>} : vector<16x16xf32>, vector<16x8xf32>, vector<16x8xf32> -> vector<16x8xf32>
    %214 = vector.extract_strided_slice %196 {offsets = [0, 0, 1], sizes = [16, 16, 1], strides = [1, 1, 1]} : vector<16x16x2xf32> to vector<16x16x1xf32>
    %215 = vector.shape_cast %214 : vector<16x16x1xf32> to vector<16x16xf32>
    %216 = arith.addf %215, %0 : vector<16x16xf32>
    %cst_75 = arith.constant dense<0xFF800000> : vector<16xf32>
    %217 = vector.multi_reduction <maximumf>, %216, %cst_75 [1] : vector<16x16xf32> to vector<16xf32>
    %218 = vector.shape_cast %217 : vector<16xf32> to vector<16x1xf32>
    %219 = vector.broadcast %218 : vector<16x1xf32> to vector<16x16xf32>
    %220 = arith.subf %216, %219 : vector<16x16xf32>
    %221 = math.exp %220 : vector<16x16xf32>
    %cst_76 = arith.constant dense<0.000000e+00> : vector<16xf32>
    %222 = vector.multi_reduction <add>, %221, %cst_76 [1] : vector<16x16xf32> to vector<16xf32>
    %223 = vector.shape_cast %222 : vector<16xf32> to vector<16x1xf32>
    %cst_77 = arith.constant 9.99999968E-21 : f32
    %224 = vector.broadcast %cst_77 : f32 to vector<16x1xf32>
    %225 = arith.maximumf %223, %224 : vector<16x1xf32>
    %226 = tpu.reciprocal %225 {approx = true} : vector<16x1xf32> -> vector<16x1xf32>
    %227 = vector.broadcast %226 : vector<16x1xf32> to vector<16x16xf32>
    %228 = arith.mulf %221, %227 : vector<16x16xf32>
    %229 = vector.extract_strided_slice %178 {offsets = [0, 8], sizes = [16, 8], strides = [1, 1]} : vector<16x16xf32> to vector<16x8xf32>
    %cst_78 = arith.constant dense<0.000000e+00> : vector<16x8xf32>
    %230 = tpu.matmul %228, %229, %cst_78 {dimension_numbers = #tpu.dot_dimension_numbers<[1], [0], [0], [1], [0, 0, 1, 1], [], []>} : vector<16x16xf32>, vector<16x8xf32>, vector<16x8xf32> -> vector<16x8xf32>
    %231 = arith.addf %213, %230 : vector<16x8xf32>
    %cst_79 = arith.constant 5.000000e-01 : f32
    %232 = vector.broadcast %cst_79 : f32 to vector<16x8xf32>
    %233 = arith.mulf %231, %232 : vector<16x8xf32>
    %234 = vector.extract_strided_slice %172 {offsets = [2, 0], sizes = [1, 8], strides = [1, 1]} : vector<8x16xf32> to vector<1x8xf32>
    %235 = vector.broadcast %234 : vector<1x8xf32> to vector<16x8xf32>
    %236 = arith.addf %233, %235 : vector<16x8xf32>
    %cst_80 = arith.constant dense<0.000000e+00> : vector<16x8xf32>
    %237 = tpu.matmul %1, %236, %cst_80 {dimension_numbers = #tpu.dot_dimension_numbers<[1], [0], [0], [1], [0, 0, 1, 1], [], []>} : vector<16x16xf32>, vector<16x8xf32>, vector<16x8xf32> -> vector<16x8xf32>
    %238 = vector.extract_strided_slice %172 {offsets = [5, 0], sizes = [1, 8], strides = [1, 1]} : vector<8x16xf32> to vector<1x8xf32>
    %239 = vector.broadcast %238 : vector<1x8xf32> to vector<16x8xf32>
    %240 = arith.mulf %239, %237 : vector<16x8xf32>
    %241 = arith.subf %236, %240 : vector<16x8xf32>
    %242 = arith.mulf %241, %241 : vector<16x8xf32>
    %cst_81 = arith.constant dense<0.000000e+00> : vector<16x8xf32>
    %243 = tpu.matmul %1, %242, %cst_81 {dimension_numbers = #tpu.dot_dimension_numbers<[1], [0], [0], [1], [0, 0, 1, 1], [], []>} : vector<16x16xf32>, vector<16x8xf32>, vector<16x8xf32> -> vector<16x8xf32>
    %244 = vector.extract_strided_slice %172 {offsets = [3, 0], sizes = [1, 8], strides = [1, 1]} : vector<8x16xf32> to vector<1x8xf32>
    %245 = vector.broadcast %244 : vector<1x8xf32> to vector<16x8xf32>
    %246 = arith.mulf %245, %241 : vector<16x8xf32>
    %cst_82 = arith.constant 9.99999974E-6 : f32
    %247 = vector.broadcast %cst_82 : f32 to vector<16x8xf32>
    %248 = arith.addf %243, %247 : vector<16x8xf32>
    %249 = math.rsqrt %248 : vector<16x8xf32>
    %250 = arith.mulf %246, %249 : vector<16x8xf32>
    %251 = vector.extract_strided_slice %172 {offsets = [4, 0], sizes = [1, 8], strides = [1, 1]} : vector<8x16xf32> to vector<1x8xf32>
    %252 = vector.broadcast %251 : vector<1x8xf32> to vector<16x8xf32>
    %253 = arith.addf %250, %252 : vector<16x8xf32>
    %cst_83 = arith.constant 0.000000e+00 : f32
    %254 = vector.broadcast %cst_83 : f32 to vector<16x8xf32>
    %255 = arith.maximumf %253, %254 : vector<16x8xf32>
    %cst_84 = arith.constant dense<0.000000e+00> : vector<2x8xf32>
    %256 = tpu.matmul %2, %255, %cst_84 {dimension_numbers = #tpu.dot_dimension_numbers<[1], [0], [0], [1], [0, 0, 1, 1], [], []>} : vector<2x16xf32>, vector<16x8xf32>, vector<2x8xf32> -> vector<2x8xf32>
    %c0_85 = arith.constant 0 : index
    %c0_86 = arith.constant 0 : index
    %257 = vector.load %arg14[%c0_85, %c0_86] : memref<8x128xf32, #tpu.memory_space<vmem>>, vector<8x128xf32>
    %cst_87 = arith.constant dense<0.000000e+00> : vector<2x128xf32>
    %258 = tpu.matmul %256, %257, %cst_87 {dimension_numbers = #tpu.dot_dimension_numbers<[1], [0], [0], [1], [0, 0, 1, 1], [], []>} : vector<2x8xf32>, vector<8x128xf32>, vector<2x128xf32> -> vector<2x128xf32>
    %c0_88 = arith.constant 0 : index
    %c0_89 = arith.constant 0 : index
    %259 = vector.load %arg15[%c0_88, %c0_89] : memref<1x128xf32, #tpu.memory_space<vmem>>, vector<1x128xf32>
    %260 = vector.broadcast %259 : vector<1x128xf32> to vector<2x128xf32>
    %261 = arith.addf %258, %260 : vector<2x128xf32>
    %c0_90 = arith.constant 0 : index
    %c0_91 = arith.constant 0 : index
    %262 = vector.load %arg16[%c0_90, %c0_91] : memref<2x128xf32, #tpu.memory_space<vmem>>, vector<2x128xf32>
    tpu.vector_store %arg16[%c0_90, %c0_91], %261 {strides = array<i32>} : memref<2x128xf32, #tpu.memory_space<vmem>>, vector<2x128xf32>,
    return
  }
  func.func @transform_0(%arg0: i32) -> (i32, i32) {
    %c0_i32 = arith.constant 0 : i32
    %c0_i32_0 = arith.constant 0 : i32
    %c0_i32_1 = arith.constant 0 : i32
    return %c0_i32, %c0_i32_0 : i32, i32
  }
  func.func @transform_1(%arg0: i32) -> (i32, i32) {
    %c0_i32 = arith.constant 0 : i32
    %c0_i32_0 = arith.constant 0 : i32
    %c0_i32_1 = arith.constant 0 : i32
    return %c0_i32, %c0_i32_0 : i32, i32
  }
  func.func @transform_2(%arg0: i32) -> (i32, i32) {
    %c0_i32 = arith.constant 0 : i32
    %c0_i32_0 = arith.constant 0 : i32
    %c0_i32_1 = arith.constant 0 : i32
    return %c0_i32, %c0_i32_0 : i32, i32
  }
  func.func @transform_3(%arg0: i32) -> (i32, i32) {
    %c0_i32 = arith.constant 0 : i32
    %c0_i32_0 = arith.constant 0 : i32
    %c0_i32_1 = arith.constant 0 : i32
    return %c0_i32, %c0_i32_0 : i32, i32
  }
  func.func @transform_4(%arg0: i32) -> (i32, i32) {
    %c0_i32 = arith.constant 0 : i32
    %c0_i32_0 = arith.constant 0 : i32
    %c0_i32_1 = arith.constant 0 : i32
    return %c0_i32, %c0_i32_0 : i32, i32
  }
  func.func @transform_5(%arg0: i32) -> (i32, i32) {
    %c0_i32 = arith.constant 0 : i32
    %c0_i32_0 = arith.constant 0 : i32
    %c0_i32_1 = arith.constant 0 : i32
    return %c0_i32, %c0_i32_0 : i32, i32
  }
  func.func @transform_6(%arg0: i32) -> (i32, i32) {
    %c0_i32 = arith.constant 0 : i32
    %c0_i32_0 = arith.constant 0 : i32
    %c0_i32_1 = arith.constant 0 : i32
    return %c0_i32, %c0_i32_0 : i32, i32
  }
  func.func @transform_7(%arg0: i32) -> (i32, i32) {
    %c0_i32 = arith.constant 0 : i32
    %c0_i32_0 = arith.constant 0 : i32
    %c0_i32_1 = arith.constant 0 : i32
    return %c0_i32, %c0_i32_0 : i32, i32
  }
  func.func @transform_8(%arg0: i32) -> (i32, i32) {
    %c0_i32 = arith.constant 0 : i32
    %c0_i32_0 = arith.constant 0 : i32
    %c0_i32_1 = arith.constant 0 : i32
    return %c0_i32, %c0_i32_0 : i32, i32
  }
  func.func @transform_9(%arg0: i32) -> (i32, i32) {
    %c0_i32 = arith.constant 0 : i32
    %c0_i32_0 = arith.constant 0 : i32
    %c0_i32_1 = arith.constant 0 : i32
    return %c0_i32, %c0_i32_0 : i32, i32
  }
  func.func @transform_10(%arg0: i32) -> (i32, i32) {
    %c0_i32 = arith.constant 0 : i32
    %c0_i32_0 = arith.constant 0 : i32
    %c0_i32_1 = arith.constant 0 : i32
    return %c0_i32, %c0_i32_0 : i32, i32
  }
  func.func @transform_11(%arg0: i32) -> (i32, i32) {
    %c0_i32 = arith.constant 0 : i32
    %c0_i32_0 = arith.constant 0 : i32
    %c0_i32_1 = arith.constant 0 : i32
    return %c0_i32, %c0_i32_0 : i32, i32
  }
  func.func @transform_12(%arg0: i32) -> (i32, i32) {
    %c0_i32 = arith.constant 0 : i32
    %c0_i32_0 = arith.constant 0 : i32
    %c0_i32_1 = arith.constant 0 : i32
    return %c0_i32, %c0_i32_0 : i32, i32
  }
  func.func @transform_13(%arg0: i32) -> (i32, i32) {
    %c0_i32 = arith.constant 0 : i32
    %c0_i32_0 = arith.constant 0 : i32
    %c0_i32_1 = arith.constant 0 : i32
    return %c0_i32, %c0_i32_0 : i32, i32
  }
  func.func @transform_14(%arg0: i32) -> (i32, i32) {
    %c0_i32 = arith.constant 0 : i32
    %c0_i32_0 = arith.constant 0 : i32
    %c0_i32_1 = arith.constant 0 : i32
    return %c0_i32, %c0_i32_0 : i32, i32
  }
  func.func @transform_15(%arg0: i32) -> (i32, i32) {
    %c0_i32 = arith.constant 0 : i32
    %c0_i32_0 = arith.constant 0 : i32
    %c0_i32_1 = arith.constant 0 : i32
    return %c0_i32, %c0_i32_0 : i32, i32
  }
}

</mosaic_0001>

<llo_original>
// kernel: tpu_custom_call.1
$region0: #{tpu_custom_call.1}
  #allocation0 [shape = 'u32[]', space=smem, size = 0x4, offset = 0x4, fixed_abs, tag = 'smem constant byte address 0x4 - core index']
  #allocation1 [shape = 'u32[72,128]{1,0:T(1,128)}', space=vmem, size = 0x9000, scoped, tag = 'internal scratch']
  #allocation2 [shape = 'f32[16,16]{1,0:T(8,128)}', space=vmem, size = 0x2000, scoped, tag = 'scratch operand']
  %s0 = inlined_call_operand.vmem [shape: f32[16,8], index: 0, kind: input, shape index: {}]
  %s1 = inlined_call_operand.vmem [shape: f32[16,16], index: 1, kind: input, shape index: {}]
  %s2 = inlined_call_operand.vmem [shape: f32[16,16], index: 2, kind: input, shape index: {}]
  %s3 = inlined_call_operand.hbm [shape: f32[2,16], index: 3, kind: input, shape index: {}]
  %s4 = inlined_call_operand.vmem [shape: f32[8,32], index: 4, kind: input, shape index: {}]
  %s5 = inlined_call_operand.hbm [shape: f32[8,16], index: 5, kind: input, shape index: {}]
  %s6 = inlined_call_operand.vmem [shape: f32[16,2], index: 6, kind: input, shape index: {}]
  %s7 = inlined_call_operand.vmem [shape: f32[16,32], index: 7, kind: input, shape index: {}]
  %s8 = inlined_call_operand.hbm [shape: f32[8,16], index: 8, kind: input, shape index: {}]
  %s9 = inlined_call_operand.vmem [shape: f32[16,2], index: 9, kind: input, shape index: {}]
  %s10 = inlined_call_operand.vmem [shape: f32[16,32], index: 10, kind: input, shape index: {}]
  %s11 = inlined_call_operand.vmem [shape: f32[8,16], index: 11, kind: input, shape index: {}]
  %s12 = inlined_call_operand.vmem [shape: f32[16,2], index: 12, kind: input, shape index: {}]
  %s13 = inlined_call_operand.hbm [shape: f32[8,128], index: 13, kind: input, shape index: {}]
  %s14 = inlined_call_operand.vmem [shape: f32[1,128], index: 14, kind: input, shape index: {}]
  %s15 = inlined_call_operand.hbm [shape: f32[2,128], index: 15, kind: output, shape index: {}]
  %s16 = sld [smem:[#allocation0]]
  $region86: #{tpu_custom_call.1} parent=0
    _
  %s18 = ssub.s32 1, %s16
  %s19 = scalar_select 0, %s18, %s16
  $region1: #{tpu_custom_call.1} parent=0
    #allocation3 [shape = 'u8[1024]{0}', space=vmem, size = 0x400, scoped, tag = 'input window, operand 3, single buffered']
    #allocation4 [shape = 's32[1]{0}', space=sflag, size = 0x4, scoped, tag = 'scoped memory for tpu_custom_call.1']
    #allocation5 [shape = 's32[1]{0}', space=sflag, size = 0x4, scoped, tag = 'scoped memory for tpu_custom_call.1']
    #allocation6 [shape = 'u8[4096]{0}', space=vmem, size = 0x1000, scoped, tag = 'input window, operand 5, single buffered']
    #allocation7 [shape = 's32[1]{0}', space=sflag, size = 0x4, scoped, tag = 'scoped memory for tpu_custom_call.1']
    #allocation8 [shape = 'u8[4096]{0}', space=vmem, size = 0x1000, scoped, tag = 'input window, operand 8, single buffered']
    #allocation9 [shape = 'u8[4096]{0}', space=vmem, size = 0x1000, scoped, tag = 'input window, operand 13, single buffered']
    #allocation10 [shape = 's32[1]{0}', space=sflag, size = 0x4, scoped, tag = 'scoped memory for tpu_custom_call.1']
    #allocation11 [shape = 'u8[1024]{0}', space=vmem, size = 0x400, scoped, tag = 'output window, operand 0, single buffered']
    %20 = vsyncpa [#allocation4], 0
    %21 = vsyncpa [#allocation7], 0
    %22 = vsyncpa [#allocation10], 0
    %23 = vsyncpa [#allocation5], 0
    // Predicated region
    $region2: #{tpu_custom_call.1} parent=1 // pred_check
      _
    $region3: #{tpu_custom_call.1} parent=1 // pred_check_branch
      %25 = sbr.rel (0) target = $region5
    $region4: #{tpu_custom_call.1} parent=1 // pred_region
      _
    $region5: #{tpu_custom_call.1} parent=1 // pred_fallthru
      _
    // Predicated region
    $region6: #{tpu_custom_call.1} parent=1 // pred_check
      _
    $region7: #{tpu_custom_call.1} parent=1 // pred_check_branch
      %27 = sbr.rel (0) target = $region9
    $region8: #{tpu_custom_call.1} parent=1 // pred_region
      _
    $region9: #{tpu_custom_call.1} parent=1 // pred_fallthru
      _
    // Predicated region
    $region10: #{tpu_custom_call.1} parent=1 // pred_check
      _
    $region11: #{tpu_custom_call.1} parent=1 // pred_check_branch
      %29 = sbr.rel (0) target = $region13
    $region12: #{tpu_custom_call.1} parent=1 // pred_region
      _
    $region13: #{tpu_custom_call.1} parent=1 // pred_fallthru
      _
    // Predicated region
    $region14: #{tpu_custom_call.1} parent=1 // pred_check
      _
    $region15: #{tpu_custom_call.1} parent=1 // pred_check_branch
      %31 = sbr.rel (0) target = $region17
    $region16: #{tpu_custom_call.1} parent=1 // pred_region
      %33 = vsyncadd [#allocation4], 0
      %s35 = sshll.u32 %s3, 4
      %s36 = int_to_ptr.hbm [resolvable:$true] %s35
      %s37 = sshll.u32 [#allocation3], 4
      %s38 = int_to_ptr.vmem [resolvable:$true] %s37
      %40 = dma.hbm_to_vmem [thread:$0]  %s36, 32, %s38, [#allocation4]
    $region17: #{tpu_custom_call.1} parent=1 // pred_fallthru
      _
    // Predicated region
    $region18: #{tpu_custom_call.1} parent=1 // pred_check
      _
    $region19: #{tpu_custom_call.1} parent=1 // pred_check_branch
      %42 = sbr.rel (0) target = $region21
    $region20: #{tpu_custom_call.1} parent=1 // pred_region
      _
    $region21: #{tpu_custom_call.1} parent=1 // pred_fallthru
      _
    // Predicated region
    $region22: #{tpu_custom_call.1} parent=1 // pred_check
      _
    $region23: #{tpu_custom_call.1} parent=1 // pred_check_branch
      %44 = sbr.rel (0) target = $region25
    $region24: #{tpu_custom_call.1} parent=1 // pred_region
      %46 = vsyncadd [#allocation7], 0
      %s48 = sshll.u32 %s5, 4
      %s49 = int_to_ptr.hbm [resolvable:$true] %s48
      %s50 = sshll.u32 [#allocation6], 4
      %s51 = int_to_ptr.vmem [resolvable:$true] %s50
      %53 = dma.hbm_to_vmem [thread:$0]  %s49, 128, %s51, [#allocation7]
    $region25: #{tpu_custom_call.1} parent=1 // pred_fallthru
      _
    // Predicated region
    $region26: #{tpu_custom_call.1} parent=1 // pred_check
      _
    $region27: #{tpu_custom_call.1} parent=1 // pred_check_branch
      %55 = sbr.rel (0) target = $region29
    $region28: #{tpu_custom_call.1} parent=1 // pred_region
      _
    $region29: #{tpu_custom_call.1} parent=1 // pred_fallthru
      _
    // Predicated region
    $region30: #{tpu_custom_call.1} parent=1 // pred_check
      _
    $region31: #{tpu_custom_call.1} parent=1 // pred_check_branch
      %57 = sbr.rel (0) target = $region33
    $region32: #{tpu_custom_call.1} parent=1 // pred_region
      _
    $region33: #{tpu_custom_call.1} parent=1 // pred_fallthru
      _
    // Predicated region
    $region34: #{tpu_custom_call.1} parent=1 // pred_check
      _
    $region35: #{tpu_custom_call.1} parent=1 // pred_check_branch
      %59 = sbr.rel (0) target = $region37
    $region36: #{tpu_custom_call.1} parent=1 // pred_region
      %61 = vsyncadd [#allocation7], 0
      %s63 = sshll.u32 %s8, 4
      %s64 = int_to_ptr.hbm [resolvable:$true] %s63
      %s65 = sshll.u32 [#allocation8], 4
      %s66 = int_to_ptr.vmem [resolvable:$true] %s65
      %68 = dma.hbm_to_vmem [thread:$0]  %s64, 128, %s66, [#allocation7]
    $region37: #{tpu_custom_call.1} parent=1 // pred_fallthru
      _
    // Predicated region
    $region38: #{tpu_custom_call.1} parent=1 // pred_check
      _
    $region39: #{tpu_custom_call.1} parent=1 // pred_check_branch
      %70 = sbr.rel (0) target = $region41
    $region40: #{tpu_custom_call.1} parent=1 // pred_region
      _
    $region41: #{tpu_custom_call.1} parent=1 // pred_fallthru
      _
    // Predicated region
    $region42: #{tpu_custom_call.1} parent=1 // pred_check
      _
    $region43: #{tpu_custom_call.1} parent=1 // pred_check_branch
      %72 = sbr.rel (0) target = $region45
    $region44: #{tpu_custom_call.1} parent=1 // pred_region
      _
    $region45: #{tpu_custom_call.1} parent=1 // pred_fallthru
      _
    // Predicated region
    $region46: #{tpu_custom_call.1} parent=1 // pred_check
      _
    $region47: #{tpu_custom_call.1} parent=1 // pred_check_branch
      %74 = sbr.rel (0) target = $region49
    $region48: #{tpu_custom_call.1} parent=1 // pred_region
      _
    $region49: #{tpu_custom_call.1} parent=1 // pred_fallthru
      _
    // Predicated region
    $region50: #{tpu_custom_call.1} parent=1 // pred_check
      _
    $region51: #{tpu_custom_call.1} parent=1 // pred_check_branch
      %76 = sbr.rel (0) target = $region53
    $region52: #{tpu_custom_call.1} parent=1 // pred_region
      _
    $region53: #{tpu_custom_call.1} parent=1 // pred_fallthru
      _
    // Predicated region
    $region54: #{tpu_custom_call.1} parent=1 // pred_check
      _
    $region55: #{tpu_custom_call.1} parent=1 // pred_check_branch
      %78 = sbr.rel (0) target = $region57
    $region56: #{tpu_custom_call.1} parent=1 // pred_region
      %80 = vsyncadd [#allocation10], 0
      %s82 = sshll.u32 %s13, 4
      %s83 = int_to_ptr.hbm [resolvable:$true] %s82
      %s84 = sshll.u32 [#allocation9], 4
      %s85 = int_to_ptr.vmem [resolvable:$true] %s84
      %87 = dma.hbm_to_vmem [thread:$0]  %s83, 128, %s85, [#allocation10]
    $region57: #{tpu_custom_call.1} parent=1 // pred_fallthru
      _
    // Predicated region
    $region58: #{tpu_custom_call.1} parent=1 // pred_check
      _
    $region59: #{tpu_custom_call.1} parent=1 // pred_check_branch
      %89 = sbr.rel (0) target = $region61
    $region60: #{tpu_custom_call.1} parent=1 // pred_region
      _
    $region61: #{tpu_custom_call.1} parent=1 // pred_fallthru
      _
    // Predicated region
    $region62: #{tpu_custom_call.1} parent=1 // pred_check
      _
    $region63: #{tpu_custom_call.1} parent=1 // pred_check_branch
      %91 = sbr.rel (0) target = $region65
    $region64: #{tpu_custom_call.1} parent=1 // pred_region
      %93 = dma.done [#allocation4], 32
    $region65: #{tpu_custom_call.1} parent=1 // pred_fallthru
      _
    // Predicated region
    $region66: #{tpu_custom_call.1} parent=1 // pred_check
      _
    $region67: #{tpu_custom_call.1} parent=1 // pred_check_branch
      %95 = sbr.rel (0) target = $region69
    $region68: #{tpu_custom_call.1} parent=1 // pred_region
      %97 = dma.done [#allocation7], 128
    $region69: #{tpu_custom_call.1} parent=1 // pred_fallthru
      _
    // Predicated region
    $region70: #{tpu_custom_call.1} parent=1 // pred_check
      _
    $region71: #{tpu_custom_call.1} parent=1 // pred_check_branch
      %99 = sbr.rel (0) target = $region73
    $region72: #{tpu_custom_call.1} parent=1 // pred_region
      %101 = dma.done [#allocation7], 128
    $region73: #{tpu_custom_call.1} parent=1 // pred_fallthru
      _
    // Predicated region
    $region74: #{tpu_custom_call.1} parent=1 // pred_check
      _
    $region75: #{tpu_custom_call.1} parent=1 // pred_check_branch
      %103 = sbr.rel (0) target = $region77
    $region76: #{tpu_custom_call.1} parent=1 // pred_region
      %105 = dma.done [#allocation10], 128
    $region77: #{tpu_custom_call.1} parent=1 // pred_fallthru
      _
    %v106 = vld [vmem:[%s1] sm:$0xff]
    %v107 = vld [vmem:[%s1 + $0x8] sm:$0xff]
    %v108 = vld [vmem:[%s2] sm:$0xff]
    %v109 = vld [vmem:[%s2 + $0x8] sm:$0xff]
    %v110 = vld [vmem:[#allocation3] sm:$0x3]
    %v111 = vld [vmem:[%s0] sm:$0xff]
    %v112 = vld [vmem:[%s0 + $0x8] sm:$0xff]
    %v113 = vld [vmem:[#allocation6] sm:$0xff]
    %v114 = vld [vmem:[%s4] sm:$0xff]
    %vm115 = vcmask 64512
    %v117 = vsel %vm115, %v111, 0
    %v120 = vsel %vm115, %v112, 0
    %122 = vmatpush.msra.mxu0 0.0
    %123 = vmatpush.msra.mxu0 0.0
    %124 = vmatpush.msra.mxu0 0.0
    %125 = vmatpush.msra.mxu0 0.0
    %126 = vmatpush.msra.mxu0 0.0
    %127 = vmatpush.msra.mxu0 0.0
    %128 = vmatpush.msra.mxu0 0.0
    %129 = vmatpush.msra.mxu0 0.0
    %130 = vmatpush.msra.mxu0 0.0
    %131 = vmatpush.msra.mxu0 0.0
    %132 = vmatpush.msra.mxu0 0.0
    %133 = vmatpush.msra.mxu0 0.0
    %134 = vmatpush.msra.mxu0 0.0
    %135 = vmatpush.msra.mxu0 0.0
    %136 = vmatpush.msra.mxu0 0.0
    %137 = vmatpush.msra.mxu0 %v114
    %138 = vmatmul.f32.gmra.mxu0 %v117
    %v139 = vpop.f32.mrf.mxu0
    %v140 = vadd.f32 0.0, %v139
    %141 = vmatmul.f32.gmra.mxu0 %v120
    %v142 = vpop.f32.mrf.mxu0
    %v143 = vadd.f32 0.0, %v142
    %144 = vdwg.mxu0
    %v145 = vperm.slane %v113, 0
    %v146 = vadd.f32 %v140, %v145
    %v147 = vadd.f32 %v143, %v145
    %v148 = vperm.slane %v113, 1
    %150 = vrot.lane.b32.xlu0 %v148, 16
    %v151 = vpop.permute.xlu0 %150
    %v153 = vadd.f32 %v140, %v151
    %v154 = vadd.f32 %v143, %v151
    %v157 = vrot.slane %v153, 1
    %v158 = vrot.slane %v153, 2
    %v159 = vrot.slane %v153, 3
    %v160 = vrot.slane %v153, 4
    %v161 = vrot.slane %v153, 5
    %v162 = vrot.slane %v153, 6
    %v163 = vrot.slane %v153, 7
    %v164 = vrot.slane %v154, 1
    %v165 = vrot.slane %v154, 2
    %v166 = vrot.slane %v154, 3
    %v167 = vrot.slane %v154, 4
    %v168 = vrot.slane %v154, 5
    %v169 = vrot.slane %v154, 6
    %v170 = vrot.slane %v154, 7
    %v171 = vperm.slane %v153, 0
    %v172 = vperm.slane %v157, 0
    %v173 = vperm.slane %v158, 0
    %v174 = vperm.slane %v159, 0
    %v175 = vperm.slane %v160, 0
    %v176 = vperm.slane %v161, 0
    %v177 = vperm.slane %v162, 0
    %v178 = vperm.slane %v163, 0
    %v179 = vperm.slane %v154, 0
    %v180 = vperm.slane %v164, 0
    %v181 = vperm.slane %v165, 0
    %v182 = vperm.slane %v166, 0
    %v183 = vperm.slane %v167, 0
    %v184 = vperm.slane %v168, 0
    %v185 = vperm.slane %v169, 0
    %v186 = vperm.slane %v170, 0
    %205 = vrot.lane.b32.xlu0 %v146, 16
    %v206 = vpop.permute.xlu0 %205
    %207 = vrot.lane.b32.xlu0 %v147, 16
    %v208 = vpop.permute.xlu0 %207
    %v211 = vadd.f32 %v171, %v206
    %v212 = vadd.f32 %v171, %v208
    %v213 = vadd.f32 %v172, %v206
    %v214 = vadd.f32 %v172, %v208
    %v215 = vadd.f32 %v173, %v206
    %v216 = vadd.f32 %v173, %v208
    %v217 = vadd.f32 %v174, %v206
    %v218 = vadd.f32 %v174, %v208
    %v219 = vadd.f32 %v175, %v206
    %v220 = vadd.f32 %v175, %v208
    %v221 = vadd.f32 %v176, %v206
    %v222 = vadd.f32 %v176, %v208
    %v223 = vadd.f32 %v177, %v206
    %v224 = vadd.f32 %v177, %v208
    %v225 = vadd.f32 %v178, %v206
    %v226 = vadd.f32 %v178, %v208
    %v227 = vadd.f32 %v179, %v206
    %v228 = vadd.f32 %v179, %v208
    %v229 = vadd.f32 %v180, %v206
    %v230 = vadd.f32 %v180, %v208
    %v231 = vadd.f32 %v181, %v206
    %v232 = vadd.f32 %v181, %v208
    %v233 = vadd.f32 %v182, %v206
    %v234 = vadd.f32 %v182, %v208
    %v235 = vadd.f32 %v183, %v206
    %v236 = vadd.f32 %v183, %v208
    %v237 = vadd.f32 %v184, %v206
    %v238 = vadd.f32 %v184, %v208
    %v239 = vadd.f32 %v185, %v206
    %v240 = vadd.f32 %v185, %v208
    %v241 = vadd.f32 %v186, %v206
    %v242 = vadd.f32 %v186, %v208
    %vm243 = vcmp.gt.f32.partialorder %v211, 0.0
    %vm244 = vcmp.gt.f32.partialorder %v212, 0.0
    %vm245 = vcmp.gt.f32.partialorder %v213, 0.0
    %vm246 = vcmp.gt.f32.partialorder %v214, 0.0
    %vm247 = vcmp.gt.f32.partialorder %v215, 0.0
    %vm248 = vcmp.gt.f32.partialorder %v216, 0.0
    %vm249 = vcmp.gt.f32.partialorder %v217, 0.0
    %vm250 = vcmp.gt.f32.partialorder %v218, 0.0
    %vm251 = vcmp.gt.f32.partialorder %v219, 0.0
    %vm252 = vcmp.gt.f32.partialorder %v220, 0.0
    %vm253 = vcmp.gt.f32.partialorder %v221, 0.0
    %vm254 = vcmp.gt.f32.partialorder %v222, 0.0
    %vm255 = vcmp.gt.f32.partialorder %v223, 0.0
    %vm256 = vcmp.gt.f32.partialorder %v224, 0.0
    %vm257 = vcmp.gt.f32.partialorder %v225, 0.0
    %vm258 = vcmp.gt.f32.partialorder %v226, 0.0
    %vm259 = vcmp.gt.f32.partialorder %v227, 0.0
    %vm260 = vcmp.gt.f32.partialorder %v228, 0.0
    %vm261 = vcmp.gt.f32.partialorder %v229, 0.0
    %vm262 = vcmp.gt.f32.partialorder %v230, 0.0
    %vm263 = vcmp.gt.f32.partialorder %v231, 0.0
    %vm264 = vcmp.gt.f32.partialorder %v232, 0.0
    %vm265 = vcmp.gt.f32.partialorder %v233, 0.0
    %vm266 = vcmp.gt.f32.partialorder %v234, 0.0
    %vm267 = vcmp.gt.f32.partialorder %v235, 0.0
    %vm268 = vcmp.gt.f32.partialorder %v236, 0.0
    %vm269 = vcmp.gt.f32.partialorder %v237, 0.0
    %vm270 = vcmp.gt.f32.partialorder %v238, 0.0
    %vm271 = vcmp.gt.f32.partialorder %v239, 0.0
    %vm272 = vcmp.gt.f32.partialorder %v240, 0.0
    %vm273 = vcmp.gt.f32.partialorder %v241, 0.0
    %vm274 = vcmp.gt.f32.partialorder %v242, 0.0
    %v275 = vmul.f32 %v211, 0.2
    %v276 = vmul.f32 %v212, 0.2
    %v277 = vmul.f32 %v213, 0.2
    %v278 = vmul.f32 %v214, 0.2
    %v279 = vmul.f32 %v215, 0.2
    %v280 = vmul.f32 %v216, 0.2
    %v281 = vmul.f32 %v217, 0.2
    %v282 = vmul.f32 %v218, 0.2
    %v283 = vmul.f32 %v219, 0.2
    %v284 = vmul.f32 %v220, 0.2
    %v285 = vmul.f32 %v221, 0.2
    %v286 = vmul.f32 %v222, 0.2
    %v287 = vmul.f32 %v223, 0.2
    %v288 = vmul.f32 %v224, 0.2
    %v289 = vmul.f32 %v225, 0.2
    %v290 = vmul.f32 %v226, 0.2
    %v291 = vmul.f32 %v227, 0.2
    %v292 = vmul.f32 %v228, 0.2
    %v293 = vmul.f32 %v229, 0.2
    %v294 = vmul.f32 %v230, 0.2
    %v295 = vmul.f32 %v231, 0.2
    %v296 = vmul.f32 %v232, 0.2
    %v297 = vmul.f32 %v233, 0.2
    %v298 = vmul.f32 %v234, 0.2
    %v299 = vmul.f32 %v235, 0.2
    %v300 = vmul.f32 %v236, 0.2
    %v301 = vmul.f32 %v237, 0.2
    %v302 = vmul.f32 %v238, 0.2
    %v303 = vmul.f32 %v239, 0.2
    %v304 = vmul.f32 %v240, 0.2
    %v305 = vmul.f32 %v241, 0.2
    %v306 = vmul.f32 %v242, 0.2
    %v307 = vsel %vm243, %v211, %v275
    %v308 = vsel %vm244, %v212, %v276
    %v309 = vsel %vm245, %v213, %v277
    %v310 = vsel %vm246, %v214, %v278
    %v311 = vsel %vm247, %v215, %v279
    %v312 = vsel %vm248, %v216, %v280
    %v313 = vsel %vm249, %v217, %v281
    %v314 = vsel %vm250, %v218, %v282
    %v315 = vsel %vm251, %v219, %v283
    %v316 = vsel %vm252, %v220, %v284
    %v317 = vsel %vm253, %v221, %v285
    %v318 = vsel %vm254, %v222, %v286
    %v319 = vsel %vm255, %v223, %v287
    %v320 = vsel %vm256, %v224, %v288
    %v321 = vsel %vm257, %v225, %v289
    %v322 = vsel %vm258, %v226, %v290
    %v323 = vsel %vm259, %v227, %v291
    %v324 = vsel %vm260, %v228, %v292
    %v325 = vsel %vm261, %v229, %v293
    %v326 = vsel %vm262, %v230, %v294
    %v327 = vsel %vm263, %v231, %v295
    %v328 = vsel %vm264, %v232, %v296
    %v329 = vsel %vm265, %v233, %v297
    %v330 = vsel %vm266, %v234, %v298
    %v331 = vsel %vm267, %v235, %v299
    %v332 = vsel %vm268, %v236, %v300
    %v333 = vsel %vm269, %v237, %v301
    %v334 = vsel %vm270, %v238, %v302
    %v335 = vsel %vm271, %v239, %v303
    %v336 = vsel %vm272, %v240, %v304
    %v337 = vsel %vm273, %v241, %v305
    %v338 = vsel %vm274, %v242, %v306
    %v339 = vld [vmem:[%s6] sm:$0xff]
    %v340 = vld [vmem:[%s6 + $0x8] sm:$0xff]
    %373 = vrot.lane.b32.xlu0 %v307, 112
    %v374 = vpop.permute.xlu0 %373
    %375 = vrot.lane.b32.xlu0 %v308, 112
    %v376 = vpop.permute.xlu0 %375
    %377 = vrot.lane.b32.xlu0 %v309, 112
    %v378 = vpop.permute.xlu0 %377
    %379 = vrot.lane.b32.xlu0 %v310, 112
    %v380 = vpop.permute.xlu0 %379
    %381 = vrot.lane.b32.xlu0 %v311, 112
    %v382 = vpop.permute.xlu0 %381
    %383 = vrot.lane.b32.xlu0 %v312, 112
    %v384 = vpop.permute.xlu0 %383
    %385 = vrot.lane.b32.xlu0 %v313, 112
    %v386 = vpop.permute.xlu0 %385
    %387 = vrot.lane.b32.xlu0 %v314, 112
    %v388 = vpop.permute.xlu0 %387
    %389 = vrot.lane.b32.xlu0 %v315, 112
    %v390 = vpop.permute.xlu0 %389
    %391 = vrot.lane.b32.xlu0 %v316, 112
    %v392 = vpop.permute.xlu0 %391
    %393 = vrot.lane.b32.xlu0 %v317, 112
    %v394 = vpop.permute.xlu0 %393
    %395 = vrot.lane.b32.xlu0 %v318, 112
    %v396 = vpop.permute.xlu0 %395
    %397 = vrot.lane.b32.xlu0 %v319, 112
    %v398 = vpop.permute.xlu0 %397
    %399 = vrot.lane.b32.xlu0 %v320, 112
    %v400 = vpop.permute.xlu0 %399
    %401 = vrot.lane.b32.xlu0 %v321, 112
    %v402 = vpop.permute.xlu0 %401
    %403 = vrot.lane.b32.xlu0 %v322, 112
    %v404 = vpop.permute.xlu0 %403
    %405 = vrot.lane.b32.xlu0 %v323, 112
    %v406 = vpop.permute.xlu0 %405
    %407 = vrot.lane.b32.xlu0 %v324, 112
    %v408 = vpop.permute.xlu0 %407
    %409 = vrot.lane.b32.xlu0 %v325, 112
    %v410 = vpop.permute.xlu0 %409
    %411 = vrot.lane.b32.xlu0 %v326, 112
    %v412 = vpop.permute.xlu0 %411
    %413 = vrot.lane.b32.xlu0 %v327, 112
    %v414 = vpop.permute.xlu0 %413
    %415 = vrot.lane.b32.xlu0 %v328, 112
    %v416 = vpop.permute.xlu0 %415
    %417 = vrot.lane.b32.xlu0 %v329, 112
    %v418 = vpop.permute.xlu0 %417
    %419 = vrot.lane.b32.xlu0 %v330, 112
    %v420 = vpop.permute.xlu0 %419
    %421 = vrot.lane.b32.xlu0 %v331, 112
    %v422 = vpop.permute.xlu0 %421
    %423 = vrot.lane.b32.xlu0 %v332, 112
    %v424 = vpop.permute.xlu0 %423
    %425 = vrot.lane.b32.xlu0 %v333, 112
    %v426 = vpop.permute.xlu0 %425
    %427 = vrot.lane.b32.xlu0 %v334, 112
    %v428 = vpop.permute.xlu0 %427
    %429 = vrot.lane.b32.xlu0 %v335, 112
    %v430 = vpop.permute.xlu0 %429
    %431 = vrot.lane.b32.xlu0 %v336, 112
    %v432 = vpop.permute.xlu0 %431
    %433 = vrot.lane.b32.xlu0 %v337, 112
    %v434 = vpop.permute.xlu0 %433
    %435 = vrot.lane.b32.xlu0 %v338, 112
    %v436 = vpop.permute.xlu0 %435
    %vm437 = vcmask 130048
    %v438 = vsel %vm437, %v374, 0
    %v440 = vsel %vm437, %v376, 0
    %v442 = vsel %vm437, %v378, 0
    %v444 = vsel %vm437, %v380, 0
    %v446 = vsel %vm437, %v382, 0
    %v448 = vsel %vm437, %v384, 0
    %v450 = vsel %vm437, %v386, 0
    %v452 = vsel %vm437, %v388, 0
    %v454 = vsel %vm437, %v390, 0
    %v456 = vsel %vm437, %v392, 0
    %v458 = vsel %vm437, %v394, 0
    %v460 = vsel %vm437, %v396, 0
    %v462 = vsel %vm437, %v398, 0
    %v464 = vsel %vm437, %v400, 0
    %v466 = vsel %vm437, %v402, 0
    %v468 = vsel %vm437, %v404, 0
    %v470 = vsel %vm437, %v406, 0
    %v472 = vsel %vm437, %v408, 0
    %v474 = vsel %vm437, %v410, 0
    %v476 = vsel %vm437, %v412, 0
    %v478 = vsel %vm437, %v414, 0
    %v480 = vsel %vm437, %v416, 0
    %v482 = vsel %vm437, %v418, 0
    %v484 = vsel %vm437, %v420, 0
    %v486 = vsel %vm437, %v422, 0
    %v488 = vsel %vm437, %v424, 0
    %v490 = vsel %vm437, %v426, 0
    %v492 = vsel %vm437, %v428, 0
    %v494 = vsel %vm437, %v430, 0
    %v496 = vsel %vm437, %v432, 0
    %v498 = vsel %vm437, %v434, 0
    %v500 = vsel %vm437, %v436, 0
    %502 = vmatpush.msra.mxu0 0.0
    %503 = vmatpush.msra.mxu0 0.0
    %504 = vmatpush.msra.mxu0 0.0
    %505 = vmatpush.msra.mxu0 0.0
    %506 = vmatpush.msra.mxu0 0.0
    %507 = vmatpush.msra.mxu0 0.0
    %508 = vmatpush.msra.mxu0 0.0
    %509 = vmatpush.msra.mxu0 0.0
    %510 = vmatpush.msra.mxu0 0.0
    %511 = vmatpush.msra.mxu0 0.0
    %512 = vmatpush.msra.mxu0 0.0
    %513 = vmatpush.msra.mxu0 0.0
    %514 = vmatpush.msra.mxu0 0.0
    %515 = vmatpush.msra.mxu0 0.0
    %516 = vmatpush.msra.mxu0 %v340
    %517 = vmatpush.msra.mxu0 %v339
    %518 = vmatmul.f32.gmra.mxu0 %v438
    %v519 = vpop.f32.mrf.mxu0
    %v520 = vadd.f32 0.0, %v519
    %521 = vmatmul.f32.gmra.mxu0 %v440
    %v522 = vpop.f32.mrf.mxu0
    %v523 = vadd.f32 0.0, %v522
    %524 = vmatmul.f32.gmra.mxu0 %v442
    %v525 = vpop.f32.mrf.mxu0
    %v526 = vadd.f32 0.0, %v525
    %527 = vmatmul.f32.gmra.mxu0 %v444
    %v528 = vpop.f32.mrf.mxu0
    %v529 = vadd.f32 0.0, %v528
    %530 = vmatmul.f32.gmra.mxu0 %v446
    %v531 = vpop.f32.mrf.mxu0
    %v532 = vadd.f32 0.0, %v531
    %533 = vmatmul.f32.gmra.mxu0 %v448
    %v534 = vpop.f32.mrf.mxu0
    %v535 = vadd.f32 0.0, %v534
    %536 = vmatmul.f32.gmra.mxu0 %v450
    %v537 = vpop.f32.mrf.mxu0
    %v538 = vadd.f32 0.0, %v537
    %539 = vmatmul.f32.gmra.mxu0 %v452
    %v540 = vpop.f32.mrf.mxu0
    %v541 = vadd.f32 0.0, %v540
    %542 = vmatmul.f32.gmra.mxu0 %v454
    %v543 = vpop.f32.mrf.mxu0
    %v544 = vadd.f32 0.0, %v543
    %545 = vmatmul.f32.gmra.mxu0 %v456
    %v546 = vpop.f32.mrf.mxu0
    %v547 = vadd.f32 0.0, %v546
    %548 = vmatmul.f32.gmra.mxu0 %v458
    %v549 = vpop.f32.mrf.mxu0
    %v550 = vadd.f32 0.0, %v549
    %551 = vmatmul.f32.gmra.mxu0 %v460
    %v552 = vpop.f32.mrf.mxu0
    %v553 = vadd.f32 0.0, %v552
    %554 = vmatmul.f32.gmra.mxu0 %v462
    %v555 = vpop.f32.mrf.mxu0
    %v556 = vadd.f32 0.0, %v555
    %557 = vmatmul.f32.gmra.mxu0 %v464
    %v558 = vpop.f32.mrf.mxu0
    %v559 = vadd.f32 0.0, %v558
    %560 = vmatmul.f32.gmra.mxu0 %v466
    %v561 = vpop.f32.mrf.mxu0
    %v562 = vadd.f32 0.0, %v561
    %563 = vmatmul.f32.gmra.mxu0 %v468
    %v564 = vpop.f32.mrf.mxu0
    %v565 = vadd.f32 0.0, %v564
    %566 = vmatmul.f32.gmra.mxu0 %v470
    %v567 = vpop.f32.mrf.mxu0
    %v568 = vadd.f32 0.0, %v567
    %569 = vmatmul.f32.gmra.mxu0 %v472
    %v570 = vpop.f32.mrf.mxu0
    %v571 = vadd.f32 0.0, %v570
    %572 = vmatmul.f32.gmra.mxu0 %v474
    %v573 = vpop.f32.mrf.mxu0
    %v574 = vadd.f32 0.0, %v573
    %575 = vmatmul.f32.gmra.mxu0 %v476
    %v576 = vpop.f32.mrf.mxu0
    %v577 = vadd.f32 0.0, %v576
    %578 = vmatmul.f32.gmra.mxu0 %v478
    %v579 = vpop.f32.mrf.mxu0
    %v580 = vadd.f32 0.0, %v579
    %581 = vmatmul.f32.gmra.mxu0 %v480
    %v582 = vpop.f32.mrf.mxu0
    %v583 = vadd.f32 0.0, %v582
    %584 = vmatmul.f32.gmra.mxu0 %v482
    %v585 = vpop.f32.mrf.mxu0
    %v586 = vadd.f32 0.0, %v585
    %587 = vmatmul.f32.gmra.mxu0 %v484
    %v588 = vpop.f32.mrf.mxu0
    %v589 = vadd.f32 0.0, %v588
    %590 = vmatmul.f32.gmra.mxu0 %v486
    %v591 = vpop.f32.mrf.mxu0
    %v592 = vadd.f32 0.0, %v591
    %593 = vmatmul.f32.gmra.mxu0 %v488
    %v594 = vpop.f32.mrf.mxu0
    %v595 = vadd.f32 0.0, %v594
    %596 = vmatmul.f32.gmra.mxu0 %v490
    %v597 = vpop.f32.mrf.mxu0
    %v598 = vadd.f32 0.0, %v597
    %599 = vmatmul.f32.gmra.mxu0 %v492
    %v600 = vpop.f32.mrf.mxu0
    %v601 = vadd.f32 0.0, %v600
    %602 = vmatmul.f32.gmra.mxu0 %v494
    %v603 = vpop.f32.mrf.mxu0
    %v604 = vadd.f32 0.0, %v603
    %605 = vmatmul.f32.gmra.mxu0 %v496
    %v606 = vpop.f32.mrf.mxu0
    %v607 = vadd.f32 0.0, %v606
    %608 = vmatmul.f32.gmra.mxu0 %v498
    %v609 = vpop.f32.mrf.mxu0
    %v610 = vadd.f32 0.0, %v609
    %611 = vmatmul.f32.gmra.mxu0 %v500
    %v612 = vpop.f32.mrf.mxu0
    %v613 = vadd.f32 0.0, %v612
    %614 = vdwg.mxu0
    %v617 = vperm.slane %v106, 0
    %v618 = vlaneseq
    %v619 = vshrl.u32 %v618, 7
    %621 = vset.pattern.permute.xlu0 %v619
    %622 = vperm.xlu0 %621, %v617
    %v623 = vpop.permute.xlu0 %622
    %v624 = vlaneseq
    %v625 = vshrl.u32 %v624, 7
    %v626 = vadd.s32 %v625, 8
    %627 = vset.pattern.permute.xlu0 %v626
    %628 = vperm.xlu0 %627, %v617
    %v629 = vpop.permute.xlu0 %628
    %v630 = vperm.slane %v106, 1
    %v631 = vlaneseq
    %v632 = vshrl.u32 %v631, 7
    %634 = vset.pattern.permute.xlu0 %v632
    %635 = vperm.xlu0 %634, %v630
    %v636 = vpop.permute.xlu0 %635
    %v637 = vlaneseq
    %v638 = vshrl.u32 %v637, 7
    %v639 = vadd.s32 %v638, 8
    %640 = vset.pattern.permute.xlu0 %v639
    %641 = vperm.xlu0 %640, %v630
    %v642 = vpop.permute.xlu0 %641
    %v643 = vperm.slane %v106, 2
    %v644 = vlaneseq
    %v645 = vshrl.u32 %v644, 7
    %647 = vset.pattern.permute.xlu0 %v645
    %648 = vperm.xlu0 %647, %v643
    %v649 = vpop.permute.xlu0 %648
    %v650 = vlaneseq
    %v651 = vshrl.u32 %v650, 7
    %v652 = vadd.s32 %v651, 8
    %653 = vset.pattern.permute.xlu0 %v652
    %654 = vperm.xlu0 %653, %v643
    %v655 = vpop.permute.xlu0 %654
    %v656 = vperm.slane %v106, 3
    %v657 = vlaneseq
    %v658 = vshrl.u32 %v657, 7
    %660 = vset.pattern.permute.xlu0 %v658
    %661 = vperm.xlu0 %660, %v656
    %v662 = vpop.permute.xlu0 %661
    %v663 = vlaneseq
    %v664 = vshrl.u32 %v663, 7
    %v665 = vadd.s32 %v664, 8
    %666 = vset.pattern.permute.xlu0 %v665
    %667 = vperm.xlu0 %666, %v656
    %v668 = vpop.permute.xlu0 %667
    %v669 = vperm.slane %v106, 4
    %v670 = vlaneseq
    %v671 = vshrl.u32 %v670, 7
    %673 = vset.pattern.permute.xlu0 %v671
    %674 = vperm.xlu0 %673, %v669
    %v675 = vpop.permute.xlu0 %674
    %v676 = vlaneseq
    %v677 = vshrl.u32 %v676, 7
    %v678 = vadd.s32 %v677, 8
    %679 = vset.pattern.permute.xlu0 %v678
    %680 = vperm.xlu0 %679, %v669
    %v681 = vpop.permute.xlu0 %680
    %v682 = vperm.slane %v106, 5
    %v683 = vlaneseq
    %v684 = vshrl.u32 %v683, 7
    %686 = vset.pattern.permute.xlu0 %v684
    %687 = vperm.xlu0 %686, %v682
    %v688 = vpop.permute.xlu0 %687
    %v689 = vlaneseq
    %v690 = vshrl.u32 %v689, 7
    %v691 = vadd.s32 %v690, 8
    %692 = vset.pattern.permute.xlu0 %v691
    %693 = vperm.xlu0 %692, %v682
    %v694 = vpop.permute.xlu0 %693
    %v695 = vperm.slane %v106, 6
    %v696 = vlaneseq
    %v697 = vshrl.u32 %v696, 7
    %699 = vset.pattern.permute.xlu0 %v697
    %700 = vperm.xlu0 %699, %v695
    %v701 = vpop.permute.xlu0 %700
    %v702 = vlaneseq
    %v703 = vshrl.u32 %v702, 7
    %v704 = vadd.s32 %v703, 8
    %705 = vset.pattern.permute.xlu0 %v704
    %706 = vperm.xlu0 %705, %v695
    %v707 = vpop.permute.xlu0 %706
    %v708 = vperm.slane %v106, 7
    %v709 = vlaneseq
    %v710 = vshrl.u32 %v709, 7
    %712 = vset.pattern.permute.xlu0 %v710
    %713 = vperm.xlu0 %712, %v708
    %v714 = vpop.permute.xlu0 %713
    %v715 = vlaneseq
    %v716 = vshrl.u32 %v715, 7
    %v717 = vadd.s32 %v716, 8
    %718 = vset.pattern.permute.xlu0 %v717
    %719 = vperm.xlu0 %718, %v708
    %v720 = vpop.permute.xlu0 %719
    %v721 = vperm.slane %v107, 0
    %v722 = vlaneseq
    %v723 = vshrl.u32 %v722, 7
    %725 = vset.pattern.permute.xlu0 %v723
    %726 = vperm.xlu0 %725, %v721
    %v727 = vpop.permute.xlu0 %726
    %v728 = vlaneseq
    %v729 = vshrl.u32 %v728, 7
    %v730 = vadd.s32 %v729, 8
    %731 = vset.pattern.permute.xlu0 %v730
    %732 = vperm.xlu0 %731, %v721
    %v733 = vpop.permute.xlu0 %732
    %v734 = vperm.slane %v107, 1
    %v735 = vlaneseq
    %v736 = vshrl.u32 %v735, 7
    %738 = vset.pattern.permute.xlu0 %v736
    %739 = vperm.xlu0 %738, %v734
    %v740 = vpop.permute.xlu0 %739
    %v741 = vlaneseq
    %v742 = vshrl.u32 %v741, 7
    %v743 = vadd.s32 %v742, 8
    %744 = vset.pattern.permute.xlu0 %v743
    %745 = vperm.xlu0 %744, %v734
    %v746 = vpop.permute.xlu0 %745
    %v747 = vperm.slane %v107, 2
    %v748 = vlaneseq
    %v749 = vshrl.u32 %v748, 7
    %751 = vset.pattern.permute.xlu0 %v749
    %752 = vperm.xlu0 %751, %v747
    %v753 = vpop.permute.xlu0 %752
    %v754 = vlaneseq
    %v755 = vshrl.u32 %v754, 7
    %v756 = vadd.s32 %v755, 8
    %757 = vset.pattern.permute.xlu0 %v756
    %758 = vperm.xlu0 %757, %v747
    %v759 = vpop.permute.xlu0 %758
    %v760 = vperm.slane %v107, 3
    %v761 = vlaneseq
    %v762 = vshrl.u32 %v761, 7
    %764 = vset.pattern.permute.xlu0 %v762
    %765 = vperm.xlu0 %764, %v760
    %v766 = vpop.permute.xlu0 %765
    %v767 = vlaneseq
    %v768 = vshrl.u32 %v767, 7
    %v769 = vadd.s32 %v768, 8
    %770 = vset.pattern.permute.xlu0 %v769
    %771 = vperm.xlu0 %770, %v760
    %v772 = vpop.permute.xlu0 %771
    %v773 = vperm.slane %v107, 4
    %v774 = vlaneseq
    %v775 = vshrl.u32 %v774, 7
    %777 = vset.pattern.permute.xlu0 %v775
    %778 = vperm.xlu0 %777, %v773
    %v779 = vpop.permute.xlu0 %778
    %v780 = vlaneseq
    %v781 = vshrl.u32 %v780, 7
    %v782 = vadd.s32 %v781, 8
    %783 = vset.pattern.permute.xlu0 %v782
    %784 = vperm.xlu0 %783, %v773
    %v785 = vpop.permute.xlu0 %784
    %v786 = vperm.slane %v107, 5
    %v787 = vlaneseq
    %v788 = vshrl.u32 %v787, 7
    %790 = vset.pattern.permute.xlu0 %v788
    %791 = vperm.xlu0 %790, %v786
    %v792 = vpop.permute.xlu0 %791
    %v793 = vlaneseq
    %v794 = vshrl.u32 %v793, 7
    %v795 = vadd.s32 %v794, 8
    %796 = vset.pattern.permute.xlu0 %v795
    %797 = vperm.xlu0 %796, %v786
    %v798 = vpop.permute.xlu0 %797
    %v799 = vperm.slane %v107, 6
    %v800 = vlaneseq
    %v801 = vshrl.u32 %v800, 7
    %803 = vset.pattern.permute.xlu0 %v801
    %804 = vperm.xlu0 %803, %v799
    %v805 = vpop.permute.xlu0 %804
    %v806 = vlaneseq
    %v807 = vshrl.u32 %v806, 7
    %v808 = vadd.s32 %v807, 8
    %809 = vset.pattern.permute.xlu0 %v808
    %810 = vperm.xlu0 %809, %v799
    %v811 = vpop.permute.xlu0 %810
    %v812 = vperm.slane %v107, 7
    %v813 = vlaneseq
    %v814 = vshrl.u32 %v813, 7
    %816 = vset.pattern.permute.xlu0 %v814
    %817 = vperm.xlu0 %816, %v812
    %v818 = vpop.permute.xlu0 %817
    %v819 = vlaneseq
    %v820 = vshrl.u32 %v819, 7
    %v821 = vadd.s32 %v820, 8
    %822 = vset.pattern.permute.xlu0 %v821
    %823 = vperm.xlu0 %822, %v812
    %v824 = vpop.permute.xlu0 %823
    %v857 = vadd.f32 %v520, %v623
    %v858 = vadd.f32 %v523, %v629
    %v859 = vadd.f32 %v526, %v636
    %v860 = vadd.f32 %v529, %v642
    %v861 = vadd.f32 %v532, %v649
    %v862 = vadd.f32 %v535, %v655
    %v863 = vadd.f32 %v538, %v662
    %v864 = vadd.f32 %v541, %v668
    %v865 = vadd.f32 %v544, %v675
    %v866 = vadd.f32 %v547, %v681
    %v867 = vadd.f32 %v550, %v688
    %v868 = vadd.f32 %v553, %v694
    %v869 = vadd.f32 %v556, %v701
    %v870 = vadd.f32 %v559, %v707
    %v871 = vadd.f32 %v562, %v714
    %v872 = vadd.f32 %v565, %v720
    %v873 = vadd.f32 %v568, %v727
    %v874 = vadd.f32 %v571, %v733
    %v875 = vadd.f32 %v574, %v740
    %v876 = vadd.f32 %v577, %v746
    %v877 = vadd.f32 %v580, %v753
    %v878 = vadd.f32 %v583, %v759
    %v879 = vadd.f32 %v586, %v766
    %v880 = vadd.f32 %v589, %v772
    %v881 = vadd.f32 %v592, %v779
    %v882 = vadd.f32 %v595, %v785
    %v883 = vadd.f32 %v598, %v792
    %v884 = vadd.f32 %v601, %v798
    %v885 = vadd.f32 %v604, %v805
    %v886 = vadd.f32 %v607, %v811
    %v887 = vadd.f32 %v610, %v818
    %v888 = vadd.f32 %v613, %v824
    %921 = vset.pattern.permute.xlu0 0
    %922 = vperm.xlu0 %921, %v857
    %v923 = vpop.permute.xlu0 %922
    %924 = vset.pattern.permute.xlu0 0
    %925 = vperm.xlu0 %924, %v858
    %v926 = vpop.permute.xlu0 %925
    %927 = vset.pattern.permute.xlu0 0
    %928 = vperm.xlu0 %927, %v859
    %v929 = vpop.permute.xlu0 %928
    %930 = vset.pattern.permute.xlu0 0
    %931 = vperm.xlu0 %930, %v860
    %v932 = vpop.permute.xlu0 %931
    %933 = vset.pattern.permute.xlu0 0
    %934 = vperm.xlu0 %933, %v861
    %v935 = vpop.permute.xlu0 %934
    %936 = vset.pattern.permute.xlu0 0
    %937 = vperm.xlu0 %936, %v862
    %v938 = vpop.permute.xlu0 %937
    %939 = vset.pattern.permute.xlu0 0
    %940 = vperm.xlu0 %939, %v863
    %v941 = vpop.permute.xlu0 %940
    %942 = vset.pattern.permute.xlu0 0
    %943 = vperm.xlu0 %942, %v864
    %v944 = vpop.permute.xlu0 %943
    %945 = vset.pattern.permute.xlu0 0
    %946 = vperm.xlu0 %945, %v865
    %v947 = vpop.permute.xlu0 %946
    %948 = vset.pattern.permute.xlu0 0
    %949 = vperm.xlu0 %948, %v866
    %v950 = vpop.permute.xlu0 %949
    %951 = vset.pattern.permute.xlu0 0
    %952 = vperm.xlu0 %951, %v867
    %v953 = vpop.permute.xlu0 %952
    %954 = vset.pattern.permute.xlu0 0
    %955 = vperm.xlu0 %954, %v868
    %v956 = vpop.permute.xlu0 %955
    %957 = vset.pattern.permute.xlu0 0
    %958 = vperm.xlu0 %957, %v869
    %v959 = vpop.permute.xlu0 %958
    %960 = vset.pattern.permute.xlu0 0
    %961 = vperm.xlu0 %960, %v870
    %v962 = vpop.permute.xlu0 %961
    %963 = vset.pattern.permute.xlu0 0
    %964 = vperm.xlu0 %963, %v871
    %v965 = vpop.permute.xlu0 %964
    %966 = vset.pattern.permute.xlu0 0
    %967 = vperm.xlu0 %966, %v872
    %v968 = vpop.permute.xlu0 %967
    %969 = vset.pattern.permute.xlu0 0
    %970 = vperm.xlu0 %969, %v873
    %v971 = vpop.permute.xlu0 %970
    %972 = vset.pattern.permute.xlu0 0
    %973 = vperm.xlu0 %972, %v874
    %v974 = vpop.permute.xlu0 %973
    %975 = vset.pattern.permute.xlu0 0
    %976 = vperm.xlu0 %975, %v875
    %v977 = vpop.permute.xlu0 %976
    %978 = vset.pattern.permute.xlu0 0
    %979 = vperm.xlu0 %978, %v876
    %v980 = vpop.permute.xlu0 %979
    %981 = vset.pattern.permute.xlu0 0
    %982 = vperm.xlu0 %981, %v877
    %v983 = vpop.permute.xlu0 %982
    %984 = vset.pattern.permute.xlu0 0
    %985 = vperm.xlu0 %984, %v878
    %v986 = vpop.permute.xlu0 %985
    %987 = vset.pattern.permute.xlu0 0
    %988 = vperm.xlu0 %987, %v879
    %v989 = vpop.permute.xlu0 %988
    %990 = vset.pattern.permute.xlu0 0
    %991 = vperm.xlu0 %990, %v880
    %v992 = vpop.permute.xlu0 %991
    %993 = vset.pattern.permute.xlu0 0
    %994 = vperm.xlu0 %993, %v881
    %v995 = vpop.permute.xlu0 %994
    %996 = vset.pattern.permute.xlu0 0
    %997 = vperm.xlu0 %996, %v882
    %v998 = vpop.permute.xlu0 %997
    %999 = vset.pattern.permute.xlu0 0
    %1000 = vperm.xlu0 %999, %v883
    %v1001 = vpop.permute.xlu0 %1000
    %1002 = vset.pattern.permute.xlu0 0
    %1003 = vperm.xlu0 %1002, %v884
    %v1004 = vpop.permute.xlu0 %1003
    %1005 = vset.pattern.permute.xlu0 0
    %1006 = vperm.xlu0 %1005, %v885
    %v1007 = vpop.permute.xlu0 %1006
    %1008 = vset.pattern.permute.xlu0 0
    %1009 = vperm.xlu0 %1008, %v886
    %v1010 = vpop.permute.xlu0 %1009
    %1011 = vset.pattern.permute.xlu0 0
    %1012 = vperm.xlu0 %1011, %v887
    %v1013 = vpop.permute.xlu0 %1012
    %1014 = vset.pattern.permute.xlu0 0
    %1015 = vperm.xlu0 %1014, %v888
    %v1016 = vpop.permute.xlu0 %1015
    %v1017 = vlaneseq
    %v1018 = vand.u32 %v1017, 127
    %v1019 = vperm.slane %v923, %v1018
    %v1020 = vadd.s32 %v1018, 4294967288
    %v1021 = vperm.slane %v926, %v1020
    %vm1022 = vcmask 130112
    %v1023 = vsel %vm1022, %v1021, %v1019
    %v1024 = vperm.slane %v929, %v1018
    %v1025 = vperm.slane %v932, %v1020
    %v1026 = vsel %vm1022, %v1025, %v1024
    %v1027 = vperm.slane %v935, %v1018
    %v1028 = vperm.slane %v938, %v1020
    %v1029 = vsel %vm1022, %v1028, %v1027
    %v1030 = vperm.slane %v941, %v1018
    %v1031 = vperm.slane %v944, %v1020
    %v1032 = vsel %vm1022, %v1031, %v1030
    %v1033 = vperm.slane %v947, %v1018
    %v1034 = vperm.slane %v950, %v1020
    %v1035 = vsel %vm1022, %v1034, %v1033
    %v1036 = vperm.slane %v953, %v1018
    %v1037 = vperm.slane %v956, %v1020
    %v1038 = vsel %vm1022, %v1037, %v1036
    %v1039 = vperm.slane %v959, %v1018
    %v1040 = vperm.slane %v962, %v1020
    %v1041 = vsel %vm1022, %v1040, %v1039
    %v1042 = vperm.slane %v965, %v1018
    %v1043 = vperm.slane %v968, %v1020
    %v1044 = vsel %vm1022, %v1043, %v1042
    %v1045 = vperm.slane %v971, %v1018
    %v1046 = vperm.slane %v974, %v1020
    %v1047 = vsel %vm1022, %v1046, %v1045
    %v1048 = vperm.slane %v977, %v1018
    %v1049 = vperm.slane %v980, %v1020
    %v1050 = vsel %vm1022, %v1049, %v1048
    %v1051 = vperm.slane %v983, %v1018
    %v1052 = vperm.slane %v986, %v1020
    %v1053 = vsel %vm1022, %v1052, %v1051
    %v1054 = vperm.slane %v989, %v1018
    %v1055 = vperm.slane %v992, %v1020
    %v1056 = vsel %vm1022, %v1055, %v1054
    %v1057 = vperm.slane %v995, %v1018
    %v1058 = vperm.slane %v998, %v1020
    %v1059 = vsel %vm1022, %v1058, %v1057
    %v1060 = vperm.slane %v1001, %v1018
    %v1061 = vperm.slane %v1004, %v1020
    %v1062 = vsel %vm1022, %v1061, %v1060
    %v1063 = vperm.slane %v1007, %v1018
    %v1064 = vperm.slane %v1010, %v1020
    %v1065 = vsel %vm1022, %v1064, %v1063
    %v1066 = vperm.slane %v1013, %v1018
    %v1067 = vperm.slane %v1016, %v1020
    %v1068 = vsel %vm1022, %v1067, %v1066
    %vm1069 = vcmask 1041409
    %v1070 = vsel %vm1069, %v1026, %v1023
    %vm1071 = vcmask 1042434
    %v1072 = vsel %vm1071, %v1029, %v1070
    %vm1073 = vcmask 1043459
    %v1074 = vsel %vm1073, %v1032, %v1072
    %vm1075 = vcmask 1044484
    %v1076 = vsel %vm1075, %v1035, %v1074
    %vm1077 = vcmask 1045509
    %v1078 = vsel %vm1077, %v1038, %v1076
    %vm1079 = vcmask 1046534
    %v1080 = vsel %vm1079, %v1041, %v1078
    %vm1081 = vcmask 1047559
    %v1082 = vsel %vm1081, %v1044, %v1080
    %v1083 = vsel %vm1069, %v1050, %v1047
    %v1084 = vsel %vm1071, %v1053, %v1083
    %v1085 = vsel %vm1073, %v1056, %v1084
    %v1086 = vsel %vm1075, %v1059, %v1085
    %v1087 = vsel %vm1077, %v1062, %v1086
    %v1088 = vsel %vm1079, %v1065, %v1087
    %v1089 = vsel %vm1081, %v1068, %v1088
    %v1092 = vsel %vm437, %v1082, -inf
    %1093 = vmax.xlane.f32.xlu0 %v1092
    %v1094 = vpop.xlane.xlu0 %1093
    %v1095 = vsel %vm437, %v1089, -inf
    %1096 = vmax.xlane.f32.xlu0 %v1095
    %v1097 = vpop.xlane.xlu0 %1096
    %v1100 = vperm.slane %v1094, 0
    %v1101 = vperm.slane %v1094, 1
    %v1102 = vperm.slane %v1094, 2
    %v1103 = vperm.slane %v1094, 3
    %v1104 = vperm.slane %v1094, 4
    %v1105 = vperm.slane %v1094, 5
    %v1106 = vperm.slane %v1094, 6
    %v1107 = vperm.slane %v1094, 7
    %v1108 = vperm.slane %v1097, 0
    %v1109 = vperm.slane %v1097, 1
    %v1110 = vperm.slane %v1097, 2
    %v1111 = vperm.slane %v1097, 3
    %v1112 = vperm.slane %v1097, 4
    %v1113 = vperm.slane %v1097, 5
    %v1114 = vperm.slane %v1097, 6
    %v1115 = vperm.slane %v1097, 7
    %v1132 = vsub.f32 %v857, %v1100
    %v1133 = vsub.f32 %v858, %v1100
    %v1134 = vsub.f32 %v859, %v1101
    %v1135 = vsub.f32 %v860, %v1101
    %v1136 = vsub.f32 %v861, %v1102
    %v1137 = vsub.f32 %v862, %v1102
    %v1138 = vsub.f32 %v863, %v1103
    %v1139 = vsub.f32 %v864, %v1103
    %v1140 = vsub.f32 %v865, %v1104
    %v1141 = vsub.f32 %v866, %v1104
    %v1142 = vsub.f32 %v867, %v1105
    %v1143 = vsub.f32 %v868, %v1105
    %v1144 = vsub.f32 %v869, %v1106
    %v1145 = vsub.f32 %v870, %v1106
    %v1146 = vsub.f32 %v871, %v1107
    %v1147 = vsub.f32 %v872, %v1107
    %v1148 = vsub.f32 %v873, %v1108
    %v1149 = vsub.f32 %v874, %v1108
    %v1150 = vsub.f32 %v875, %v1109
    %v1151 = vsub.f32 %v876, %v1109
    %v1152 = vsub.f32 %v877, %v1110
    %v1153 = vsub.f32 %v878, %v1110
    %v1154 = vsub.f32 %v879, %v1111
    %v1155 = vsub.f32 %v880, %v1111
    %v1156 = vsub.f32 %v881, %v1112
    %v1157 = vsub.f32 %v882, %v1112
    %v1158 = vsub.f32 %v883, %v1113
    %v1159 = vsub.f32 %v884, %v1113
    %v1160 = vsub.f32 %v885, %v1114
    %v1161 = vsub.f32 %v886, %v1114
    %v1162 = vsub.f32 %v887, %v1115
    %v1163 = vsub.f32 %v888, %v1115
    %v1164 = vmul.f32 %v1132, 1.442695
    %v1165 = vpow.pop %v1164
    %v1166 = vmul.f32 %v1133, 1.442695
    %v1167 = vpow.pop %v1166
    %v1168 = vmul.f32 %v1134, 1.442695
    %v1169 = vpow.pop %v1168
    %v1170 = vmul.f32 %v1135, 1.442695
    %v1171 = vpow.pop %v1170
    %v1172 = vmul.f32 %v1136, 1.442695
    %v1173 = vpow.pop %v1172
    %v1174 = vmul.f32 %v1137, 1.442695
    %v1175 = vpow.pop %v1174
    %v1176 = vmul.f32 %v1138, 1.442695
    %v1177 = vpow.pop %v1176
    %v1178 = vmul.f32 %v1139, 1.442695
    %v1179 = vpow.pop %v1178
    %v1180 = vmul.f32 %v1140, 1.442695
    %v1181 = vpow.pop %v1180
    %v1182 = vmul.f32 %v1141, 1.442695
    %v1183 = vpow.pop %v1182
    %v1184 = vmul.f32 %v1142, 1.442695
    %v1185 = vpow.pop %v1184
    %v1186 = vmul.f32 %v1143, 1.442695
    %v1187 = vpow.pop %v1186
    %v1188 = vmul.f32 %v1144, 1.442695
    %v1189 = vpow.pop %v1188
    %v1190 = vmul.f32 %v1145, 1.442695
    %v1191 = vpow.pop %v1190
    %v1192 = vmul.f32 %v1146, 1.442695
    %v1193 = vpow.pop %v1192
    %v1194 = vmul.f32 %v1147, 1.442695
    %v1195 = vpow.pop %v1194
    %v1196 = vmul.f32 %v1148, 1.442695
    %v1197 = vpow.pop %v1196
    %v1198 = vmul.f32 %v1149, 1.442695
    %v1199 = vpow.pop %v1198
    %v1200 = vmul.f32 %v1150, 1.442695
    %v1201 = vpow.pop %v1200
    %v1202 = vmul.f32 %v1151, 1.442695
    %v1203 = vpow.pop %v1202
    %v1204 = vmul.f32 %v1152, 1.442695
    %v1205 = vpow.pop %v1204
    %v1206 = vmul.f32 %v1153, 1.442695
    %v1207 = vpow.pop %v1206
    %v1208 = vmul.f32 %v1154, 1.442695
    %v1209 = vpow.pop %v1208
    %v1210 = vmul.f32 %v1155, 1.442695
    %v1211 = vpow.pop %v1210
    %v1212 = vmul.f32 %v1156, 1.442695
    %v1213 = vpow.pop %v1212
    %v1214 = vmul.f32 %v1157, 1.442695
    %v1215 = vpow.pop %v1214
    %v1216 = vmul.f32 %v1158, 1.442695
    %v1217 = vpow.pop %v1216
    %v1218 = vmul.f32 %v1159, 1.442695
    %v1219 = vpow.pop %v1218
    %v1220 = vmul.f32 %v1160, 1.442695
    %v1221 = vpow.pop %v1220
    %v1222 = vmul.f32 %v1161, 1.442695
    %v1223 = vpow.pop %v1222
    %v1224 = vmul.f32 %v1162, 1.442695
    %v1225 = vpow.pop %v1224
    %v1226 = vmul.f32 %v1163, 1.442695
    %v1227 = vpow.pop %v1226
    %1260 = vset.pattern.permute.xlu0 0
    %1261 = vperm.xlu0 %1260, %v1165
    %v1262 = vpop.permute.xlu0 %1261
    %1263 = vset.pattern.permute.xlu0 0
    %1264 = vperm.xlu0 %1263, %v1167
    %v1265 = vpop.permute.xlu0 %1264
    %1266 = vset.pattern.permute.xlu0 0
    %1267 = vperm.xlu0 %1266, %v1169
    %v1268 = vpop.permute.xlu0 %1267
    %1269 = vset.pattern.permute.xlu0 0
    %1270 = vperm.xlu0 %1269, %v1171
    %v1271 = vpop.permute.xlu0 %1270
    %1272 = vset.pattern.permute.xlu0 0
    %1273 = vperm.xlu0 %1272, %v1173
    %v1274 = vpop.permute.xlu0 %1273
    %1275 = vset.pattern.permute.xlu0 0
    %1276 = vperm.xlu0 %1275, %v1175
    %v1277 = vpop.permute.xlu0 %1276
    %1278 = vset.pattern.permute.xlu0 0
    %1279 = vperm.xlu0 %1278, %v1177
    %v1280 = vpop.permute.xlu0 %1279
    %1281 = vset.pattern.permute.xlu0 0
    %1282 = vperm.xlu0 %1281, %v1179
    %v1283 = vpop.permute.xlu0 %1282
    %1284 = vset.pattern.permute.xlu0 0
    %1285 = vperm.xlu0 %1284, %v1181
    %v1286 = vpop.permute.xlu0 %1285
    %1287 = vset.pattern.permute.xlu0 0
    %1288 = vperm.xlu0 %1287, %v1183
    %v1289 = vpop.permute.xlu0 %1288
    %1290 = vset.pattern.permute.xlu0 0
    %1291 = vperm.xlu0 %1290, %v1185
    %v1292 = vpop.permute.xlu0 %1291
    %1293 = vset.pattern.permute.xlu0 0
    %1294 = vperm.xlu0 %1293, %v1187
    %v1295 = vpop.permute.xlu0 %1294
    %1296 = vset.pattern.permute.xlu0 0
    %1297 = vperm.xlu0 %1296, %v1189
    %v1298 = vpop.permute.xlu0 %1297
    %1299 = vset.pattern.permute.xlu0 0
    %1300 = vperm.xlu0 %1299, %v1191
    %v1301 = vpop.permute.xlu0 %1300
    %1302 = vset.pattern.permute.xlu0 0
    %1303 = vperm.xlu0 %1302, %v1193
    %v1304 = vpop.permute.xlu0 %1303
    %1305 = vset.pattern.permute.xlu0 0
    %1306 = vperm.xlu0 %1305, %v1195
    %v1307 = vpop.permute.xlu0 %1306
    %1308 = vset.pattern.permute.xlu0 0
    %1309 = vperm.xlu0 %1308, %v1197
    %v1310 = vpop.permute.xlu0 %1309
    %1311 = vset.pattern.permute.xlu0 0
    %1312 = vperm.xlu0 %1311, %v1199
    %v1313 = vpop.permute.xlu0 %1312
    %1314 = vset.pattern.permute.xlu0 0
    %1315 = vperm.xlu0 %1314, %v1201
    %v1316 = vpop.permute.xlu0 %1315
    %1317 = vset.pattern.permute.xlu0 0
    %1318 = vperm.xlu0 %1317, %v1203
    %v1319 = vpop.permute.xlu0 %1318
    %1320 = vset.pattern.permute.xlu0 0
    %1321 = vperm.xlu0 %1320, %v1205
    %v1322 = vpop.permute.xlu0 %1321
    %1323 = vset.pattern.permute.xlu0 0
    %1324 = vperm.xlu0 %1323, %v1207
    %v1325 = vpop.permute.xlu0 %1324
    %1326 = vset.pattern.permute.xlu0 0
    %1327 = vperm.xlu0 %1326, %v1209
    %v1328 = vpop.permute.xlu0 %1327
    %1329 = vset.pattern.permute.xlu0 0
    %1330 = vperm.xlu0 %1329, %v1211
    %v1331 = vpop.permute.xlu0 %1330
    %1332 = vset.pattern.permute.xlu0 0
    %1333 = vperm.xlu0 %1332, %v1213
    %v1334 = vpop.permute.xlu0 %1333
    %1335 = vset.pattern.permute.xlu0 0
    %1336 = vperm.xlu0 %1335, %v1215
    %v1337 = vpop.permute.xlu0 %1336
    %1338 = vset.pattern.permute.xlu0 0
    %1339 = vperm.xlu0 %1338, %v1217
    %v1340 = vpop.permute.xlu0 %1339
    %1341 = vset.pattern.permute.xlu0 0
    %1342 = vperm.xlu0 %1341, %v1219
    %v1343 = vpop.permute.xlu0 %1342
    %1344 = vset.pattern.permute.xlu0 0
    %1345 = vperm.xlu0 %1344, %v1221
    %v1346 = vpop.permute.xlu0 %1345
    %1347 = vset.pattern.permute.xlu0 0
    %1348 = vperm.xlu0 %1347, %v1223
    %v1349 = vpop.permute.xlu0 %1348
    %1350 = vset.pattern.permute.xlu0 0
    %1351 = vperm.xlu0 %1350, %v1225
    %v1352 = vpop.permute.xlu0 %1351
    %1353 = vset.pattern.permute.xlu0 0
    %1354 = vperm.xlu0 %1353, %v1227
    %v1355 = vpop.permute.xlu0 %1354
    %v1356 = vperm.slane %v1262, %v1018
    %v1357 = vperm.slane %v1265, %v1020
    %v1358 = vsel %vm1022, %v1357, %v1356
    %v1359 = vperm.slane %v1268, %v1018
    %v1360 = vperm.slane %v1271, %v1020
    %v1361 = vsel %vm1022, %v1360, %v1359
    %v1362 = vperm.slane %v1274, %v1018
    %v1363 = vperm.slane %v1277, %v1020
    %v1364 = vsel %vm1022, %v1363, %v1362
    %v1365 = vperm.slane %v1280, %v1018
    %v1366 = vperm.slane %v1283, %v1020
    %v1367 = vsel %vm1022, %v1366, %v1365
    %v1368 = vperm.slane %v1286, %v1018
    %v1369 = vperm.slane %v1289, %v1020
    %v1370 = vsel %vm1022, %v1369, %v1368
    %v1371 = vperm.slane %v1292, %v1018
    %v1372 = vperm.slane %v1295, %v1020
    %v1373 = vsel %vm1022, %v1372, %v1371
    %v1374 = vperm.slane %v1298, %v1018
    %v1375 = vperm.slane %v1301, %v1020
    %v1376 = vsel %vm1022, %v1375, %v1374
    %v1377 = vperm.slane %v1304, %v1018
    %v1378 = vperm.slane %v1307, %v1020
    %v1379 = vsel %vm1022, %v1378, %v1377
    %v1380 = vperm.slane %v1310, %v1018
    %v1381 = vperm.slane %v1313, %v1020
    %v1382 = vsel %vm1022, %v1381, %v1380
    %v1383 = vperm.slane %v1316, %v1018
    %v1384 = vperm.slane %v1319, %v1020
    %v1385 = vsel %vm1022, %v1384, %v1383
    %v1386 = vperm.slane %v1322, %v1018
    %v1387 = vperm.slane %v1325, %v1020
    %v1388 = vsel %vm1022, %v1387, %v1386
    %v1389 = vperm.slane %v1328, %v1018
    %v1390 = vperm.slane %v1331, %v1020
    %v1391 = vsel %vm1022, %v1390, %v1389
    %v1392 = vperm.slane %v1334, %v1018
    %v1393 = vperm.slane %v1337, %v1020
    %v1394 = vsel %vm1022, %v1393, %v1392
    %v1395 = vperm.slane %v1340, %v1018
    %v1396 = vperm.slane %v1343, %v1020
    %v1397 = vsel %vm1022, %v1396, %v1395
    %v1398 = vperm.slane %v1346, %v1018
    %v1399 = vperm.slane %v1349, %v1020
    %v1400 = vsel %vm1022, %v1399, %v1398
    %v1401 = vperm.slane %v1352, %v1018
    %v1402 = vperm.slane %v1355, %v1020
    %v1403 = vsel %vm1022, %v1402, %v1401
    %v1404 = vsel %vm1069, %v1361, %v1358
    %v1405 = vsel %vm1071, %v1364, %v1404
    %v1406 = vsel %vm1073, %v1367, %v1405
    %v1407 = vsel %vm1075, %v1370, %v1406
    %v1408 = vsel %vm1077, %v1373, %v1407
    %v1409 = vsel %vm1079, %v1376, %v1408
    %v1410 = vsel %vm1081, %v1379, %v1409
    %v1411 = vsel %vm1069, %v1385, %v1382
    %v1412 = vsel %vm1071, %v1388, %v1411
    %v1413 = vsel %vm1073, %v1391, %v1412
    %v1414 = vsel %vm1075, %v1394, %v1413
    %v1415 = vsel %vm1077, %v1397, %v1414
    %v1416 = vsel %vm1079, %v1400, %v1415
    %v1417 = vsel %vm1081, %v1403, %v1416
    %v1420 = vsel %vm437, %v1410, 0.0
    %1421 = vadd.xlane.f32.xlu0 %v1420
    %v1422 = vpop.xlane.xlu0 %1421
    %v1423 = vsel %vm437, %v1417, 0.0
    %1424 = vadd.xlane.f32.xlu0 %v1423
    %v1425 = vpop.xlane.xlu0 %1424
    %v1426 = vmax.f32 %v1422, 1e-20
    %v1427 = vmax.f32 %v1425, 1e-20
    %v1428 = vrcp.pop %v1426
    %v1429 = vrcp.pop %v1427
    %v1432 = vperm.slane %v1428, 0
    %v1433 = vperm.slane %v1428, 1
    %v1434 = vperm.slane %v1428, 2
    %v1435 = vperm.slane %v1428, 3
    %v1436 = vperm.slane %v1428, 4
    %v1437 = vperm.slane %v1428, 5
    %v1438 = vperm.slane %v1428, 6
    %v1439 = vperm.slane %v1428, 7
    %v1440 = vperm.slane %v1429, 0
    %v1441 = vperm.slane %v1429, 1
    %v1442 = vperm.slane %v1429, 2
    %v1443 = vperm.slane %v1429, 3
    %v1444 = vperm.slane %v1429, 4
    %v1445 = vperm.slane %v1429, 5
    %v1446 = vperm.slane %v1429, 6
    %v1447 = vperm.slane %v1429, 7
    %v1464 = vmul.f32 %v1165, %v1432
    %v1465 = vmul.f32 %v1167, %v1432
    %v1466 = vmul.f32 %v1169, %v1433
    %v1467 = vmul.f32 %v1171, %v1433
    %v1468 = vmul.f32 %v1173, %v1434
    %v1469 = vmul.f32 %v1175, %v1434
    %v1470 = vmul.f32 %v1177, %v1435
    %v1471 = vmul.f32 %v1179, %v1435
    %v1472 = vmul.f32 %v1181, %v1436
    %v1473 = vmul.f32 %v1183, %v1436
    %v1474 = vmul.f32 %v1185, %v1437
    %v1475 = vmul.f32 %v1187, %v1437
    %v1476 = vmul.f32 %v1189, %v1438
    %v1477 = vmul.f32 %v1191, %v1438
    %v1478 = vmul.f32 %v1193, %v1439
    %v1479 = vmul.f32 %v1195, %v1439
    %v1480 = vmul.f32 %v1197, %v1440
    %v1481 = vmul.f32 %v1199, %v1440
    %v1482 = vmul.f32 %v1201, %v1441
    %v1483 = vmul.f32 %v1203, %v1441
    %v1484 = vmul.f32 %v1205, %v1442
    %v1485 = vmul.f32 %v1207, %v1442
    %v1486 = vmul.f32 %v1209, %v1443
    %v1487 = vmul.f32 %v1211, %v1443
    %v1488 = vmul.f32 %v1213, %v1444
    %v1489 = vmul.f32 %v1215, %v1444
    %v1490 = vmul.f32 %v1217, %v1445
    %v1491 = vmul.f32 %v1219, %v1445
    %v1492 = vmul.f32 %v1221, %v1446
    %v1493 = vmul.f32 %v1223, %v1446
    %v1494 = vmul.f32 %v1225, %v1447
    %v1495 = vmul.f32 %v1227, %v1447
    %1528 = vset.pattern.permute.xlu0 0
    %1529 = vperm.xlu0 %1528, %v1464
    %v1530 = vpop.permute.xlu0 %1529
    %1531 = vset.pattern.permute.xlu0 0
    %1532 = vperm.xlu0 %1531, %v1465
    %v1533 = vpop.permute.xlu0 %1532
    %1534 = vset.pattern.permute.xlu0 0
    %1535 = vperm.xlu0 %1534, %v1466
    %v1536 = vpop.permute.xlu0 %1535
    %1537 = vset.pattern.permute.xlu0 0
    %1538 = vperm.xlu0 %1537, %v1467
    %v1539 = vpop.permute.xlu0 %1538
    %1540 = vset.pattern.permute.xlu0 0
    %1541 = vperm.xlu0 %1540, %v1468
    %v1542 = vpop.permute.xlu0 %1541
    %1543 = vset.pattern.permute.xlu0 0
    %1544 = vperm.xlu0 %1543, %v1469
    %v1545 = vpop.permute.xlu0 %1544
    %1546 = vset.pattern.permute.xlu0 0
    %1547 = vperm.xlu0 %1546, %v1470
    %v1548 = vpop.permute.xlu0 %1547
    %1549 = vset.pattern.permute.xlu0 0
    %1550 = vperm.xlu0 %1549, %v1471
    %v1551 = vpop.permute.xlu0 %1550
    %1552 = vset.pattern.permute.xlu0 0
    %1553 = vperm.xlu0 %1552, %v1472
    %v1554 = vpop.permute.xlu0 %1553
    %1555 = vset.pattern.permute.xlu0 0
    %1556 = vperm.xlu0 %1555, %v1473
    %v1557 = vpop.permute.xlu0 %1556
    %1558 = vset.pattern.permute.xlu0 0
    %1559 = vperm.xlu0 %1558, %v1474
    %v1560 = vpop.permute.xlu0 %1559
    %1561 = vset.pattern.permute.xlu0 0
    %1562 = vperm.xlu0 %1561, %v1475
    %v1563 = vpop.permute.xlu0 %1562
    %1564 = vset.pattern.permute.xlu0 0
    %1565 = vperm.xlu0 %1564, %v1476
    %v1566 = vpop.permute.xlu0 %1565
    %1567 = vset.pattern.permute.xlu0 0
    %1568 = vperm.xlu0 %1567, %v1477
    %v1569 = vpop.permute.xlu0 %1568
    %1570 = vset.pattern.permute.xlu0 0
    %1571 = vperm.xlu0 %1570, %v1478
    %v1572 = vpop.permute.xlu0 %1571
    %1573 = vset.pattern.permute.xlu0 0
    %1574 = vperm.xlu0 %1573, %v1479
    %v1575 = vpop.permute.xlu0 %1574
    %1576 = vset.pattern.permute.xlu0 0
    %1577 = vperm.xlu0 %1576, %v1480
    %v1578 = vpop.permute.xlu0 %1577
    %1579 = vset.pattern.permute.xlu0 0
    %1580 = vperm.xlu0 %1579, %v1481
    %v1581 = vpop.permute.xlu0 %1580
    %1582 = vset.pattern.permute.xlu0 0
    %1583 = vperm.xlu0 %1582, %v1482
    %v1584 = vpop.permute.xlu0 %1583
    %1585 = vset.pattern.permute.xlu0 0
    %1586 = vperm.xlu0 %1585, %v1483
    %v1587 = vpop.permute.xlu0 %1586
    %1588 = vset.pattern.permute.xlu0 0
    %1589 = vperm.xlu0 %1588, %v1484
    %v1590 = vpop.permute.xlu0 %1589
    %1591 = vset.pattern.permute.xlu0 0
    %1592 = vperm.xlu0 %1591, %v1485
    %v1593 = vpop.permute.xlu0 %1592
    %1594 = vset.pattern.permute.xlu0 0
    %1595 = vperm.xlu0 %1594, %v1486
    %v1596 = vpop.permute.xlu0 %1595
    %1597 = vset.pattern.permute.xlu0 0
    %1598 = vperm.xlu0 %1597, %v1487
    %v1599 = vpop.permute.xlu0 %1598
    %1600 = vset.pattern.permute.xlu0 0
    %1601 = vperm.xlu0 %1600, %v1488
    %v1602 = vpop.permute.xlu0 %1601
    %1603 = vset.pattern.permute.xlu0 0
    %1604 = vperm.xlu0 %1603, %v1489
    %v1605 = vpop.permute.xlu0 %1604
    %1606 = vset.pattern.permute.xlu0 0
    %1607 = vperm.xlu0 %1606, %v1490
    %v1608 = vpop.permute.xlu0 %1607
    %1609 = vset.pattern.permute.xlu0 0
    %1610 = vperm.xlu0 %1609, %v1491
    %v1611 = vpop.permute.xlu0 %1610
    %1612 = vset.pattern.permute.xlu0 0
    %1613 = vperm.xlu0 %1612, %v1492
    %v1614 = vpop.permute.xlu0 %1613
    %1615 = vset.pattern.permute.xlu0 0
    %1616 = vperm.xlu0 %1615, %v1493
    %v1617 = vpop.permute.xlu0 %1616
    %1618 = vset.pattern.permute.xlu0 0
    %1619 = vperm.xlu0 %1618, %v1494
    %v1620 = vpop.permute.xlu0 %1619
    %1621 = vset.pattern.permute.xlu0 0
    %1622 = vperm.xlu0 %1621, %v1495
    %v1623 = vpop.permute.xlu0 %1622
    %v1624 = vperm.slane %v1530, %v1018
    %v1625 = vperm.slane %v1533, %v1020
    %v1626 = vsel %vm1022, %v1625, %v1624
    %v1627 = vperm.slane %v1536, %v1018
    %v1628 = vperm.slane %v1539, %v1020
    %v1629 = vsel %vm1022, %v1628, %v1627
    %v1630 = vperm.slane %v1542, %v1018
    %v1631 = vperm.slane %v1545, %v1020
    %v1632 = vsel %vm1022, %v1631, %v1630
    %v1633 = vperm.slane %v1548, %v1018
    %v1634 = vperm.slane %v1551, %v1020
    %v1635 = vsel %vm1022, %v1634, %v1633
    %v1636 = vperm.slane %v1554, %v1018
    %v1637 = vperm.slane %v1557, %v1020
    %v1638 = vsel %vm1022, %v1637, %v1636
    %v1639 = vperm.slane %v1560, %v1018
    %v1640 = vperm.slane %v1563, %v1020
    %v1641 = vsel %vm1022, %v1640, %v1639
    %v1642 = vperm.slane %v1566, %v1018
    %v1643 = vperm.slane %v1569, %v1020
    %v1644 = vsel %vm1022, %v1643, %v1642
    %v1645 = vperm.slane %v1572, %v1018
    %v1646 = vperm.slane %v1575, %v1020
    %v1647 = vsel %vm1022, %v1646, %v1645
    %v1648 = vperm.slane %v1578, %v1018
    %v1649 = vperm.slane %v1581, %v1020
    %v1650 = vsel %vm1022, %v1649, %v1648
    %v1651 = vperm.slane %v1584, %v1018
    %v1652 = vperm.slane %v1587, %v1020
    %v1653 = vsel %vm1022, %v1652, %v1651
    %v1654 = vperm.slane %v1590, %v1018
    %v1655 = vperm.slane %v1593, %v1020
    %v1656 = vsel %vm1022, %v1655, %v1654
    %v1657 = vperm.slane %v1596, %v1018
    %v1658 = vperm.slane %v1599, %v1020
    %v1659 = vsel %vm1022, %v1658, %v1657
    %v1660 = vperm.slane %v1602, %v1018
    %v1661 = vperm.slane %v1605, %v1020
    %v1662 = vsel %vm1022, %v1661, %v1660
    %v1663 = vperm.slane %v1608, %v1018
    %v1664 = vperm.slane %v1611, %v1020
    %v1665 = vsel %vm1022, %v1664, %v1663
    %v1666 = vperm.slane %v1614, %v1018
    %v1667 = vperm.slane %v1617, %v1020
    %v1668 = vsel %vm1022, %v1667, %v1666
    %v1669 = vperm.slane %v1620, %v1018
    %v1670 = vperm.slane %v1623, %v1020
    %v1671 = vsel %vm1022, %v1670, %v1669
    %v1672 = vsel %vm1069, %v1629, %v1626
    %v1673 = vsel %vm1071, %v1632, %v1672
    %v1674 = vsel %vm1073, %v1635, %v1673
    %v1675 = vsel %vm1075, %v1638, %v1674
    %v1676 = vsel %vm1077, %v1641, %v1675
    %v1677 = vsel %vm1079, %v1644, %v1676
    %v1678 = vsel %vm1081, %v1647, %v1677
    %v1679 = vsel %vm1069, %v1653, %v1650
    %v1680 = vsel %vm1071, %v1656, %v1679
    %v1681 = vsel %vm1073, %v1659, %v1680
    %v1682 = vsel %vm1075, %v1662, %v1681
    %v1683 = vsel %vm1077, %v1665, %v1682
    %v1684 = vsel %vm1079, %v1668, %v1683
    %v1685 = vsel %vm1081, %v1671, %v1684
    %v1686 = vsel %vm437, %v1678, 0
    %v1688 = vsel %vm437, %v1685, 0
    %1690 = vmatpush.msra.mxu0 0.0
    %1691 = vmatpush.msra.mxu0 0.0
    %1692 = vmatpush.msra.mxu0 0.0
    %1693 = vmatpush.msra.mxu0 0.0
    %1694 = vmatpush.msra.mxu0 0.0
    %1695 = vmatpush.msra.mxu0 0.0
    %1696 = vmatpush.msra.mxu0 0.0
    %1697 = vmatpush.msra.mxu0 0.0
    %1698 = vmatpush.msra.mxu0 0.0
    %1699 = vmatpush.msra.mxu0 0.0
    %1700 = vmatpush.msra.mxu0 0.0
    %1701 = vmatpush.msra.mxu0 0.0
    %1702 = vmatpush.msra.mxu0 0.0
    %1703 = vmatpush.msra.mxu0 0.0
    %1704 = vmatpush.msra.mxu0 %v147
    %1705 = vmatpush.msra.mxu0 %v146
    %1706 = vmatmul.f32.gmra.mxu0 %v1686
    %v1707 = vpop.f32.mrf.mxu0
    %v1708 = vadd.f32 0.0, %v1707
    %1709 = vmatmul.f32.gmra.mxu0 %v1688
    %v1710 = vpop.f32.mrf.mxu0
    %v1711 = vadd.f32 0.0, %v1710
    %1712 = vdwg.mxu0
    %1713 = vst.msk [vmem:[#allocation2] sm:$0xff] %vm115, %v1708
    %1714 = vst.msk [vmem:[#allocation2 + $0x8] sm:$0xff] %vm115, %v1711
    %1715 = vset.pattern.permute.xlu0 1
    %1716 = vperm.xlu0 %1715, %v857
    %v1717 = vpop.permute.xlu0 %1716
    %1718 = vset.pattern.permute.xlu0 1
    %1719 = vperm.xlu0 %1718, %v858
    %v1720 = vpop.permute.xlu0 %1719
    %1721 = vset.pattern.permute.xlu0 1
    %1722 = vperm.xlu0 %1721, %v859
    %v1723 = vpop.permute.xlu0 %1722
    %1724 = vset.pattern.permute.xlu0 1
    %1725 = vperm.xlu0 %1724, %v860
    %v1726 = vpop.permute.xlu0 %1725
    %1727 = vset.pattern.permute.xlu0 1
    %1728 = vperm.xlu0 %1727, %v861
    %v1729 = vpop.permute.xlu0 %1728
    %1730 = vset.pattern.permute.xlu0 1
    %1731 = vperm.xlu0 %1730, %v862
    %v1732 = vpop.permute.xlu0 %1731
    %1733 = vset.pattern.permute.xlu0 1
    %1734 = vperm.xlu0 %1733, %v863
    %v1735 = vpop.permute.xlu0 %1734
    %1736 = vset.pattern.permute.xlu0 1
    %1737 = vperm.xlu0 %1736, %v864
    %v1738 = vpop.permute.xlu0 %1737
    %1739 = vset.pattern.permute.xlu0 1
    %1740 = vperm.xlu0 %1739, %v865
    %v1741 = vpop.permute.xlu0 %1740
    %1742 = vset.pattern.permute.xlu0 1
    %1743 = vperm.xlu0 %1742, %v866
    %v1744 = vpop.permute.xlu0 %1743
    %1745 = vset.pattern.permute.xlu0 1
    %1746 = vperm.xlu0 %1745, %v867
    %v1747 = vpop.permute.xlu0 %1746
    %1748 = vset.pattern.permute.xlu0 1
    %1749 = vperm.xlu0 %1748, %v868
    %v1750 = vpop.permute.xlu0 %1749
    %1751 = vset.pattern.permute.xlu0 1
    %1752 = vperm.xlu0 %1751, %v869
    %v1753 = vpop.permute.xlu0 %1752
    %1754 = vset.pattern.permute.xlu0 1
    %1755 = vperm.xlu0 %1754, %v870
    %v1756 = vpop.permute.xlu0 %1755
    %1757 = vset.pattern.permute.xlu0 1
    %1758 = vperm.xlu0 %1757, %v871
    %v1759 = vpop.permute.xlu0 %1758
    %1760 = vset.pattern.permute.xlu0 1
    %1761 = vperm.xlu0 %1760, %v872
    %v1762 = vpop.permute.xlu0 %1761
    %1763 = vset.pattern.permute.xlu0 1
    %1764 = vperm.xlu0 %1763, %v873
    %v1765 = vpop.permute.xlu0 %1764
    %1766 = vset.pattern.permute.xlu0 1
    %1767 = vperm.xlu0 %1766, %v874
    %v1768 = vpop.permute.xlu0 %1767
    %1769 = vset.pattern.permute.xlu0 1
    %1770 = vperm.xlu0 %1769, %v875
    %v1771 = vpop.permute.xlu0 %1770
    %1772 = vset.pattern.permute.xlu0 1
    %1773 = vperm.xlu0 %1772, %v876
    %v1774 = vpop.permute.xlu0 %1773
    %1775 = vset.pattern.permute.xlu0 1
    %1776 = vperm.xlu0 %1775, %v877
    %v1777 = vpop.permute.xlu0 %1776
    %1778 = vset.pattern.permute.xlu0 1
    %1779 = vperm.xlu0 %1778, %v878
    %v1780 = vpop.permute.xlu0 %1779
    %1781 = vset.pattern.permute.xlu0 1
    %1782 = vperm.xlu0 %1781, %v879
    %v1783 = vpop.permute.xlu0 %1782
    %1784 = vset.pattern.permute.xlu0 1
    %1785 = vperm.xlu0 %1784, %v880
    %v1786 = vpop.permute.xlu0 %1785
    %1787 = vset.pattern.permute.xlu0 1
    %1788 = vperm.xlu0 %1787, %v881
    %v1789 = vpop.permute.xlu0 %1788
    %1790 = vset.pattern.permute.xlu0 1
    %1791 = vperm.xlu0 %1790, %v882
    %v1792 = vpop.permute.xlu0 %1791
    %1793 = vset.pattern.permute.xlu0 1
    %1794 = vperm.xlu0 %1793, %v883
    %v1795 = vpop.permute.xlu0 %1794
    %1796 = vset.pattern.permute.xlu0 1
    %1797 = vperm.xlu0 %1796, %v884
    %v1798 = vpop.permute.xlu0 %1797
    %1799 = vset.pattern.permute.xlu0 1
    %1800 = vperm.xlu0 %1799, %v885
    %v1801 = vpop.permute.xlu0 %1800
    %1802 = vset.pattern.permute.xlu0 1
    %1803 = vperm.xlu0 %1802, %v886
    %v1804 = vpop.permute.xlu0 %1803
    %1805 = vset.pattern.permute.xlu0 1
    %1806 = vperm.xlu0 %1805, %v887
    %v1807 = vpop.permute.xlu0 %1806
    %1808 = vset.pattern.permute.xlu0 1
    %1809 = vperm.xlu0 %1808, %v888
    %v1810 = vpop.permute.xlu0 %1809
    %v1811 = vperm.slane %v1717, %v1018
    %v1812 = vperm.slane %v1720, %v1020
    %v1813 = vsel %vm1022, %v1812, %v1811
    %v1814 = vperm.slane %v1723, %v1018
    %v1815 = vperm.slane %v1726, %v1020
    %v1816 = vsel %vm1022, %v1815, %v1814
    %v1817 = vperm.slane %v1729, %v1018
    %v1818 = vperm.slane %v1732, %v1020
    %v1819 = vsel %vm1022, %v1818, %v1817
    %v1820 = vperm.slane %v1735, %v1018
    %v1821 = vperm.slane %v1738, %v1020
    %v1822 = vsel %vm1022, %v1821, %v1820
    %v1823 = vperm.slane %v1741, %v1018
    %v1824 = vperm.slane %v1744, %v1020
    %v1825 = vsel %vm1022, %v1824, %v1823
    %v1826 = vperm.slane %v1747, %v1018
    %v1827 = vperm.slane %v1750, %v1020
    %v1828 = vsel %vm1022, %v1827, %v1826
    %v1829 = vperm.slane %v1753, %v1018
    %v1830 = vperm.slane %v1756, %v1020
    %v1831 = vsel %vm1022, %v1830, %v1829
    %v1832 = vperm.slane %v1759, %v1018
    %v1833 = vperm.slane %v1762, %v1020
    %v1834 = vsel %vm1022, %v1833, %v1832
    %v1835 = vperm.slane %v1765, %v1018
    %v1836 = vperm.slane %v1768, %v1020
    %v1837 = vsel %vm1022, %v1836, %v1835
    %v1838 = vperm.slane %v1771, %v1018
    %v1839 = vperm.slane %v1774, %v1020
    %v1840 = vsel %vm1022, %v1839, %v1838
    %v1841 = vperm.slane %v1777, %v1018
    %v1842 = vperm.slane %v1780, %v1020
    %v1843 = vsel %vm1022, %v1842, %v1841
    %v1844 = vperm.slane %v1783, %v1018
    %v1845 = vperm.slane %v1786, %v1020
    %v1846 = vsel %vm1022, %v1845, %v1844
    %v1847 = vperm.slane %v1789, %v1018
    %v1848 = vperm.slane %v1792, %v1020
    %v1849 = vsel %vm1022, %v1848, %v1847
    %v1850 = vperm.slane %v1795, %v1018
    %v1851 = vperm.slane %v1798, %v1020
    %v1852 = vsel %vm1022, %v1851, %v1850
    %v1853 = vperm.slane %v1801, %v1018
    %v1854 = vperm.slane %v1804, %v1020
    %v1855 = vsel %vm1022, %v1854, %v1853
    %v1856 = vperm.slane %v1807, %v1018
    %v1857 = vperm.slane %v1810, %v1020
    %v1858 = vsel %vm1022, %v1857, %v1856
    %v1859 = vsel %vm1069, %v1816, %v1813
    %v1860 = vsel %vm1071, %v1819, %v1859
    %v1861 = vsel %vm1073, %v1822, %v1860
    %v1862 = vsel %vm1075, %v1825, %v1861
    %v1863 = vsel %vm1077, %v1828, %v1862
    %v1864 = vsel %vm1079, %v1831, %v1863
    %v1865 = vsel %vm1081, %v1834, %v1864
    %v1866 = vsel %vm1069, %v1840, %v1837
    %v1867 = vsel %vm1071, %v1843, %v1866
    %v1868 = vsel %vm1073, %v1846, %v1867
    %v1869 = vsel %vm1075, %v1849, %v1868
    %v1870 = vsel %vm1077, %v1852, %v1869
    %v1871 = vsel %vm1079, %v1855, %v1870
    %v1872 = vsel %vm1081, %v1858, %v1871
    %v1875 = vsel %vm437, %v1865, -inf
    %1876 = vmax.xlane.f32.xlu0 %v1875
    %v1877 = vpop.xlane.xlu0 %1876
    %v1878 = vsel %vm437, %v1872, -inf
    %1879 = vmax.xlane.f32.xlu0 %v1878
    %v1880 = vpop.xlane.xlu0 %1879
    %v1883 = vperm.slane %v1877, 0
    %v1884 = vperm.slane %v1877, 1
    %v1885 = vperm.slane %v1877, 2
    %v1886 = vperm.slane %v1877, 3
    %v1887 = vperm.slane %v1877, 4
    %v1888 = vperm.slane %v1877, 5
    %v1889 = vperm.slane %v1877, 6
    %v1890 = vperm.slane %v1877, 7
    %v1891 = vperm.slane %v1880, 0
    %v1892 = vperm.slane %v1880, 1
    %v1893 = vperm.slane %v1880, 2
    %v1894 = vperm.slane %v1880, 3
    %v1895 = vperm.slane %v1880, 4
    %v1896 = vperm.slane %v1880, 5
    %v1897 = vperm.slane %v1880, 6
    %v1898 = vperm.slane %v1880, 7
    %v1915 = vsub.f32 %v857, %v1883
    %v1916 = vsub.f32 %v858, %v1883
    %v1917 = vsub.f32 %v859, %v1884
    %v1918 = vsub.f32 %v860, %v1884
    %v1919 = vsub.f32 %v861, %v1885
    %v1920 = vsub.f32 %v862, %v1885
    %v1921 = vsub.f32 %v863, %v1886
    %v1922 = vsub.f32 %v864, %v1886
    %v1923 = vsub.f32 %v865, %v1887
    %v1924 = vsub.f32 %v866, %v1887
    %v1925 = vsub.f32 %v867, %v1888
    %v1926 = vsub.f32 %v868, %v1888
    %v1927 = vsub.f32 %v869, %v1889
    %v1928 = vsub.f32 %v870, %v1889
    %v1929 = vsub.f32 %v871, %v1890
    %v1930 = vsub.f32 %v872, %v1890
    %v1931 = vsub.f32 %v873, %v1891
    %v1932 = vsub.f32 %v874, %v1891
    %v1933 = vsub.f32 %v875, %v1892
    %v1934 = vsub.f32 %v876, %v1892
    %v1935 = vsub.f32 %v877, %v1893
    %v1936 = vsub.f32 %v878, %v1893
    %v1937 = vsub.f32 %v879, %v1894
    %v1938 = vsub.f32 %v880, %v1894
    %v1939 = vsub.f32 %v881, %v1895
    %v1940 = vsub.f32 %v882, %v1895
    %v1941 = vsub.f32 %v883, %v1896
    %v1942 = vsub.f32 %v884, %v1896
    %v1943 = vsub.f32 %v885, %v1897
    %v1944 = vsub.f32 %v886, %v1897
    %v1945 = vsub.f32 %v887, %v1898
    %v1946 = vsub.f32 %v888, %v1898
    %v1947 = vmul.f32 %v1915, 1.442695
    %v1948 = vpow.pop %v1947
    %v1949 = vmul.f32 %v1916, 1.442695
    %v1950 = vpow.pop %v1949
    %v1951 = vmul.f32 %v1917, 1.442695
    %v1952 = vpow.pop %v1951
    %v1953 = vmul.f32 %v1918, 1.442695
    %v1954 = vpow.pop %v1953
    %v1955 = vmul.f32 %v1919, 1.442695
    %v1956 = vpow.pop %v1955
    %v1957 = vmul.f32 %v1920, 1.442695
    %v1958 = vpow.pop %v1957
    %v1959 = vmul.f32 %v1921, 1.442695
    %v1960 = vpow.pop %v1959
    %v1961 = vmul.f32 %v1922, 1.442695
    %v1962 = vpow.pop %v1961
    %v1963 = vmul.f32 %v1923, 1.442695
    %v1964 = vpow.pop %v1963
    %v1965 = vmul.f32 %v1924, 1.442695
    %v1966 = vpow.pop %v1965
    %v1967 = vmul.f32 %v1925, 1.442695
    %v1968 = vpow.pop %v1967
    %v1969 = vmul.f32 %v1926, 1.442695
    %v1970 = vpow.pop %v1969
    %v1971 = vmul.f32 %v1927, 1.442695
    %v1972 = vpow.pop %v1971
    %v1973 = vmul.f32 %v1928, 1.442695
    %v1974 = vpow.pop %v1973
    %v1975 = vmul.f32 %v1929, 1.442695
    %v1976 = vpow.pop %v1975
    %v1977 = vmul.f32 %v1930, 1.442695
    %v1978 = vpow.pop %v1977
    %v1979 = vmul.f32 %v1931, 1.442695
    %v1980 = vpow.pop %v1979
    %v1981 = vmul.f32 %v1932, 1.442695
    %v1982 = vpow.pop %v1981
    %v1983 = vmul.f32 %v1933, 1.442695
    %v1984 = vpow.pop %v1983
    %v1985 = vmul.f32 %v1934, 1.442695
    %v1986 = vpow.pop %v1985
    %v1987 = vmul.f32 %v1935, 1.442695
    %v1988 = vpow.pop %v1987
    %v1989 = vmul.f32 %v1936, 1.442695
    %v1990 = vpow.pop %v1989
    %v1991 = vmul.f32 %v1937, 1.442695
    %v1992 = vpow.pop %v1991
    %v1993 = vmul.f32 %v1938, 1.442695
    %v1994 = vpow.pop %v1993
    %v1995 = vmul.f32 %v1939, 1.442695
    %v1996 = vpow.pop %v1995
    %v1997 = vmul.f32 %v1940, 1.442695
    %v1998 = vpow.pop %v1997
    %v1999 = vmul.f32 %v1941, 1.442695
    %v2000 = vpow.pop %v1999
    %v2001 = vmul.f32 %v1942, 1.442695
    %v2002 = vpow.pop %v2001
    %v2003 = vmul.f32 %v1943, 1.442695
    %v2004 = vpow.pop %v2003
    %v2005 = vmul.f32 %v1944, 1.442695
    %v2006 = vpow.pop %v2005
    %v2007 = vmul.f32 %v1945, 1.442695
    %v2008 = vpow.pop %v2007
    %v2009 = vmul.f32 %v1946, 1.442695
    %v2010 = vpow.pop %v2009
    %2043 = vset.pattern.permute.xlu0 1
    %2044 = vperm.xlu0 %2043, %v1948
    %v2045 = vpop.permute.xlu0 %2044
    %2046 = vset.pattern.permute.xlu0 1
    %2047 = vperm.xlu0 %2046, %v1950
    %v2048 = vpop.permute.xlu0 %2047
    %2049 = vset.pattern.permute.xlu0 1
    %2050 = vperm.xlu0 %2049, %v1952
    %v2051 = vpop.permute.xlu0 %2050
    %2052 = vset.pattern.permute.xlu0 1
    %2053 = vperm.xlu0 %2052, %v1954
    %v2054 = vpop.permute.xlu0 %2053
    %2055 = vset.pattern.permute.xlu0 1
    %2056 = vperm.xlu0 %2055, %v1956
    %v2057 = vpop.permute.xlu0 %2056
    %2058 = vset.pattern.permute.xlu0 1
    %2059 = vperm.xlu0 %2058, %v1958
    %v2060 = vpop.permute.xlu0 %2059
    %2061 = vset.pattern.permute.xlu0 1
    %2062 = vperm.xlu0 %2061, %v1960
    %v2063 = vpop.permute.xlu0 %2062
    %2064 = vset.pattern.permute.xlu0 1
    %2065 = vperm.xlu0 %2064, %v1962
    %v2066 = vpop.permute.xlu0 %2065
    %2067 = vset.pattern.permute.xlu0 1
    %2068 = vperm.xlu0 %2067, %v1964
    %v2069 = vpop.permute.xlu0 %2068
    %2070 = vset.pattern.permute.xlu0 1
    %2071 = vperm.xlu0 %2070, %v1966
    %v2072 = vpop.permute.xlu0 %2071
    %2073 = vset.pattern.permute.xlu0 1
    %2074 = vperm.xlu0 %2073, %v1968
    %v2075 = vpop.permute.xlu0 %2074
    %2076 = vset.pattern.permute.xlu0 1
    %2077 = vperm.xlu0 %2076, %v1970
    %v2078 = vpop.permute.xlu0 %2077
    %2079 = vset.pattern.permute.xlu0 1
    %2080 = vperm.xlu0 %2079, %v1972
    %v2081 = vpop.permute.xlu0 %2080
    %2082 = vset.pattern.permute.xlu0 1
    %2083 = vperm.xlu0 %2082, %v1974
    %v2084 = vpop.permute.xlu0 %2083
    %2085 = vset.pattern.permute.xlu0 1
    %2086 = vperm.xlu0 %2085, %v1976
    %v2087 = vpop.permute.xlu0 %2086
    %2088 = vset.pattern.permute.xlu0 1
    %2089 = vperm.xlu0 %2088, %v1978
    %v2090 = vpop.permute.xlu0 %2089
    %2091 = vset.pattern.permute.xlu0 1
    %2092 = vperm.xlu0 %2091, %v1980
    %v2093 = vpop.permute.xlu0 %2092
    %2094 = vset.pattern.permute.xlu0 1
    %2095 = vperm.xlu0 %2094, %v1982
    %v2096 = vpop.permute.xlu0 %2095
    %2097 = vset.pattern.permute.xlu0 1
    %2098 = vperm.xlu0 %2097, %v1984
    %v2099 = vpop.permute.xlu0 %2098
    %2100 = vset.pattern.permute.xlu0 1
    %2101 = vperm.xlu0 %2100, %v1986
    %v2102 = vpop.permute.xlu0 %2101
    %2103 = vset.pattern.permute.xlu0 1
    %2104 = vperm.xlu0 %2103, %v1988
    %v2105 = vpop.permute.xlu0 %2104
    %2106 = vset.pattern.permute.xlu0 1
    %2107 = vperm.xlu0 %2106, %v1990
    %v2108 = vpop.permute.xlu0 %2107
    %2109 = vset.pattern.permute.xlu0 1
    %2110 = vperm.xlu0 %2109, %v1992
    %v2111 = vpop.permute.xlu0 %2110
    %2112 = vset.pattern.permute.xlu0 1
    %2113 = vperm.xlu0 %2112, %v1994
    %v2114 = vpop.permute.xlu0 %2113
    %2115 = vset.pattern.permute.xlu0 1
    %2116 = vperm.xlu0 %2115, %v1996
    %v2117 = vpop.permute.xlu0 %2116
    %2118 = vset.pattern.permute.xlu0 1
    %2119 = vperm.xlu0 %2118, %v1998
    %v2120 = vpop.permute.xlu0 %2119
    %2121 = vset.pattern.permute.xlu0 1
    %2122 = vperm.xlu0 %2121, %v2000
    %v2123 = vpop.permute.xlu0 %2122
    %2124 = vset.pattern.permute.xlu0 1
    %2125 = vperm.xlu0 %2124, %v2002
    %v2126 = vpop.permute.xlu0 %2125
    %2127 = vset.pattern.permute.xlu0 1
    %2128 = vperm.xlu0 %2127, %v2004
    %v2129 = vpop.permute.xlu0 %2128
    %2130 = vset.pattern.permute.xlu0 1
    %2131 = vperm.xlu0 %2130, %v2006
    %v2132 = vpop.permute.xlu0 %2131
    %2133 = vset.pattern.permute.xlu0 1
    %2134 = vperm.xlu0 %2133, %v2008
    %v2135 = vpop.permute.xlu0 %2134
    %2136 = vset.pattern.permute.xlu0 1
    %2137 = vperm.xlu0 %2136, %v2010
    %v2138 = vpop.permute.xlu0 %2137
    %v2139 = vperm.slane %v2045, %v1018
    %v2140 = vperm.slane %v2048, %v1020
    %v2141 = vsel %vm1022, %v2140, %v2139
    %v2142 = vperm.slane %v2051, %v1018
    %v2143 = vperm.slane %v2054, %v1020
    %v2144 = vsel %vm1022, %v2143, %v2142
    %v2145 = vperm.slane %v2057, %v1018
    %v2146 = vperm.slane %v2060, %v1020
    %v2147 = vsel %vm1022, %v2146, %v2145
    %v2148 = vperm.slane %v2063, %v1018
    %v2149 = vperm.slane %v2066, %v1020
    %v2150 = vsel %vm1022, %v2149, %v2148
    %v2151 = vperm.slane %v2069, %v1018
    %v2152 = vperm.slane %v2072, %v1020
    %v2153 = vsel %vm1022, %v2152, %v2151
    %v2154 = vperm.slane %v2075, %v1018
    %v2155 = vperm.slane %v2078, %v1020
    %v2156 = vsel %vm1022, %v2155, %v2154
    %v2157 = vperm.slane %v2081, %v1018
    %v2158 = vperm.slane %v2084, %v1020
    %v2159 = vsel %vm1022, %v2158, %v2157
    %v2160 = vperm.slane %v2087, %v1018
    %v2161 = vperm.slane %v2090, %v1020
    %v2162 = vsel %vm1022, %v2161, %v2160
    %v2163 = vperm.slane %v2093, %v1018
    %v2164 = vperm.slane %v2096, %v1020
    %v2165 = vsel %vm1022, %v2164, %v2163
    %v2166 = vperm.slane %v2099, %v1018
    %v2167 = vperm.slane %v2102, %v1020
    %v2168 = vsel %vm1022, %v2167, %v2166
    %v2169 = vperm.slane %v2105, %v1018
    %v2170 = vperm.slane %v2108, %v1020
    %v2171 = vsel %vm1022, %v2170, %v2169
    %v2172 = vperm.slane %v2111, %v1018
    %v2173 = vperm.slane %v2114, %v1020
    %v2174 = vsel %vm1022, %v2173, %v2172
    %v2175 = vperm.slane %v2117, %v1018
    %v2176 = vperm.slane %v2120, %v1020
    %v2177 = vsel %vm1022, %v2176, %v2175
    %v2178 = vperm.slane %v2123, %v1018
    %v2179 = vperm.slane %v2126, %v1020
    %v2180 = vsel %vm1022, %v2179, %v2178
    %v2181 = vperm.slane %v2129, %v1018
    %v2182 = vperm.slane %v2132, %v1020
    %v2183 = vsel %vm1022, %v2182, %v2181
    %v2184 = vperm.slane %v2135, %v1018
    %v2185 = vperm.slane %v2138, %v1020
    %v2186 = vsel %vm1022, %v2185, %v2184
    %v2187 = vsel %vm1069, %v2144, %v2141
    %v2188 = vsel %vm1071, %v2147, %v2187
    %v2189 = vsel %vm1073, %v2150, %v2188
    %v2190 = vsel %vm1075, %v2153, %v2189
    %v2191 = vsel %vm1077, %v2156, %v2190
    %v2192 = vsel %vm1079, %v2159, %v2191
    %v2193 = vsel %vm1081, %v2162, %v2192
    %v2194 = vsel %vm1069, %v2168, %v2165
    %v2195 = vsel %vm1071, %v2171, %v2194
    %v2196 = vsel %vm1073, %v2174, %v2195
    %v2197 = vsel %vm1075, %v2177, %v2196
    %v2198 = vsel %vm1077, %v2180, %v2197
    %v2199 = vsel %vm1079, %v2183, %v2198
    %v2200 = vsel %vm1081, %v2186, %v2199
    %v2203 = vsel %vm437, %v2193, 0.0
    %2204 = vadd.xlane.f32.xlu0 %v2203
    %v2205 = vpop.xlane.xlu0 %2204
    %v2206 = vsel %vm437, %v2200, 0.0
    %2207 = vadd.xlane.f32.xlu0 %v2206
    %v2208 = vpop.xlane.xlu0 %2207
    %v2209 = vmax.f32 %v2205, 1e-20
    %v2210 = vmax.f32 %v2208, 1e-20
    %v2211 = vrcp.pop %v2209
    %v2212 = vrcp.pop %v2210
    %v2215 = vperm.slane %v2211, 0
    %v2216 = vperm.slane %v2211, 1
    %v2217 = vperm.slane %v2211, 2
    %v2218 = vperm.slane %v2211, 3
    %v2219 = vperm.slane %v2211, 4
    %v2220 = vperm.slane %v2211, 5
    %v2221 = vperm.slane %v2211, 6
    %v2222 = vperm.slane %v2211, 7
    %v2223 = vperm.slane %v2212, 0
    %v2224 = vperm.slane %v2212, 1
    %v2225 = vperm.slane %v2212, 2
    %v2226 = vperm.slane %v2212, 3
    %v2227 = vperm.slane %v2212, 4
    %v2228 = vperm.slane %v2212, 5
    %v2229 = vperm.slane %v2212, 6
    %v2230 = vperm.slane %v2212, 7
    %v2247 = vmul.f32 %v1948, %v2215
    %v2248 = vmul.f32 %v1950, %v2215
    %v2249 = vmul.f32 %v1952, %v2216
    %v2250 = vmul.f32 %v1954, %v2216
    %v2251 = vmul.f32 %v1956, %v2217
    %v2252 = vmul.f32 %v1958, %v2217
    %v2253 = vmul.f32 %v1960, %v2218
    %v2254 = vmul.f32 %v1962, %v2218
    %v2255 = vmul.f32 %v1964, %v2219
    %v2256 = vmul.f32 %v1966, %v2219
    %v2257 = vmul.f32 %v1968, %v2220
    %v2258 = vmul.f32 %v1970, %v2220
    %v2259 = vmul.f32 %v1972, %v2221
    %v2260 = vmul.f32 %v1974, %v2221
    %v2261 = vmul.f32 %v1976, %v2222
    %v2262 = vmul.f32 %v1978, %v2222
    %v2263 = vmul.f32 %v1980, %v2223
    %v2264 = vmul.f32 %v1982, %v2223
    %v2265 = vmul.f32 %v1984, %v2224
    %v2266 = vmul.f32 %v1986, %v2224
    %v2267 = vmul.f32 %v1988, %v2225
    %v2268 = vmul.f32 %v1990, %v2225
    %v2269 = vmul.f32 %v1992, %v2226
    %v2270 = vmul.f32 %v1994, %v2226
    %v2271 = vmul.f32 %v1996, %v2227
    %v2272 = vmul.f32 %v1998, %v2227
    %v2273 = vmul.f32 %v2000, %v2228
    %v2274 = vmul.f32 %v2002, %v2228
    %v2275 = vmul.f32 %v2004, %v2229
    %v2276 = vmul.f32 %v2006, %v2229
    %v2277 = vmul.f32 %v2008, %v2230
    %v2278 = vmul.f32 %v2010, %v2230
    %2311 = vset.pattern.permute.xlu0 1
    %2312 = vperm.xlu0 %2311, %v2247
    %v2313 = vpop.permute.xlu0 %2312
    %2314 = vset.pattern.permute.xlu0 1
    %2315 = vperm.xlu0 %2314, %v2248
    %v2316 = vpop.permute.xlu0 %2315
    %2317 = vset.pattern.permute.xlu0 1
    %2318 = vperm.xlu0 %2317, %v2249
    %v2319 = vpop.permute.xlu0 %2318
    %2320 = vset.pattern.permute.xlu0 1
    %2321 = vperm.xlu0 %2320, %v2250
    %v2322 = vpop.permute.xlu0 %2321
    %2323 = vset.pattern.permute.xlu0 1
    %2324 = vperm.xlu0 %2323, %v2251
    %v2325 = vpop.permute.xlu0 %2324
    %2326 = vset.pattern.permute.xlu0 1
    %2327 = vperm.xlu0 %2326, %v2252
    %v2328 = vpop.permute.xlu0 %2327
    %2329 = vset.pattern.permute.xlu0 1
    %2330 = vperm.xlu0 %2329, %v2253
    %v2331 = vpop.permute.xlu0 %2330
    %2332 = vset.pattern.permute.xlu0 1
    %2333 = vperm.xlu0 %2332, %v2254
    %v2334 = vpop.permute.xlu0 %2333
    %2335 = vset.pattern.permute.xlu0 1
    %2336 = vperm.xlu0 %2335, %v2255
    %v2337 = vpop.permute.xlu0 %2336
    %2338 = vset.pattern.permute.xlu0 1
    %2339 = vperm.xlu0 %2338, %v2256
    %v2340 = vpop.permute.xlu0 %2339
    %2341 = vset.pattern.permute.xlu0 1
    %2342 = vperm.xlu0 %2341, %v2257
    %v2343 = vpop.permute.xlu0 %2342
    %2344 = vset.pattern.permute.xlu0 1
    %2345 = vperm.xlu0 %2344, %v2258
    %v2346 = vpop.permute.xlu0 %2345
    %2347 = vset.pattern.permute.xlu0 1
    %2348 = vperm.xlu0 %2347, %v2259
    %v2349 = vpop.permute.xlu0 %2348
    %2350 = vset.pattern.permute.xlu0 1
    %2351 = vperm.xlu0 %2350, %v2260
    %v2352 = vpop.permute.xlu0 %2351
    %2353 = vset.pattern.permute.xlu0 1
    %2354 = vperm.xlu0 %2353, %v2261
    %v2355 = vpop.permute.xlu0 %2354
    %2356 = vset.pattern.permute.xlu0 1
    %2357 = vperm.xlu0 %2356, %v2262
    %v2358 = vpop.permute.xlu0 %2357
    %2359 = vset.pattern.permute.xlu0 1
    %2360 = vperm.xlu0 %2359, %v2263
    %v2361 = vpop.permute.xlu0 %2360
    %2362 = vset.pattern.permute.xlu0 1
    %2363 = vperm.xlu0 %2362, %v2264
    %v2364 = vpop.permute.xlu0 %2363
    %2365 = vset.pattern.permute.xlu0 1
    %2366 = vperm.xlu0 %2365, %v2265
    %v2367 = vpop.permute.xlu0 %2366
    %2368 = vset.pattern.permute.xlu0 1
    %2369 = vperm.xlu0 %2368, %v2266
    %v2370 = vpop.permute.xlu0 %2369
    %2371 = vset.pattern.permute.xlu0 1
    %2372 = vperm.xlu0 %2371, %v2267
    %v2373 = vpop.permute.xlu0 %2372
    %2374 = vset.pattern.permute.xlu0 1
    %2375 = vperm.xlu0 %2374, %v2268
    %v2376 = vpop.permute.xlu0 %2375
    %2377 = vset.pattern.permute.xlu0 1
    %2378 = vperm.xlu0 %2377, %v2269
    %v2379 = vpop.permute.xlu0 %2378
    %2380 = vset.pattern.permute.xlu0 1
    %2381 = vperm.xlu0 %2380, %v2270
    %v2382 = vpop.permute.xlu0 %2381
    %2383 = vset.pattern.permute.xlu0 1
    %2384 = vperm.xlu0 %2383, %v2271
    %v2385 = vpop.permute.xlu0 %2384
    %2386 = vset.pattern.permute.xlu0 1
    %2387 = vperm.xlu0 %2386, %v2272
    %v2388 = vpop.permute.xlu0 %2387
    %2389 = vset.pattern.permute.xlu0 1
    %2390 = vperm.xlu0 %2389, %v2273
    %v2391 = vpop.permute.xlu0 %2390
    %2392 = vset.pattern.permute.xlu0 1
    %2393 = vperm.xlu0 %2392, %v2274
    %v2394 = vpop.permute.xlu0 %2393
    %2395 = vset.pattern.permute.xlu0 1
    %2396 = vperm.xlu0 %2395, %v2275
    %v2397 = vpop.permute.xlu0 %2396
    %2398 = vset.pattern.permute.xlu0 1
    %2399 = vperm.xlu0 %2398, %v2276
    %v2400 = vpop.permute.xlu0 %2399
    %2401 = vset.pattern.permute.xlu0 1
    %2402 = vperm.xlu0 %2401, %v2277
    %v2403 = vpop.permute.xlu0 %2402
    %2404 = vset.pattern.permute.xlu0 1
    %2405 = vperm.xlu0 %2404, %v2278
    %v2406 = vpop.permute.xlu0 %2405
    %v2407 = vperm.slane %v2313, %v1018
    %v2408 = vperm.slane %v2316, %v1020
    %v2409 = vsel %vm1022, %v2408, %v2407
    %v2410 = vperm.slane %v2319, %v1018
    %v2411 = vperm.slane %v2322, %v1020
    %v2412 = vsel %vm1022, %v2411, %v2410
    %v2413 = vperm.slane %v2325, %v1018
    %v2414 = vperm.slane %v2328, %v1020
    %v2415 = vsel %vm1022, %v2414, %v2413
    %v2416 = vperm.slane %v2331, %v1018
    %v2417 = vperm.slane %v2334, %v1020
    %v2418 = vsel %vm1022, %v2417, %v2416
    %v2419 = vperm.slane %v2337, %v1018
    %v2420 = vperm.slane %v2340, %v1020
    %v2421 = vsel %vm1022, %v2420, %v2419
    %v2422 = vperm.slane %v2343, %v1018
    %v2423 = vperm.slane %v2346, %v1020
    %v2424 = vsel %vm1022, %v2423, %v2422
    %v2425 = vperm.slane %v2349, %v1018
    %v2426 = vperm.slane %v2352, %v1020
    %v2427 = vsel %vm1022, %v2426, %v2425
    %v2428 = vperm.slane %v2355, %v1018
    %v2429 = vperm.slane %v2358, %v1020
    %v2430 = vsel %vm1022, %v2429, %v2428
    %v2431 = vperm.slane %v2361, %v1018
    %v2432 = vperm.slane %v2364, %v1020
    %v2433 = vsel %vm1022, %v2432, %v2431
    %v2434 = vperm.slane %v2367, %v1018
    %v2435 = vperm.slane %v2370, %v1020
    %v2436 = vsel %vm1022, %v2435, %v2434
    %v2437 = vperm.slane %v2373, %v1018
    %v2438 = vperm.slane %v2376, %v1020
    %v2439 = vsel %vm1022, %v2438, %v2437
    %v2440 = vperm.slane %v2379, %v1018
    %v2441 = vperm.slane %v2382, %v1020
    %v2442 = vsel %vm1022, %v2441, %v2440
    %v2443 = vperm.slane %v2385, %v1018
    %v2444 = vperm.slane %v2388, %v1020
    %v2445 = vsel %vm1022, %v2444, %v2443
    %v2446 = vperm.slane %v2391, %v1018
    %v2447 = vperm.slane %v2394, %v1020
    %v2448 = vsel %vm1022, %v2447, %v2446
    %v2449 = vperm.slane %v2397, %v1018
    %v2450 = vperm.slane %v2400, %v1020
    %v2451 = vsel %vm1022, %v2450, %v2449
    %v2452 = vperm.slane %v2403, %v1018
    %v2453 = vperm.slane %v2406, %v1020
    %v2454 = vsel %vm1022, %v2453, %v2452
    %v2455 = vsel %vm1069, %v2412, %v2409
    %v2456 = vsel %vm1071, %v2415, %v2455
    %v2457 = vsel %vm1073, %v2418, %v2456
    %v2458 = vsel %vm1075, %v2421, %v2457
    %v2459 = vsel %vm1077, %v2424, %v2458
    %v2460 = vsel %vm1079, %v2427, %v2459
    %v2461 = vsel %vm1081, %v2430, %v2460
    %v2462 = vsel %vm1069, %v2436, %v2433
    %v2463 = vsel %vm1071, %v2439, %v2462
    %v2464 = vsel %vm1073, %v2442, %v2463
    %v2465 = vsel %vm1075, %v2445, %v2464
    %v2466 = vsel %vm1077, %v2448, %v2465
    %v2467 = vsel %vm1079, %v2451, %v2466
    %v2468 = vsel %vm1081, %v2454, %v2467
    %2469 = vrot.lane.b32.xlu0 %v146, 120
    %v2470 = vpop.permute.xlu0 %2469
    %2471 = vrot.lane.b32.xlu0 %v147, 120
    %v2472 = vpop.permute.xlu0 %2471
    %v2475 = vsel %vm437, %v2461, 0
    %v2477 = vsel %vm437, %v2468, 0
    %2479 = vmatpush.msra.mxu0 0.0
    %2480 = vmatpush.msra.mxu0 0.0
    %2481 = vmatpush.msra.mxu0 0.0
    %2482 = vmatpush.msra.mxu0 0.0
    %2483 = vmatpush.msra.mxu0 0.0
    %2484 = vmatpush.msra.mxu0 0.0
    %2485 = vmatpush.msra.mxu0 0.0
    %2486 = vmatpush.msra.mxu0 0.0
    %2487 = vmatpush.msra.mxu0 0.0
    %2488 = vmatpush.msra.mxu0 0.0
    %2489 = vmatpush.msra.mxu0 0.0
    %2490 = vmatpush.msra.mxu0 0.0
    %2491 = vmatpush.msra.mxu0 0.0
    %2492 = vmatpush.msra.mxu0 0.0
    %2493 = vmatpush.msra.mxu0 %v2472
    %2494 = vmatpush.msra.mxu0 %v2470
    %2495 = vmatmul.f32.gmra.mxu0 %v2475
    %v2496 = vpop.f32.mrf.mxu0
    %v2497 = vadd.f32 0.0, %v2496
    %2498 = vmatmul.f32.gmra.mxu0 %v2477
    %v2499 = vpop.f32.mrf.mxu0
    %v2500 = vadd.f32 0.0, %v2499
    %2501 = vdwg.mxu0
    %2504 = vrot.lane.b32.xlu0 %v2497, 8
    %v2505 = vpop.permute.xlu0 %2504
    %2506 = vrot.lane.b32.xlu0 %v2500, 8
    %v2507 = vpop.permute.xlu0 %2506
    %2510 = vst.msk [vmem:[#allocation2] sm:$0xff] %vm1022, %v2505
    %2511 = vst.msk [vmem:[#allocation2 + $0x8] sm:$0xff] %vm1022, %v2507
    %v2512 = vld [vmem:[#allocation2] sm:$0xff]
    %v2513 = vld [vmem:[#allocation2 + $0x8] sm:$0xff]
    %v2514 = vperm.slane %v113, 2
    %v2515 = vadd.f32 %v2512, %v2514
    %v2516 = vadd.f32 %v2513, %v2514
    %v2518 = vsel %vm437, %v108, 0
    %v2521 = vsel %vm437, %v109, 0
    %2523 = vmatpush.msra.mxu0 0.0
    %2524 = vmatpush.msra.mxu0 0.0
    %2525 = vmatpush.msra.mxu0 0.0
    %2526 = vmatpush.msra.mxu0 0.0
    %2527 = vmatpush.msra.mxu0 0.0
    %2528 = vmatpush.msra.mxu0 0.0
    %2529 = vmatpush.msra.mxu0 0.0
    %2530 = vmatpush.msra.mxu0 0.0
    %2531 = vmatpush.msra.mxu0 0.0
    %2532 = vmatpush.msra.mxu0 0.0
    %2533 = vmatpush.msra.mxu0 0.0
    %2534 = vmatpush.msra.mxu0 0.0
    %2535 = vmatpush.msra.mxu0 0.0
    %2536 = vmatpush.msra.mxu0 0.0
    %2537 = vmatpush.msra.mxu0 %v2516
    %2538 = vmatpush.msra.mxu0 %v2515
    %2539 = vmatmul.f32.gmra.mxu0 %v2518
    %v2540 = vpop.f32.mrf.mxu0
    %v2541 = vadd.f32 0.0, %v2540
    %2542 = vmatmul.f32.gmra.mxu0 %v2521
    %v2543 = vpop.f32.mrf.mxu0
    %v2544 = vadd.f32 0.0, %v2543
    %2545 = vdwg.mxu0
    %v2546 = vperm.slane %v113, 5
    %v2547 = vmul.f32 %v2546, %v2541
    %v2548 = vmul.f32 %v2546, %v2544
    %v2549 = vsub.f32 %v2515, %v2547
    %v2550 = vsub.f32 %v2516, %v2548
    %v2551 = vmul.f32 %v2549, %v2549
    %v2552 = vmul.f32 %v2550, %v2550
    %v2553 = vperm.slane %v113, 3
    %v2554 = vmul.f32 %v2553, %v2549
    %v2555 = vmul.f32 %v2553, %v2550
    %2556 = vmatpush.msra.mxu0 0.0
    %2557 = vmatpush.msra.mxu0 0.0
    %2558 = vmatpush.msra.mxu0 0.0
    %2559 = vmatpush.msra.mxu0 0.0
    %2560 = vmatpush.msra.mxu0 0.0
    %2561 = vmatpush.msra.mxu0 0.0
    %2562 = vmatpush.msra.mxu0 0.0
    %2563 = vmatpush.msra.mxu0 0.0
    %2564 = vmatpush.msra.mxu0 0.0
    %2565 = vmatpush.msra.mxu0 0.0
    %2566 = vmatpush.msra.mxu0 0.0
    %2567 = vmatpush.msra.mxu0 0.0
    %2568 = vmatpush.msra.mxu0 0.0
    %2569 = vmatpush.msra.mxu0 0.0
    %2570 = vmatpush.msra.mxu0 %v2552
    %2571 = vmatpush.msra.mxu0 %v2551
    %2572 = vmatmul.f32.gmra.mxu0 %v2518
    %v2573 = vpop.f32.mrf.mxu0
    %v2574 = vadd.f32 1e-05, %v2573
    %2575 = vmatmul.f32.gmra.mxu0 %v2521
    %v2576 = vpop.f32.mrf.mxu0
    %v2577 = vadd.f32 1e-05, %v2576
    %2578 = vdwg.mxu0
    %v2579 = vrsqrt.pop %v2574
    %v2580 = vmul.f32 %v2579, %v2574
    %v2581 = vmul.f32 %v2580, %v2579
    %v2582 = vmul.f32 0.5, %v2581
    %v2583 = vsub.f32 1.5, %v2582
    %v2584 = vmul.f32 %v2579, %v2583
    %vm2585 = vweird.f32 %v2574
    %vm2586 = vweird.f32 %v2579
    %vm2587 = vmor %vm2585, %vm2586
    %v2588 = vsel %vm2587, %v2579, %v2584
    %v2589 = vrsqrt.pop %v2577
    %v2590 = vmul.f32 %v2589, %v2577
    %v2591 = vmul.f32 %v2590, %v2589
    %v2592 = vmul.f32 0.5, %v2591
    %v2593 = vsub.f32 1.5, %v2592
    %v2594 = vmul.f32 %v2589, %v2593
    %vm2595 = vweird.f32 %v2577
    %vm2596 = vweird.f32 %v2589
    %vm2597 = vmor %vm2595, %vm2596
    %v2598 = vsel %vm2597, %v2589, %v2594
    %v2599 = vmul.f32 %v2554, %v2588
    %v2600 = vmul.f32 %v2555, %v2598
    %v2601 = vperm.slane %v113, 4
    %v2602 = vadd.f32 %v2599, %v2601
    %v2603 = vadd.f32 %v2600, %v2601
    %v2604 = vmax.f32 %v2602, 0.0
    %v2605 = vmax.f32 %v2603, 0.0
    %v2606 = vld [vmem:[#allocation8] sm:$0xff]
    %v2607 = vld [vmem:[%s7] sm:$0xff]
    %v2608 = vld [vmem:[%s7 + $0x8] sm:$0xff]
    %v2610 = vsel %vm437, %v2604, 0
    %v2613 = vsel %vm437, %v2605, 0
    %2615 = vmatpush.msra.mxu0 0.0
    %2616 = vmatpush.msra.mxu0 0.0
    %2617 = vmatpush.msra.mxu0 0.0
    %2618 = vmatpush.msra.mxu0 0.0
    %2619 = vmatpush.msra.mxu0 0.0
    %2620 = vmatpush.msra.mxu0 0.0
    %2621 = vmatpush.msra.mxu0 0.0
    %2622 = vmatpush.msra.mxu0 0.0
    %2623 = vmatpush.msra.mxu0 0.0
    %2624 = vmatpush.msra.mxu0 0.0
    %2625 = vmatpush.msra.mxu0 0.0
    %2626 = vmatpush.msra.mxu0 0.0
    %2627 = vmatpush.msra.mxu0 0.0
    %2628 = vmatpush.msra.mxu0 0.0
    %2629 = vmatpush.msra.mxu0 %v2608
    %2630 = vmatpush.msra.mxu0 %v2607
    %2631 = vmatmul.f32.gmra.mxu0 %v2610
    %v2632 = vpop.f32.mrf.mxu0
    %v2633 = vadd.f32 0.0, %v2632
    %2634 = vmatmul.f32.gmra.mxu0 %v2613
    %v2635 = vpop.f32.mrf.mxu0
    %v2636 = vadd.f32 0.0, %v2635
    %2637 = vdwg.mxu0
    %v2638 = vperm.slane %v2606, 0
    %v2639 = vadd.f32 %v2633, %v2638
    %v2640 = vadd.f32 %v2636, %v2638
    %v2641 = vperm.slane %v2606, 1
    %2643 = vrot.lane.b32.xlu0 %v2641, 16
    %v2644 = vpop.permute.xlu0 %2643
    %v2646 = vadd.f32 %v2633, %v2644
    %v2647 = vadd.f32 %v2636, %v2644
    %v2650 = vrot.slane %v2646, 1
    %v2651 = vrot.slane %v2646, 2
    %v2652 = vrot.slane %v2646, 3
    %v2653 = vrot.slane %v2646, 4
    %v2654 = vrot.slane %v2646, 5
    %v2655 = vrot.slane %v2646, 6
    %v2656 = vrot.slane %v2646, 7
    %v2657 = vrot.slane %v2647, 1
    %v2658 = vrot.slane %v2647, 2
    %v2659 = vrot.slane %v2647, 3
    %v2660 = vrot.slane %v2647, 4
    %v2661 = vrot.slane %v2647, 5
    %v2662 = vrot.slane %v2647, 6
    %v2663 = vrot.slane %v2647, 7
    %v2664 = vperm.slane %v2646, 0
    %v2665 = vperm.slane %v2650, 0
    %v2666 = vperm.slane %v2651, 0
    %v2667 = vperm.slane %v2652, 0
    %v2668 = vperm.slane %v2653, 0
    %v2669 = vperm.slane %v2654, 0
    %v2670 = vperm.slane %v2655, 0
    %v2671 = vperm.slane %v2656, 0
    %v2672 = vperm.slane %v2647, 0
    %v2673 = vperm.slane %v2657, 0
    %v2674 = vperm.slane %v2658, 0
    %v2675 = vperm.slane %v2659, 0
    %v2676 = vperm.slane %v2660, 0
    %v2677 = vperm.slane %v2661, 0
    %v2678 = vperm.slane %v2662, 0
    %v2679 = vperm.slane %v2663, 0
    %2698 = vrot.lane.b32.xlu0 %v2639, 16
    %v2699 = vpop.permute.xlu0 %2698
    %2700 = vrot.lane.b32.xlu0 %v2640, 16
    %v2701 = vpop.permute.xlu0 %2700
    %v2704 = vadd.f32 %v2664, %v2699
    %v2705 = vadd.f32 %v2664, %v2701
    %v2706 = vadd.f32 %v2665, %v2699
    %v2707 = vadd.f32 %v2665, %v2701
    %v2708 = vadd.f32 %v2666, %v2699
    %v2709 = vadd.f32 %v2666, %v2701
    %v2710 = vadd.f32 %v2667, %v2699
    %v2711 = vadd.f32 %v2667, %v2701
    %v2712 = vadd.f32 %v2668, %v2699
    %v2713 = vadd.f32 %v2668, %v2701
    %v2714 = vadd.f32 %v2669, %v2699
    %v2715 = vadd.f32 %v2669, %v2701
    %v2716 = vadd.f32 %v2670, %v2699
    %v2717 = vadd.f32 %v2670, %v2701
    %v2718 = vadd.f32 %v2671, %v2699
    %v2719 = vadd.f32 %v2671, %v2701
    %v2720 = vadd.f32 %v2672, %v2699
    %v2721 = vadd.f32 %v2672, %v2701
    %v2722 = vadd.f32 %v2673, %v2699
    %v2723 = vadd.f32 %v2673, %v2701
    %v2724 = vadd.f32 %v2674, %v2699
    %v2725 = vadd.f32 %v2674, %v2701
    %v2726 = vadd.f32 %v2675, %v2699
    %v2727 = vadd.f32 %v2675, %v2701
    %v2728 = vadd.f32 %v2676, %v2699
    %v2729 = vadd.f32 %v2676, %v2701
    %v2730 = vadd.f32 %v2677, %v2699
    %v2731 = vadd.f32 %v2677, %v2701
    %v2732 = vadd.f32 %v2678, %v2699
    %v2733 = vadd.f32 %v2678, %v2701
    %v2734 = vadd.f32 %v2679, %v2699
    %v2735 = vadd.f32 %v2679, %v2701
    %vm2736 = vcmp.gt.f32.partialorder %v2704, 0.0
    %vm2737 = vcmp.gt.f32.partialorder %v2705, 0.0
    %vm2738 = vcmp.gt.f32.partialorder %v2706, 0.0
    %vm2739 = vcmp.gt.f32.partialorder %v2707, 0.0
    %vm2740 = vcmp.gt.f32.partialorder %v2708, 0.0
    %vm2741 = vcmp.gt.f32.partialorder %v2709, 0.0
    %vm2742 = vcmp.gt.f32.partialorder %v2710, 0.0
    %vm2743 = vcmp.gt.f32.partialorder %v2711, 0.0
    %vm2744 = vcmp.gt.f32.partialorder %v2712, 0.0
    %vm2745 = vcmp.gt.f32.partialorder %v2713, 0.0
    %vm2746 = vcmp.gt.f32.partialorder %v2714, 0.0
    %vm2747 = vcmp.gt.f32.partialorder %v2715, 0.0
    %vm2748 = vcmp.gt.f32.partialorder %v2716, 0.0
    %vm2749 = vcmp.gt.f32.partialorder %v2717, 0.0
    %vm2750 = vcmp.gt.f32.partialorder %v2718, 0.0
    %vm2751 = vcmp.gt.f32.partialorder %v2719, 0.0
    %vm2752 = vcmp.gt.f32.partialorder %v2720, 0.0
    %vm2753 = vcmp.gt.f32.partialorder %v2721, 0.0
    %vm2754 = vcmp.gt.f32.partialorder %v2722, 0.0
    %vm2755 = vcmp.gt.f32.partialorder %v2723, 0.0
    %vm2756 = vcmp.gt.f32.partialorder %v2724, 0.0
    %vm2757 = vcmp.gt.f32.partialorder %v2725, 0.0
    %vm2758 = vcmp.gt.f32.partialorder %v2726, 0.0
    %vm2759 = vcmp.gt.f32.partialorder %v2727, 0.0
    %vm2760 = vcmp.gt.f32.partialorder %v2728, 0.0
    %vm2761 = vcmp.gt.f32.partialorder %v2729, 0.0
    %vm2762 = vcmp.gt.f32.partialorder %v2730, 0.0
    %vm2763 = vcmp.gt.f32.partialorder %v2731, 0.0
    %vm2764 = vcmp.gt.f32.partialorder %v2732, 0.0
    %vm2765 = vcmp.gt.f32.partialorder %v2733, 0.0
    %vm2766 = vcmp.gt.f32.partialorder %v2734, 0.0
    %vm2767 = vcmp.gt.f32.partialorder %v2735, 0.0
    %v2768 = vmul.f32 %v2704, 0.2
    %v2769 = vmul.f32 %v2705, 0.2
    %v2770 = vmul.f32 %v2706, 0.2
    %v2771 = vmul.f32 %v2707, 0.2
    %v2772 = vmul.f32 %v2708, 0.2
    %v2773 = vmul.f32 %v2709, 0.2
    %v2774 = vmul.f32 %v2710, 0.2
    %v2775 = vmul.f32 %v2711, 0.2
    %v2776 = vmul.f32 %v2712, 0.2
    %v2777 = vmul.f32 %v2713, 0.2
    %v2778 = vmul.f32 %v2714, 0.2
    %v2779 = vmul.f32 %v2715, 0.2
    %v2780 = vmul.f32 %v2716, 0.2
    %v2781 = vmul.f32 %v2717, 0.2
    %v2782 = vmul.f32 %v2718, 0.2
    %v2783 = vmul.f32 %v2719, 0.2
    %v2784 = vmul.f32 %v2720, 0.2
    %v2785 = vmul.f32 %v2721, 0.2
    %v2786 = vmul.f32 %v2722, 0.2
    %v2787 = vmul.f32 %v2723, 0.2
    %v2788 = vmul.f32 %v2724, 0.2
    %v2789 = vmul.f32 %v2725, 0.2
    %v2790 = vmul.f32 %v2726, 0.2
    %v2791 = vmul.f32 %v2727, 0.2
    %v2792 = vmul.f32 %v2728, 0.2
    %v2793 = vmul.f32 %v2729, 0.2
    %v2794 = vmul.f32 %v2730, 0.2
    %v2795 = vmul.f32 %v2731, 0.2
    %v2796 = vmul.f32 %v2732, 0.2
    %v2797 = vmul.f32 %v2733, 0.2
    %v2798 = vmul.f32 %v2734, 0.2
    %v2799 = vmul.f32 %v2735, 0.2
    %v2800 = vsel %vm2736, %v2704, %v2768
    %v2801 = vsel %vm2737, %v2705, %v2769
    %v2802 = vsel %vm2738, %v2706, %v2770
    %v2803 = vsel %vm2739, %v2707, %v2771
    %v2804 = vsel %vm2740, %v2708, %v2772
    %v2805 = vsel %vm2741, %v2709, %v2773
    %v2806 = vsel %vm2742, %v2710, %v2774
    %v2807 = vsel %vm2743, %v2711, %v2775
    %v2808 = vsel %vm2744, %v2712, %v2776
    %v2809 = vsel %vm2745, %v2713, %v2777
    %v2810 = vsel %vm2746, %v2714, %v2778
    %v2811 = vsel %vm2747, %v2715, %v2779
    %v2812 = vsel %vm2748, %v2716, %v2780
    %v2813 = vsel %vm2749, %v2717, %v2781
    %v2814 = vsel %vm2750, %v2718, %v2782
    %v2815 = vsel %vm2751, %v2719, %v2783
    %v2816 = vsel %vm2752, %v2720, %v2784
    %v2817 = vsel %vm2753, %v2721, %v2785
    %v2818 = vsel %vm2754, %v2722, %v2786
    %v2819 = vsel %vm2755, %v2723, %v2787
    %v2820 = vsel %vm2756, %v2724, %v2788
    %v2821 = vsel %vm2757, %v2725, %v2789
    %v2822 = vsel %vm2758, %v2726, %v2790
    %v2823 = vsel %vm2759, %v2727, %v2791
    %v2824 = vsel %vm2760, %v2728, %v2792
    %v2825 = vsel %vm2761, %v2729, %v2793
    %v2826 = vsel %vm2762, %v2730, %v2794
    %v2827 = vsel %vm2763, %v2731, %v2795
    %v2828 = vsel %vm2764, %v2732, %v2796
    %v2829 = vsel %vm2765, %v2733, %v2797
    %v2830 = vsel %vm2766, %v2734, %v2798
    %v2831 = vsel %vm2767, %v2735, %v2799
    %v2832 = vld [vmem:[%s9] sm:$0xff]
    %v2833 = vld [vmem:[%s9 + $0x8] sm:$0xff]
    %2866 = vrot.lane.b32.xlu0 %v2800, 112
    %v2867 = vpop.permute.xlu0 %2866
    %2868 = vrot.lane.b32.xlu0 %v2801, 112
    %v2869 = vpop.permute.xlu0 %2868
    %2870 = vrot.lane.b32.xlu0 %v2802, 112
    %v2871 = vpop.permute.xlu0 %2870
    %2872 = vrot.lane.b32.xlu0 %v2803, 112
    %v2873 = vpop.permute.xlu0 %2872
    %2874 = vrot.lane.b32.xlu0 %v2804, 112
    %v2875 = vpop.permute.xlu0 %2874
    %2876 = vrot.lane.b32.xlu0 %v2805, 112
    %v2877 = vpop.permute.xlu0 %2876
    %2878 = vrot.lane.b32.xlu0 %v2806, 112
    %v2879 = vpop.permute.xlu0 %2878
    %2880 = vrot.lane.b32.xlu0 %v2807, 112
    %v2881 = vpop.permute.xlu0 %2880
    %2882 = vrot.lane.b32.xlu0 %v2808, 112
    %v2883 = vpop.permute.xlu0 %2882
    %2884 = vrot.lane.b32.xlu0 %v2809, 112
    %v2885 = vpop.permute.xlu0 %2884
    %2886 = vrot.lane.b32.xlu0 %v2810, 112
    %v2887 = vpop.permute.xlu0 %2886
    %2888 = vrot.lane.b32.xlu0 %v2811, 112
    %v2889 = vpop.permute.xlu0 %2888
    %2890 = vrot.lane.b32.xlu0 %v2812, 112
    %v2891 = vpop.permute.xlu0 %2890
    %2892 = vrot.lane.b32.xlu0 %v2813, 112
    %v2893 = vpop.permute.xlu0 %2892
    %2894 = vrot.lane.b32.xlu0 %v2814, 112
    %v2895 = vpop.permute.xlu0 %2894
    %2896 = vrot.lane.b32.xlu0 %v2815, 112
    %v2897 = vpop.permute.xlu0 %2896
    %2898 = vrot.lane.b32.xlu0 %v2816, 112
    %v2899 = vpop.permute.xlu0 %2898
    %2900 = vrot.lane.b32.xlu0 %v2817, 112
    %v2901 = vpop.permute.xlu0 %2900
    %2902 = vrot.lane.b32.xlu0 %v2818, 112
    %v2903 = vpop.permute.xlu0 %2902
    %2904 = vrot.lane.b32.xlu0 %v2819, 112
    %v2905 = vpop.permute.xlu0 %2904
    %2906 = vrot.lane.b32.xlu0 %v2820, 112
    %v2907 = vpop.permute.xlu0 %2906
    %2908 = vrot.lane.b32.xlu0 %v2821, 112
    %v2909 = vpop.permute.xlu0 %2908
    %2910 = vrot.lane.b32.xlu0 %v2822, 112
    %v2911 = vpop.permute.xlu0 %2910
    %2912 = vrot.lane.b32.xlu0 %v2823, 112
    %v2913 = vpop.permute.xlu0 %2912
    %2914 = vrot.lane.b32.xlu0 %v2824, 112
    %v2915 = vpop.permute.xlu0 %2914
    %2916 = vrot.lane.b32.xlu0 %v2825, 112
    %v2917 = vpop.permute.xlu0 %2916
    %2918 = vrot.lane.b32.xlu0 %v2826, 112
    %v2919 = vpop.permute.xlu0 %2918
    %2920 = vrot.lane.b32.xlu0 %v2827, 112
    %v2921 = vpop.permute.xlu0 %2920
    %2922 = vrot.lane.b32.xlu0 %v2828, 112
    %v2923 = vpop.permute.xlu0 %2922
    %2924 = vrot.lane.b32.xlu0 %v2829, 112
    %v2925 = vpop.permute.xlu0 %2924
    %2926 = vrot.lane.b32.xlu0 %v2830, 112
    %v2927 = vpop.permute.xlu0 %2926
    %2928 = vrot.lane.b32.xlu0 %v2831, 112
    %v2929 = vpop.permute.xlu0 %2928
    %v2930 = vsel %vm437, %v2867, 0
    %v2932 = vsel %vm437, %v2869, 0
    %v2934 = vsel %vm437, %v2871, 0
    %v2936 = vsel %vm437, %v2873, 0
    %v2938 = vsel %vm437, %v2875, 0
    %v2940 = vsel %vm437, %v2877, 0
    %v2942 = vsel %vm437, %v2879, 0
    %v2944 = vsel %vm437, %v2881, 0
    %v2946 = vsel %vm437, %v2883, 0
    %v2948 = vsel %vm437, %v2885, 0
    %v2950 = vsel %vm437, %v2887, 0
    %v2952 = vsel %vm437, %v2889, 0
    %v2954 = vsel %vm437, %v2891, 0
    %v2956 = vsel %vm437, %v2893, 0
    %v2958 = vsel %vm437, %v2895, 0
    %v2960 = vsel %vm437, %v2897, 0
    %v2962 = vsel %vm437, %v2899, 0
    %v2964 = vsel %vm437, %v2901, 0
    %v2966 = vsel %vm437, %v2903, 0
    %v2968 = vsel %vm437, %v2905, 0
    %v2970 = vsel %vm437, %v2907, 0
    %v2972 = vsel %vm437, %v2909, 0
    %v2974 = vsel %vm437, %v2911, 0
    %v2976 = vsel %vm437, %v2913, 0
    %v2978 = vsel %vm437, %v2915, 0
    %v2980 = vsel %vm437, %v2917, 0
    %v2982 = vsel %vm437, %v2919, 0
    %v2984 = vsel %vm437, %v2921, 0
    %v2986 = vsel %vm437, %v2923, 0
    %v2988 = vsel %vm437, %v2925, 0
    %v2990 = vsel %vm437, %v2927, 0
    %v2992 = vsel %vm437, %v2929, 0
    %2994 = vmatpush.msra.mxu0 0.0
    %2995 = vmatpush.msra.mxu0 0.0
    %2996 = vmatpush.msra.mxu0 0.0
    %2997 = vmatpush.msra.mxu0 0.0
    %2998 = vmatpush.msra.mxu0 0.0
    %2999 = vmatpush.msra.mxu0 0.0
    %3000 = vmatpush.msra.mxu0 0.0
    %3001 = vmatpush.msra.mxu0 0.0
    %3002 = vmatpush.msra.mxu0 0.0
    %3003 = vmatpush.msra.mxu0 0.0
    %3004 = vmatpush.msra.mxu0 0.0
    %3005 = vmatpush.msra.mxu0 0.0
    %3006 = vmatpush.msra.mxu0 0.0
    %3007 = vmatpush.msra.mxu0 0.0
    %3008 = vmatpush.msra.mxu0 %v2833
    %3009 = vmatpush.msra.mxu0 %v2832
    %3010 = vmatmul.f32.gmra.mxu0 %v2930
    %v3011 = vpop.f32.mrf.mxu0
    %v3012 = vadd.f32 0.0, %v3011
    %3013 = vmatmul.f32.gmra.mxu0 %v2932
    %v3014 = vpop.f32.mrf.mxu0
    %v3015 = vadd.f32 0.0, %v3014
    %3016 = vmatmul.f32.gmra.mxu0 %v2934
    %v3017 = vpop.f32.mrf.mxu0
    %v3018 = vadd.f32 0.0, %v3017
    %3019 = vmatmul.f32.gmra.mxu0 %v2936
    %v3020 = vpop.f32.mrf.mxu0
    %v3021 = vadd.f32 0.0, %v3020
    %3022 = vmatmul.f32.gmra.mxu0 %v2938
    %v3023 = vpop.f32.mrf.mxu0
    %v3024 = vadd.f32 0.0, %v3023
    %3025 = vmatmul.f32.gmra.mxu0 %v2940
    %v3026 = vpop.f32.mrf.mxu0
    %v3027 = vadd.f32 0.0, %v3026
    %3028 = vmatmul.f32.gmra.mxu0 %v2942
    %v3029 = vpop.f32.mrf.mxu0
    %v3030 = vadd.f32 0.0, %v3029
    %3031 = vmatmul.f32.gmra.mxu0 %v2944
    %v3032 = vpop.f32.mrf.mxu0
    %v3033 = vadd.f32 0.0, %v3032
    %3034 = vmatmul.f32.gmra.mxu0 %v2946
    %v3035 = vpop.f32.mrf.mxu0
    %v3036 = vadd.f32 0.0, %v3035
    %3037 = vmatmul.f32.gmra.mxu0 %v2948
    %v3038 = vpop.f32.mrf.mxu0
    %v3039 = vadd.f32 0.0, %v3038
    %3040 = vmatmul.f32.gmra.mxu0 %v2950
    %v3041 = vpop.f32.mrf.mxu0
    %v3042 = vadd.f32 0.0, %v3041
    %3043 = vmatmul.f32.gmra.mxu0 %v2952
    %v3044 = vpop.f32.mrf.mxu0
    %v3045 = vadd.f32 0.0, %v3044
    %3046 = vmatmul.f32.gmra.mxu0 %v2954
    %v3047 = vpop.f32.mrf.mxu0
    %v3048 = vadd.f32 0.0, %v3047
    %3049 = vmatmul.f32.gmra.mxu0 %v2956
    %v3050 = vpop.f32.mrf.mxu0
    %v3051 = vadd.f32 0.0, %v3050
    %3052 = vmatmul.f32.gmra.mxu0 %v2958
    %v3053 = vpop.f32.mrf.mxu0
    %v3054 = vadd.f32 0.0, %v3053
    %3055 = vmatmul.f32.gmra.mxu0 %v2960
    %v3056 = vpop.f32.mrf.mxu0
    %v3057 = vadd.f32 0.0, %v3056
    %3058 = vmatmul.f32.gmra.mxu0 %v2962
    %v3059 = vpop.f32.mrf.mxu0
    %v3060 = vadd.f32 0.0, %v3059
    %3061 = vmatmul.f32.gmra.mxu0 %v2964
    %v3062 = vpop.f32.mrf.mxu0
    %v3063 = vadd.f32 0.0, %v3062
    %3064 = vmatmul.f32.gmra.mxu0 %v2966
    %v3065 = vpop.f32.mrf.mxu0
    %v3066 = vadd.f32 0.0, %v3065
    %3067 = vmatmul.f32.gmra.mxu0 %v2968
    %v3068 = vpop.f32.mrf.mxu0
    %v3069 = vadd.f32 0.0, %v3068
    %3070 = vmatmul.f32.gmra.mxu0 %v2970
    %v3071 = vpop.f32.mrf.mxu0
    %v3072 = vadd.f32 0.0, %v3071
    %3073 = vmatmul.f32.gmra.mxu0 %v2972
    %v3074 = vpop.f32.mrf.mxu0
    %v3075 = vadd.f32 0.0, %v3074
    %3076 = vmatmul.f32.gmra.mxu0 %v2974
    %v3077 = vpop.f32.mrf.mxu0
    %v3078 = vadd.f32 0.0, %v3077
    %3079 = vmatmul.f32.gmra.mxu0 %v2976
    %v3080 = vpop.f32.mrf.mxu0
    %v3081 = vadd.f32 0.0, %v3080
    %3082 = vmatmul.f32.gmra.mxu0 %v2978
    %v3083 = vpop.f32.mrf.mxu0
    %v3084 = vadd.f32 0.0, %v3083
    %3085 = vmatmul.f32.gmra.mxu0 %v2980
    %v3086 = vpop.f32.mrf.mxu0
    %v3087 = vadd.f32 0.0, %v3086
    %3088 = vmatmul.f32.gmra.mxu0 %v2982
    %v3089 = vpop.f32.mrf.mxu0
    %v3090 = vadd.f32 0.0, %v3089
    %3091 = vmatmul.f32.gmra.mxu0 %v2984
    %v3092 = vpop.f32.mrf.mxu0
    %v3093 = vadd.f32 0.0, %v3092
    %3094 = vmatmul.f32.gmra.mxu0 %v2986
    %v3095 = vpop.f32.mrf.mxu0
    %v3096 = vadd.f32 0.0, %v3095
    %3097 = vmatmul.f32.gmra.mxu0 %v2988
    %v3098 = vpop.f32.mrf.mxu0
    %v3099 = vadd.f32 0.0, %v3098
    %3100 = vmatmul.f32.gmra.mxu0 %v2990
    %v3101 = vpop.f32.mrf.mxu0
    %v3102 = vadd.f32 0.0, %v3101
    %3103 = vmatmul.f32.gmra.mxu0 %v2992
    %v3104 = vpop.f32.mrf.mxu0
    %v3105 = vadd.f32 0.0, %v3104
    %3106 = vdwg.mxu0
    %v3107 = vadd.f32 %v3012, %v623
    %v3108 = vadd.f32 %v3015, %v629
    %v3109 = vadd.f32 %v3018, %v636
    %v3110 = vadd.f32 %v3021, %v642
    %v3111 = vadd.f32 %v3024, %v649
    %v3112 = vadd.f32 %v3027, %v655
    %v3113 = vadd.f32 %v3030, %v662
    %v3114 = vadd.f32 %v3033, %v668
    %v3115 = vadd.f32 %v3036, %v675
    %v3116 = vadd.f32 %v3039, %v681
    %v3117 = vadd.f32 %v3042, %v688
    %v3118 = vadd.f32 %v3045, %v694
    %v3119 = vadd.f32 %v3048, %v701
    %v3120 = vadd.f32 %v3051, %v707
    %v3121 = vadd.f32 %v3054, %v714
    %v3122 = vadd.f32 %v3057, %v720
    %v3123 = vadd.f32 %v3060, %v727
    %v3124 = vadd.f32 %v3063, %v733
    %v3125 = vadd.f32 %v3066, %v740
    %v3126 = vadd.f32 %v3069, %v746
    %v3127 = vadd.f32 %v3072, %v753
    %v3128 = vadd.f32 %v3075, %v759
    %v3129 = vadd.f32 %v3078, %v766
    %v3130 = vadd.f32 %v3081, %v772
    %v3131 = vadd.f32 %v3084, %v779
    %v3132 = vadd.f32 %v3087, %v785
    %v3133 = vadd.f32 %v3090, %v792
    %v3134 = vadd.f32 %v3093, %v798
    %v3135 = vadd.f32 %v3096, %v805
    %v3136 = vadd.f32 %v3099, %v811
    %v3137 = vadd.f32 %v3102, %v818
    %v3138 = vadd.f32 %v3105, %v824
    %3171 = vset.pattern.permute.xlu0 0
    %3172 = vperm.xlu0 %3171, %v3107
    %v3173 = vpop.permute.xlu0 %3172
    %3174 = vset.pattern.permute.xlu0 0
    %3175 = vperm.xlu0 %3174, %v3108
    %v3176 = vpop.permute.xlu0 %3175
    %3177 = vset.pattern.permute.xlu0 0
    %3178 = vperm.xlu0 %3177, %v3109
    %v3179 = vpop.permute.xlu0 %3178
    %3180 = vset.pattern.permute.xlu0 0
    %3181 = vperm.xlu0 %3180, %v3110
    %v3182 = vpop.permute.xlu0 %3181
    %3183 = vset.pattern.permute.xlu0 0
    %3184 = vperm.xlu0 %3183, %v3111
    %v3185 = vpop.permute.xlu0 %3184
    %3186 = vset.pattern.permute.xlu0 0
    %3187 = vperm.xlu0 %3186, %v3112
    %v3188 = vpop.permute.xlu0 %3187
    %3189 = vset.pattern.permute.xlu0 0
    %3190 = vperm.xlu0 %3189, %v3113
    %v3191 = vpop.permute.xlu0 %3190
    %3192 = vset.pattern.permute.xlu0 0
    %3193 = vperm.xlu0 %3192, %v3114
    %v3194 = vpop.permute.xlu0 %3193
    %3195 = vset.pattern.permute.xlu0 0
    %3196 = vperm.xlu0 %3195, %v3115
    %v3197 = vpop.permute.xlu0 %3196
    %3198 = vset.pattern.permute.xlu0 0
    %3199 = vperm.xlu0 %3198, %v3116
    %v3200 = vpop.permute.xlu0 %3199
    %3201 = vset.pattern.permute.xlu0 0
    %3202 = vperm.xlu0 %3201, %v3117
    %v3203 = vpop.permute.xlu0 %3202
    %3204 = vset.pattern.permute.xlu0 0
    %3205 = vperm.xlu0 %3204, %v3118
    %v3206 = vpop.permute.xlu0 %3205
    %3207 = vset.pattern.permute.xlu0 0
    %3208 = vperm.xlu0 %3207, %v3119
    %v3209 = vpop.permute.xlu0 %3208
    %3210 = vset.pattern.permute.xlu0 0
    %3211 = vperm.xlu0 %3210, %v3120
    %v3212 = vpop.permute.xlu0 %3211
    %3213 = vset.pattern.permute.xlu0 0
    %3214 = vperm.xlu0 %3213, %v3121
    %v3215 = vpop.permute.xlu0 %3214
    %3216 = vset.pattern.permute.xlu0 0
    %3217 = vperm.xlu0 %3216, %v3122
    %v3218 = vpop.permute.xlu0 %3217
    %3219 = vset.pattern.permute.xlu0 0
    %3220 = vperm.xlu0 %3219, %v3123
    %v3221 = vpop.permute.xlu0 %3220
    %3222 = vset.pattern.permute.xlu0 0
    %3223 = vperm.xlu0 %3222, %v3124
    %v3224 = vpop.permute.xlu0 %3223
    %3225 = vset.pattern.permute.xlu0 0
    %3226 = vperm.xlu0 %3225, %v3125
    %v3227 = vpop.permute.xlu0 %3226
    %3228 = vset.pattern.permute.xlu0 0
    %3229 = vperm.xlu0 %3228, %v3126
    %v3230 = vpop.permute.xlu0 %3229
    %3231 = vset.pattern.permute.xlu0 0
    %3232 = vperm.xlu0 %3231, %v3127
    %v3233 = vpop.permute.xlu0 %3232
    %3234 = vset.pattern.permute.xlu0 0
    %3235 = vperm.xlu0 %3234, %v3128
    %v3236 = vpop.permute.xlu0 %3235
    %3237 = vset.pattern.permute.xlu0 0
    %3238 = vperm.xlu0 %3237, %v3129
    %v3239 = vpop.permute.xlu0 %3238
    %3240 = vset.pattern.permute.xlu0 0
    %3241 = vperm.xlu0 %3240, %v3130
    %v3242 = vpop.permute.xlu0 %3241
    %3243 = vset.pattern.permute.xlu0 0
    %3244 = vperm.xlu0 %3243, %v3131
    %v3245 = vpop.permute.xlu0 %3244
    %3246 = vset.pattern.permute.xlu0 0
    %3247 = vperm.xlu0 %3246, %v3132
    %v3248 = vpop.permute.xlu0 %3247
    %3249 = vset.pattern.permute.xlu0 0
    %3250 = vperm.xlu0 %3249, %v3133
    %v3251 = vpop.permute.xlu0 %3250
    %3252 = vset.pattern.permute.xlu0 0
    %3253 = vperm.xlu0 %3252, %v3134
    %v3254 = vpop.permute.xlu0 %3253
    %3255 = vset.pattern.permute.xlu0 0
    %3256 = vperm.xlu0 %3255, %v3135
    %v3257 = vpop.permute.xlu0 %3256
    %3258 = vset.pattern.permute.xlu0 0
    %3259 = vperm.xlu0 %3258, %v3136
    %v3260 = vpop.permute.xlu0 %3259
    %3261 = vset.pattern.permute.xlu0 0
    %3262 = vperm.xlu0 %3261, %v3137
    %v3263 = vpop.permute.xlu0 %3262
    %3264 = vset.pattern.permute.xlu0 0
    %3265 = vperm.xlu0 %3264, %v3138
    %v3266 = vpop.permute.xlu0 %3265
    %v3267 = vperm.slane %v3173, %v1018
    %v3268 = vperm.slane %v3176, %v1020
    %v3269 = vsel %vm1022, %v3268, %v3267
    %v3270 = vperm.slane %v3179, %v1018
    %v3271 = vperm.slane %v3182, %v1020
    %v3272 = vsel %vm1022, %v3271, %v3270
    %v3273 = vperm.slane %v3185, %v1018
    %v3274 = vperm.slane %v3188, %v1020
    %v3275 = vsel %vm1022, %v3274, %v3273
    %v3276 = vperm.slane %v3191, %v1018
    %v3277 = vperm.slane %v3194, %v1020
    %v3278 = vsel %vm1022, %v3277, %v3276
    %v3279 = vperm.slane %v3197, %v1018
    %v3280 = vperm.slane %v3200, %v1020
    %v3281 = vsel %vm1022, %v3280, %v3279
    %v3282 = vperm.slane %v3203, %v1018
    %v3283 = vperm.slane %v3206, %v1020
    %v3284 = vsel %vm1022, %v3283, %v3282
    %v3285 = vperm.slane %v3209, %v1018
    %v3286 = vperm.slane %v3212, %v1020
    %v3287 = vsel %vm1022, %v3286, %v3285
    %v3288 = vperm.slane %v3215, %v1018
    %v3289 = vperm.slane %v3218, %v1020
    %v3290 = vsel %vm1022, %v3289, %v3288
    %v3291 = vperm.slane %v3221, %v1018
    %v3292 = vperm.slane %v3224, %v1020
    %v3293 = vsel %vm1022, %v3292, %v3291
    %v3294 = vperm.slane %v3227, %v1018
    %v3295 = vperm.slane %v3230, %v1020
    %v3296 = vsel %vm1022, %v3295, %v3294
    %v3297 = vperm.slane %v3233, %v1018
    %v3298 = vperm.slane %v3236, %v1020
    %v3299 = vsel %vm1022, %v3298, %v3297
    %v3300 = vperm.slane %v3239, %v1018
    %v3301 = vperm.slane %v3242, %v1020
    %v3302 = vsel %vm1022, %v3301, %v3300
    %v3303 = vperm.slane %v3245, %v1018
    %v3304 = vperm.slane %v3248, %v1020
    %v3305 = vsel %vm1022, %v3304, %v3303
    %v3306 = vperm.slane %v3251, %v1018
    %v3307 = vperm.slane %v3254, %v1020
    %v3308 = vsel %vm1022, %v3307, %v3306
    %v3309 = vperm.slane %v3257, %v1018
    %v3310 = vperm.slane %v3260, %v1020
    %v3311 = vsel %vm1022, %v3310, %v3309
    %v3312 = vperm.slane %v3263, %v1018
    %v3313 = vperm.slane %v3266, %v1020
    %v3314 = vsel %vm1022, %v3313, %v3312
    %v3315 = vsel %vm1069, %v3272, %v3269
    %v3316 = vsel %vm1071, %v3275, %v3315
    %v3317 = vsel %vm1073, %v3278, %v3316
    %v3318 = vsel %vm1075, %v3281, %v3317
    %v3319 = vsel %vm1077, %v3284, %v3318
    %v3320 = vsel %vm1079, %v3287, %v3319
    %v3321 = vsel %vm1081, %v3290, %v3320
    %v3322 = vsel %vm1069, %v3296, %v3293
    %v3323 = vsel %vm1071, %v3299, %v3322
    %v3324 = vsel %vm1073, %v3302, %v3323
    %v3325 = vsel %vm1075, %v3305, %v3324
    %v3326 = vsel %vm1077, %v3308, %v3325
    %v3327 = vsel %vm1079, %v3311, %v3326
    %v3328 = vsel %vm1081, %v3314, %v3327
    %v3331 = vsel %vm437, %v3321, -inf
    %3332 = vmax.xlane.f32.xlu0 %v3331
    %v3333 = vpop.xlane.xlu0 %3332
    %v3334 = vsel %vm437, %v3328, -inf
    %3335 = vmax.xlane.f32.xlu0 %v3334
    %v3336 = vpop.xlane.xlu0 %3335
    %v3339 = vperm.slane %v3333, 0
    %v3340 = vperm.slane %v3333, 1
    %v3341 = vperm.slane %v3333, 2
    %v3342 = vperm.slane %v3333, 3
    %v3343 = vperm.slane %v3333, 4
    %v3344 = vperm.slane %v3333, 5
    %v3345 = vperm.slane %v3333, 6
    %v3346 = vperm.slane %v3333, 7
    %v3347 = vperm.slane %v3336, 0
    %v3348 = vperm.slane %v3336, 1
    %v3349 = vperm.slane %v3336, 2
    %v3350 = vperm.slane %v3336, 3
    %v3351 = vperm.slane %v3336, 4
    %v3352 = vperm.slane %v3336, 5
    %v3353 = vperm.slane %v3336, 6
    %v3354 = vperm.slane %v3336, 7
    %v3371 = vsub.f32 %v3107, %v3339
    %v3372 = vsub.f32 %v3108, %v3339
    %v3373 = vsub.f32 %v3109, %v3340
    %v3374 = vsub.f32 %v3110, %v3340
    %v3375 = vsub.f32 %v3111, %v3341
    %v3376 = vsub.f32 %v3112, %v3341
    %v3377 = vsub.f32 %v3113, %v3342
    %v3378 = vsub.f32 %v3114, %v3342
    %v3379 = vsub.f32 %v3115, %v3343
    %v3380 = vsub.f32 %v3116, %v3343
    %v3381 = vsub.f32 %v3117, %v3344
    %v3382 = vsub.f32 %v3118, %v3344
    %v3383 = vsub.f32 %v3119, %v3345
    %v3384 = vsub.f32 %v3120, %v3345
    %v3385 = vsub.f32 %v3121, %v3346
    %v3386 = vsub.f32 %v3122, %v3346
    %v3387 = vsub.f32 %v3123, %v3347
    %v3388 = vsub.f32 %v3124, %v3347
    %v3389 = vsub.f32 %v3125, %v3348
    %v3390 = vsub.f32 %v3126, %v3348
    %v3391 = vsub.f32 %v3127, %v3349
    %v3392 = vsub.f32 %v3128, %v3349
    %v3393 = vsub.f32 %v3129, %v3350
    %v3394 = vsub.f32 %v3130, %v3350
    %v3395 = vsub.f32 %v3131, %v3351
    %v3396 = vsub.f32 %v3132, %v3351
    %v3397 = vsub.f32 %v3133, %v3352
    %v3398 = vsub.f32 %v3134, %v3352
    %v3399 = vsub.f32 %v3135, %v3353
    %v3400 = vsub.f32 %v3136, %v3353
    %v3401 = vsub.f32 %v3137, %v3354
    %v3402 = vsub.f32 %v3138, %v3354
    %v3403 = vmul.f32 %v3371, 1.442695
    %v3404 = vpow.pop %v3403
    %v3405 = vmul.f32 %v3372, 1.442695
    %v3406 = vpow.pop %v3405
    %v3407 = vmul.f32 %v3373, 1.442695
    %v3408 = vpow.pop %v3407
    %v3409 = vmul.f32 %v3374, 1.442695
    %v3410 = vpow.pop %v3409
    %v3411 = vmul.f32 %v3375, 1.442695
    %v3412 = vpow.pop %v3411
    %v3413 = vmul.f32 %v3376, 1.442695
    %v3414 = vpow.pop %v3413
    %v3415 = vmul.f32 %v3377, 1.442695
    %v3416 = vpow.pop %v3415
    %v3417 = vmul.f32 %v3378, 1.442695
    %v3418 = vpow.pop %v3417
    %v3419 = vmul.f32 %v3379, 1.442695
    %v3420 = vpow.pop %v3419
    %v3421 = vmul.f32 %v3380, 1.442695
    %v3422 = vpow.pop %v3421
    %v3423 = vmul.f32 %v3381, 1.442695
    %v3424 = vpow.pop %v3423
    %v3425 = vmul.f32 %v3382, 1.442695
    %v3426 = vpow.pop %v3425
    %v3427 = vmul.f32 %v3383, 1.442695
    %v3428 = vpow.pop %v3427
    %v3429 = vmul.f32 %v3384, 1.442695
    %v3430 = vpow.pop %v3429
    %v3431 = vmul.f32 %v3385, 1.442695
    %v3432 = vpow.pop %v3431
    %v3433 = vmul.f32 %v3386, 1.442695
    %v3434 = vpow.pop %v3433
    %v3435 = vmul.f32 %v3387, 1.442695
    %v3436 = vpow.pop %v3435
    %v3437 = vmul.f32 %v3388, 1.442695
    %v3438 = vpow.pop %v3437
    %v3439 = vmul.f32 %v3389, 1.442695
    %v3440 = vpow.pop %v3439
    %v3441 = vmul.f32 %v3390, 1.442695
    %v3442 = vpow.pop %v3441
    %v3443 = vmul.f32 %v3391, 1.442695
    %v3444 = vpow.pop %v3443
    %v3445 = vmul.f32 %v3392, 1.442695
    %v3446 = vpow.pop %v3445
    %v3447 = vmul.f32 %v3393, 1.442695
    %v3448 = vpow.pop %v3447
    %v3449 = vmul.f32 %v3394, 1.442695
    %v3450 = vpow.pop %v3449
    %v3451 = vmul.f32 %v3395, 1.442695
    %v3452 = vpow.pop %v3451
    %v3453 = vmul.f32 %v3396, 1.442695
    %v3454 = vpow.pop %v3453
    %v3455 = vmul.f32 %v3397, 1.442695
    %v3456 = vpow.pop %v3455
    %v3457 = vmul.f32 %v3398, 1.442695
    %v3458 = vpow.pop %v3457
    %v3459 = vmul.f32 %v3399, 1.442695
    %v3460 = vpow.pop %v3459
    %v3461 = vmul.f32 %v3400, 1.442695
    %v3462 = vpow.pop %v3461
    %v3463 = vmul.f32 %v3401, 1.442695
    %v3464 = vpow.pop %v3463
    %v3465 = vmul.f32 %v3402, 1.442695
    %v3466 = vpow.pop %v3465
    %3499 = vset.pattern.permute.xlu0 0
    %3500 = vperm.xlu0 %3499, %v3404
    %v3501 = vpop.permute.xlu0 %3500
    %3502 = vset.pattern.permute.xlu0 0
    %3503 = vperm.xlu0 %3502, %v3406
    %v3504 = vpop.permute.xlu0 %3503
    %3505 = vset.pattern.permute.xlu0 0
    %3506 = vperm.xlu0 %3505, %v3408
    %v3507 = vpop.permute.xlu0 %3506
    %3508 = vset.pattern.permute.xlu0 0
    %3509 = vperm.xlu0 %3508, %v3410
    %v3510 = vpop.permute.xlu0 %3509
    %3511 = vset.pattern.permute.xlu0 0
    %3512 = vperm.xlu0 %3511, %v3412
    %v3513 = vpop.permute.xlu0 %3512
    %3514 = vset.pattern.permute.xlu0 0
    %3515 = vperm.xlu0 %3514, %v3414
    %v3516 = vpop.permute.xlu0 %3515
    %3517 = vset.pattern.permute.xlu0 0
    %3518 = vperm.xlu0 %3517, %v3416
    %v3519 = vpop.permute.xlu0 %3518
    %3520 = vset.pattern.permute.xlu0 0
    %3521 = vperm.xlu0 %3520, %v3418
    %v3522 = vpop.permute.xlu0 %3521
    %3523 = vset.pattern.permute.xlu0 0
    %3524 = vperm.xlu0 %3523, %v3420
    %v3525 = vpop.permute.xlu0 %3524
    %3526 = vset.pattern.permute.xlu0 0
    %3527 = vperm.xlu0 %3526, %v3422
    %v3528 = vpop.permute.xlu0 %3527
    %3529 = vset.pattern.permute.xlu0 0
    %3530 = vperm.xlu0 %3529, %v3424
    %v3531 = vpop.permute.xlu0 %3530
    %3532 = vset.pattern.permute.xlu0 0
    %3533 = vperm.xlu0 %3532, %v3426
    %v3534 = vpop.permute.xlu0 %3533
    %3535 = vset.pattern.permute.xlu0 0
    %3536 = vperm.xlu0 %3535, %v3428
    %v3537 = vpop.permute.xlu0 %3536
    %3538 = vset.pattern.permute.xlu0 0
    %3539 = vperm.xlu0 %3538, %v3430
    %v3540 = vpop.permute.xlu0 %3539
    %3541 = vset.pattern.permute.xlu0 0
    %3542 = vperm.xlu0 %3541, %v3432
    %v3543 = vpop.permute.xlu0 %3542
    %3544 = vset.pattern.permute.xlu0 0
    %3545 = vperm.xlu0 %3544, %v3434
    %v3546 = vpop.permute.xlu0 %3545
    %3547 = vset.pattern.permute.xlu0 0
    %3548 = vperm.xlu0 %3547, %v3436
    %v3549 = vpop.permute.xlu0 %3548
    %3550 = vset.pattern.permute.xlu0 0
    %3551 = vperm.xlu0 %3550, %v3438
    %v3552 = vpop.permute.xlu0 %3551
    %3553 = vset.pattern.permute.xlu0 0
    %3554 = vperm.xlu0 %3553, %v3440
    %v3555 = vpop.permute.xlu0 %3554
    %3556 = vset.pattern.permute.xlu0 0
    %3557 = vperm.xlu0 %3556, %v3442
    %v3558 = vpop.permute.xlu0 %3557
    %3559 = vset.pattern.permute.xlu0 0
    %3560 = vperm.xlu0 %3559, %v3444
    %v3561 = vpop.permute.xlu0 %3560
    %3562 = vset.pattern.permute.xlu0 0
    %3563 = vperm.xlu0 %3562, %v3446
    %v3564 = vpop.permute.xlu0 %3563
    %3565 = vset.pattern.permute.xlu0 0
    %3566 = vperm.xlu0 %3565, %v3448
    %v3567 = vpop.permute.xlu0 %3566
    %3568 = vset.pattern.permute.xlu0 0
    %3569 = vperm.xlu0 %3568, %v3450
    %v3570 = vpop.permute.xlu0 %3569
    %3571 = vset.pattern.permute.xlu0 0
    %3572 = vperm.xlu0 %3571, %v3452
    %v3573 = vpop.permute.xlu0 %3572
    %3574 = vset.pattern.permute.xlu0 0
    %3575 = vperm.xlu0 %3574, %v3454
    %v3576 = vpop.permute.xlu0 %3575
    %3577 = vset.pattern.permute.xlu0 0
    %3578 = vperm.xlu0 %3577, %v3456
    %v3579 = vpop.permute.xlu0 %3578
    %3580 = vset.pattern.permute.xlu0 0
    %3581 = vperm.xlu0 %3580, %v3458
    %v3582 = vpop.permute.xlu0 %3581
    %3583 = vset.pattern.permute.xlu0 0
    %3584 = vperm.xlu0 %3583, %v3460
    %v3585 = vpop.permute.xlu0 %3584
    %3586 = vset.pattern.permute.xlu0 0
    %3587 = vperm.xlu0 %3586, %v3462
    %v3588 = vpop.permute.xlu0 %3587
    %3589 = vset.pattern.permute.xlu0 0
    %3590 = vperm.xlu0 %3589, %v3464
    %v3591 = vpop.permute.xlu0 %3590
    %3592 = vset.pattern.permute.xlu0 0
    %3593 = vperm.xlu0 %3592, %v3466
    %v3594 = vpop.permute.xlu0 %3593
    %v3595 = vperm.slane %v3501, %v1018
    %v3596 = vperm.slane %v3504, %v1020
    %v3597 = vsel %vm1022, %v3596, %v3595
    %v3598 = vperm.slane %v3507, %v1018
    %v3599 = vperm.slane %v3510, %v1020
    %v3600 = vsel %vm1022, %v3599, %v3598
    %v3601 = vperm.slane %v3513, %v1018
    %v3602 = vperm.slane %v3516, %v1020
    %v3603 = vsel %vm1022, %v3602, %v3601
    %v3604 = vperm.slane %v3519, %v1018
    %v3605 = vperm.slane %v3522, %v1020
    %v3606 = vsel %vm1022, %v3605, %v3604
    %v3607 = vperm.slane %v3525, %v1018
    %v3608 = vperm.slane %v3528, %v1020
    %v3609 = vsel %vm1022, %v3608, %v3607
    %v3610 = vperm.slane %v3531, %v1018
    %v3611 = vperm.slane %v3534, %v1020
    %v3612 = vsel %vm1022, %v3611, %v3610
    %v3613 = vperm.slane %v3537, %v1018
    %v3614 = vperm.slane %v3540, %v1020
    %v3615 = vsel %vm1022, %v3614, %v3613
    %v3616 = vperm.slane %v3543, %v1018
    %v3617 = vperm.slane %v3546, %v1020
    %v3618 = vsel %vm1022, %v3617, %v3616
    %v3619 = vperm.slane %v3549, %v1018
    %v3620 = vperm.slane %v3552, %v1020
    %v3621 = vsel %vm1022, %v3620, %v3619
    %v3622 = vperm.slane %v3555, %v1018
    %v3623 = vperm.slane %v3558, %v1020
    %v3624 = vsel %vm1022, %v3623, %v3622
    %v3625 = vperm.slane %v3561, %v1018
    %v3626 = vperm.slane %v3564, %v1020
    %v3627 = vsel %vm1022, %v3626, %v3625
    %v3628 = vperm.slane %v3567, %v1018
    %v3629 = vperm.slane %v3570, %v1020
    %v3630 = vsel %vm1022, %v3629, %v3628
    %v3631 = vperm.slane %v3573, %v1018
    %v3632 = vperm.slane %v3576, %v1020
    %v3633 = vsel %vm1022, %v3632, %v3631
    %v3634 = vperm.slane %v3579, %v1018
    %v3635 = vperm.slane %v3582, %v1020
    %v3636 = vsel %vm1022, %v3635, %v3634
    %v3637 = vperm.slane %v3585, %v1018
    %v3638 = vperm.slane %v3588, %v1020
    %v3639 = vsel %vm1022, %v3638, %v3637
    %v3640 = vperm.slane %v3591, %v1018
    %v3641 = vperm.slane %v3594, %v1020
    %v3642 = vsel %vm1022, %v3641, %v3640
    %v3643 = vsel %vm1069, %v3600, %v3597
    %v3644 = vsel %vm1071, %v3603, %v3643
    %v3645 = vsel %vm1073, %v3606, %v3644
    %v3646 = vsel %vm1075, %v3609, %v3645
    %v3647 = vsel %vm1077, %v3612, %v3646
    %v3648 = vsel %vm1079, %v3615, %v3647
    %v3649 = vsel %vm1081, %v3618, %v3648
    %v3650 = vsel %vm1069, %v3624, %v3621
    %v3651 = vsel %vm1071, %v3627, %v3650
    %v3652 = vsel %vm1073, %v3630, %v3651
    %v3653 = vsel %vm1075, %v3633, %v3652
    %v3654 = vsel %vm1077, %v3636, %v3653
    %v3655 = vsel %vm1079, %v3639, %v3654
    %v3656 = vsel %vm1081, %v3642, %v3655
    %v3659 = vsel %vm437, %v3649, 0.0
    %3660 = vadd.xlane.f32.xlu0 %v3659
    %v3661 = vpop.xlane.xlu0 %3660
    %v3662 = vsel %vm437, %v3656, 0.0
    %3663 = vadd.xlane.f32.xlu0 %v3662
    %v3664 = vpop.xlane.xlu0 %3663
    %v3665 = vmax.f32 %v3661, 1e-20
    %v3666 = vmax.f32 %v3664, 1e-20
    %v3667 = vrcp.pop %v3665
    %v3668 = vrcp.pop %v3666
    %v3671 = vperm.slane %v3667, 0
    %v3672 = vperm.slane %v3667, 1
    %v3673 = vperm.slane %v3667, 2
    %v3674 = vperm.slane %v3667, 3
    %v3675 = vperm.slane %v3667, 4
    %v3676 = vperm.slane %v3667, 5
    %v3677 = vperm.slane %v3667, 6
    %v3678 = vperm.slane %v3667, 7
    %v3679 = vperm.slane %v3668, 0
    %v3680 = vperm.slane %v3668, 1
    %v3681 = vperm.slane %v3668, 2
    %v3682 = vperm.slane %v3668, 3
    %v3683 = vperm.slane %v3668, 4
    %v3684 = vperm.slane %v3668, 5
    %v3685 = vperm.slane %v3668, 6
    %v3686 = vperm.slane %v3668, 7
    %v3703 = vmul.f32 %v3404, %v3671
    %v3704 = vmul.f32 %v3406, %v3671
    %v3705 = vmul.f32 %v3408, %v3672
    %v3706 = vmul.f32 %v3410, %v3672
    %v3707 = vmul.f32 %v3412, %v3673
    %v3708 = vmul.f32 %v3414, %v3673
    %v3709 = vmul.f32 %v3416, %v3674
    %v3710 = vmul.f32 %v3418, %v3674
    %v3711 = vmul.f32 %v3420, %v3675
    %v3712 = vmul.f32 %v3422, %v3675
    %v3713 = vmul.f32 %v3424, %v3676
    %v3714 = vmul.f32 %v3426, %v3676
    %v3715 = vmul.f32 %v3428, %v3677
    %v3716 = vmul.f32 %v3430, %v3677
    %v3717 = vmul.f32 %v3432, %v3678
    %v3718 = vmul.f32 %v3434, %v3678
    %v3719 = vmul.f32 %v3436, %v3679
    %v3720 = vmul.f32 %v3438, %v3679
    %v3721 = vmul.f32 %v3440, %v3680
    %v3722 = vmul.f32 %v3442, %v3680
    %v3723 = vmul.f32 %v3444, %v3681
    %v3724 = vmul.f32 %v3446, %v3681
    %v3725 = vmul.f32 %v3448, %v3682
    %v3726 = vmul.f32 %v3450, %v3682
    %v3727 = vmul.f32 %v3452, %v3683
    %v3728 = vmul.f32 %v3454, %v3683
    %v3729 = vmul.f32 %v3456, %v3684
    %v3730 = vmul.f32 %v3458, %v3684
    %v3731 = vmul.f32 %v3460, %v3685
    %v3732 = vmul.f32 %v3462, %v3685
    %v3733 = vmul.f32 %v3464, %v3686
    %v3734 = vmul.f32 %v3466, %v3686
    %3767 = vset.pattern.permute.xlu0 0
    %3768 = vperm.xlu0 %3767, %v3703
    %v3769 = vpop.permute.xlu0 %3768
    %3770 = vset.pattern.permute.xlu0 0
    %3771 = vperm.xlu0 %3770, %v3704
    %v3772 = vpop.permute.xlu0 %3771
    %3773 = vset.pattern.permute.xlu0 0
    %3774 = vperm.xlu0 %3773, %v3705
    %v3775 = vpop.permute.xlu0 %3774
    %3776 = vset.pattern.permute.xlu0 0
    %3777 = vperm.xlu0 %3776, %v3706
    %v3778 = vpop.permute.xlu0 %3777
    %3779 = vset.pattern.permute.xlu0 0
    %3780 = vperm.xlu0 %3779, %v3707
    %v3781 = vpop.permute.xlu0 %3780
    %3782 = vset.pattern.permute.xlu0 0
    %3783 = vperm.xlu0 %3782, %v3708
    %v3784 = vpop.permute.xlu0 %3783
    %3785 = vset.pattern.permute.xlu0 0
    %3786 = vperm.xlu0 %3785, %v3709
    %v3787 = vpop.permute.xlu0 %3786
    %3788 = vset.pattern.permute.xlu0 0
    %3789 = vperm.xlu0 %3788, %v3710
    %v3790 = vpop.permute.xlu0 %3789
    %3791 = vset.pattern.permute.xlu0 0
    %3792 = vperm.xlu0 %3791, %v3711
    %v3793 = vpop.permute.xlu0 %3792
    %3794 = vset.pattern.permute.xlu0 0
    %3795 = vperm.xlu0 %3794, %v3712
    %v3796 = vpop.permute.xlu0 %3795
    %3797 = vset.pattern.permute.xlu0 0
    %3798 = vperm.xlu0 %3797, %v3713
    %v3799 = vpop.permute.xlu0 %3798
    %3800 = vset.pattern.permute.xlu0 0
    %3801 = vperm.xlu0 %3800, %v3714
    %v3802 = vpop.permute.xlu0 %3801
    %3803 = vset.pattern.permute.xlu0 0
    %3804 = vperm.xlu0 %3803, %v3715
    %v3805 = vpop.permute.xlu0 %3804
    %3806 = vset.pattern.permute.xlu0 0
    %3807 = vperm.xlu0 %3806, %v3716
    %v3808 = vpop.permute.xlu0 %3807
    %3809 = vset.pattern.permute.xlu0 0
    %3810 = vperm.xlu0 %3809, %v3717
    %v3811 = vpop.permute.xlu0 %3810
    %3812 = vset.pattern.permute.xlu0 0
    %3813 = vperm.xlu0 %3812, %v3718
    %v3814 = vpop.permute.xlu0 %3813
    %3815 = vset.pattern.permute.xlu0 0
    %3816 = vperm.xlu0 %3815, %v3719
    %v3817 = vpop.permute.xlu0 %3816
    %3818 = vset.pattern.permute.xlu0 0
    %3819 = vperm.xlu0 %3818, %v3720
    %v3820 = vpop.permute.xlu0 %3819
    %3821 = vset.pattern.permute.xlu0 0
    %3822 = vperm.xlu0 %3821, %v3721
    %v3823 = vpop.permute.xlu0 %3822
    %3824 = vset.pattern.permute.xlu0 0
    %3825 = vperm.xlu0 %3824, %v3722
    %v3826 = vpop.permute.xlu0 %3825
    %3827 = vset.pattern.permute.xlu0 0
    %3828 = vperm.xlu0 %3827, %v3723
    %v3829 = vpop.permute.xlu0 %3828
    %3830 = vset.pattern.permute.xlu0 0
    %3831 = vperm.xlu0 %3830, %v3724
    %v3832 = vpop.permute.xlu0 %3831
    %3833 = vset.pattern.permute.xlu0 0
    %3834 = vperm.xlu0 %3833, %v3725
    %v3835 = vpop.permute.xlu0 %3834
    %3836 = vset.pattern.permute.xlu0 0
    %3837 = vperm.xlu0 %3836, %v3726
    %v3838 = vpop.permute.xlu0 %3837
    %3839 = vset.pattern.permute.xlu0 0
    %3840 = vperm.xlu0 %3839, %v3727
    %v3841 = vpop.permute.xlu0 %3840
    %3842 = vset.pattern.permute.xlu0 0
    %3843 = vperm.xlu0 %3842, %v3728
    %v3844 = vpop.permute.xlu0 %3843
    %3845 = vset.pattern.permute.xlu0 0
    %3846 = vperm.xlu0 %3845, %v3729
    %v3847 = vpop.permute.xlu0 %3846
    %3848 = vset.pattern.permute.xlu0 0
    %3849 = vperm.xlu0 %3848, %v3730
    %v3850 = vpop.permute.xlu0 %3849
    %3851 = vset.pattern.permute.xlu0 0
    %3852 = vperm.xlu0 %3851, %v3731
    %v3853 = vpop.permute.xlu0 %3852
    %3854 = vset.pattern.permute.xlu0 0
    %3855 = vperm.xlu0 %3854, %v3732
    %v3856 = vpop.permute.xlu0 %3855
    %3857 = vset.pattern.permute.xlu0 0
    %3858 = vperm.xlu0 %3857, %v3733
    %v3859 = vpop.permute.xlu0 %3858
    %3860 = vset.pattern.permute.xlu0 0
    %3861 = vperm.xlu0 %3860, %v3734
    %v3862 = vpop.permute.xlu0 %3861
    %v3863 = vperm.slane %v3769, %v1018
    %v3864 = vperm.slane %v3772, %v1020
    %v3865 = vsel %vm1022, %v3864, %v3863
    %v3866 = vperm.slane %v3775, %v1018
    %v3867 = vperm.slane %v3778, %v1020
    %v3868 = vsel %vm1022, %v3867, %v3866
    %v3869 = vperm.slane %v3781, %v1018
    %v3870 = vperm.slane %v3784, %v1020
    %v3871 = vsel %vm1022, %v3870, %v3869
    %v3872 = vperm.slane %v3787, %v1018
    %v3873 = vperm.slane %v3790, %v1020
    %v3874 = vsel %vm1022, %v3873, %v3872
    %v3875 = vperm.slane %v3793, %v1018
    %v3876 = vperm.slane %v3796, %v1020
    %v3877 = vsel %vm1022, %v3876, %v3875
    %v3878 = vperm.slane %v3799, %v1018
    %v3879 = vperm.slane %v3802, %v1020
    %v3880 = vsel %vm1022, %v3879, %v3878
    %v3881 = vperm.slane %v3805, %v1018
    %v3882 = vperm.slane %v3808, %v1020
    %v3883 = vsel %vm1022, %v3882, %v3881
    %v3884 = vperm.slane %v3811, %v1018
    %v3885 = vperm.slane %v3814, %v1020
    %v3886 = vsel %vm1022, %v3885, %v3884
    %v3887 = vperm.slane %v3817, %v1018
    %v3888 = vperm.slane %v3820, %v1020
    %v3889 = vsel %vm1022, %v3888, %v3887
    %v3890 = vperm.slane %v3823, %v1018
    %v3891 = vperm.slane %v3826, %v1020
    %v3892 = vsel %vm1022, %v3891, %v3890
    %v3893 = vperm.slane %v3829, %v1018
    %v3894 = vperm.slane %v3832, %v1020
    %v3895 = vsel %vm1022, %v3894, %v3893
    %v3896 = vperm.slane %v3835, %v1018
    %v3897 = vperm.slane %v3838, %v1020
    %v3898 = vsel %vm1022, %v3897, %v3896
    %v3899 = vperm.slane %v3841, %v1018
    %v3900 = vperm.slane %v3844, %v1020
    %v3901 = vsel %vm1022, %v3900, %v3899
    %v3902 = vperm.slane %v3847, %v1018
    %v3903 = vperm.slane %v3850, %v1020
    %v3904 = vsel %vm1022, %v3903, %v3902
    %v3905 = vperm.slane %v3853, %v1018
    %v3906 = vperm.slane %v3856, %v1020
    %v3907 = vsel %vm1022, %v3906, %v3905
    %v3908 = vperm.slane %v3859, %v1018
    %v3909 = vperm.slane %v3862, %v1020
    %v3910 = vsel %vm1022, %v3909, %v3908
    %v3911 = vsel %vm1069, %v3868, %v3865
    %v3912 = vsel %vm1071, %v3871, %v3911
    %v3913 = vsel %vm1073, %v3874, %v3912
    %v3914 = vsel %vm1075, %v3877, %v3913
    %v3915 = vsel %vm1077, %v3880, %v3914
    %v3916 = vsel %vm1079, %v3883, %v3915
    %v3917 = vsel %vm1081, %v3886, %v3916
    %v3918 = vsel %vm1069, %v3892, %v3889
    %v3919 = vsel %vm1071, %v3895, %v3918
    %v3920 = vsel %vm1073, %v3898, %v3919
    %v3921 = vsel %vm1075, %v3901, %v3920
    %v3922 = vsel %vm1077, %v3904, %v3921
    %v3923 = vsel %vm1079, %v3907, %v3922
    %v3924 = vsel %vm1081, %v3910, %v3923
    %v3925 = vsel %vm437, %v3917, 0
    %v3927 = vsel %vm437, %v3924, 0
    %3929 = vmatpush.msra.mxu0 0.0
    %3930 = vmatpush.msra.mxu0 0.0
    %3931 = vmatpush.msra.mxu0 0.0
    %3932 = vmatpush.msra.mxu0 0.0
    %3933 = vmatpush.msra.mxu0 0.0
    %3934 = vmatpush.msra.mxu0 0.0
    %3935 = vmatpush.msra.mxu0 0.0
    %3936 = vmatpush.msra.mxu0 0.0
    %3937 = vmatpush.msra.mxu0 0.0
    %3938 = vmatpush.msra.mxu0 0.0
    %3939 = vmatpush.msra.mxu0 0.0
    %3940 = vmatpush.msra.mxu0 0.0
    %3941 = vmatpush.msra.mxu0 0.0
    %3942 = vmatpush.msra.mxu0 0.0
    %3943 = vmatpush.msra.mxu0 %v2640
    %3944 = vmatpush.msra.mxu0 %v2639
    %3945 = vmatmul.f32.gmra.mxu0 %v3925
    %v3946 = vpop.f32.mrf.mxu0
    %v3947 = vadd.f32 0.0, %v3946
    %3948 = vmatmul.f32.gmra.mxu0 %v3927
    %v3949 = vpop.f32.mrf.mxu0
    %v3950 = vadd.f32 0.0, %v3949
    %3951 = vdwg.mxu0
    %3952 = vst.msk [vmem:[#allocation2] sm:$0xff] %vm115, %v3947
    %3953 = vst.msk [vmem:[#allocation2 + $0x8] sm:$0xff] %vm115, %v3950
    %3954 = vset.pattern.permute.xlu0 1
    %3955 = vperm.xlu0 %3954, %v3107
    %v3956 = vpop.permute.xlu0 %3955
    %3957 = vset.pattern.permute.xlu0 1
    %3958 = vperm.xlu0 %3957, %v3108
    %v3959 = vpop.permute.xlu0 %3958
    %3960 = vset.pattern.permute.xlu0 1
    %3961 = vperm.xlu0 %3960, %v3109
    %v3962 = vpop.permute.xlu0 %3961
    %3963 = vset.pattern.permute.xlu0 1
    %3964 = vperm.xlu0 %3963, %v3110
    %v3965 = vpop.permute.xlu0 %3964
    %3966 = vset.pattern.permute.xlu0 1
    %3967 = vperm.xlu0 %3966, %v3111
    %v3968 = vpop.permute.xlu0 %3967
    %3969 = vset.pattern.permute.xlu0 1
    %3970 = vperm.xlu0 %3969, %v3112
    %v3971 = vpop.permute.xlu0 %3970
    %3972 = vset.pattern.permute.xlu0 1
    %3973 = vperm.xlu0 %3972, %v3113
    %v3974 = vpop.permute.xlu0 %3973
    %3975 = vset.pattern.permute.xlu0 1
    %3976 = vperm.xlu0 %3975, %v3114
    %v3977 = vpop.permute.xlu0 %3976
    %3978 = vset.pattern.permute.xlu0 1
    %3979 = vperm.xlu0 %3978, %v3115
    %v3980 = vpop.permute.xlu0 %3979
    %3981 = vset.pattern.permute.xlu0 1
    %3982 = vperm.xlu0 %3981, %v3116
    %v3983 = vpop.permute.xlu0 %3982
    %3984 = vset.pattern.permute.xlu0 1
    %3985 = vperm.xlu0 %3984, %v3117
    %v3986 = vpop.permute.xlu0 %3985
    %3987 = vset.pattern.permute.xlu0 1
    %3988 = vperm.xlu0 %3987, %v3118
    %v3989 = vpop.permute.xlu0 %3988
    %3990 = vset.pattern.permute.xlu0 1
    %3991 = vperm.xlu0 %3990, %v3119
    %v3992 = vpop.permute.xlu0 %3991
    %3993 = vset.pattern.permute.xlu0 1
    %3994 = vperm.xlu0 %3993, %v3120
    %v3995 = vpop.permute.xlu0 %3994
    %3996 = vset.pattern.permute.xlu0 1
    %3997 = vperm.xlu0 %3996, %v3121
    %v3998 = vpop.permute.xlu0 %3997
    %3999 = vset.pattern.permute.xlu0 1
    %4000 = vperm.xlu0 %3999, %v3122
    %v4001 = vpop.permute.xlu0 %4000
    %4002 = vset.pattern.permute.xlu0 1
    %4003 = vperm.xlu0 %4002, %v3123
    %v4004 = vpop.permute.xlu0 %4003
    %4005 = vset.pattern.permute.xlu0 1
    %4006 = vperm.xlu0 %4005, %v3124
    %v4007 = vpop.permute.xlu0 %4006
    %4008 = vset.pattern.permute.xlu0 1
    %4009 = vperm.xlu0 %4008, %v3125
    %v4010 = vpop.permute.xlu0 %4009
    %4011 = vset.pattern.permute.xlu0 1
    %4012 = vperm.xlu0 %4011, %v3126
    %v4013 = vpop.permute.xlu0 %4012
    %4014 = vset.pattern.permute.xlu0 1
    %4015 = vperm.xlu0 %4014, %v3127
    %v4016 = vpop.permute.xlu0 %4015
    %4017 = vset.pattern.permute.xlu0 1
    %4018 = vperm.xlu0 %4017, %v3128
    %v4019 = vpop.permute.xlu0 %4018
    %4020 = vset.pattern.permute.xlu0 1
    %4021 = vperm.xlu0 %4020, %v3129
    %v4022 = vpop.permute.xlu0 %4021
    %4023 = vset.pattern.permute.xlu0 1
    %4024 = vperm.xlu0 %4023, %v3130
    %v4025 = vpop.permute.xlu0 %4024
    %4026 = vset.pattern.permute.xlu0 1
    %4027 = vperm.xlu0 %4026, %v3131
    %v4028 = vpop.permute.xlu0 %4027
    %4029 = vset.pattern.permute.xlu0 1
    %4030 = vperm.xlu0 %4029, %v3132
    %v4031 = vpop.permute.xlu0 %4030
    %4032 = vset.pattern.permute.xlu0 1
    %4033 = vperm.xlu0 %4032, %v3133
    %v4034 = vpop.permute.xlu0 %4033
    %4035 = vset.pattern.permute.xlu0 1
    %4036 = vperm.xlu0 %4035, %v3134
    %v4037 = vpop.permute.xlu0 %4036
    %4038 = vset.pattern.permute.xlu0 1
    %4039 = vperm.xlu0 %4038, %v3135
    %v4040 = vpop.permute.xlu0 %4039
    %4041 = vset.pattern.permute.xlu0 1
    %4042 = vperm.xlu0 %4041, %v3136
    %v4043 = vpop.permute.xlu0 %4042
    %4044 = vset.pattern.permute.xlu0 1
    %4045 = vperm.xlu0 %4044, %v3137
    %v4046 = vpop.permute.xlu0 %4045
    %4047 = vset.pattern.permute.xlu0 1
    %4048 = vperm.xlu0 %4047, %v3138
    %v4049 = vpop.permute.xlu0 %4048
    %v4050 = vperm.slane %v3956, %v1018
    %v4051 = vperm.slane %v3959, %v1020
    %v4052 = vsel %vm1022, %v4051, %v4050
    %v4053 = vperm.slane %v3962, %v1018
    %v4054 = vperm.slane %v3965, %v1020
    %v4055 = vsel %vm1022, %v4054, %v4053
    %v4056 = vperm.slane %v3968, %v1018
    %v4057 = vperm.slane %v3971, %v1020
    %v4058 = vsel %vm1022, %v4057, %v4056
    %v4059 = vperm.slane %v3974, %v1018
    %v4060 = vperm.slane %v3977, %v1020
    %v4061 = vsel %vm1022, %v4060, %v4059
    %v4062 = vperm.slane %v3980, %v1018
    %v4063 = vperm.slane %v3983, %v1020
    %v4064 = vsel %vm1022, %v4063, %v4062
    %v4065 = vperm.slane %v3986, %v1018
    %v4066 = vperm.slane %v3989, %v1020
    %v4067 = vsel %vm1022, %v4066, %v4065
    %v4068 = vperm.slane %v3992, %v1018
    %v4069 = vperm.slane %v3995, %v1020
    %v4070 = vsel %vm1022, %v4069, %v4068
    %v4071 = vperm.slane %v3998, %v1018
    %v4072 = vperm.slane %v4001, %v1020
    %v4073 = vsel %vm1022, %v4072, %v4071
    %v4074 = vperm.slane %v4004, %v1018
    %v4075 = vperm.slane %v4007, %v1020
    %v4076 = vsel %vm1022, %v4075, %v4074
    %v4077 = vperm.slane %v4010, %v1018
    %v4078 = vperm.slane %v4013, %v1020
    %v4079 = vsel %vm1022, %v4078, %v4077
    %v4080 = vperm.slane %v4016, %v1018
    %v4081 = vperm.slane %v4019, %v1020
    %v4082 = vsel %vm1022, %v4081, %v4080
    %v4083 = vperm.slane %v4022, %v1018
    %v4084 = vperm.slane %v4025, %v1020
    %v4085 = vsel %vm1022, %v4084, %v4083
    %v4086 = vperm.slane %v4028, %v1018
    %v4087 = vperm.slane %v4031, %v1020
    %v4088 = vsel %vm1022, %v4087, %v4086
    %v4089 = vperm.slane %v4034, %v1018
    %v4090 = vperm.slane %v4037, %v1020
    %v4091 = vsel %vm1022, %v4090, %v4089
    %v4092 = vperm.slane %v4040, %v1018
    %v4093 = vperm.slane %v4043, %v1020
    %v4094 = vsel %vm1022, %v4093, %v4092
    %v4095 = vperm.slane %v4046, %v1018
    %v4096 = vperm.slane %v4049, %v1020
    %v4097 = vsel %vm1022, %v4096, %v4095
    %v4098 = vsel %vm1069, %v4055, %v4052
    %v4099 = vsel %vm1071, %v4058, %v4098
    %v4100 = vsel %vm1073, %v4061, %v4099
    %v4101 = vsel %vm1075, %v4064, %v4100
    %v4102 = vsel %vm1077, %v4067, %v4101
    %v4103 = vsel %vm1079, %v4070, %v4102
    %v4104 = vsel %vm1081, %v4073, %v4103
    %v4105 = vsel %vm1069, %v4079, %v4076
    %v4106 = vsel %vm1071, %v4082, %v4105
    %v4107 = vsel %vm1073, %v4085, %v4106
    %v4108 = vsel %vm1075, %v4088, %v4107
    %v4109 = vsel %vm1077, %v4091, %v4108
    %v4110 = vsel %vm1079, %v4094, %v4109
    %v4111 = vsel %vm1081, %v4097, %v4110
    %v4114 = vsel %vm437, %v4104, -inf
    %4115 = vmax.xlane.f32.xlu0 %v4114
    %v4116 = vpop.xlane.xlu0 %4115
    %v4117 = vsel %vm437, %v4111, -inf
    %4118 = vmax.xlane.f32.xlu0 %v4117
    %v4119 = vpop.xlane.xlu0 %4118
    %v4122 = vperm.slane %v4116, 0
    %v4123 = vperm.slane %v4116, 1
    %v4124 = vperm.slane %v4116, 2
    %v4125 = vperm.slane %v4116, 3
    %v4126 = vperm.slane %v4116, 4
    %v4127 = vperm.slane %v4116, 5
    %v4128 = vperm.slane %v4116, 6
    %v4129 = vperm.slane %v4116, 7
    %v4130 = vperm.slane %v4119, 0
    %v4131 = vperm.slane %v4119, 1
    %v4132 = vperm.slane %v4119, 2
    %v4133 = vperm.slane %v4119, 3
    %v4134 = vperm.slane %v4119, 4
    %v4135 = vperm.slane %v4119, 5
    %v4136 = vperm.slane %v4119, 6
    %v4137 = vperm.slane %v4119, 7
    %v4154 = vsub.f32 %v3107, %v4122
    %v4155 = vsub.f32 %v3108, %v4122
    %v4156 = vsub.f32 %v3109, %v4123
    %v4157 = vsub.f32 %v3110, %v4123
    %v4158 = vsub.f32 %v3111, %v4124
    %v4159 = vsub.f32 %v3112, %v4124
    %v4160 = vsub.f32 %v3113, %v4125
    %v4161 = vsub.f32 %v3114, %v4125
    %v4162 = vsub.f32 %v3115, %v4126
    %v4163 = vsub.f32 %v3116, %v4126
    %v4164 = vsub.f32 %v3117, %v4127
    %v4165 = vsub.f32 %v3118, %v4127
    %v4166 = vsub.f32 %v3119, %v4128
    %v4167 = vsub.f32 %v3120, %v4128
    %v4168 = vsub.f32 %v3121, %v4129
    %v4169 = vsub.f32 %v3122, %v4129
    %v4170 = vsub.f32 %v3123, %v4130
    %v4171 = vsub.f32 %v3124, %v4130
    %v4172 = vsub.f32 %v3125, %v4131
    %v4173 = vsub.f32 %v3126, %v4131
    %v4174 = vsub.f32 %v3127, %v4132
    %v4175 = vsub.f32 %v3128, %v4132
    %v4176 = vsub.f32 %v3129, %v4133
    %v4177 = vsub.f32 %v3130, %v4133
    %v4178 = vsub.f32 %v3131, %v4134
    %v4179 = vsub.f32 %v3132, %v4134
    %v4180 = vsub.f32 %v3133, %v4135
    %v4181 = vsub.f32 %v3134, %v4135
    %v4182 = vsub.f32 %v3135, %v4136
    %v4183 = vsub.f32 %v3136, %v4136
    %v4184 = vsub.f32 %v3137, %v4137
    %v4185 = vsub.f32 %v3138, %v4137
    %v4186 = vmul.f32 %v4154, 1.442695
    %v4187 = vpow.pop %v4186
    %v4188 = vmul.f32 %v4155, 1.442695
    %v4189 = vpow.pop %v4188
    %v4190 = vmul.f32 %v4156, 1.442695
    %v4191 = vpow.pop %v4190
    %v4192 = vmul.f32 %v4157, 1.442695
    %v4193 = vpow.pop %v4192
    %v4194 = vmul.f32 %v4158, 1.442695
    %v4195 = vpow.pop %v4194
    %v4196 = vmul.f32 %v4159, 1.442695
    %v4197 = vpow.pop %v4196
    %v4198 = vmul.f32 %v4160, 1.442695
    %v4199 = vpow.pop %v4198
    %v4200 = vmul.f32 %v4161, 1.442695
    %v4201 = vpow.pop %v4200
    %v4202 = vmul.f32 %v4162, 1.442695
    %v4203 = vpow.pop %v4202
    %v4204 = vmul.f32 %v4163, 1.442695
    %v4205 = vpow.pop %v4204
    %v4206 = vmul.f32 %v4164, 1.442695
    %v4207 = vpow.pop %v4206
    %v4208 = vmul.f32 %v4165, 1.442695
    %v4209 = vpow.pop %v4208
    %v4210 = vmul.f32 %v4166, 1.442695
    %v4211 = vpow.pop %v4210
    %v4212 = vmul.f32 %v4167, 1.442695
    %v4213 = vpow.pop %v4212
    %v4214 = vmul.f32 %v4168, 1.442695
    %v4215 = vpow.pop %v4214
    %v4216 = vmul.f32 %v4169, 1.442695
    %v4217 = vpow.pop %v4216
    %v4218 = vmul.f32 %v4170, 1.442695
    %v4219 = vpow.pop %v4218
    %v4220 = vmul.f32 %v4171, 1.442695
    %v4221 = vpow.pop %v4220
    %v4222 = vmul.f32 %v4172, 1.442695
    %v4223 = vpow.pop %v4222
    %v4224 = vmul.f32 %v4173, 1.442695
    %v4225 = vpow.pop %v4224
    %v4226 = vmul.f32 %v4174, 1.442695
    %v4227 = vpow.pop %v4226
    %v4228 = vmul.f32 %v4175, 1.442695
    %v4229 = vpow.pop %v4228
    %v4230 = vmul.f32 %v4176, 1.442695
    %v4231 = vpow.pop %v4230
    %v4232 = vmul.f32 %v4177, 1.442695
    %v4233 = vpow.pop %v4232
    %v4234 = vmul.f32 %v4178, 1.442695
    %v4235 = vpow.pop %v4234
    %v4236 = vmul.f32 %v4179, 1.442695
    %v4237 = vpow.pop %v4236
    %v4238 = vmul.f32 %v4180, 1.442695
    %v4239 = vpow.pop %v4238
    %v4240 = vmul.f32 %v4181, 1.442695
    %v4241 = vpow.pop %v4240
    %v4242 = vmul.f32 %v4182, 1.442695
    %v4243 = vpow.pop %v4242
    %v4244 = vmul.f32 %v4183, 1.442695
    %v4245 = vpow.pop %v4244
    %v4246 = vmul.f32 %v4184, 1.442695
    %v4247 = vpow.pop %v4246
    %v4248 = vmul.f32 %v4185, 1.442695
    %v4249 = vpow.pop %v4248
    %4282 = vset.pattern.permute.xlu0 1
    %4283 = vperm.xlu0 %4282, %v4187
    %v4284 = vpop.permute.xlu0 %4283
    %4285 = vset.pattern.permute.xlu0 1
    %4286 = vperm.xlu0 %4285, %v4189
    %v4287 = vpop.permute.xlu0 %4286
    %4288 = vset.pattern.permute.xlu0 1
    %4289 = vperm.xlu0 %4288, %v4191
    %v4290 = vpop.permute.xlu0 %4289
    %4291 = vset.pattern.permute.xlu0 1
    %4292 = vperm.xlu0 %4291, %v4193
    %v4293 = vpop.permute.xlu0 %4292
    %4294 = vset.pattern.permute.xlu0 1
    %4295 = vperm.xlu0 %4294, %v4195
    %v4296 = vpop.permute.xlu0 %4295
    %4297 = vset.pattern.permute.xlu0 1
    %4298 = vperm.xlu0 %4297, %v4197
    %v4299 = vpop.permute.xlu0 %4298
    %4300 = vset.pattern.permute.xlu0 1
    %4301 = vperm.xlu0 %4300, %v4199
    %v4302 = vpop.permute.xlu0 %4301
    %4303 = vset.pattern.permute.xlu0 1
    %4304 = vperm.xlu0 %4303, %v4201
    %v4305 = vpop.permute.xlu0 %4304
    %4306 = vset.pattern.permute.xlu0 1
    %4307 = vperm.xlu0 %4306, %v4203
    %v4308 = vpop.permute.xlu0 %4307
    %4309 = vset.pattern.permute.xlu0 1
    %4310 = vperm.xlu0 %4309, %v4205
    %v4311 = vpop.permute.xlu0 %4310
    %4312 = vset.pattern.permute.xlu0 1
    %4313 = vperm.xlu0 %4312, %v4207
    %v4314 = vpop.permute.xlu0 %4313
    %4315 = vset.pattern.permute.xlu0 1
    %4316 = vperm.xlu0 %4315, %v4209
    %v4317 = vpop.permute.xlu0 %4316
    %4318 = vset.pattern.permute.xlu0 1
    %4319 = vperm.xlu0 %4318, %v4211
    %v4320 = vpop.permute.xlu0 %4319
    %4321 = vset.pattern.permute.xlu0 1
    %4322 = vperm.xlu0 %4321, %v4213
    %v4323 = vpop.permute.xlu0 %4322
    %4324 = vset.pattern.permute.xlu0 1
    %4325 = vperm.xlu0 %4324, %v4215
    %v4326 = vpop.permute.xlu0 %4325
    %4327 = vset.pattern.permute.xlu0 1
    %4328 = vperm.xlu0 %4327, %v4217
    %v4329 = vpop.permute.xlu0 %4328
    %4330 = vset.pattern.permute.xlu0 1
    %4331 = vperm.xlu0 %4330, %v4219
    %v4332 = vpop.permute.xlu0 %4331
    %4333 = vset.pattern.permute.xlu0 1
    %4334 = vperm.xlu0 %4333, %v4221
    %v4335 = vpop.permute.xlu0 %4334
    %4336 = vset.pattern.permute.xlu0 1
    %4337 = vperm.xlu0 %4336, %v4223
    %v4338 = vpop.permute.xlu0 %4337
    %4339 = vset.pattern.permute.xlu0 1
    %4340 = vperm.xlu0 %4339, %v4225
    %v4341 = vpop.permute.xlu0 %4340
    %4342 = vset.pattern.permute.xlu0 1
    %4343 = vperm.xlu0 %4342, %v4227
    %v4344 = vpop.permute.xlu0 %4343
    %4345 = vset.pattern.permute.xlu0 1
    %4346 = vperm.xlu0 %4345, %v4229
    %v4347 = vpop.permute.xlu0 %4346
    %4348 = vset.pattern.permute.xlu0 1
    %4349 = vperm.xlu0 %4348, %v4231
    %v4350 = vpop.permute.xlu0 %4349
    %4351 = vset.pattern.permute.xlu0 1
    %4352 = vperm.xlu0 %4351, %v4233
    %v4353 = vpop.permute.xlu0 %4352
    %4354 = vset.pattern.permute.xlu0 1
    %4355 = vperm.xlu0 %4354, %v4235
    %v4356 = vpop.permute.xlu0 %4355
    %4357 = vset.pattern.permute.xlu0 1
    %4358 = vperm.xlu0 %4357, %v4237
    %v4359 = vpop.permute.xlu0 %4358
    %4360 = vset.pattern.permute.xlu0 1
    %4361 = vperm.xlu0 %4360, %v4239
    %v4362 = vpop.permute.xlu0 %4361
    %4363 = vset.pattern.permute.xlu0 1
    %4364 = vperm.xlu0 %4363, %v4241
    %v4365 = vpop.permute.xlu0 %4364
    %4366 = vset.pattern.permute.xlu0 1
    %4367 = vperm.xlu0 %4366, %v4243
    %v4368 = vpop.permute.xlu0 %4367
    %4369 = vset.pattern.permute.xlu0 1
    %4370 = vperm.xlu0 %4369, %v4245
    %v4371 = vpop.permute.xlu0 %4370
    %4372 = vset.pattern.permute.xlu0 1
    %4373 = vperm.xlu0 %4372, %v4247
    %v4374 = vpop.permute.xlu0 %4373
    %4375 = vset.pattern.permute.xlu0 1
    %4376 = vperm.xlu0 %4375, %v4249
    %v4377 = vpop.permute.xlu0 %4376
    %v4378 = vperm.slane %v4284, %v1018
    %v4379 = vperm.slane %v4287, %v1020
    %v4380 = vsel %vm1022, %v4379, %v4378
    %v4381 = vperm.slane %v4290, %v1018
    %v4382 = vperm.slane %v4293, %v1020
    %v4383 = vsel %vm1022, %v4382, %v4381
    %v4384 = vperm.slane %v4296, %v1018
    %v4385 = vperm.slane %v4299, %v1020
    %v4386 = vsel %vm1022, %v4385, %v4384
    %v4387 = vperm.slane %v4302, %v1018
    %v4388 = vperm.slane %v4305, %v1020
    %v4389 = vsel %vm1022, %v4388, %v4387
    %v4390 = vperm.slane %v4308, %v1018
    %v4391 = vperm.slane %v4311, %v1020
    %v4392 = vsel %vm1022, %v4391, %v4390
    %v4393 = vperm.slane %v4314, %v1018
    %v4394 = vperm.slane %v4317, %v1020
    %v4395 = vsel %vm1022, %v4394, %v4393
    %v4396 = vperm.slane %v4320, %v1018
    %v4397 = vperm.slane %v4323, %v1020
    %v4398 = vsel %vm1022, %v4397, %v4396
    %v4399 = vperm.slane %v4326, %v1018
    %v4400 = vperm.slane %v4329, %v1020
    %v4401 = vsel %vm1022, %v4400, %v4399
    %v4402 = vperm.slane %v4332, %v1018
    %v4403 = vperm.slane %v4335, %v1020
    %v4404 = vsel %vm1022, %v4403, %v4402
    %v4405 = vperm.slane %v4338, %v1018
    %v4406 = vperm.slane %v4341, %v1020
    %v4407 = vsel %vm1022, %v4406, %v4405
    %v4408 = vperm.slane %v4344, %v1018
    %v4409 = vperm.slane %v4347, %v1020
    %v4410 = vsel %vm1022, %v4409, %v4408
    %v4411 = vperm.slane %v4350, %v1018
    %v4412 = vperm.slane %v4353, %v1020
    %v4413 = vsel %vm1022, %v4412, %v4411
    %v4414 = vperm.slane %v4356, %v1018
    %v4415 = vperm.slane %v4359, %v1020
    %v4416 = vsel %vm1022, %v4415, %v4414
    %v4417 = vperm.slane %v4362, %v1018
    %v4418 = vperm.slane %v4365, %v1020
    %v4419 = vsel %vm1022, %v4418, %v4417
    %v4420 = vperm.slane %v4368, %v1018
    %v4421 = vperm.slane %v4371, %v1020
    %v4422 = vsel %vm1022, %v4421, %v4420
    %v4423 = vperm.slane %v4374, %v1018
    %v4424 = vperm.slane %v4377, %v1020
    %v4425 = vsel %vm1022, %v4424, %v4423
    %v4426 = vsel %vm1069, %v4383, %v4380
    %v4427 = vsel %vm1071, %v4386, %v4426
    %v4428 = vsel %vm1073, %v4389, %v4427
    %v4429 = vsel %vm1075, %v4392, %v4428
    %v4430 = vsel %vm1077, %v4395, %v4429
    %v4431 = vsel %vm1079, %v4398, %v4430
    %v4432 = vsel %vm1081, %v4401, %v4431
    %v4433 = vsel %vm1069, %v4407, %v4404
    %v4434 = vsel %vm1071, %v4410, %v4433
    %v4435 = vsel %vm1073, %v4413, %v4434
    %v4436 = vsel %vm1075, %v4416, %v4435
    %v4437 = vsel %vm1077, %v4419, %v4436
    %v4438 = vsel %vm1079, %v4422, %v4437
    %v4439 = vsel %vm1081, %v4425, %v4438
    %v4442 = vsel %vm437, %v4432, 0.0
    %4443 = vadd.xlane.f32.xlu0 %v4442
    %v4444 = vpop.xlane.xlu0 %4443
    %v4445 = vsel %vm437, %v4439, 0.0
    %4446 = vadd.xlane.f32.xlu0 %v4445
    %v4447 = vpop.xlane.xlu0 %4446
    %v4448 = vmax.f32 %v4444, 1e-20
    %v4449 = vmax.f32 %v4447, 1e-20
    %v4450 = vrcp.pop %v4448
    %v4451 = vrcp.pop %v4449
    %v4454 = vperm.slane %v4450, 0
    %v4455 = vperm.slane %v4450, 1
    %v4456 = vperm.slane %v4450, 2
    %v4457 = vperm.slane %v4450, 3
    %v4458 = vperm.slane %v4450, 4
    %v4459 = vperm.slane %v4450, 5
    %v4460 = vperm.slane %v4450, 6
    %v4461 = vperm.slane %v4450, 7
    %v4462 = vperm.slane %v4451, 0
    %v4463 = vperm.slane %v4451, 1
    %v4464 = vperm.slane %v4451, 2
    %v4465 = vperm.slane %v4451, 3
    %v4466 = vperm.slane %v4451, 4
    %v4467 = vperm.slane %v4451, 5
    %v4468 = vperm.slane %v4451, 6
    %v4469 = vperm.slane %v4451, 7
    %v4486 = vmul.f32 %v4187, %v4454
    %v4487 = vmul.f32 %v4189, %v4454
    %v4488 = vmul.f32 %v4191, %v4455
    %v4489 = vmul.f32 %v4193, %v4455
    %v4490 = vmul.f32 %v4195, %v4456
    %v4491 = vmul.f32 %v4197, %v4456
    %v4492 = vmul.f32 %v4199, %v4457
    %v4493 = vmul.f32 %v4201, %v4457
    %v4494 = vmul.f32 %v4203, %v4458
    %v4495 = vmul.f32 %v4205, %v4458
    %v4496 = vmul.f32 %v4207, %v4459
    %v4497 = vmul.f32 %v4209, %v4459
    %v4498 = vmul.f32 %v4211, %v4460
    %v4499 = vmul.f32 %v4213, %v4460
    %v4500 = vmul.f32 %v4215, %v4461
    %v4501 = vmul.f32 %v4217, %v4461
    %v4502 = vmul.f32 %v4219, %v4462
    %v4503 = vmul.f32 %v4221, %v4462
    %v4504 = vmul.f32 %v4223, %v4463
    %v4505 = vmul.f32 %v4225, %v4463
    %v4506 = vmul.f32 %v4227, %v4464
    %v4507 = vmul.f32 %v4229, %v4464
    %v4508 = vmul.f32 %v4231, %v4465
    %v4509 = vmul.f32 %v4233, %v4465
    %v4510 = vmul.f32 %v4235, %v4466
    %v4511 = vmul.f32 %v4237, %v4466
    %v4512 = vmul.f32 %v4239, %v4467
    %v4513 = vmul.f32 %v4241, %v4467
    %v4514 = vmul.f32 %v4243, %v4468
    %v4515 = vmul.f32 %v4245, %v4468
    %v4516 = vmul.f32 %v4247, %v4469
    %v4517 = vmul.f32 %v4249, %v4469
    %4550 = vset.pattern.permute.xlu0 1
    %4551 = vperm.xlu0 %4550, %v4486
    %v4552 = vpop.permute.xlu0 %4551
    %4553 = vset.pattern.permute.xlu0 1
    %4554 = vperm.xlu0 %4553, %v4487
    %v4555 = vpop.permute.xlu0 %4554
    %4556 = vset.pattern.permute.xlu0 1
    %4557 = vperm.xlu0 %4556, %v4488
    %v4558 = vpop.permute.xlu0 %4557
    %4559 = vset.pattern.permute.xlu0 1
    %4560 = vperm.xlu0 %4559, %v4489
    %v4561 = vpop.permute.xlu0 %4560
    %4562 = vset.pattern.permute.xlu0 1
    %4563 = vperm.xlu0 %4562, %v4490
    %v4564 = vpop.permute.xlu0 %4563
    %4565 = vset.pattern.permute.xlu0 1
    %4566 = vperm.xlu0 %4565, %v4491
    %v4567 = vpop.permute.xlu0 %4566
    %4568 = vset.pattern.permute.xlu0 1
    %4569 = vperm.xlu0 %4568, %v4492
    %v4570 = vpop.permute.xlu0 %4569
    %4571 = vset.pattern.permute.xlu0 1
    %4572 = vperm.xlu0 %4571, %v4493
    %v4573 = vpop.permute.xlu0 %4572
    %4574 = vset.pattern.permute.xlu0 1
    %4575 = vperm.xlu0 %4574, %v4494
    %v4576 = vpop.permute.xlu0 %4575
    %4577 = vset.pattern.permute.xlu0 1
    %4578 = vperm.xlu0 %4577, %v4495
    %v4579 = vpop.permute.xlu0 %4578
    %4580 = vset.pattern.permute.xlu0 1
    %4581 = vperm.xlu0 %4580, %v4496
    %v4582 = vpop.permute.xlu0 %4581
    %4583 = vset.pattern.permute.xlu0 1
    %4584 = vperm.xlu0 %4583, %v4497
    %v4585 = vpop.permute.xlu0 %4584
    %4586 = vset.pattern.permute.xlu0 1
    %4587 = vperm.xlu0 %4586, %v4498
    %v4588 = vpop.permute.xlu0 %4587
    %4589 = vset.pattern.permute.xlu0 1
    %4590 = vperm.xlu0 %4589, %v4499
    %v4591 = vpop.permute.xlu0 %4590
    %4592 = vset.pattern.permute.xlu0 1
    %4593 = vperm.xlu0 %4592, %v4500
    %v4594 = vpop.permute.xlu0 %4593
    %4595 = vset.pattern.permute.xlu0 1
    %4596 = vperm.xlu0 %4595, %v4501
    %v4597 = vpop.permute.xlu0 %4596
    %4598 = vset.pattern.permute.xlu0 1
    %4599 = vperm.xlu0 %4598, %v4502
    %v4600 = vpop.permute.xlu0 %4599
    %4601 = vset.pattern.permute.xlu0 1
    %4602 = vperm.xlu0 %4601, %v4503
    %v4603 = vpop.permute.xlu0 %4602
    %4604 = vset.pattern.permute.xlu0 1
    %4605 = vperm.xlu0 %4604, %v4504
    %v4606 = vpop.permute.xlu0 %4605
    %4607 = vset.pattern.permute.xlu0 1
    %4608 = vperm.xlu0 %4607, %v4505
    %v4609 = vpop.permute.xlu0 %4608
    %4610 = vset.pattern.permute.xlu0 1
    %4611 = vperm.xlu0 %4610, %v4506
    %v4612 = vpop.permute.xlu0 %4611
    %4613 = vset.pattern.permute.xlu0 1
    %4614 = vperm.xlu0 %4613, %v4507
    %v4615 = vpop.permute.xlu0 %4614
    %4616 = vset.pattern.permute.xlu0 1
    %4617 = vperm.xlu0 %4616, %v4508
    %v4618 = vpop.permute.xlu0 %4617
    %4619 = vset.pattern.permute.xlu0 1
    %4620 = vperm.xlu0 %4619, %v4509
    %v4621 = vpop.permute.xlu0 %4620
    %4622 = vset.pattern.permute.xlu0 1
    %4623 = vperm.xlu0 %4622, %v4510
    %v4624 = vpop.permute.xlu0 %4623
    %4625 = vset.pattern.permute.xlu0 1
    %4626 = vperm.xlu0 %4625, %v4511
    %v4627 = vpop.permute.xlu0 %4626
    %4628 = vset.pattern.permute.xlu0 1
    %4629 = vperm.xlu0 %4628, %v4512
    %v4630 = vpop.permute.xlu0 %4629
    %4631 = vset.pattern.permute.xlu0 1
    %4632 = vperm.xlu0 %4631, %v4513
    %v4633 = vpop.permute.xlu0 %4632
    %4634 = vset.pattern.permute.xlu0 1
    %4635 = vperm.xlu0 %4634, %v4514
    %v4636 = vpop.permute.xlu0 %4635
    %4637 = vset.pattern.permute.xlu0 1
    %4638 = vperm.xlu0 %4637, %v4515
    %v4639 = vpop.permute.xlu0 %4638
    %4640 = vset.pattern.permute.xlu0 1
    %4641 = vperm.xlu0 %4640, %v4516
    %v4642 = vpop.permute.xlu0 %4641
    %4643 = vset.pattern.permute.xlu0 1
    %4644 = vperm.xlu0 %4643, %v4517
    %v4645 = vpop.permute.xlu0 %4644
    %v4646 = vperm.slane %v4552, %v1018
    %v4647 = vperm.slane %v4555, %v1020
    %v4648 = vsel %vm1022, %v4647, %v4646
    %v4649 = vperm.slane %v4558, %v1018
    %v4650 = vperm.slane %v4561, %v1020
    %v4651 = vsel %vm1022, %v4650, %v4649
    %v4652 = vperm.slane %v4564, %v1018
    %v4653 = vperm.slane %v4567, %v1020
    %v4654 = vsel %vm1022, %v4653, %v4652
    %v4655 = vperm.slane %v4570, %v1018
    %v4656 = vperm.slane %v4573, %v1020
    %v4657 = vsel %vm1022, %v4656, %v4655
    %v4658 = vperm.slane %v4576, %v1018
    %v4659 = vperm.slane %v4579, %v1020
    %v4660 = vsel %vm1022, %v4659, %v4658
    %v4661 = vperm.slane %v4582, %v1018
    %v4662 = vperm.slane %v4585, %v1020
    %v4663 = vsel %vm1022, %v4662, %v4661
    %v4664 = vperm.slane %v4588, %v1018
    %v4665 = vperm.slane %v4591, %v1020
    %v4666 = vsel %vm1022, %v4665, %v4664
    %v4667 = vperm.slane %v4594, %v1018
    %v4668 = vperm.slane %v4597, %v1020
    %v4669 = vsel %vm1022, %v4668, %v4667
    %v4670 = vperm.slane %v4600, %v1018
    %v4671 = vperm.slane %v4603, %v1020
    %v4672 = vsel %vm1022, %v4671, %v4670
    %v4673 = vperm.slane %v4606, %v1018
    %v4674 = vperm.slane %v4609, %v1020
    %v4675 = vsel %vm1022, %v4674, %v4673
    %v4676 = vperm.slane %v4612, %v1018
    %v4677 = vperm.slane %v4615, %v1020
    %v4678 = vsel %vm1022, %v4677, %v4676
    %v4679 = vperm.slane %v4618, %v1018
    %v4680 = vperm.slane %v4621, %v1020
    %v4681 = vsel %vm1022, %v4680, %v4679
    %v4682 = vperm.slane %v4624, %v1018
    %v4683 = vperm.slane %v4627, %v1020
    %v4684 = vsel %vm1022, %v4683, %v4682
    %v4685 = vperm.slane %v4630, %v1018
    %v4686 = vperm.slane %v4633, %v1020
    %v4687 = vsel %vm1022, %v4686, %v4685
    %v4688 = vperm.slane %v4636, %v1018
    %v4689 = vperm.slane %v4639, %v1020
    %v4690 = vsel %vm1022, %v4689, %v4688
    %v4691 = vperm.slane %v4642, %v1018
    %v4692 = vperm.slane %v4645, %v1020
    %v4693 = vsel %vm1022, %v4692, %v4691
    %v4694 = vsel %vm1069, %v4651, %v4648
    %v4695 = vsel %vm1071, %v4654, %v4694
    %v4696 = vsel %vm1073, %v4657, %v4695
    %v4697 = vsel %vm1075, %v4660, %v4696
    %v4698 = vsel %vm1077, %v4663, %v4697
    %v4699 = vsel %vm1079, %v4666, %v4698
    %v4700 = vsel %vm1081, %v4669, %v4699
    %v4701 = vsel %vm1069, %v4675, %v4672
    %v4702 = vsel %vm1071, %v4678, %v4701
    %v4703 = vsel %vm1073, %v4681, %v4702
    %v4704 = vsel %vm1075, %v4684, %v4703
    %v4705 = vsel %vm1077, %v4687, %v4704
    %v4706 = vsel %vm1079, %v4690, %v4705
    %v4707 = vsel %vm1081, %v4693, %v4706
    %4708 = vrot.lane.b32.xlu0 %v2639, 120
    %v4709 = vpop.permute.xlu0 %4708
    %4710 = vrot.lane.b32.xlu0 %v2640, 120
    %v4711 = vpop.permute.xlu0 %4710
    %v4714 = vsel %vm437, %v4700, 0
    %v4716 = vsel %vm437, %v4707, 0
    %4718 = vmatpush.msra.mxu0 0.0
    %4719 = vmatpush.msra.mxu0 0.0
    %4720 = vmatpush.msra.mxu0 0.0
    %4721 = vmatpush.msra.mxu0 0.0
    %4722 = vmatpush.msra.mxu0 0.0
    %4723 = vmatpush.msra.mxu0 0.0
    %4724 = vmatpush.msra.mxu0 0.0
    %4725 = vmatpush.msra.mxu0 0.0
    %4726 = vmatpush.msra.mxu0 0.0
    %4727 = vmatpush.msra.mxu0 0.0
    %4728 = vmatpush.msra.mxu0 0.0
    %4729 = vmatpush.msra.mxu0 0.0
    %4730 = vmatpush.msra.mxu0 0.0
    %4731 = vmatpush.msra.mxu0 0.0
    %4732 = vmatpush.msra.mxu0 %v4711
    %4733 = vmatpush.msra.mxu0 %v4709
    %4734 = vmatmul.f32.gmra.mxu0 %v4714
    %v4735 = vpop.f32.mrf.mxu0
    %v4736 = vadd.f32 0.0, %v4735
    %4737 = vmatmul.f32.gmra.mxu0 %v4716
    %v4738 = vpop.f32.mrf.mxu0
    %v4739 = vadd.f32 0.0, %v4738
    %4740 = vdwg.mxu0
    %4743 = vrot.lane.b32.xlu0 %v4736, 8
    %v4744 = vpop.permute.xlu0 %4743
    %4745 = vrot.lane.b32.xlu0 %v4739, 8
    %v4746 = vpop.permute.xlu0 %4745
    %4749 = vst.msk [vmem:[#allocation2] sm:$0xff] %vm1022, %v4744
    %4750 = vst.msk [vmem:[#allocation2 + $0x8] sm:$0xff] %vm1022, %v4746
    %v4751 = vld [vmem:[#allocation2] sm:$0xff]
    %v4752 = vld [vmem:[#allocation2 + $0x8] sm:$0xff]
    %v4753 = vperm.slane %v2606, 2
    %v4754 = vadd.f32 %v4751, %v4753
    %v4755 = vadd.f32 %v4752, %v4753
    %4756 = vmatpush.msra.mxu0 0.0
    %4757 = vmatpush.msra.mxu0 0.0
    %4758 = vmatpush.msra.mxu0 0.0
    %4759 = vmatpush.msra.mxu0 0.0
    %4760 = vmatpush.msra.mxu0 0.0
    %4761 = vmatpush.msra.mxu0 0.0
    %4762 = vmatpush.msra.mxu0 0.0
    %4763 = vmatpush.msra.mxu0 0.0
    %4764 = vmatpush.msra.mxu0 0.0
    %4765 = vmatpush.msra.mxu0 0.0
    %4766 = vmatpush.msra.mxu0 0.0
    %4767 = vmatpush.msra.mxu0 0.0
    %4768 = vmatpush.msra.mxu0 0.0
    %4769 = vmatpush.msra.mxu0 0.0
    %4770 = vmatpush.msra.mxu0 %v4755
    %4771 = vmatpush.msra.mxu0 %v4754
    %4772 = vmatmul.f32.gmra.mxu0 %v2518
    %v4773 = vpop.f32.mrf.mxu0
    %v4774 = vadd.f32 0.0, %v4773
    %4775 = vmatmul.f32.gmra.mxu0 %v2521
    %v4776 = vpop.f32.mrf.mxu0
    %v4777 = vadd.f32 0.0, %v4776
    %4778 = vdwg.mxu0
    %v4779 = vperm.slane %v2606, 5
    %v4780 = vmul.f32 %v4779, %v4774
    %v4781 = vmul.f32 %v4779, %v4777
    %v4782 = vsub.f32 %v4754, %v4780
    %v4783 = vsub.f32 %v4755, %v4781
    %v4784 = vmul.f32 %v4782, %v4782
    %v4785 = vmul.f32 %v4783, %v4783
    %v4786 = vperm.slane %v2606, 3
    %v4787 = vmul.f32 %v4786, %v4782
    %v4788 = vmul.f32 %v4786, %v4783
    %4789 = vmatpush.msra.mxu0 0.0
    %4790 = vmatpush.msra.mxu0 0.0
    %4791 = vmatpush.msra.mxu0 0.0
    %4792 = vmatpush.msra.mxu0 0.0
    %4793 = vmatpush.msra.mxu0 0.0
    %4794 = vmatpush.msra.mxu0 0.0
    %4795 = vmatpush.msra.mxu0 0.0
    %4796 = vmatpush.msra.mxu0 0.0
    %4797 = vmatpush.msra.mxu0 0.0
    %4798 = vmatpush.msra.mxu0 0.0
    %4799 = vmatpush.msra.mxu0 0.0
    %4800 = vmatpush.msra.mxu0 0.0
    %4801 = vmatpush.msra.mxu0 0.0
    %4802 = vmatpush.msra.mxu0 0.0
    %4803 = vmatpush.msra.mxu0 %v4785
    %4804 = vmatpush.msra.mxu0 %v4784
    %4805 = vmatmul.f32.gmra.mxu0 %v2518
    %v4806 = vpop.f32.mrf.mxu0
    %v4807 = vadd.f32 1e-05, %v4806
    %4808 = vmatmul.f32.gmra.mxu0 %v2521
    %v4809 = vpop.f32.mrf.mxu0
    %v4810 = vadd.f32 1e-05, %v4809
    %4811 = vdwg.mxu0
    %v4812 = vrsqrt.pop %v4807
    %v4813 = vmul.f32 %v4812, %v4807
    %v4814 = vmul.f32 %v4813, %v4812
    %v4815 = vmul.f32 0.5, %v4814
    %v4816 = vsub.f32 1.5, %v4815
    %v4817 = vmul.f32 %v4812, %v4816
    %vm4818 = vweird.f32 %v4807
    %vm4819 = vweird.f32 %v4812
    %vm4820 = vmor %vm4818, %vm4819
    %v4821 = vsel %vm4820, %v4812, %v4817
    %v4822 = vrsqrt.pop %v4810
    %v4823 = vmul.f32 %v4822, %v4810
    %v4824 = vmul.f32 %v4823, %v4822
    %v4825 = vmul.f32 0.5, %v4824
    %v4826 = vsub.f32 1.5, %v4825
    %v4827 = vmul.f32 %v4822, %v4826
    %vm4828 = vweird.f32 %v4810
    %vm4829 = vweird.f32 %v4822
    %vm4830 = vmor %vm4828, %vm4829
    %v4831 = vsel %vm4830, %v4822, %v4827
    %v4832 = vmul.f32 %v4787, %v4821
    %v4833 = vmul.f32 %v4788, %v4831
    %v4834 = vperm.slane %v2606, 4
    %v4835 = vadd.f32 %v4832, %v4834
    %v4836 = vadd.f32 %v4833, %v4834
    %v4837 = vmax.f32 %v4835, 0.0
    %v4838 = vmax.f32 %v4836, 0.0
    %v4839 = vld [vmem:[%s11] sm:$0xff]
    %v4840 = vld [vmem:[%s10] sm:$0xff]
    %v4841 = vld [vmem:[%s10 + $0x8] sm:$0xff]
    %v4843 = vsel %vm437, %v4837, 0
    %v4846 = vsel %vm437, %v4838, 0
    %4848 = vmatpush.msra.mxu0 0.0
    %4849 = vmatpush.msra.mxu0 0.0
    %4850 = vmatpush.msra.mxu0 0.0
    %4851 = vmatpush.msra.mxu0 0.0
    %4852 = vmatpush.msra.mxu0 0.0
    %4853 = vmatpush.msra.mxu0 0.0
    %4854 = vmatpush.msra.mxu0 0.0
    %4855 = vmatpush.msra.mxu0 0.0
    %4856 = vmatpush.msra.mxu0 0.0
    %4857 = vmatpush.msra.mxu0 0.0
    %4858 = vmatpush.msra.mxu0 0.0
    %4859 = vmatpush.msra.mxu0 0.0
    %4860 = vmatpush.msra.mxu0 0.0
    %4861 = vmatpush.msra.mxu0 0.0
    %4862 = vmatpush.msra.mxu0 %v4841
    %4863 = vmatpush.msra.mxu0 %v4840
    %4864 = vmatmul.f32.gmra.mxu0 %v4843
    %v4865 = vpop.f32.mrf.mxu0
    %v4866 = vadd.f32 0.0, %v4865
    %4867 = vmatmul.f32.gmra.mxu0 %v4846
    %v4868 = vpop.f32.mrf.mxu0
    %v4869 = vadd.f32 0.0, %v4868
    %4870 = vdwg.mxu0
    %v4871 = vperm.slane %v4839, 0
    %v4872 = vadd.f32 %v4866, %v4871
    %v4873 = vadd.f32 %v4869, %v4871
    %v4874 = vperm.slane %v4839, 1
    %4876 = vrot.lane.b32.xlu0 %v4874, 16
    %v4877 = vpop.permute.xlu0 %4876
    %v4879 = vadd.f32 %v4866, %v4877
    %v4880 = vadd.f32 %v4869, %v4877
    %v4883 = vrot.slane %v4879, 1
    %v4884 = vrot.slane %v4879, 2
    %v4885 = vrot.slane %v4879, 3
    %v4886 = vrot.slane %v4879, 4
    %v4887 = vrot.slane %v4879, 5
    %v4888 = vrot.slane %v4879, 6
    %v4889 = vrot.slane %v4879, 7
    %v4890 = vrot.slane %v4880, 1
    %v4891 = vrot.slane %v4880, 2
    %v4892 = vrot.slane %v4880, 3
    %v4893 = vrot.slane %v4880, 4
    %v4894 = vrot.slane %v4880, 5
    %v4895 = vrot.slane %v4880, 6
    %v4896 = vrot.slane %v4880, 7
    %v4897 = vperm.slane %v4879, 0
    %v4898 = vperm.slane %v4883, 0
    %v4899 = vperm.slane %v4884, 0
    %v4900 = vperm.slane %v4885, 0
    %v4901 = vperm.slane %v4886, 0
    %v4902 = vperm.slane %v4887, 0
    %v4903 = vperm.slane %v4888, 0
    %v4904 = vperm.slane %v4889, 0
    %v4905 = vperm.slane %v4880, 0
    %v4906 = vperm.slane %v4890, 0
    %v4907 = vperm.slane %v4891, 0
    %v4908 = vperm.slane %v4892, 0
    %v4909 = vperm.slane %v4893, 0
    %v4910 = vperm.slane %v4894, 0
    %v4911 = vperm.slane %v4895, 0
    %v4912 = vperm.slane %v4896, 0
    %4931 = vrot.lane.b32.xlu0 %v4872, 16
    %v4932 = vpop.permute.xlu0 %4931
    %4933 = vrot.lane.b32.xlu0 %v4873, 16
    %v4934 = vpop.permute.xlu0 %4933
    %v4937 = vadd.f32 %v4897, %v4932
    %v4938 = vadd.f32 %v4897, %v4934
    %v4939 = vadd.f32 %v4898, %v4932
    %v4940 = vadd.f32 %v4898, %v4934
    %v4941 = vadd.f32 %v4899, %v4932
    %v4942 = vadd.f32 %v4899, %v4934
    %v4943 = vadd.f32 %v4900, %v4932
    %v4944 = vadd.f32 %v4900, %v4934
    %v4945 = vadd.f32 %v4901, %v4932
    %v4946 = vadd.f32 %v4901, %v4934
    %v4947 = vadd.f32 %v4902, %v4932
    %v4948 = vadd.f32 %v4902, %v4934
    %v4949 = vadd.f32 %v4903, %v4932
    %v4950 = vadd.f32 %v4903, %v4934
    %v4951 = vadd.f32 %v4904, %v4932
    %v4952 = vadd.f32 %v4904, %v4934
    %v4953 = vadd.f32 %v4905, %v4932
    %v4954 = vadd.f32 %v4905, %v4934
    %v4955 = vadd.f32 %v4906, %v4932
    %v4956 = vadd.f32 %v4906, %v4934
    %v4957 = vadd.f32 %v4907, %v4932
    %v4958 = vadd.f32 %v4907, %v4934
    %v4959 = vadd.f32 %v4908, %v4932
    %v4960 = vadd.f32 %v4908, %v4934
    %v4961 = vadd.f32 %v4909, %v4932
    %v4962 = vadd.f32 %v4909, %v4934
    %v4963 = vadd.f32 %v4910, %v4932
    %v4964 = vadd.f32 %v4910, %v4934
    %v4965 = vadd.f32 %v4911, %v4932
    %v4966 = vadd.f32 %v4911, %v4934
    %v4967 = vadd.f32 %v4912, %v4932
    %v4968 = vadd.f32 %v4912, %v4934
    %vm4969 = vcmp.gt.f32.partialorder %v4937, 0.0
    %vm4970 = vcmp.gt.f32.partialorder %v4938, 0.0
    %vm4971 = vcmp.gt.f32.partialorder %v4939, 0.0
    %vm4972 = vcmp.gt.f32.partialorder %v4940, 0.0
    %vm4973 = vcmp.gt.f32.partialorder %v4941, 0.0
    %vm4974 = vcmp.gt.f32.partialorder %v4942, 0.0
    %vm4975 = vcmp.gt.f32.partialorder %v4943, 0.0
    %vm4976 = vcmp.gt.f32.partialorder %v4944, 0.0
    %vm4977 = vcmp.gt.f32.partialorder %v4945, 0.0
    %vm4978 = vcmp.gt.f32.partialorder %v4946, 0.0
    %vm4979 = vcmp.gt.f32.partialorder %v4947, 0.0
    %vm4980 = vcmp.gt.f32.partialorder %v4948, 0.0
    %vm4981 = vcmp.gt.f32.partialorder %v4949, 0.0
    %vm4982 = vcmp.gt.f32.partialorder %v4950, 0.0
    %vm4983 = vcmp.gt.f32.partialorder %v4951, 0.0
    %vm4984 = vcmp.gt.f32.partialorder %v4952, 0.0
    %vm4985 = vcmp.gt.f32.partialorder %v4953, 0.0
    %vm4986 = vcmp.gt.f32.partialorder %v4954, 0.0
    %vm4987 = vcmp.gt.f32.partialorder %v4955, 0.0
    %vm4988 = vcmp.gt.f32.partialorder %v4956, 0.0
    %vm4989 = vcmp.gt.f32.partialorder %v4957, 0.0
    %vm4990 = vcmp.gt.f32.partialorder %v4958, 0.0
    %vm4991 = vcmp.gt.f32.partialorder %v4959, 0.0
    %vm4992 = vcmp.gt.f32.partialorder %v4960, 0.0
    %vm4993 = vcmp.gt.f32.partialorder %v4961, 0.0
    %vm4994 = vcmp.gt.f32.partialorder %v4962, 0.0
    %vm4995 = vcmp.gt.f32.partialorder %v4963, 0.0
    %vm4996 = vcmp.gt.f32.partialorder %v4964, 0.0
    %vm4997 = vcmp.gt.f32.partialorder %v4965, 0.0
    %vm4998 = vcmp.gt.f32.partialorder %v4966, 0.0
    %vm4999 = vcmp.gt.f32.partialorder %v4967, 0.0
    %vm5000 = vcmp.gt.f32.partialorder %v4968, 0.0
    %v5001 = vmul.f32 %v4937, 0.2
    %v5002 = vmul.f32 %v4938, 0.2
    %v5003 = vmul.f32 %v4939, 0.2
    %v5004 = vmul.f32 %v4940, 0.2
    %v5005 = vmul.f32 %v4941, 0.2
    %v5006 = vmul.f32 %v4942, 0.2
    %v5007 = vmul.f32 %v4943, 0.2
    %v5008 = vmul.f32 %v4944, 0.2
    %v5009 = vmul.f32 %v4945, 0.2
    %v5010 = vmul.f32 %v4946, 0.2
    %v5011 = vmul.f32 %v4947, 0.2
    %v5012 = vmul.f32 %v4948, 0.2
    %v5013 = vmul.f32 %v4949, 0.2
    %v5014 = vmul.f32 %v4950, 0.2
    %v5015 = vmul.f32 %v4951, 0.2
    %v5016 = vmul.f32 %v4952, 0.2
    %v5017 = vmul.f32 %v4953, 0.2
    %v5018 = vmul.f32 %v4954, 0.2
    %v5019 = vmul.f32 %v4955, 0.2
    %v5020 = vmul.f32 %v4956, 0.2
    %v5021 = vmul.f32 %v4957, 0.2
    %v5022 = vmul.f32 %v4958, 0.2
    %v5023 = vmul.f32 %v4959, 0.2
    %v5024 = vmul.f32 %v4960, 0.2
    %v5025 = vmul.f32 %v4961, 0.2
    %v5026 = vmul.f32 %v4962, 0.2
    %v5027 = vmul.f32 %v4963, 0.2
    %v5028 = vmul.f32 %v4964, 0.2
    %v5029 = vmul.f32 %v4965, 0.2
    %v5030 = vmul.f32 %v4966, 0.2
    %v5031 = vmul.f32 %v4967, 0.2
    %v5032 = vmul.f32 %v4968, 0.2
    %v5033 = vsel %vm4969, %v4937, %v5001
    %v5034 = vsel %vm4970, %v4938, %v5002
    %v5035 = vsel %vm4971, %v4939, %v5003
    %v5036 = vsel %vm4972, %v4940, %v5004
    %v5037 = vsel %vm4973, %v4941, %v5005
    %v5038 = vsel %vm4974, %v4942, %v5006
    %v5039 = vsel %vm4975, %v4943, %v5007
    %v5040 = vsel %vm4976, %v4944, %v5008
    %v5041 = vsel %vm4977, %v4945, %v5009
    %v5042 = vsel %vm4978, %v4946, %v5010
    %v5043 = vsel %vm4979, %v4947, %v5011
    %v5044 = vsel %vm4980, %v4948, %v5012
    %v5045 = vsel %vm4981, %v4949, %v5013
    %v5046 = vsel %vm4982, %v4950, %v5014
    %v5047 = vsel %vm4983, %v4951, %v5015
    %v5048 = vsel %vm4984, %v4952, %v5016
    %v5049 = vsel %vm4985, %v4953, %v5017
    %v5050 = vsel %vm4986, %v4954, %v5018
    %v5051 = vsel %vm4987, %v4955, %v5019
    %v5052 = vsel %vm4988, %v4956, %v5020
    %v5053 = vsel %vm4989, %v4957, %v5021
    %v5054 = vsel %vm4990, %v4958, %v5022
    %v5055 = vsel %vm4991, %v4959, %v5023
    %v5056 = vsel %vm4992, %v4960, %v5024
    %v5057 = vsel %vm4993, %v4961, %v5025
    %v5058 = vsel %vm4994, %v4962, %v5026
    %v5059 = vsel %vm4995, %v4963, %v5027
    %v5060 = vsel %vm4996, %v4964, %v5028
    %v5061 = vsel %vm4997, %v4965, %v5029
    %v5062 = vsel %vm4998, %v4966, %v5030
    %v5063 = vsel %vm4999, %v4967, %v5031
    %v5064 = vsel %vm5000, %v4968, %v5032
    %v5065 = vld [vmem:[%s12] sm:$0xff]
    %v5066 = vld [vmem:[%s12 + $0x8] sm:$0xff]
    %5099 = vrot.lane.b32.xlu0 %v5033, 112
    %v5100 = vpop.permute.xlu0 %5099
    %5101 = vrot.lane.b32.xlu0 %v5034, 112
    %v5102 = vpop.permute.xlu0 %5101
    %5103 = vrot.lane.b32.xlu0 %v5035, 112
    %v5104 = vpop.permute.xlu0 %5103
    %5105 = vrot.lane.b32.xlu0 %v5036, 112
    %v5106 = vpop.permute.xlu0 %5105
    %5107 = vrot.lane.b32.xlu0 %v5037, 112
    %v5108 = vpop.permute.xlu0 %5107
    %5109 = vrot.lane.b32.xlu0 %v5038, 112
    %v5110 = vpop.permute.xlu0 %5109
    %5111 = vrot.lane.b32.xlu0 %v5039, 112
    %v5112 = vpop.permute.xlu0 %5111
    %5113 = vrot.lane.b32.xlu0 %v5040, 112
    %v5114 = vpop.permute.xlu0 %5113
    %5115 = vrot.lane.b32.xlu0 %v5041, 112
    %v5116 = vpop.permute.xlu0 %5115
    %5117 = vrot.lane.b32.xlu0 %v5042, 112
    %v5118 = vpop.permute.xlu0 %5117
    %5119 = vrot.lane.b32.xlu0 %v5043, 112
    %v5120 = vpop.permute.xlu0 %5119
    %5121 = vrot.lane.b32.xlu0 %v5044, 112
    %v5122 = vpop.permute.xlu0 %5121
    %5123 = vrot.lane.b32.xlu0 %v5045, 112
    %v5124 = vpop.permute.xlu0 %5123
    %5125 = vrot.lane.b32.xlu0 %v5046, 112
    %v5126 = vpop.permute.xlu0 %5125
    %5127 = vrot.lane.b32.xlu0 %v5047, 112
    %v5128 = vpop.permute.xlu0 %5127
    %5129 = vrot.lane.b32.xlu0 %v5048, 112
    %v5130 = vpop.permute.xlu0 %5129
    %5131 = vrot.lane.b32.xlu0 %v5049, 112
    %v5132 = vpop.permute.xlu0 %5131
    %5133 = vrot.lane.b32.xlu0 %v5050, 112
    %v5134 = vpop.permute.xlu0 %5133
    %5135 = vrot.lane.b32.xlu0 %v5051, 112
    %v5136 = vpop.permute.xlu0 %5135
    %5137 = vrot.lane.b32.xlu0 %v5052, 112
    %v5138 = vpop.permute.xlu0 %5137
    %5139 = vrot.lane.b32.xlu0 %v5053, 112
    %v5140 = vpop.permute.xlu0 %5139
    %5141 = vrot.lane.b32.xlu0 %v5054, 112
    %v5142 = vpop.permute.xlu0 %5141
    %5143 = vrot.lane.b32.xlu0 %v5055, 112
    %v5144 = vpop.permute.xlu0 %5143
    %5145 = vrot.lane.b32.xlu0 %v5056, 112
    %v5146 = vpop.permute.xlu0 %5145
    %5147 = vrot.lane.b32.xlu0 %v5057, 112
    %v5148 = vpop.permute.xlu0 %5147
    %5149 = vrot.lane.b32.xlu0 %v5058, 112
    %v5150 = vpop.permute.xlu0 %5149
    %5151 = vrot.lane.b32.xlu0 %v5059, 112
    %v5152 = vpop.permute.xlu0 %5151
    %5153 = vrot.lane.b32.xlu0 %v5060, 112
    %v5154 = vpop.permute.xlu0 %5153
    %5155 = vrot.lane.b32.xlu0 %v5061, 112
    %v5156 = vpop.permute.xlu0 %5155
    %5157 = vrot.lane.b32.xlu0 %v5062, 112
    %v5158 = vpop.permute.xlu0 %5157
    %5159 = vrot.lane.b32.xlu0 %v5063, 112
    %v5160 = vpop.permute.xlu0 %5159
    %5161 = vrot.lane.b32.xlu0 %v5064, 112
    %v5162 = vpop.permute.xlu0 %5161
    %v5163 = vsel %vm437, %v5100, 0
    %v5165 = vsel %vm437, %v5102, 0
    %v5167 = vsel %vm437, %v5104, 0
    %v5169 = vsel %vm437, %v5106, 0
    %v5171 = vsel %vm437, %v5108, 0
    %v5173 = vsel %vm437, %v5110, 0
    %v5175 = vsel %vm437, %v5112, 0
    %v5177 = vsel %vm437, %v5114, 0
    %v5179 = vsel %vm437, %v5116, 0
    %v5181 = vsel %vm437, %v5118, 0
    %v5183 = vsel %vm437, %v5120, 0
    %v5185 = vsel %vm437, %v5122, 0
    %v5187 = vsel %vm437, %v5124, 0
    %v5189 = vsel %vm437, %v5126, 0
    %v5191 = vsel %vm437, %v5128, 0
    %v5193 = vsel %vm437, %v5130, 0
    %v5195 = vsel %vm437, %v5132, 0
    %v5197 = vsel %vm437, %v5134, 0
    %v5199 = vsel %vm437, %v5136, 0
    %v5201 = vsel %vm437, %v5138, 0
    %v5203 = vsel %vm437, %v5140, 0
    %v5205 = vsel %vm437, %v5142, 0
    %v5207 = vsel %vm437, %v5144, 0
    %v5209 = vsel %vm437, %v5146, 0
    %v5211 = vsel %vm437, %v5148, 0
    %v5213 = vsel %vm437, %v5150, 0
    %v5215 = vsel %vm437, %v5152, 0
    %v5217 = vsel %vm437, %v5154, 0
    %v5219 = vsel %vm437, %v5156, 0
    %v5221 = vsel %vm437, %v5158, 0
    %v5223 = vsel %vm437, %v5160, 0
    %v5225 = vsel %vm437, %v5162, 0
    %5227 = vmatpush.msra.mxu0 0.0
    %5228 = vmatpush.msra.mxu0 0.0
    %5229 = vmatpush.msra.mxu0 0.0
    %5230 = vmatpush.msra.mxu0 0.0
    %5231 = vmatpush.msra.mxu0 0.0
    %5232 = vmatpush.msra.mxu0 0.0
    %5233 = vmatpush.msra.mxu0 0.0
    %5234 = vmatpush.msra.mxu0 0.0
    %5235 = vmatpush.msra.mxu0 0.0
    %5236 = vmatpush.msra.mxu0 0.0
    %5237 = vmatpush.msra.mxu0 0.0
    %5238 = vmatpush.msra.mxu0 0.0
    %5239 = vmatpush.msra.mxu0 0.0
    %5240 = vmatpush.msra.mxu0 0.0
    %5241 = vmatpush.msra.mxu0 %v5066
    %5242 = vmatpush.msra.mxu0 %v5065
    %5243 = vmatmul.f32.gmra.mxu0 %v5163
    %v5244 = vpop.f32.mrf.mxu0
    %v5245 = vadd.f32 0.0, %v5244
    %5246 = vmatmul.f32.gmra.mxu0 %v5165
    %v5247 = vpop.f32.mrf.mxu0
    %v5248 = vadd.f32 0.0, %v5247
    %5249 = vmatmul.f32.gmra.mxu0 %v5167
    %v5250 = vpop.f32.mrf.mxu0
    %v5251 = vadd.f32 0.0, %v5250
    %5252 = vmatmul.f32.gmra.mxu0 %v5169
    %v5253 = vpop.f32.mrf.mxu0
    %v5254 = vadd.f32 0.0, %v5253
    %5255 = vmatmul.f32.gmra.mxu0 %v5171
    %v5256 = vpop.f32.mrf.mxu0
    %v5257 = vadd.f32 0.0, %v5256
    %5258 = vmatmul.f32.gmra.mxu0 %v5173
    %v5259 = vpop.f32.mrf.mxu0
    %v5260 = vadd.f32 0.0, %v5259
    %5261 = vmatmul.f32.gmra.mxu0 %v5175
    %v5262 = vpop.f32.mrf.mxu0
    %v5263 = vadd.f32 0.0, %v5262
    %5264 = vmatmul.f32.gmra.mxu0 %v5177
    %v5265 = vpop.f32.mrf.mxu0
    %v5266 = vadd.f32 0.0, %v5265
    %5267 = vmatmul.f32.gmra.mxu0 %v5179
    %v5268 = vpop.f32.mrf.mxu0
    %v5269 = vadd.f32 0.0, %v5268
    %5270 = vmatmul.f32.gmra.mxu0 %v5181
    %v5271 = vpop.f32.mrf.mxu0
    %v5272 = vadd.f32 0.0, %v5271
    %5273 = vmatmul.f32.gmra.mxu0 %v5183
    %v5274 = vpop.f32.mrf.mxu0
    %v5275 = vadd.f32 0.0, %v5274
    %5276 = vmatmul.f32.gmra.mxu0 %v5185
    %v5277 = vpop.f32.mrf.mxu0
    %v5278 = vadd.f32 0.0, %v5277
    %5279 = vmatmul.f32.gmra.mxu0 %v5187
    %v5280 = vpop.f32.mrf.mxu0
    %v5281 = vadd.f32 0.0, %v5280
    %5282 = vmatmul.f32.gmra.mxu0 %v5189
    %v5283 = vpop.f32.mrf.mxu0
    %v5284 = vadd.f32 0.0, %v5283
    %5285 = vmatmul.f32.gmra.mxu0 %v5191
    %v5286 = vpop.f32.mrf.mxu0
    %v5287 = vadd.f32 0.0, %v5286
    %5288 = vmatmul.f32.gmra.mxu0 %v5193
    %v5289 = vpop.f32.mrf.mxu0
    %v5290 = vadd.f32 0.0, %v5289
    %5291 = vmatmul.f32.gmra.mxu0 %v5195
    %v5292 = vpop.f32.mrf.mxu0
    %v5293 = vadd.f32 0.0, %v5292
    %5294 = vmatmul.f32.gmra.mxu0 %v5197
    %v5295 = vpop.f32.mrf.mxu0
    %v5296 = vadd.f32 0.0, %v5295
    %5297 = vmatmul.f32.gmra.mxu0 %v5199
    %v5298 = vpop.f32.mrf.mxu0
    %v5299 = vadd.f32 0.0, %v5298
    %5300 = vmatmul.f32.gmra.mxu0 %v5201
    %v5301 = vpop.f32.mrf.mxu0
    %v5302 = vadd.f32 0.0, %v5301
    %5303 = vmatmul.f32.gmra.mxu0 %v5203
    %v5304 = vpop.f32.mrf.mxu0
    %v5305 = vadd.f32 0.0, %v5304
    %5306 = vmatmul.f32.gmra.mxu0 %v5205
    %v5307 = vpop.f32.mrf.mxu0
    %v5308 = vadd.f32 0.0, %v5307
    %5309 = vmatmul.f32.gmra.mxu0 %v5207
    %v5310 = vpop.f32.mrf.mxu0
    %v5311 = vadd.f32 0.0, %v5310
    %5312 = vmatmul.f32.gmra.mxu0 %v5209
    %v5313 = vpop.f32.mrf.mxu0
    %v5314 = vadd.f32 0.0, %v5313
    %5315 = vmatmul.f32.gmra.mxu0 %v5211
    %v5316 = vpop.f32.mrf.mxu0
    %v5317 = vadd.f32 0.0, %v5316
    %5318 = vmatmul.f32.gmra.mxu0 %v5213
    %v5319 = vpop.f32.mrf.mxu0
    %v5320 = vadd.f32 0.0, %v5319
    %5321 = vmatmul.f32.gmra.mxu0 %v5215
    %v5322 = vpop.f32.mrf.mxu0
    %v5323 = vadd.f32 0.0, %v5322
    %5324 = vmatmul.f32.gmra.mxu0 %v5217
    %v5325 = vpop.f32.mrf.mxu0
    %v5326 = vadd.f32 0.0, %v5325
    %5327 = vmatmul.f32.gmra.mxu0 %v5219
    %v5328 = vpop.f32.mrf.mxu0
    %v5329 = vadd.f32 0.0, %v5328
    %5330 = vmatmul.f32.gmra.mxu0 %v5221
    %v5331 = vpop.f32.mrf.mxu0
    %v5332 = vadd.f32 0.0, %v5331
    %5333 = vmatmul.f32.gmra.mxu0 %v5223
    %v5334 = vpop.f32.mrf.mxu0
    %v5335 = vadd.f32 0.0, %v5334
    %5336 = vmatmul.f32.gmra.mxu0 %v5225
    %v5337 = vpop.f32.mrf.mxu0
    %v5338 = vadd.f32 0.0, %v5337
    %5339 = vdwg.mxu0
    %v5340 = vadd.f32 %v5245, %v623
    %v5341 = vadd.f32 %v5248, %v629
    %v5342 = vadd.f32 %v5251, %v636
    %v5343 = vadd.f32 %v5254, %v642
    %v5344 = vadd.f32 %v5257, %v649
    %v5345 = vadd.f32 %v5260, %v655
    %v5346 = vadd.f32 %v5263, %v662
    %v5347 = vadd.f32 %v5266, %v668
    %v5348 = vadd.f32 %v5269, %v675
    %v5349 = vadd.f32 %v5272, %v681
    %v5350 = vadd.f32 %v5275, %v688
    %v5351 = vadd.f32 %v5278, %v694
    %v5352 = vadd.f32 %v5281, %v701
    %v5353 = vadd.f32 %v5284, %v707
    %v5354 = vadd.f32 %v5287, %v714
    %v5355 = vadd.f32 %v5290, %v720
    %v5356 = vadd.f32 %v5293, %v727
    %v5357 = vadd.f32 %v5296, %v733
    %v5358 = vadd.f32 %v5299, %v740
    %v5359 = vadd.f32 %v5302, %v746
    %v5360 = vadd.f32 %v5305, %v753
    %v5361 = vadd.f32 %v5308, %v759
    %v5362 = vadd.f32 %v5311, %v766
    %v5363 = vadd.f32 %v5314, %v772
    %v5364 = vadd.f32 %v5317, %v779
    %v5365 = vadd.f32 %v5320, %v785
    %v5366 = vadd.f32 %v5323, %v792
    %v5367 = vadd.f32 %v5326, %v798
    %v5368 = vadd.f32 %v5329, %v805
    %v5369 = vadd.f32 %v5332, %v811
    %v5370 = vadd.f32 %v5335, %v818
    %v5371 = vadd.f32 %v5338, %v824
    %5404 = vset.pattern.permute.xlu0 0
    %5405 = vperm.xlu0 %5404, %v5340
    %v5406 = vpop.permute.xlu0 %5405
    %5407 = vset.pattern.permute.xlu0 0
    %5408 = vperm.xlu0 %5407, %v5341
    %v5409 = vpop.permute.xlu0 %5408
    %5410 = vset.pattern.permute.xlu0 0
    %5411 = vperm.xlu0 %5410, %v5342
    %v5412 = vpop.permute.xlu0 %5411
    %5413 = vset.pattern.permute.xlu0 0
    %5414 = vperm.xlu0 %5413, %v5343
    %v5415 = vpop.permute.xlu0 %5414
    %5416 = vset.pattern.permute.xlu0 0
    %5417 = vperm.xlu0 %5416, %v5344
    %v5418 = vpop.permute.xlu0 %5417
    %5419 = vset.pattern.permute.xlu0 0
    %5420 = vperm.xlu0 %5419, %v5345
    %v5421 = vpop.permute.xlu0 %5420
    %5422 = vset.pattern.permute.xlu0 0
    %5423 = vperm.xlu0 %5422, %v5346
    %v5424 = vpop.permute.xlu0 %5423
    %5425 = vset.pattern.permute.xlu0 0
    %5426 = vperm.xlu0 %5425, %v5347
    %v5427 = vpop.permute.xlu0 %5426
    %5428 = vset.pattern.permute.xlu0 0
    %5429 = vperm.xlu0 %5428, %v5348
    %v5430 = vpop.permute.xlu0 %5429
    %5431 = vset.pattern.permute.xlu0 0
    %5432 = vperm.xlu0 %5431, %v5349
    %v5433 = vpop.permute.xlu0 %5432
    %5434 = vset.pattern.permute.xlu0 0
    %5435 = vperm.xlu0 %5434, %v5350
    %v5436 = vpop.permute.xlu0 %5435
    %5437 = vset.pattern.permute.xlu0 0
    %5438 = vperm.xlu0 %5437, %v5351
    %v5439 = vpop.permute.xlu0 %5438
    %5440 = vset.pattern.permute.xlu0 0
    %5441 = vperm.xlu0 %5440, %v5352
    %v5442 = vpop.permute.xlu0 %5441
    %5443 = vset.pattern.permute.xlu0 0
    %5444 = vperm.xlu0 %5443, %v5353
    %v5445 = vpop.permute.xlu0 %5444
    %5446 = vset.pattern.permute.xlu0 0
    %5447 = vperm.xlu0 %5446, %v5354
    %v5448 = vpop.permute.xlu0 %5447
    %5449 = vset.pattern.permute.xlu0 0
    %5450 = vperm.xlu0 %5449, %v5355
    %v5451 = vpop.permute.xlu0 %5450
    %5452 = vset.pattern.permute.xlu0 0
    %5453 = vperm.xlu0 %5452, %v5356
    %v5454 = vpop.permute.xlu0 %5453
    %5455 = vset.pattern.permute.xlu0 0
    %5456 = vperm.xlu0 %5455, %v5357
    %v5457 = vpop.permute.xlu0 %5456
    %5458 = vset.pattern.permute.xlu0 0
    %5459 = vperm.xlu0 %5458, %v5358
    %v5460 = vpop.permute.xlu0 %5459
    %5461 = vset.pattern.permute.xlu0 0
    %5462 = vperm.xlu0 %5461, %v5359
    %v5463 = vpop.permute.xlu0 %5462
    %5464 = vset.pattern.permute.xlu0 0
    %5465 = vperm.xlu0 %5464, %v5360
    %v5466 = vpop.permute.xlu0 %5465
    %5467 = vset.pattern.permute.xlu0 0
    %5468 = vperm.xlu0 %5467, %v5361
    %v5469 = vpop.permute.xlu0 %5468
    %5470 = vset.pattern.permute.xlu0 0
    %5471 = vperm.xlu0 %5470, %v5362
    %v5472 = vpop.permute.xlu0 %5471
    %5473 = vset.pattern.permute.xlu0 0
    %5474 = vperm.xlu0 %5473, %v5363
    %v5475 = vpop.permute.xlu0 %5474
    %5476 = vset.pattern.permute.xlu0 0
    %5477 = vperm.xlu0 %5476, %v5364
    %v5478 = vpop.permute.xlu0 %5477
    %5479 = vset.pattern.permute.xlu0 0
    %5480 = vperm.xlu0 %5479, %v5365
    %v5481 = vpop.permute.xlu0 %5480
    %5482 = vset.pattern.permute.xlu0 0
    %5483 = vperm.xlu0 %5482, %v5366
    %v5484 = vpop.permute.xlu0 %5483
    %5485 = vset.pattern.permute.xlu0 0
    %5486 = vperm.xlu0 %5485, %v5367
    %v5487 = vpop.permute.xlu0 %5486
    %5488 = vset.pattern.permute.xlu0 0
    %5489 = vperm.xlu0 %5488, %v5368
    %v5490 = vpop.permute.xlu0 %5489
    %5491 = vset.pattern.permute.xlu0 0
    %5492 = vperm.xlu0 %5491, %v5369
    %v5493 = vpop.permute.xlu0 %5492
    %5494 = vset.pattern.permute.xlu0 0
    %5495 = vperm.xlu0 %5494, %v5370
    %v5496 = vpop.permute.xlu0 %5495
    %5497 = vset.pattern.permute.xlu0 0
    %5498 = vperm.xlu0 %5497, %v5371
    %v5499 = vpop.permute.xlu0 %5498
    %v5500 = vperm.slane %v5406, %v1018
    %v5501 = vperm.slane %v5409, %v1020
    %v5502 = vsel %vm1022, %v5501, %v5500
    %v5503 = vperm.slane %v5412, %v1018
    %v5504 = vperm.slane %v5415, %v1020
    %v5505 = vsel %vm1022, %v5504, %v5503
    %v5506 = vperm.slane %v5418, %v1018
    %v5507 = vperm.slane %v5421, %v1020
    %v5508 = vsel %vm1022, %v5507, %v5506
    %v5509 = vperm.slane %v5424, %v1018
    %v5510 = vperm.slane %v5427, %v1020
    %v5511 = vsel %vm1022, %v5510, %v5509
    %v5512 = vperm.slane %v5430, %v1018
    %v5513 = vperm.slane %v5433, %v1020
    %v5514 = vsel %vm1022, %v5513, %v5512
    %v5515 = vperm.slane %v5436, %v1018
    %v5516 = vperm.slane %v5439, %v1020
    %v5517 = vsel %vm1022, %v5516, %v5515
    %v5518 = vperm.slane %v5442, %v1018
    %v5519 = vperm.slane %v5445, %v1020
    %v5520 = vsel %vm1022, %v5519, %v5518
    %v5521 = vperm.slane %v5448, %v1018
    %v5522 = vperm.slane %v5451, %v1020
    %v5523 = vsel %vm1022, %v5522, %v5521
    %v5524 = vperm.slane %v5454, %v1018
    %v5525 = vperm.slane %v5457, %v1020
    %v5526 = vsel %vm1022, %v5525, %v5524
    %v5527 = vperm.slane %v5460, %v1018
    %v5528 = vperm.slane %v5463, %v1020
    %v5529 = vsel %vm1022, %v5528, %v5527
    %v5530 = vperm.slane %v5466, %v1018
    %v5531 = vperm.slane %v5469, %v1020
    %v5532 = vsel %vm1022, %v5531, %v5530
    %v5533 = vperm.slane %v5472, %v1018
    %v5534 = vperm.slane %v5475, %v1020
    %v5535 = vsel %vm1022, %v5534, %v5533
    %v5536 = vperm.slane %v5478, %v1018
    %v5537 = vperm.slane %v5481, %v1020
    %v5538 = vsel %vm1022, %v5537, %v5536
    %v5539 = vperm.slane %v5484, %v1018
    %v5540 = vperm.slane %v5487, %v1020
    %v5541 = vsel %vm1022, %v5540, %v5539
    %v5542 = vperm.slane %v5490, %v1018
    %v5543 = vperm.slane %v5493, %v1020
    %v5544 = vsel %vm1022, %v5543, %v5542
    %v5545 = vperm.slane %v5496, %v1018
    %v5546 = vperm.slane %v5499, %v1020
    %v5547 = vsel %vm1022, %v5546, %v5545
    %v5548 = vsel %vm1069, %v5505, %v5502
    %v5549 = vsel %vm1071, %v5508, %v5548
    %v5550 = vsel %vm1073, %v5511, %v5549
    %v5551 = vsel %vm1075, %v5514, %v5550
    %v5552 = vsel %vm1077, %v5517, %v5551
    %v5553 = vsel %vm1079, %v5520, %v5552
    %v5554 = vsel %vm1081, %v5523, %v5553
    %v5555 = vsel %vm1069, %v5529, %v5526
    %v5556 = vsel %vm1071, %v5532, %v5555
    %v5557 = vsel %vm1073, %v5535, %v5556
    %v5558 = vsel %vm1075, %v5538, %v5557
    %v5559 = vsel %vm1077, %v5541, %v5558
    %v5560 = vsel %vm1079, %v5544, %v5559
    %v5561 = vsel %vm1081, %v5547, %v5560
    %v5564 = vsel %vm437, %v5554, -inf
    %5565 = vmax.xlane.f32.xlu0 %v5564
    %v5566 = vpop.xlane.xlu0 %5565
    %v5567 = vsel %vm437, %v5561, -inf
    %5568 = vmax.xlane.f32.xlu0 %v5567
    %v5569 = vpop.xlane.xlu0 %5568
    %v5572 = vperm.slane %v5566, 0
    %v5573 = vperm.slane %v5566, 1
    %v5574 = vperm.slane %v5566, 2
    %v5575 = vperm.slane %v5566, 3
    %v5576 = vperm.slane %v5566, 4
    %v5577 = vperm.slane %v5566, 5
    %v5578 = vperm.slane %v5566, 6
    %v5579 = vperm.slane %v5566, 7
    %v5580 = vperm.slane %v5569, 0
    %v5581 = vperm.slane %v5569, 1
    %v5582 = vperm.slane %v5569, 2
    %v5583 = vperm.slane %v5569, 3
    %v5584 = vperm.slane %v5569, 4
    %v5585 = vperm.slane %v5569, 5
    %v5586 = vperm.slane %v5569, 6
    %v5587 = vperm.slane %v5569, 7
    %v5604 = vsub.f32 %v5340, %v5572
    %v5605 = vsub.f32 %v5341, %v5572
    %v5606 = vsub.f32 %v5342, %v5573
    %v5607 = vsub.f32 %v5343, %v5573
    %v5608 = vsub.f32 %v5344, %v5574
    %v5609 = vsub.f32 %v5345, %v5574
    %v5610 = vsub.f32 %v5346, %v5575
    %v5611 = vsub.f32 %v5347, %v5575
    %v5612 = vsub.f32 %v5348, %v5576
    %v5613 = vsub.f32 %v5349, %v5576
    %v5614 = vsub.f32 %v5350, %v5577
    %v5615 = vsub.f32 %v5351, %v5577
    %v5616 = vsub.f32 %v5352, %v5578
    %v5617 = vsub.f32 %v5353, %v5578
    %v5618 = vsub.f32 %v5354, %v5579
    %v5619 = vsub.f32 %v5355, %v5579
    %v5620 = vsub.f32 %v5356, %v5580
    %v5621 = vsub.f32 %v5357, %v5580
    %v5622 = vsub.f32 %v5358, %v5581
    %v5623 = vsub.f32 %v5359, %v5581
    %v5624 = vsub.f32 %v5360, %v5582
    %v5625 = vsub.f32 %v5361, %v5582
    %v5626 = vsub.f32 %v5362, %v5583
    %v5627 = vsub.f32 %v5363, %v5583
    %v5628 = vsub.f32 %v5364, %v5584
    %v5629 = vsub.f32 %v5365, %v5584
    %v5630 = vsub.f32 %v5366, %v5585
    %v5631 = vsub.f32 %v5367, %v5585
    %v5632 = vsub.f32 %v5368, %v5586
    %v5633 = vsub.f32 %v5369, %v5586
    %v5634 = vsub.f32 %v5370, %v5587
    %v5635 = vsub.f32 %v5371, %v5587
    %v5636 = vmul.f32 %v5604, 1.442695
    %v5637 = vpow.pop %v5636
    %v5638 = vmul.f32 %v5605, 1.442695
    %v5639 = vpow.pop %v5638
    %v5640 = vmul.f32 %v5606, 1.442695
    %v5641 = vpow.pop %v5640
    %v5642 = vmul.f32 %v5607, 1.442695
    %v5643 = vpow.pop %v5642
    %v5644 = vmul.f32 %v5608, 1.442695
    %v5645 = vpow.pop %v5644
    %v5646 = vmul.f32 %v5609, 1.442695
    %v5647 = vpow.pop %v5646
    %v5648 = vmul.f32 %v5610, 1.442695
    %v5649 = vpow.pop %v5648
    %v5650 = vmul.f32 %v5611, 1.442695
    %v5651 = vpow.pop %v5650
    %v5652 = vmul.f32 %v5612, 1.442695
    %v5653 = vpow.pop %v5652
    %v5654 = vmul.f32 %v5613, 1.442695
    %v5655 = vpow.pop %v5654
    %v5656 = vmul.f32 %v5614, 1.442695
    %v5657 = vpow.pop %v5656
    %v5658 = vmul.f32 %v5615, 1.442695
    %v5659 = vpow.pop %v5658
    %v5660 = vmul.f32 %v5616, 1.442695
    %v5661 = vpow.pop %v5660
    %v5662 = vmul.f32 %v5617, 1.442695
    %v5663 = vpow.pop %v5662
    %v5664 = vmul.f32 %v5618, 1.442695
    %v5665 = vpow.pop %v5664
    %v5666 = vmul.f32 %v5619, 1.442695
    %v5667 = vpow.pop %v5666
    %v5668 = vmul.f32 %v5620, 1.442695
    %v5669 = vpow.pop %v5668
    %v5670 = vmul.f32 %v5621, 1.442695
    %v5671 = vpow.pop %v5670
    %v5672 = vmul.f32 %v5622, 1.442695
    %v5673 = vpow.pop %v5672
    %v5674 = vmul.f32 %v5623, 1.442695
    %v5675 = vpow.pop %v5674
    %v5676 = vmul.f32 %v5624, 1.442695
    %v5677 = vpow.pop %v5676
    %v5678 = vmul.f32 %v5625, 1.442695
    %v5679 = vpow.pop %v5678
    %v5680 = vmul.f32 %v5626, 1.442695
    %v5681 = vpow.pop %v5680
    %v5682 = vmul.f32 %v5627, 1.442695
    %v5683 = vpow.pop %v5682
    %v5684 = vmul.f32 %v5628, 1.442695
    %v5685 = vpow.pop %v5684
    %v5686 = vmul.f32 %v5629, 1.442695
    %v5687 = vpow.pop %v5686
    %v5688 = vmul.f32 %v5630, 1.442695
    %v5689 = vpow.pop %v5688
    %v5690 = vmul.f32 %v5631, 1.442695
    %v5691 = vpow.pop %v5690
    %v5692 = vmul.f32 %v5632, 1.442695
    %v5693 = vpow.pop %v5692
    %v5694 = vmul.f32 %v5633, 1.442695
    %v5695 = vpow.pop %v5694
    %v5696 = vmul.f32 %v5634, 1.442695
    %v5697 = vpow.pop %v5696
    %v5698 = vmul.f32 %v5635, 1.442695
    %v5699 = vpow.pop %v5698
    %5732 = vset.pattern.permute.xlu0 0
    %5733 = vperm.xlu0 %5732, %v5637
    %v5734 = vpop.permute.xlu0 %5733
    %5735 = vset.pattern.permute.xlu0 0
    %5736 = vperm.xlu0 %5735, %v5639
    %v5737 = vpop.permute.xlu0 %5736
    %5738 = vset.pattern.permute.xlu0 0
    %5739 = vperm.xlu0 %5738, %v5641
    %v5740 = vpop.permute.xlu0 %5739
    %5741 = vset.pattern.permute.xlu0 0
    %5742 = vperm.xlu0 %5741, %v5643
    %v5743 = vpop.permute.xlu0 %5742
    %5744 = vset.pattern.permute.xlu0 0
    %5745 = vperm.xlu0 %5744, %v5645
    %v5746 = vpop.permute.xlu0 %5745
    %5747 = vset.pattern.permute.xlu0 0
    %5748 = vperm.xlu0 %5747, %v5647
    %v5749 = vpop.permute.xlu0 %5748
    %5750 = vset.pattern.permute.xlu0 0
    %5751 = vperm.xlu0 %5750, %v5649
    %v5752 = vpop.permute.xlu0 %5751
    %5753 = vset.pattern.permute.xlu0 0
    %5754 = vperm.xlu0 %5753, %v5651
    %v5755 = vpop.permute.xlu0 %5754
    %5756 = vset.pattern.permute.xlu0 0
    %5757 = vperm.xlu0 %5756, %v5653
    %v5758 = vpop.permute.xlu0 %5757
    %5759 = vset.pattern.permute.xlu0 0
    %5760 = vperm.xlu0 %5759, %v5655
    %v5761 = vpop.permute.xlu0 %5760
    %5762 = vset.pattern.permute.xlu0 0
    %5763 = vperm.xlu0 %5762, %v5657
    %v5764 = vpop.permute.xlu0 %5763
    %5765 = vset.pattern.permute.xlu0 0
    %5766 = vperm.xlu0 %5765, %v5659
    %v5767 = vpop.permute.xlu0 %5766
    %5768 = vset.pattern.permute.xlu0 0
    %5769 = vperm.xlu0 %5768, %v5661
    %v5770 = vpop.permute.xlu0 %5769
    %5771 = vset.pattern.permute.xlu0 0
    %5772 = vperm.xlu0 %5771, %v5663
    %v5773 = vpop.permute.xlu0 %5772
    %5774 = vset.pattern.permute.xlu0 0
    %5775 = vperm.xlu0 %5774, %v5665
    %v5776 = vpop.permute.xlu0 %5775
    %5777 = vset.pattern.permute.xlu0 0
    %5778 = vperm.xlu0 %5777, %v5667
    %v5779 = vpop.permute.xlu0 %5778
    %5780 = vset.pattern.permute.xlu0 0
    %5781 = vperm.xlu0 %5780, %v5669
    %v5782 = vpop.permute.xlu0 %5781
    %5783 = vset.pattern.permute.xlu0 0
    %5784 = vperm.xlu0 %5783, %v5671
    %v5785 = vpop.permute.xlu0 %5784
    %5786 = vset.pattern.permute.xlu0 0
    %5787 = vperm.xlu0 %5786, %v5673
    %v5788 = vpop.permute.xlu0 %5787
    %5789 = vset.pattern.permute.xlu0 0
    %5790 = vperm.xlu0 %5789, %v5675
    %v5791 = vpop.permute.xlu0 %5790
    %5792 = vset.pattern.permute.xlu0 0
    %5793 = vperm.xlu0 %5792, %v5677
    %v5794 = vpop.permute.xlu0 %5793
    %5795 = vset.pattern.permute.xlu0 0
    %5796 = vperm.xlu0 %5795, %v5679
    %v5797 = vpop.permute.xlu0 %5796
    %5798 = vset.pattern.permute.xlu0 0
    %5799 = vperm.xlu0 %5798, %v5681
    %v5800 = vpop.permute.xlu0 %5799
    %5801 = vset.pattern.permute.xlu0 0
    %5802 = vperm.xlu0 %5801, %v5683
    %v5803 = vpop.permute.xlu0 %5802
    %5804 = vset.pattern.permute.xlu0 0
    %5805 = vperm.xlu0 %5804, %v5685
    %v5806 = vpop.permute.xlu0 %5805
    %5807 = vset.pattern.permute.xlu0 0
    %5808 = vperm.xlu0 %5807, %v5687
    %v5809 = vpop.permute.xlu0 %5808
    %5810 = vset.pattern.permute.xlu0 0
    %5811 = vperm.xlu0 %5810, %v5689
    %v5812 = vpop.permute.xlu0 %5811
    %5813 = vset.pattern.permute.xlu0 0
    %5814 = vperm.xlu0 %5813, %v5691
    %v5815 = vpop.permute.xlu0 %5814
    %5816 = vset.pattern.permute.xlu0 0
    %5817 = vperm.xlu0 %5816, %v5693
    %v5818 = vpop.permute.xlu0 %5817
    %5819 = vset.pattern.permute.xlu0 0
    %5820 = vperm.xlu0 %5819, %v5695
    %v5821 = vpop.permute.xlu0 %5820
    %5822 = vset.pattern.permute.xlu0 0
    %5823 = vperm.xlu0 %5822, %v5697
    %v5824 = vpop.permute.xlu0 %5823
    %5825 = vset.pattern.permute.xlu0 0
    %5826 = vperm.xlu0 %5825, %v5699
    %v5827 = vpop.permute.xlu0 %5826
    %v5828 = vperm.slane %v5734, %v1018
    %v5829 = vperm.slane %v5737, %v1020
    %v5830 = vsel %vm1022, %v5829, %v5828
    %v5831 = vperm.slane %v5740, %v1018
    %v5832 = vperm.slane %v5743, %v1020
    %v5833 = vsel %vm1022, %v5832, %v5831
    %v5834 = vperm.slane %v5746, %v1018
    %v5835 = vperm.slane %v5749, %v1020
    %v5836 = vsel %vm1022, %v5835, %v5834
    %v5837 = vperm.slane %v5752, %v1018
    %v5838 = vperm.slane %v5755, %v1020
    %v5839 = vsel %vm1022, %v5838, %v5837
    %v5840 = vperm.slane %v5758, %v1018
    %v5841 = vperm.slane %v5761, %v1020
    %v5842 = vsel %vm1022, %v5841, %v5840
    %v5843 = vperm.slane %v5764, %v1018
    %v5844 = vperm.slane %v5767, %v1020
    %v5845 = vsel %vm1022, %v5844, %v5843
    %v5846 = vperm.slane %v5770, %v1018
    %v5847 = vperm.slane %v5773, %v1020
    %v5848 = vsel %vm1022, %v5847, %v5846
    %v5849 = vperm.slane %v5776, %v1018
    %v5850 = vperm.slane %v5779, %v1020
    %v5851 = vsel %vm1022, %v5850, %v5849
    %v5852 = vperm.slane %v5782, %v1018
    %v5853 = vperm.slane %v5785, %v1020
    %v5854 = vsel %vm1022, %v5853, %v5852
    %v5855 = vperm.slane %v5788, %v1018
    %v5856 = vperm.slane %v5791, %v1020
    %v5857 = vsel %vm1022, %v5856, %v5855
    %v5858 = vperm.slane %v5794, %v1018
    %v5859 = vperm.slane %v5797, %v1020
    %v5860 = vsel %vm1022, %v5859, %v5858
    %v5861 = vperm.slane %v5800, %v1018
    %v5862 = vperm.slane %v5803, %v1020
    %v5863 = vsel %vm1022, %v5862, %v5861
    %v5864 = vperm.slane %v5806, %v1018
    %v5865 = vperm.slane %v5809, %v1020
    %v5866 = vsel %vm1022, %v5865, %v5864
    %v5867 = vperm.slane %v5812, %v1018
    %v5868 = vperm.slane %v5815, %v1020
    %v5869 = vsel %vm1022, %v5868, %v5867
    %v5870 = vperm.slane %v5818, %v1018
    %v5871 = vperm.slane %v5821, %v1020
    %v5872 = vsel %vm1022, %v5871, %v5870
    %v5873 = vperm.slane %v5824, %v1018
    %v5874 = vperm.slane %v5827, %v1020
    %v5875 = vsel %vm1022, %v5874, %v5873
    %v5876 = vsel %vm1069, %v5833, %v5830
    %v5877 = vsel %vm1071, %v5836, %v5876
    %v5878 = vsel %vm1073, %v5839, %v5877
    %v5879 = vsel %vm1075, %v5842, %v5878
    %v5880 = vsel %vm1077, %v5845, %v5879
    %v5881 = vsel %vm1079, %v5848, %v5880
    %v5882 = vsel %vm1081, %v5851, %v5881
    %v5883 = vsel %vm1069, %v5857, %v5854
    %v5884 = vsel %vm1071, %v5860, %v5883
    %v5885 = vsel %vm1073, %v5863, %v5884
    %v5886 = vsel %vm1075, %v5866, %v5885
    %v5887 = vsel %vm1077, %v5869, %v5886
    %v5888 = vsel %vm1079, %v5872, %v5887
    %v5889 = vsel %vm1081, %v5875, %v5888
    %v5892 = vsel %vm437, %v5882, 0.0
    %5893 = vadd.xlane.f32.xlu0 %v5892
    %v5894 = vpop.xlane.xlu0 %5893
    %v5895 = vsel %vm437, %v5889, 0.0
    %5896 = vadd.xlane.f32.xlu0 %v5895
    %v5897 = vpop.xlane.xlu0 %5896
    %v5898 = vmax.f32 %v5894, 1e-20
    %v5899 = vmax.f32 %v5897, 1e-20
    %v5900 = vrcp.pop %v5898
    %v5901 = vrcp.pop %v5899
    %v5904 = vperm.slane %v5900, 0
    %v5905 = vperm.slane %v5900, 1
    %v5906 = vperm.slane %v5900, 2
    %v5907 = vperm.slane %v5900, 3
    %v5908 = vperm.slane %v5900, 4
    %v5909 = vperm.slane %v5900, 5
    %v5910 = vperm.slane %v5900, 6
    %v5911 = vperm.slane %v5900, 7
    %v5912 = vperm.slane %v5901, 0
    %v5913 = vperm.slane %v5901, 1
    %v5914 = vperm.slane %v5901, 2
    %v5915 = vperm.slane %v5901, 3
    %v5916 = vperm.slane %v5901, 4
    %v5917 = vperm.slane %v5901, 5
    %v5918 = vperm.slane %v5901, 6
    %v5919 = vperm.slane %v5901, 7
    %v5936 = vmul.f32 %v5637, %v5904
    %v5937 = vmul.f32 %v5639, %v5904
    %v5938 = vmul.f32 %v5641, %v5905
    %v5939 = vmul.f32 %v5643, %v5905
    %v5940 = vmul.f32 %v5645, %v5906
    %v5941 = vmul.f32 %v5647, %v5906
    %v5942 = vmul.f32 %v5649, %v5907
    %v5943 = vmul.f32 %v5651, %v5907
    %v5944 = vmul.f32 %v5653, %v5908
    %v5945 = vmul.f32 %v5655, %v5908
    %v5946 = vmul.f32 %v5657, %v5909
    %v5947 = vmul.f32 %v5659, %v5909
    %v5948 = vmul.f32 %v5661, %v5910
    %v5949 = vmul.f32 %v5663, %v5910
    %v5950 = vmul.f32 %v5665, %v5911
    %v5951 = vmul.f32 %v5667, %v5911
    %v5952 = vmul.f32 %v5669, %v5912
    %v5953 = vmul.f32 %v5671, %v5912
    %v5954 = vmul.f32 %v5673, %v5913
    %v5955 = vmul.f32 %v5675, %v5913
    %v5956 = vmul.f32 %v5677, %v5914
    %v5957 = vmul.f32 %v5679, %v5914
    %v5958 = vmul.f32 %v5681, %v5915
    %v5959 = vmul.f32 %v5683, %v5915
    %v5960 = vmul.f32 %v5685, %v5916
    %v5961 = vmul.f32 %v5687, %v5916
    %v5962 = vmul.f32 %v5689, %v5917
    %v5963 = vmul.f32 %v5691, %v5917
    %v5964 = vmul.f32 %v5693, %v5918
    %v5965 = vmul.f32 %v5695, %v5918
    %v5966 = vmul.f32 %v5697, %v5919
    %v5967 = vmul.f32 %v5699, %v5919
    %5968 = vset.pattern.permute.xlu0 1
    %5969 = vperm.xlu0 %5968, %v5340
    %v5970 = vpop.permute.xlu0 %5969
    %5971 = vset.pattern.permute.xlu0 1
    %5972 = vperm.xlu0 %5971, %v5341
    %v5973 = vpop.permute.xlu0 %5972
    %5974 = vset.pattern.permute.xlu0 1
    %5975 = vperm.xlu0 %5974, %v5342
    %v5976 = vpop.permute.xlu0 %5975
    %5977 = vset.pattern.permute.xlu0 1
    %5978 = vperm.xlu0 %5977, %v5343
    %v5979 = vpop.permute.xlu0 %5978
    %5980 = vset.pattern.permute.xlu0 1
    %5981 = vperm.xlu0 %5980, %v5344
    %v5982 = vpop.permute.xlu0 %5981
    %5983 = vset.pattern.permute.xlu0 1
    %5984 = vperm.xlu0 %5983, %v5345
    %v5985 = vpop.permute.xlu0 %5984
    %5986 = vset.pattern.permute.xlu0 1
    %5987 = vperm.xlu0 %5986, %v5346
    %v5988 = vpop.permute.xlu0 %5987
    %5989 = vset.pattern.permute.xlu0 1
    %5990 = vperm.xlu0 %5989, %v5347
    %v5991 = vpop.permute.xlu0 %5990
    %5992 = vset.pattern.permute.xlu0 1
    %5993 = vperm.xlu0 %5992, %v5348
    %v5994 = vpop.permute.xlu0 %5993
    %5995 = vset.pattern.permute.xlu0 1
    %5996 = vperm.xlu0 %5995, %v5349
    %v5997 = vpop.permute.xlu0 %5996
    %5998 = vset.pattern.permute.xlu0 1
    %5999 = vperm.xlu0 %5998, %v5350
    %v6000 = vpop.permute.xlu0 %5999
    %6001 = vset.pattern.permute.xlu0 1
    %6002 = vperm.xlu0 %6001, %v5351
    %v6003 = vpop.permute.xlu0 %6002
    %6004 = vset.pattern.permute.xlu0 1
    %6005 = vperm.xlu0 %6004, %v5352
    %v6006 = vpop.permute.xlu0 %6005
    %6007 = vset.pattern.permute.xlu0 1
    %6008 = vperm.xlu0 %6007, %v5353
    %v6009 = vpop.permute.xlu0 %6008
    %6010 = vset.pattern.permute.xlu0 1
    %6011 = vperm.xlu0 %6010, %v5354
    %v6012 = vpop.permute.xlu0 %6011
    %6013 = vset.pattern.permute.xlu0 1
    %6014 = vperm.xlu0 %6013, %v5355
    %v6015 = vpop.permute.xlu0 %6014
    %6016 = vset.pattern.permute.xlu0 1
    %6017 = vperm.xlu0 %6016, %v5356
    %v6018 = vpop.permute.xlu0 %6017
    %6019 = vset.pattern.permute.xlu0 1
    %6020 = vperm.xlu0 %6019, %v5357
    %v6021 = vpop.permute.xlu0 %6020
    %6022 = vset.pattern.permute.xlu0 1
    %6023 = vperm.xlu0 %6022, %v5358
    %v6024 = vpop.permute.xlu0 %6023
    %6025 = vset.pattern.permute.xlu0 1
    %6026 = vperm.xlu0 %6025, %v5359
    %v6027 = vpop.permute.xlu0 %6026
    %6028 = vset.pattern.permute.xlu0 1
    %6029 = vperm.xlu0 %6028, %v5360
    %v6030 = vpop.permute.xlu0 %6029
    %6031 = vset.pattern.permute.xlu0 1
    %6032 = vperm.xlu0 %6031, %v5361
    %v6033 = vpop.permute.xlu0 %6032
    %6034 = vset.pattern.permute.xlu0 1
    %6035 = vperm.xlu0 %6034, %v5362
    %v6036 = vpop.permute.xlu0 %6035
    %6037 = vset.pattern.permute.xlu0 1
    %6038 = vperm.xlu0 %6037, %v5363
    %v6039 = vpop.permute.xlu0 %6038
    %6040 = vset.pattern.permute.xlu0 1
    %6041 = vperm.xlu0 %6040, %v5364
    %v6042 = vpop.permute.xlu0 %6041
    %6043 = vset.pattern.permute.xlu0 1
    %6044 = vperm.xlu0 %6043, %v5365
    %v6045 = vpop.permute.xlu0 %6044
    %6046 = vset.pattern.permute.xlu0 1
    %6047 = vperm.xlu0 %6046, %v5366
    %v6048 = vpop.permute.xlu0 %6047
    %6049 = vset.pattern.permute.xlu0 1
    %6050 = vperm.xlu0 %6049, %v5367
    %v6051 = vpop.permute.xlu0 %6050
    %6052 = vset.pattern.permute.xlu0 1
    %6053 = vperm.xlu0 %6052, %v5368
    %v6054 = vpop.permute.xlu0 %6053
    %6055 = vset.pattern.permute.xlu0 1
    %6056 = vperm.xlu0 %6055, %v5369
    %v6057 = vpop.permute.xlu0 %6056
    %6058 = vset.pattern.permute.xlu0 1
    %6059 = vperm.xlu0 %6058, %v5370
    %v6060 = vpop.permute.xlu0 %6059
    %6061 = vset.pattern.permute.xlu0 1
    %6062 = vperm.xlu0 %6061, %v5371
    %v6063 = vpop.permute.xlu0 %6062
    %v6064 = vperm.slane %v5970, %v1018
    %v6065 = vperm.slane %v5973, %v1020
    %v6066 = vsel %vm1022, %v6065, %v6064
    %v6067 = vperm.slane %v5976, %v1018
    %v6068 = vperm.slane %v5979, %v1020
    %v6069 = vsel %vm1022, %v6068, %v6067
    %v6070 = vperm.slane %v5982, %v1018
    %v6071 = vperm.slane %v5985, %v1020
    %v6072 = vsel %vm1022, %v6071, %v6070
    %v6073 = vperm.slane %v5988, %v1018
    %v6074 = vperm.slane %v5991, %v1020
    %v6075 = vsel %vm1022, %v6074, %v6073
    %v6076 = vperm.slane %v5994, %v1018
    %v6077 = vperm.slane %v5997, %v1020
    %v6078 = vsel %vm1022, %v6077, %v6076
    %v6079 = vperm.slane %v6000, %v1018
    %v6080 = vperm.slane %v6003, %v1020
    %v6081 = vsel %vm1022, %v6080, %v6079
    %v6082 = vperm.slane %v6006, %v1018
    %v6083 = vperm.slane %v6009, %v1020
    %v6084 = vsel %vm1022, %v6083, %v6082
    %v6085 = vperm.slane %v6012, %v1018
    %v6086 = vperm.slane %v6015, %v1020
    %v6087 = vsel %vm1022, %v6086, %v6085
    %v6088 = vperm.slane %v6018, %v1018
    %v6089 = vperm.slane %v6021, %v1020
    %v6090 = vsel %vm1022, %v6089, %v6088
    %v6091 = vperm.slane %v6024, %v1018
    %v6092 = vperm.slane %v6027, %v1020
    %v6093 = vsel %vm1022, %v6092, %v6091
    %v6094 = vperm.slane %v6030, %v1018
    %v6095 = vperm.slane %v6033, %v1020
    %v6096 = vsel %vm1022, %v6095, %v6094
    %v6097 = vperm.slane %v6036, %v1018
    %v6098 = vperm.slane %v6039, %v1020
    %v6099 = vsel %vm1022, %v6098, %v6097
    %v6100 = vperm.slane %v6042, %v1018
    %v6101 = vperm.slane %v6045, %v1020
    %v6102 = vsel %vm1022, %v6101, %v6100
    %v6103 = vperm.slane %v6048, %v1018
    %v6104 = vperm.slane %v6051, %v1020
    %v6105 = vsel %vm1022, %v6104, %v6103
    %v6106 = vperm.slane %v6054, %v1018
    %v6107 = vperm.slane %v6057, %v1020
    %v6108 = vsel %vm1022, %v6107, %v6106
    %v6109 = vperm.slane %v6060, %v1018
    %v6110 = vperm.slane %v6063, %v1020
    %v6111 = vsel %vm1022, %v6110, %v6109
    %v6112 = vsel %vm1069, %v6069, %v6066
    %v6113 = vsel %vm1071, %v6072, %v6112
    %v6114 = vsel %vm1073, %v6075, %v6113
    %v6115 = vsel %vm1075, %v6078, %v6114
    %v6116 = vsel %vm1077, %v6081, %v6115
    %v6117 = vsel %vm1079, %v6084, %v6116
    %v6118 = vsel %vm1081, %v6087, %v6117
    %v6119 = vsel %vm1069, %v6093, %v6090
    %v6120 = vsel %vm1071, %v6096, %v6119
    %v6121 = vsel %vm1073, %v6099, %v6120
    %v6122 = vsel %vm1075, %v6102, %v6121
    %v6123 = vsel %vm1077, %v6105, %v6122
    %v6124 = vsel %vm1079, %v6108, %v6123
    %v6125 = vsel %vm1081, %v6111, %v6124
    %v6128 = vsel %vm437, %v6118, -inf
    %6129 = vmax.xlane.f32.xlu0 %v6128
    %v6130 = vpop.xlane.xlu0 %6129
    %v6131 = vsel %vm437, %v6125, -inf
    %6132 = vmax.xlane.f32.xlu0 %v6131
    %v6133 = vpop.xlane.xlu0 %6132
    %v6136 = vperm.slane %v6130, 0
    %v6137 = vperm.slane %v6130, 1
    %v6138 = vperm.slane %v6130, 2
    %v6139 = vperm.slane %v6130, 3
    %v6140 = vperm.slane %v6130, 4
    %v6141 = vperm.slane %v6130, 5
    %v6142 = vperm.slane %v6130, 6
    %v6143 = vperm.slane %v6130, 7
    %v6144 = vperm.slane %v6133, 0
    %v6145 = vperm.slane %v6133, 1
    %v6146 = vperm.slane %v6133, 2
    %v6147 = vperm.slane %v6133, 3
    %v6148 = vperm.slane %v6133, 4
    %v6149 = vperm.slane %v6133, 5
    %v6150 = vperm.slane %v6133, 6
    %v6151 = vperm.slane %v6133, 7
    %v6168 = vsub.f32 %v5340, %v6136
    %v6169 = vsub.f32 %v5341, %v6136
    %v6170 = vsub.f32 %v5342, %v6137
    %v6171 = vsub.f32 %v5343, %v6137
    %v6172 = vsub.f32 %v5344, %v6138
    %v6173 = vsub.f32 %v5345, %v6138
    %v6174 = vsub.f32 %v5346, %v6139
    %v6175 = vsub.f32 %v5347, %v6139
    %v6176 = vsub.f32 %v5348, %v6140
    %v6177 = vsub.f32 %v5349, %v6140
    %v6178 = vsub.f32 %v5350, %v6141
    %v6179 = vsub.f32 %v5351, %v6141
    %v6180 = vsub.f32 %v5352, %v6142
    %v6181 = vsub.f32 %v5353, %v6142
    %v6182 = vsub.f32 %v5354, %v6143
    %v6183 = vsub.f32 %v5355, %v6143
    %v6184 = vsub.f32 %v5356, %v6144
    %v6185 = vsub.f32 %v5357, %v6144
    %v6186 = vsub.f32 %v5358, %v6145
    %v6187 = vsub.f32 %v5359, %v6145
    %v6188 = vsub.f32 %v5360, %v6146
    %v6189 = vsub.f32 %v5361, %v6146
    %v6190 = vsub.f32 %v5362, %v6147
    %v6191 = vsub.f32 %v5363, %v6147
    %v6192 = vsub.f32 %v5364, %v6148
    %v6193 = vsub.f32 %v5365, %v6148
    %v6194 = vsub.f32 %v5366, %v6149
    %v6195 = vsub.f32 %v5367, %v6149
    %v6196 = vsub.f32 %v5368, %v6150
    %v6197 = vsub.f32 %v5369, %v6150
    %v6198 = vsub.f32 %v5370, %v6151
    %v6199 = vsub.f32 %v5371, %v6151
    %v6200 = vmul.f32 %v6168, 1.442695
    %v6201 = vpow.pop %v6200
    %v6202 = vmul.f32 %v6169, 1.442695
    %v6203 = vpow.pop %v6202
    %v6204 = vmul.f32 %v6170, 1.442695
    %v6205 = vpow.pop %v6204
    %v6206 = vmul.f32 %v6171, 1.442695
    %v6207 = vpow.pop %v6206
    %v6208 = vmul.f32 %v6172, 1.442695
    %v6209 = vpow.pop %v6208
    %v6210 = vmul.f32 %v6173, 1.442695
    %v6211 = vpow.pop %v6210
    %v6212 = vmul.f32 %v6174, 1.442695
    %v6213 = vpow.pop %v6212
    %v6214 = vmul.f32 %v6175, 1.442695
    %v6215 = vpow.pop %v6214
    %v6216 = vmul.f32 %v6176, 1.442695
    %v6217 = vpow.pop %v6216
    %v6218 = vmul.f32 %v6177, 1.442695
    %v6219 = vpow.pop %v6218
    %v6220 = vmul.f32 %v6178, 1.442695
    %v6221 = vpow.pop %v6220
    %v6222 = vmul.f32 %v6179, 1.442695
    %v6223 = vpow.pop %v6222
    %v6224 = vmul.f32 %v6180, 1.442695
    %v6225 = vpow.pop %v6224
    %v6226 = vmul.f32 %v6181, 1.442695
    %v6227 = vpow.pop %v6226
    %v6228 = vmul.f32 %v6182, 1.442695
    %v6229 = vpow.pop %v6228
    %v6230 = vmul.f32 %v6183, 1.442695
    %v6231 = vpow.pop %v6230
    %v6232 = vmul.f32 %v6184, 1.442695
    %v6233 = vpow.pop %v6232
    %v6234 = vmul.f32 %v6185, 1.442695
    %v6235 = vpow.pop %v6234
    %v6236 = vmul.f32 %v6186, 1.442695
    %v6237 = vpow.pop %v6236
    %v6238 = vmul.f32 %v6187, 1.442695
    %v6239 = vpow.pop %v6238
    %v6240 = vmul.f32 %v6188, 1.442695
    %v6241 = vpow.pop %v6240
    %v6242 = vmul.f32 %v6189, 1.442695
    %v6243 = vpow.pop %v6242
    %v6244 = vmul.f32 %v6190, 1.442695
    %v6245 = vpow.pop %v6244
    %v6246 = vmul.f32 %v6191, 1.442695
    %v6247 = vpow.pop %v6246
    %v6248 = vmul.f32 %v6192, 1.442695
    %v6249 = vpow.pop %v6248
    %v6250 = vmul.f32 %v6193, 1.442695
    %v6251 = vpow.pop %v6250
    %v6252 = vmul.f32 %v6194, 1.442695
    %v6253 = vpow.pop %v6252
    %v6254 = vmul.f32 %v6195, 1.442695
    %v6255 = vpow.pop %v6254
    %v6256 = vmul.f32 %v6196, 1.442695
    %v6257 = vpow.pop %v6256
    %v6258 = vmul.f32 %v6197, 1.442695
    %v6259 = vpow.pop %v6258
    %v6260 = vmul.f32 %v6198, 1.442695
    %v6261 = vpow.pop %v6260
    %v6262 = vmul.f32 %v6199, 1.442695
    %v6263 = vpow.pop %v6262
    %6296 = vset.pattern.permute.xlu0 1
    %6297 = vperm.xlu0 %6296, %v6201
    %v6298 = vpop.permute.xlu0 %6297
    %6299 = vset.pattern.permute.xlu0 1
    %6300 = vperm.xlu0 %6299, %v6203
    %v6301 = vpop.permute.xlu0 %6300
    %6302 = vset.pattern.permute.xlu0 1
    %6303 = vperm.xlu0 %6302, %v6205
    %v6304 = vpop.permute.xlu0 %6303
    %6305 = vset.pattern.permute.xlu0 1
    %6306 = vperm.xlu0 %6305, %v6207
    %v6307 = vpop.permute.xlu0 %6306
    %6308 = vset.pattern.permute.xlu0 1
    %6309 = vperm.xlu0 %6308, %v6209
    %v6310 = vpop.permute.xlu0 %6309
    %6311 = vset.pattern.permute.xlu0 1
    %6312 = vperm.xlu0 %6311, %v6211
    %v6313 = vpop.permute.xlu0 %6312
    %6314 = vset.pattern.permute.xlu0 1
    %6315 = vperm.xlu0 %6314, %v6213
    %v6316 = vpop.permute.xlu0 %6315
    %6317 = vset.pattern.permute.xlu0 1
    %6318 = vperm.xlu0 %6317, %v6215
    %v6319 = vpop.permute.xlu0 %6318
    %6320 = vset.pattern.permute.xlu0 1
    %6321 = vperm.xlu0 %6320, %v6217
    %v6322 = vpop.permute.xlu0 %6321
    %6323 = vset.pattern.permute.xlu0 1
    %6324 = vperm.xlu0 %6323, %v6219
    %v6325 = vpop.permute.xlu0 %6324
    %6326 = vset.pattern.permute.xlu0 1
    %6327 = vperm.xlu0 %6326, %v6221
    %v6328 = vpop.permute.xlu0 %6327
    %6329 = vset.pattern.permute.xlu0 1
    %6330 = vperm.xlu0 %6329, %v6223
    %v6331 = vpop.permute.xlu0 %6330
    %6332 = vset.pattern.permute.xlu0 1
    %6333 = vperm.xlu0 %6332, %v6225
    %v6334 = vpop.permute.xlu0 %6333
    %6335 = vset.pattern.permute.xlu0 1
    %6336 = vperm.xlu0 %6335, %v6227
    %v6337 = vpop.permute.xlu0 %6336
    %6338 = vset.pattern.permute.xlu0 1
    %6339 = vperm.xlu0 %6338, %v6229
    %v6340 = vpop.permute.xlu0 %6339
    %6341 = vset.pattern.permute.xlu0 1
    %6342 = vperm.xlu0 %6341, %v6231
    %v6343 = vpop.permute.xlu0 %6342
    %6344 = vset.pattern.permute.xlu0 1
    %6345 = vperm.xlu0 %6344, %v6233
    %v6346 = vpop.permute.xlu0 %6345
    %6347 = vset.pattern.permute.xlu0 1
    %6348 = vperm.xlu0 %6347, %v6235
    %v6349 = vpop.permute.xlu0 %6348
    %6350 = vset.pattern.permute.xlu0 1
    %6351 = vperm.xlu0 %6350, %v6237
    %v6352 = vpop.permute.xlu0 %6351
    %6353 = vset.pattern.permute.xlu0 1
    %6354 = vperm.xlu0 %6353, %v6239
    %v6355 = vpop.permute.xlu0 %6354
    %6356 = vset.pattern.permute.xlu0 1
    %6357 = vperm.xlu0 %6356, %v6241
    %v6358 = vpop.permute.xlu0 %6357
    %6359 = vset.pattern.permute.xlu0 1
    %6360 = vperm.xlu0 %6359, %v6243
    %v6361 = vpop.permute.xlu0 %6360
    %6362 = vset.pattern.permute.xlu0 1
    %6363 = vperm.xlu0 %6362, %v6245
    %v6364 = vpop.permute.xlu0 %6363
    %6365 = vset.pattern.permute.xlu0 1
    %6366 = vperm.xlu0 %6365, %v6247
    %v6367 = vpop.permute.xlu0 %6366
    %6368 = vset.pattern.permute.xlu0 1
    %6369 = vperm.xlu0 %6368, %v6249
    %v6370 = vpop.permute.xlu0 %6369
    %6371 = vset.pattern.permute.xlu0 1
    %6372 = vperm.xlu0 %6371, %v6251
    %v6373 = vpop.permute.xlu0 %6372
    %6374 = vset.pattern.permute.xlu0 1
    %6375 = vperm.xlu0 %6374, %v6253
    %v6376 = vpop.permute.xlu0 %6375
    %6377 = vset.pattern.permute.xlu0 1
    %6378 = vperm.xlu0 %6377, %v6255
    %v6379 = vpop.permute.xlu0 %6378
    %6380 = vset.pattern.permute.xlu0 1
    %6381 = vperm.xlu0 %6380, %v6257
    %v6382 = vpop.permute.xlu0 %6381
    %6383 = vset.pattern.permute.xlu0 1
    %6384 = vperm.xlu0 %6383, %v6259
    %v6385 = vpop.permute.xlu0 %6384
    %6386 = vset.pattern.permute.xlu0 1
    %6387 = vperm.xlu0 %6386, %v6261
    %v6388 = vpop.permute.xlu0 %6387
    %6389 = vset.pattern.permute.xlu0 1
    %6390 = vperm.xlu0 %6389, %v6263
    %v6391 = vpop.permute.xlu0 %6390
    %v6392 = vperm.slane %v6298, %v1018
    %v6393 = vperm.slane %v6301, %v1020
    %v6394 = vsel %vm1022, %v6393, %v6392
    %v6395 = vperm.slane %v6304, %v1018
    %v6396 = vperm.slane %v6307, %v1020
    %v6397 = vsel %vm1022, %v6396, %v6395
    %v6398 = vperm.slane %v6310, %v1018
    %v6399 = vperm.slane %v6313, %v1020
    %v6400 = vsel %vm1022, %v6399, %v6398
    %v6401 = vperm.slane %v6316, %v1018
    %v6402 = vperm.slane %v6319, %v1020
    %v6403 = vsel %vm1022, %v6402, %v6401
    %v6404 = vperm.slane %v6322, %v1018
    %v6405 = vperm.slane %v6325, %v1020
    %v6406 = vsel %vm1022, %v6405, %v6404
    %v6407 = vperm.slane %v6328, %v1018
    %v6408 = vperm.slane %v6331, %v1020
    %v6409 = vsel %vm1022, %v6408, %v6407
    %v6410 = vperm.slane %v6334, %v1018
    %v6411 = vperm.slane %v6337, %v1020
    %v6412 = vsel %vm1022, %v6411, %v6410
    %v6413 = vperm.slane %v6340, %v1018
    %v6414 = vperm.slane %v6343, %v1020
    %v6415 = vsel %vm1022, %v6414, %v6413
    %v6416 = vperm.slane %v6346, %v1018
    %v6417 = vperm.slane %v6349, %v1020
    %v6418 = vsel %vm1022, %v6417, %v6416
    %v6419 = vperm.slane %v6352, %v1018
    %v6420 = vperm.slane %v6355, %v1020
    %v6421 = vsel %vm1022, %v6420, %v6419
    %v6422 = vperm.slane %v6358, %v1018
    %v6423 = vperm.slane %v6361, %v1020
    %v6424 = vsel %vm1022, %v6423, %v6422
    %v6425 = vperm.slane %v6364, %v1018
    %v6426 = vperm.slane %v6367, %v1020
    %v6427 = vsel %vm1022, %v6426, %v6425
    %v6428 = vperm.slane %v6370, %v1018
    %v6429 = vperm.slane %v6373, %v1020
    %v6430 = vsel %vm1022, %v6429, %v6428
    %v6431 = vperm.slane %v6376, %v1018
    %v6432 = vperm.slane %v6379, %v1020
    %v6433 = vsel %vm1022, %v6432, %v6431
    %v6434 = vperm.slane %v6382, %v1018
    %v6435 = vperm.slane %v6385, %v1020
    %v6436 = vsel %vm1022, %v6435, %v6434
    %v6437 = vperm.slane %v6388, %v1018
    %v6438 = vperm.slane %v6391, %v1020
    %v6439 = vsel %vm1022, %v6438, %v6437
    %v6440 = vsel %vm1069, %v6397, %v6394
    %v6441 = vsel %vm1071, %v6400, %v6440
    %v6442 = vsel %vm1073, %v6403, %v6441
    %v6443 = vsel %vm1075, %v6406, %v6442
    %v6444 = vsel %vm1077, %v6409, %v6443
    %v6445 = vsel %vm1079, %v6412, %v6444
    %v6446 = vsel %vm1081, %v6415, %v6445
    %v6447 = vsel %vm1069, %v6421, %v6418
    %v6448 = vsel %vm1071, %v6424, %v6447
    %v6449 = vsel %vm1073, %v6427, %v6448
    %v6450 = vsel %vm1075, %v6430, %v6449
    %v6451 = vsel %vm1077, %v6433, %v6450
    %v6452 = vsel %vm1079, %v6436, %v6451
    %v6453 = vsel %vm1081, %v6439, %v6452
    %v6456 = vsel %vm437, %v6446, 0.0
    %6457 = vadd.xlane.f32.xlu0 %v6456
    %v6458 = vpop.xlane.xlu0 %6457
    %v6459 = vsel %vm437, %v6453, 0.0
    %6460 = vadd.xlane.f32.xlu0 %v6459
    %v6461 = vpop.xlane.xlu0 %6460
    %v6462 = vmax.f32 %v6458, 1e-20
    %v6463 = vmax.f32 %v6461, 1e-20
    %v6464 = vrcp.pop %v6462
    %v6465 = vrcp.pop %v6463
    %v6468 = vperm.slane %v6464, 0
    %v6469 = vperm.slane %v6464, 1
    %v6470 = vperm.slane %v6464, 2
    %v6471 = vperm.slane %v6464, 3
    %v6472 = vperm.slane %v6464, 4
    %v6473 = vperm.slane %v6464, 5
    %v6474 = vperm.slane %v6464, 6
    %v6475 = vperm.slane %v6464, 7
    %v6476 = vperm.slane %v6465, 0
    %v6477 = vperm.slane %v6465, 1
    %v6478 = vperm.slane %v6465, 2
    %v6479 = vperm.slane %v6465, 3
    %v6480 = vperm.slane %v6465, 4
    %v6481 = vperm.slane %v6465, 5
    %v6482 = vperm.slane %v6465, 6
    %v6483 = vperm.slane %v6465, 7
    %v6500 = vmul.f32 %v6201, %v6468
    %v6501 = vmul.f32 %v6203, %v6468
    %v6502 = vmul.f32 %v6205, %v6469
    %v6503 = vmul.f32 %v6207, %v6469
    %v6504 = vmul.f32 %v6209, %v6470
    %v6505 = vmul.f32 %v6211, %v6470
    %v6506 = vmul.f32 %v6213, %v6471
    %v6507 = vmul.f32 %v6215, %v6471
    %v6508 = vmul.f32 %v6217, %v6472
    %v6509 = vmul.f32 %v6219, %v6472
    %v6510 = vmul.f32 %v6221, %v6473
    %v6511 = vmul.f32 %v6223, %v6473
    %v6512 = vmul.f32 %v6225, %v6474
    %v6513 = vmul.f32 %v6227, %v6474
    %v6514 = vmul.f32 %v6229, %v6475
    %v6515 = vmul.f32 %v6231, %v6475
    %v6516 = vmul.f32 %v6233, %v6476
    %v6517 = vmul.f32 %v6235, %v6476
    %v6518 = vmul.f32 %v6237, %v6477
    %v6519 = vmul.f32 %v6239, %v6477
    %v6520 = vmul.f32 %v6241, %v6478
    %v6521 = vmul.f32 %v6243, %v6478
    %v6522 = vmul.f32 %v6245, %v6479
    %v6523 = vmul.f32 %v6247, %v6479
    %v6524 = vmul.f32 %v6249, %v6480
    %v6525 = vmul.f32 %v6251, %v6480
    %v6526 = vmul.f32 %v6253, %v6481
    %v6527 = vmul.f32 %v6255, %v6481
    %v6528 = vmul.f32 %v6257, %v6482
    %v6529 = vmul.f32 %v6259, %v6482
    %v6530 = vmul.f32 %v6261, %v6483
    %v6531 = vmul.f32 %v6263, %v6483
    %6564 = vset.pattern.permute.xlu0 1
    %6565 = vperm.xlu0 %6564, %v6500
    %v6566 = vpop.permute.xlu0 %6565
    %6567 = vset.pattern.permute.xlu0 1
    %6568 = vperm.xlu0 %6567, %v6501
    %v6569 = vpop.permute.xlu0 %6568
    %6570 = vset.pattern.permute.xlu0 1
    %6571 = vperm.xlu0 %6570, %v6502
    %v6572 = vpop.permute.xlu0 %6571
    %6573 = vset.pattern.permute.xlu0 1
    %6574 = vperm.xlu0 %6573, %v6503
    %v6575 = vpop.permute.xlu0 %6574
    %6576 = vset.pattern.permute.xlu0 1
    %6577 = vperm.xlu0 %6576, %v6504
    %v6578 = vpop.permute.xlu0 %6577
    %6579 = vset.pattern.permute.xlu0 1
    %6580 = vperm.xlu0 %6579, %v6505
    %v6581 = vpop.permute.xlu0 %6580
    %6582 = vset.pattern.permute.xlu0 1
    %6583 = vperm.xlu0 %6582, %v6506
    %v6584 = vpop.permute.xlu0 %6583
    %6585 = vset.pattern.permute.xlu0 1
    %6586 = vperm.xlu0 %6585, %v6507
    %v6587 = vpop.permute.xlu0 %6586
    %6588 = vset.pattern.permute.xlu0 1
    %6589 = vperm.xlu0 %6588, %v6508
    %v6590 = vpop.permute.xlu0 %6589
    %6591 = vset.pattern.permute.xlu0 1
    %6592 = vperm.xlu0 %6591, %v6509
    %v6593 = vpop.permute.xlu0 %6592
    %6594 = vset.pattern.permute.xlu0 1
    %6595 = vperm.xlu0 %6594, %v6510
    %v6596 = vpop.permute.xlu0 %6595
    %6597 = vset.pattern.permute.xlu0 1
    %6598 = vperm.xlu0 %6597, %v6511
    %v6599 = vpop.permute.xlu0 %6598
    %6600 = vset.pattern.permute.xlu0 1
    %6601 = vperm.xlu0 %6600, %v6512
    %v6602 = vpop.permute.xlu0 %6601
    %6603 = vset.pattern.permute.xlu0 1
    %6604 = vperm.xlu0 %6603, %v6513
    %v6605 = vpop.permute.xlu0 %6604
    %6606 = vset.pattern.permute.xlu0 1
    %6607 = vperm.xlu0 %6606, %v6514
    %v6608 = vpop.permute.xlu0 %6607
    %6609 = vset.pattern.permute.xlu0 1
    %6610 = vperm.xlu0 %6609, %v6515
    %v6611 = vpop.permute.xlu0 %6610
    %6612 = vset.pattern.permute.xlu0 1
    %6613 = vperm.xlu0 %6612, %v6516
    %v6614 = vpop.permute.xlu0 %6613
    %6615 = vset.pattern.permute.xlu0 1
    %6616 = vperm.xlu0 %6615, %v6517
    %v6617 = vpop.permute.xlu0 %6616
    %6618 = vset.pattern.permute.xlu0 1
    %6619 = vperm.xlu0 %6618, %v6518
    %v6620 = vpop.permute.xlu0 %6619
    %6621 = vset.pattern.permute.xlu0 1
    %6622 = vperm.xlu0 %6621, %v6519
    %v6623 = vpop.permute.xlu0 %6622
    %6624 = vset.pattern.permute.xlu0 1
    %6625 = vperm.xlu0 %6624, %v6520
    %v6626 = vpop.permute.xlu0 %6625
    %6627 = vset.pattern.permute.xlu0 1
    %6628 = vperm.xlu0 %6627, %v6521
    %v6629 = vpop.permute.xlu0 %6628
    %6630 = vset.pattern.permute.xlu0 1
    %6631 = vperm.xlu0 %6630, %v6522
    %v6632 = vpop.permute.xlu0 %6631
    %6633 = vset.pattern.permute.xlu0 1
    %6634 = vperm.xlu0 %6633, %v6523
    %v6635 = vpop.permute.xlu0 %6634
    %6636 = vset.pattern.permute.xlu0 1
    %6637 = vperm.xlu0 %6636, %v6524
    %v6638 = vpop.permute.xlu0 %6637
    %6639 = vset.pattern.permute.xlu0 1
    %6640 = vperm.xlu0 %6639, %v6525
    %v6641 = vpop.permute.xlu0 %6640
    %6642 = vset.pattern.permute.xlu0 1
    %6643 = vperm.xlu0 %6642, %v6526
    %v6644 = vpop.permute.xlu0 %6643
    %6645 = vset.pattern.permute.xlu0 1
    %6646 = vperm.xlu0 %6645, %v6527
    %v6647 = vpop.permute.xlu0 %6646
    %6648 = vset.pattern.permute.xlu0 1
    %6649 = vperm.xlu0 %6648, %v6528
    %v6650 = vpop.permute.xlu0 %6649
    %6651 = vset.pattern.permute.xlu0 1
    %6652 = vperm.xlu0 %6651, %v6529
    %v6653 = vpop.permute.xlu0 %6652
    %6654 = vset.pattern.permute.xlu0 1
    %6655 = vperm.xlu0 %6654, %v6530
    %v6656 = vpop.permute.xlu0 %6655
    %6657 = vset.pattern.permute.xlu0 1
    %6658 = vperm.xlu0 %6657, %v6531
    %v6659 = vpop.permute.xlu0 %6658
    %v6660 = vperm.slane %v6566, %v1018
    %v6661 = vperm.slane %v6569, %v1020
    %v6662 = vsel %vm1022, %v6661, %v6660
    %v6663 = vperm.slane %v6572, %v1018
    %v6664 = vperm.slane %v6575, %v1020
    %v6665 = vsel %vm1022, %v6664, %v6663
    %v6666 = vperm.slane %v6578, %v1018
    %v6667 = vperm.slane %v6581, %v1020
    %v6668 = vsel %vm1022, %v6667, %v6666
    %v6669 = vperm.slane %v6584, %v1018
    %v6670 = vperm.slane %v6587, %v1020
    %v6671 = vsel %vm1022, %v6670, %v6669
    %v6672 = vperm.slane %v6590, %v1018
    %v6673 = vperm.slane %v6593, %v1020
    %v6674 = vsel %vm1022, %v6673, %v6672
    %v6675 = vperm.slane %v6596, %v1018
    %v6676 = vperm.slane %v6599, %v1020
    %v6677 = vsel %vm1022, %v6676, %v6675
    %v6678 = vperm.slane %v6602, %v1018
    %v6679 = vperm.slane %v6605, %v1020
    %v6680 = vsel %vm1022, %v6679, %v6678
    %v6681 = vperm.slane %v6608, %v1018
    %v6682 = vperm.slane %v6611, %v1020
    %v6683 = vsel %vm1022, %v6682, %v6681
    %v6684 = vperm.slane %v6614, %v1018
    %v6685 = vperm.slane %v6617, %v1020
    %v6686 = vsel %vm1022, %v6685, %v6684
    %v6687 = vperm.slane %v6620, %v1018
    %v6688 = vperm.slane %v6623, %v1020
    %v6689 = vsel %vm1022, %v6688, %v6687
    %v6690 = vperm.slane %v6626, %v1018
    %v6691 = vperm.slane %v6629, %v1020
    %v6692 = vsel %vm1022, %v6691, %v6690
    %v6693 = vperm.slane %v6632, %v1018
    %v6694 = vperm.slane %v6635, %v1020
    %v6695 = vsel %vm1022, %v6694, %v6693
    %v6696 = vperm.slane %v6638, %v1018
    %v6697 = vperm.slane %v6641, %v1020
    %v6698 = vsel %vm1022, %v6697, %v6696
    %v6699 = vperm.slane %v6644, %v1018
    %v6700 = vperm.slane %v6647, %v1020
    %v6701 = vsel %vm1022, %v6700, %v6699
    %v6702 = vperm.slane %v6650, %v1018
    %v6703 = vperm.slane %v6653, %v1020
    %v6704 = vsel %vm1022, %v6703, %v6702
    %v6705 = vperm.slane %v6656, %v1018
    %v6706 = vperm.slane %v6659, %v1020
    %v6707 = vsel %vm1022, %v6706, %v6705
    %v6708 = vsel %vm1069, %v6665, %v6662
    %v6709 = vsel %vm1071, %v6668, %v6708
    %v6710 = vsel %vm1073, %v6671, %v6709
    %v6711 = vsel %vm1075, %v6674, %v6710
    %v6712 = vsel %vm1077, %v6677, %v6711
    %v6713 = vsel %vm1079, %v6680, %v6712
    %v6714 = vsel %vm1081, %v6683, %v6713
    %v6715 = vsel %vm1069, %v6689, %v6686
    %v6716 = vsel %vm1071, %v6692, %v6715
    %v6717 = vsel %vm1073, %v6695, %v6716
    %v6718 = vsel %vm1075, %v6698, %v6717
    %v6719 = vsel %vm1077, %v6701, %v6718
    %v6720 = vsel %vm1079, %v6704, %v6719
    %v6721 = vsel %vm1081, %v6707, %v6720
    %6722 = vrot.lane.b32.xlu0 %v4872, 120
    %v6723 = vpop.permute.xlu0 %6722
    %6724 = vrot.lane.b32.xlu0 %v4873, 120
    %v6725 = vpop.permute.xlu0 %6724
    %v6728 = vsel %vm437, %v6714, 0
    %v6730 = vsel %vm437, %v6721, 0
    %6732 = vmatpush.msra.mxu0 0.0
    %6733 = vmatpush.msra.mxu0 0.0
    %6734 = vmatpush.msra.mxu0 0.0
    %6735 = vmatpush.msra.mxu0 0.0
    %6736 = vmatpush.msra.mxu0 0.0
    %6737 = vmatpush.msra.mxu0 0.0
    %6738 = vmatpush.msra.mxu0 0.0
    %6739 = vmatpush.msra.mxu0 0.0
    %6740 = vmatpush.msra.mxu0 0.0
    %6741 = vmatpush.msra.mxu0 0.0
    %6742 = vmatpush.msra.mxu0 0.0
    %6743 = vmatpush.msra.mxu0 0.0
    %6744 = vmatpush.msra.mxu0 0.0
    %6745 = vmatpush.msra.mxu0 0.0
    %6746 = vmatpush.msra.mxu0 %v6725
    %6747 = vmatpush.msra.mxu0 %v6723
    %6748 = vmatmul.f32.gmra.mxu0 %v6728
    %v6749 = vpop.f32.mrf.mxu0
    %v6750 = vadd.f32 0.0, %v6749
    %6751 = vmatmul.f32.gmra.mxu0 %v6730
    %v6752 = vpop.f32.mrf.mxu0
    %v6753 = vadd.f32 0.0, %v6752
    %6754 = vdwg.mxu0
    %6787 = vset.pattern.permute.xlu0 0
    %6788 = vperm.xlu0 %6787, %v5936
    %v6789 = vpop.permute.xlu0 %6788
    %6790 = vset.pattern.permute.xlu0 0
    %6791 = vperm.xlu0 %6790, %v5937
    %v6792 = vpop.permute.xlu0 %6791
    %6793 = vset.pattern.permute.xlu0 0
    %6794 = vperm.xlu0 %6793, %v5938
    %v6795 = vpop.permute.xlu0 %6794
    %6796 = vset.pattern.permute.xlu0 0
    %6797 = vperm.xlu0 %6796, %v5939
    %v6798 = vpop.permute.xlu0 %6797
    %6799 = vset.pattern.permute.xlu0 0
    %6800 = vperm.xlu0 %6799, %v5940
    %v6801 = vpop.permute.xlu0 %6800
    %6802 = vset.pattern.permute.xlu0 0
    %6803 = vperm.xlu0 %6802, %v5941
    %v6804 = vpop.permute.xlu0 %6803
    %6805 = vset.pattern.permute.xlu0 0
    %6806 = vperm.xlu0 %6805, %v5942
    %v6807 = vpop.permute.xlu0 %6806
    %6808 = vset.pattern.permute.xlu0 0
    %6809 = vperm.xlu0 %6808, %v5943
    %v6810 = vpop.permute.xlu0 %6809
    %6811 = vset.pattern.permute.xlu0 0
    %6812 = vperm.xlu0 %6811, %v5944
    %v6813 = vpop.permute.xlu0 %6812
    %6814 = vset.pattern.permute.xlu0 0
    %6815 = vperm.xlu0 %6814, %v5945
    %v6816 = vpop.permute.xlu0 %6815
    %6817 = vset.pattern.permute.xlu0 0
    %6818 = vperm.xlu0 %6817, %v5946
    %v6819 = vpop.permute.xlu0 %6818
    %6820 = vset.pattern.permute.xlu0 0
    %6821 = vperm.xlu0 %6820, %v5947
    %v6822 = vpop.permute.xlu0 %6821
    %6823 = vset.pattern.permute.xlu0 0
    %6824 = vperm.xlu0 %6823, %v5948
    %v6825 = vpop.permute.xlu0 %6824
    %6826 = vset.pattern.permute.xlu0 0
    %6827 = vperm.xlu0 %6826, %v5949
    %v6828 = vpop.permute.xlu0 %6827
    %6829 = vset.pattern.permute.xlu0 0
    %6830 = vperm.xlu0 %6829, %v5950
    %v6831 = vpop.permute.xlu0 %6830
    %6832 = vset.pattern.permute.xlu0 0
    %6833 = vperm.xlu0 %6832, %v5951
    %v6834 = vpop.permute.xlu0 %6833
    %6835 = vset.pattern.permute.xlu0 0
    %6836 = vperm.xlu0 %6835, %v5952
    %v6837 = vpop.permute.xlu0 %6836
    %6838 = vset.pattern.permute.xlu0 0
    %6839 = vperm.xlu0 %6838, %v5953
    %v6840 = vpop.permute.xlu0 %6839
    %6841 = vset.pattern.permute.xlu0 0
    %6842 = vperm.xlu0 %6841, %v5954
    %v6843 = vpop.permute.xlu0 %6842
    %6844 = vset.pattern.permute.xlu0 0
    %6845 = vperm.xlu0 %6844, %v5955
    %v6846 = vpop.permute.xlu0 %6845
    %6847 = vset.pattern.permute.xlu0 0
    %6848 = vperm.xlu0 %6847, %v5956
    %v6849 = vpop.permute.xlu0 %6848
    %6850 = vset.pattern.permute.xlu0 0
    %6851 = vperm.xlu0 %6850, %v5957
    %v6852 = vpop.permute.xlu0 %6851
    %6853 = vset.pattern.permute.xlu0 0
    %6854 = vperm.xlu0 %6853, %v5958
    %v6855 = vpop.permute.xlu0 %6854
    %6856 = vset.pattern.permute.xlu0 0
    %6857 = vperm.xlu0 %6856, %v5959
    %v6858 = vpop.permute.xlu0 %6857
    %6859 = vset.pattern.permute.xlu0 0
    %6860 = vperm.xlu0 %6859, %v5960
    %v6861 = vpop.permute.xlu0 %6860
    %6862 = vset.pattern.permute.xlu0 0
    %6863 = vperm.xlu0 %6862, %v5961
    %v6864 = vpop.permute.xlu0 %6863
    %6865 = vset.pattern.permute.xlu0 0
    %6866 = vperm.xlu0 %6865, %v5962
    %v6867 = vpop.permute.xlu0 %6866
    %6868 = vset.pattern.permute.xlu0 0
    %6869 = vperm.xlu0 %6868, %v5963
    %v6870 = vpop.permute.xlu0 %6869
    %6871 = vset.pattern.permute.xlu0 0
    %6872 = vperm.xlu0 %6871, %v5964
    %v6873 = vpop.permute.xlu0 %6872
    %6874 = vset.pattern.permute.xlu0 0
    %6875 = vperm.xlu0 %6874, %v5965
    %v6876 = vpop.permute.xlu0 %6875
    %6877 = vset.pattern.permute.xlu0 0
    %6878 = vperm.xlu0 %6877, %v5966
    %v6879 = vpop.permute.xlu0 %6878
    %6880 = vset.pattern.permute.xlu0 0
    %6881 = vperm.xlu0 %6880, %v5967
    %v6882 = vpop.permute.xlu0 %6881
    %v6883 = vperm.slane %v6789, %v1018
    %v6884 = vperm.slane %v6792, %v1020
    %v6885 = vsel %vm1022, %v6884, %v6883
    %v6886 = vperm.slane %v6795, %v1018
    %v6887 = vperm.slane %v6798, %v1020
    %v6888 = vsel %vm1022, %v6887, %v6886
    %v6889 = vperm.slane %v6801, %v1018
    %v6890 = vperm.slane %v6804, %v1020
    %v6891 = vsel %vm1022, %v6890, %v6889
    %v6892 = vperm.slane %v6807, %v1018
    %v6893 = vperm.slane %v6810, %v1020
    %v6894 = vsel %vm1022, %v6893, %v6892
    %v6895 = vperm.slane %v6813, %v1018
    %v6896 = vperm.slane %v6816, %v1020
    %v6897 = vsel %vm1022, %v6896, %v6895
    %v6898 = vperm.slane %v6819, %v1018
    %v6899 = vperm.slane %v6822, %v1020
    %v6900 = vsel %vm1022, %v6899, %v6898
    %v6901 = vperm.slane %v6825, %v1018
    %v6902 = vperm.slane %v6828, %v1020
    %v6903 = vsel %vm1022, %v6902, %v6901
    %v6904 = vperm.slane %v6831, %v1018
    %v6905 = vperm.slane %v6834, %v1020
    %v6906 = vsel %vm1022, %v6905, %v6904
    %v6907 = vperm.slane %v6837, %v1018
    %v6908 = vperm.slane %v6840, %v1020
    %v6909 = vsel %vm1022, %v6908, %v6907
    %v6910 = vperm.slane %v6843, %v1018
    %v6911 = vperm.slane %v6846, %v1020
    %v6912 = vsel %vm1022, %v6911, %v6910
    %v6913 = vperm.slane %v6849, %v1018
    %v6914 = vperm.slane %v6852, %v1020
    %v6915 = vsel %vm1022, %v6914, %v6913
    %v6916 = vperm.slane %v6855, %v1018
    %v6917 = vperm.slane %v6858, %v1020
    %v6918 = vsel %vm1022, %v6917, %v6916
    %v6919 = vperm.slane %v6861, %v1018
    %v6920 = vperm.slane %v6864, %v1020
    %v6921 = vsel %vm1022, %v6920, %v6919
    %v6922 = vperm.slane %v6867, %v1018
    %v6923 = vperm.slane %v6870, %v1020
    %v6924 = vsel %vm1022, %v6923, %v6922
    %v6925 = vperm.slane %v6873, %v1018
    %v6926 = vperm.slane %v6876, %v1020
    %v6927 = vsel %vm1022, %v6926, %v6925
    %v6928 = vperm.slane %v6879, %v1018
    %v6929 = vperm.slane %v6882, %v1020
    %v6930 = vsel %vm1022, %v6929, %v6928
    %v6931 = vsel %vm1069, %v6888, %v6885
    %v6932 = vsel %vm1071, %v6891, %v6931
    %v6933 = vsel %vm1073, %v6894, %v6932
    %v6934 = vsel %vm1075, %v6897, %v6933
    %v6935 = vsel %vm1077, %v6900, %v6934
    %v6936 = vsel %vm1079, %v6903, %v6935
    %v6937 = vsel %vm1081, %v6906, %v6936
    %v6938 = vsel %vm1069, %v6912, %v6909
    %v6939 = vsel %vm1071, %v6915, %v6938
    %v6940 = vsel %vm1073, %v6918, %v6939
    %v6941 = vsel %vm1075, %v6921, %v6940
    %v6942 = vsel %vm1077, %v6924, %v6941
    %v6943 = vsel %vm1079, %v6927, %v6942
    %v6944 = vsel %vm1081, %v6930, %v6943
    %v6945 = vsel %vm437, %v6937, 0
    %v6947 = vsel %vm437, %v6944, 0
    %6949 = vmatpush.msra.mxu0 0.0
    %6950 = vmatpush.msra.mxu0 0.0
    %6951 = vmatpush.msra.mxu0 0.0
    %6952 = vmatpush.msra.mxu0 0.0
    %6953 = vmatpush.msra.mxu0 0.0
    %6954 = vmatpush.msra.mxu0 0.0
    %6955 = vmatpush.msra.mxu0 0.0
    %6956 = vmatpush.msra.mxu0 0.0
    %6957 = vmatpush.msra.mxu0 0.0
    %6958 = vmatpush.msra.mxu0 0.0
    %6959 = vmatpush.msra.mxu0 0.0
    %6960 = vmatpush.msra.mxu0 0.0
    %6961 = vmatpush.msra.mxu0 0.0
    %6962 = vmatpush.msra.mxu0 0.0
    %6963 = vmatpush.msra.mxu0 %v4873
    %6964 = vmatpush.msra.mxu0 %v4872
    %6965 = vmatmul.f32.gmra.mxu0 %v6945
    %v6966 = vpop.f32.mrf.mxu0
    %v6967 = vadd.f32 %v6750, %v6966
    %6968 = vmatmul.f32.gmra.mxu0 %v6947
    %v6969 = vpop.f32.mrf.mxu0
    %v6970 = vadd.f32 %v6753, %v6969
    %6971 = vdwg.mxu0
    %v6972 = vmul.f32 %v6967, 0.5
    %v6973 = vmul.f32 %v6970, 0.5
    %v6974 = vperm.slane %v4839, 2
    %v6975 = vadd.f32 %v6972, %v6974
    %v6976 = vadd.f32 %v6973, %v6974
    %6977 = vmatpush.msra.mxu0 0.0
    %6978 = vmatpush.msra.mxu0 0.0
    %6979 = vmatpush.msra.mxu0 0.0
    %6980 = vmatpush.msra.mxu0 0.0
    %6981 = vmatpush.msra.mxu0 0.0
    %6982 = vmatpush.msra.mxu0 0.0
    %6983 = vmatpush.msra.mxu0 0.0
    %6984 = vmatpush.msra.mxu0 0.0
    %6985 = vmatpush.msra.mxu0 0.0
    %6986 = vmatpush.msra.mxu0 0.0
    %6987 = vmatpush.msra.mxu0 0.0
    %6988 = vmatpush.msra.mxu0 0.0
    %6989 = vmatpush.msra.mxu0 0.0
    %6990 = vmatpush.msra.mxu0 0.0
    %6991 = vmatpush.msra.mxu0 %v6976
    %6992 = vmatpush.msra.mxu0 %v6975
    %6993 = vmatmul.f32.gmra.mxu0 %v2518
    %v6994 = vpop.f32.mrf.mxu0
    %v6995 = vadd.f32 0.0, %v6994
    %6996 = vmatmul.f32.gmra.mxu0 %v2521
    %v6997 = vpop.f32.mrf.mxu0
    %v6998 = vadd.f32 0.0, %v6997
    %6999 = vdwg.mxu0
    %v7000 = vperm.slane %v4839, 5
    %v7001 = vmul.f32 %v7000, %v6995
    %v7002 = vmul.f32 %v7000, %v6998
    %v7003 = vsub.f32 %v6975, %v7001
    %v7004 = vsub.f32 %v6976, %v7002
    %v7005 = vmul.f32 %v7003, %v7003
    %v7006 = vmul.f32 %v7004, %v7004
    %v7007 = vperm.slane %v4839, 3
    %v7008 = vmul.f32 %v7007, %v7003
    %v7009 = vmul.f32 %v7007, %v7004
    %7010 = vmatpush.msra.mxu0 0.0
    %7011 = vmatpush.msra.mxu0 0.0
    %7012 = vmatpush.msra.mxu0 0.0
    %7013 = vmatpush.msra.mxu0 0.0
    %7014 = vmatpush.msra.mxu0 0.0
    %7015 = vmatpush.msra.mxu0 0.0
    %7016 = vmatpush.msra.mxu0 0.0
    %7017 = vmatpush.msra.mxu0 0.0
    %7018 = vmatpush.msra.mxu0 0.0
    %7019 = vmatpush.msra.mxu0 0.0
    %7020 = vmatpush.msra.mxu0 0.0
    %7021 = vmatpush.msra.mxu0 0.0
    %7022 = vmatpush.msra.mxu0 0.0
    %7023 = vmatpush.msra.mxu0 0.0
    %7024 = vmatpush.msra.mxu0 %v7006
    %7025 = vmatpush.msra.mxu0 %v7005
    %7026 = vmatmul.f32.gmra.mxu0 %v2518
    %v7027 = vpop.f32.mrf.mxu0
    %v7028 = vadd.f32 1e-05, %v7027
    %7029 = vmatmul.f32.gmra.mxu0 %v2521
    %v7030 = vpop.f32.mrf.mxu0
    %v7031 = vadd.f32 1e-05, %v7030
    %7032 = vdwg.mxu0
    %v7033 = vrsqrt.pop %v7028
    %v7034 = vmul.f32 %v7033, %v7028
    %v7035 = vmul.f32 %v7034, %v7033
    %v7036 = vmul.f32 0.5, %v7035
    %v7037 = vsub.f32 1.5, %v7036
    %v7038 = vmul.f32 %v7033, %v7037
    %vm7039 = vweird.f32 %v7028
    %vm7040 = vweird.f32 %v7033
    %vm7041 = vmor %vm7039, %vm7040
    %v7042 = vsel %vm7041, %v7033, %v7038
    %v7043 = vrsqrt.pop %v7031
    %v7044 = vmul.f32 %v7043, %v7031
    %v7045 = vmul.f32 %v7044, %v7043
    %v7046 = vmul.f32 0.5, %v7045
    %v7047 = vsub.f32 1.5, %v7046
    %v7048 = vmul.f32 %v7043, %v7047
    %vm7049 = vweird.f32 %v7031
    %vm7050 = vweird.f32 %v7043
    %vm7051 = vmor %vm7049, %vm7050
    %v7052 = vsel %vm7051, %v7043, %v7048
    %v7053 = vmul.f32 %v7008, %v7042
    %v7054 = vmul.f32 %v7009, %v7052
    %v7055 = vperm.slane %v4839, 4
    %v7056 = vadd.f32 %v7053, %v7055
    %v7057 = vadd.f32 %v7054, %v7055
    %v7058 = vmax.f32 %v7056, 0.0
    %v7059 = vmax.f32 %v7057, 0.0
    %v7061 = vsel %vm437, %v110, 0
    %7063 = vmatpush.msra.mxu0 0.0
    %7064 = vmatpush.msra.mxu0 0.0
    %7065 = vmatpush.msra.mxu0 0.0
    %7066 = vmatpush.msra.mxu0 0.0
    %7067 = vmatpush.msra.mxu0 0.0
    %7068 = vmatpush.msra.mxu0 0.0
    %7069 = vmatpush.msra.mxu0 0.0
    %7070 = vmatpush.msra.mxu0 0.0
    %7071 = vmatpush.msra.mxu0 0.0
    %7072 = vmatpush.msra.mxu0 0.0
    %7073 = vmatpush.msra.mxu0 0.0
    %7074 = vmatpush.msra.mxu0 0.0
    %7075 = vmatpush.msra.mxu0 0.0
    %7076 = vmatpush.msra.mxu0 0.0
    %7077 = vmatpush.msra.mxu0 %v7059
    %7078 = vmatpush.msra.mxu0 %v7058
    %7079 = vmatmul.f32.gmra.mxu0 %v7061
    %v7080 = vpop.f32.mrf.mxu0
    %v7081 = vadd.f32 0.0, %v7080
    %7082 = vdwg.mxu0
    %v7083 = vld [vmem:[#allocation9] sm:$0xff]
    %v7084 = vld [vmem:[%s14] sm:$0x1]
    %v7086 = vperm.slane %v7084, 0
    %v7089 = vsel %vm115, %v7081, 0
    %7091 = vmatpush.msra.mxu0 0.0
    %7092 = vmatpush.msra.mxu0 0.0
    %7093 = vmatpush.msra.mxu0 0.0
    %7094 = vmatpush.msra.mxu0 0.0
    %7095 = vmatpush.msra.mxu0 0.0
    %7096 = vmatpush.msra.mxu0 0.0
    %7097 = vmatpush.msra.mxu0 0.0
    %7098 = vmatpush.msra.mxu0 0.0
    %7099 = vmatpush.msra.mxu0 0.0
    %7100 = vmatpush.msra.mxu0 0.0
    %7101 = vmatpush.msra.mxu0 0.0
    %7102 = vmatpush.msra.mxu0 0.0
    %7103 = vmatpush.msra.mxu0 0.0
    %7104 = vmatpush.msra.mxu0 0.0
    %7105 = vmatpush.msra.mxu0 0.0
    %7106 = vmatpush.msra.mxu0 %v7083
    %7107 = vmatmul.f32.gmra.mxu0 %v7089
    %v7108 = vpop.f32.mrf.mxu0
    %v7109 = vadd.f32 %v7086, %v7108
    %7110 = vdwg.mxu0
    %7111 = vst [vmem:[#allocation11] sm:$0x3] %v7109
    // Predicated region
    $region78: #{tpu_custom_call.1} parent=1 // pred_check
      _
    $region79: #{tpu_custom_call.1} parent=1 // pred_check_branch
      %7113 = sbr.rel (0) target = $region81
    $region80: #{tpu_custom_call.1} parent=1 // pred_region
      %7115 = vsyncadd [#allocation5], 0
      %s7117 = sshll.u32 [#allocation11], 4
      %s7118 = int_to_ptr.vmem [resolvable:$true] %s7117
      %s7119 = sshll.u32 %s15, 4
      %s7120 = int_to_ptr.hbm [resolvable:$true] %s7119
      %7122 = dma.vmem_to_hbm [thread:$0]  %s7118, 32, %s7120, [#allocation5]
    $region81: #{tpu_custom_call.1} parent=1 // pred_fallthru
      _
    // Predicated region
    $region82: #{tpu_custom_call.1} parent=1 // pred_check
      _
    $region83: #{tpu_custom_call.1} parent=1 // pred_check_branch
      %7124 = sbr.rel (0) target = $region85
    $region84: #{tpu_custom_call.1} parent=1 // pred_region
      %7126 = dma.done [#allocation5], 32
    $region85: #{tpu_custom_call.1} parent=1 // pred_fallthru
      _
    %7127 = vsyncpa [#allocation4], 1
    %7128 = vsyncpa [#allocation7], 1
    %7129 = vsyncpa [#allocation10], 1
    %7130 = vsyncpa [#allocation5], 1

</llo_original>
